<compile_context>
chip_gen: v7x
topology: tpu7x:2x2x1
jax: 0.10.0
libtpu: 0.0.40
codegen_flags: <defaults>
</compile_context>

<pallas_src>
import numpy as np

import jax
import jax.numpy as jnp
from jax import lax
from jax.experimental import pallas as pl
from jax.experimental.pallas import tpu as pltpu

EPS = 1e-5


# ------------------------------ fused kernel -------------------------------

def _fused_kernel(s2_ref, s3_ref, x_pat_ref, x_flat_ref,
                  w1_ref, b1_ref,
                  w2_ref, g2_ref, be2_ref,
                  w3_ref, g3_ref, be3_ref,
                  w4_ref, g4_ref, be4_ref,
                  wr_ref, gr_ref, ber_ref,
                  out_ref):
    f32 = jnp.float32
    bf16 = jnp.bfloat16

    def bn_relu(y, gamma, beta):
        # PyTorch train-mode BatchNorm: per-channel batch stats, biased var.
        mean = jnp.mean(y, axis=0, keepdims=True)
        diff = y - mean
        var = jnp.mean(diff * diff, axis=0, keepdims=True)
        return jnp.maximum(gamma * (diff * lax.rsqrt(var + EPS)) + beta, 0.0)

    def strided_conv(s_ref, act_bf16, w_ref):
        # sum_k  (select_k @ act) @ W_k   — selection (0/1) gathers patch rows,
        # then the per-tap channel matmul; both feed the MXU in bf16.
        acc = None
        for k in range(9):
            g = jnp.dot(s_ref[k], act_bf16, preferred_element_type=f32)
            t = jnp.dot(g.astype(bf16), w_ref[k], preferred_element_type=f32)
            acc = t if acc is None else acc + t
        return acc

    # ---- l1: Conv2d(4, 32, k=3, s=1) + ReLU   (im2col done host-side) ----
    y1 = jnp.maximum(
        jnp.dot(x_pat_ref[...], w1_ref[...], preferred_element_type=f32)
        + b1_ref[...], 0.0)                                            # (N*64, 32)

    # ---- l2: Conv2d(32, 256, k=3, s=2) + BN2d + ReLU   (8x8 -> 3x3) ----
    y2 = bn_relu(strided_conv(s2_ref, y1.astype(bf16), w2_ref),
                 g2_ref[...], be2_ref[...])                            # (N*9, 256)

    # ---- l3: Conv2d(256, 512, k=3, s=2) + BN2d + ReLU  (3x3 -> 1x1) ----
    y3 = bn_relu(strided_conv(s3_ref, y2.astype(bf16), w3_ref),
                 g3_ref[...], be3_ref[...])                            # (N, 512) == flatten

    # ---- residual: Linear(400, 128) + BN1d + ReLU ----
    res = bn_relu(jnp.dot(x_flat_ref[...], wr_ref[...], preferred_element_type=f32),
                  gr_ref[...], ber_ref[...])                           # (N, 128)

    # ---- l4: Linear(512, 128) + BN1d + ReLU, residual add fused ----
    out_ref[...] = bn_relu(jnp.dot(y3, w4_ref[...], preferred_element_type=f32),
                           g4_ref[...], be4_ref[...]) + res            # (N, 128)


def _full_block(a):
    nd = a.ndim
    return pl.BlockSpec(a.shape, lambda i, nd=nd: (0,) * nd)


# ----------------------- constant selection matrices -----------------------
# 0/1 matrices implementing the strided-conv row gathers (l2, l3) as matmuls
# inside the kernel (no in-kernel gathers / strided slices).  bf16 is exact
# for 0/1 and matches the bf16 MXU path the gathered values take anyway.

def _build_selection_matrices(N):
    s2 = np.zeros((9, N * 9, N * 64), np.float32)     # 8x8 -> 3x3, stride 2
    s3 = np.zeros((9, N, N * 9), np.float32)          # 3x3 -> 1x1, stride 2
    for k in range(9):
        kh, kw = divmod(k, 3)
        for n in range(N):
            for oh in range(3):
                for ow in range(3):
                    s2[k, n * 9 + oh * 3 + ow,
                       n * 64 + (2 * oh + kh) * 8 + (2 * ow + kw)] = 1.0
            s3[k, n, n * 9 + kh * 3 + kw] = 1.0
    return jnp.asarray(s2, jnp.bfloat16), jnp.asarray(s3, jnp.bfloat16)


def _im2col_l1(x):
    """Host-side layout prep on the tiny raw input.
    x: (N, 4, 10, 10) NCHW -> (N*64, 36) patch rows; feature order (kh, kw, ci),
    row order (n, oh, ow)."""
    N = x.shape[0]
    x_nhwc = jnp.transpose(x, (0, 2, 3, 1))                            # (N,10,10,4)
    cols = [x_nhwc[:, kh:kh + 8, kw:kw + 8, :]
            for kh in range(3) for kw in range(3)]                     # 9 x (N,8,8,4)
    return jnp.stack(cols, axis=3).reshape(N * 64, 9 * 4)


# -------------------------------- parameters -------------------------------

def _conv_weight_blocks(w):
    """PyTorch (Cout, Cin, kh, kw) -> (kh*kw, Cin, Cout), (kh,kw) major."""
    cout, cin, kh, kw = w.shape
    return jnp.transpose(w, (2, 3, 1, 0)).reshape(kh * kw, cin, cout)


def init_params(key, output_size=128):
    keys = jax.random.split(key, 8)

    def uconv(k, cout, cin, ksz):
        bound = 1.0 / float((cin * ksz * ksz) ** 0.5)
        return jax.random.uniform(k, (cout, cin, ksz, ksz), jnp.float32, -bound, bound)

    def ulin(k, fin, fout):
        bound = 1.0 / float(fin ** 0.5)
        return jax.random.uniform(k, (fin, fout), jnp.float32, -bound, bound)

    def ubias(k, cout, fan_in):
        bound = 1.0 / float(fan_in ** 0.5)
        return jax.random.uniform(k, (1, cout), jnp.float32, -bound, bound)

    ones = lambda c: jnp.ones((1, c), jnp.float32)
    zeros = lambda c: jnp.zeros((1, c), jnp.float32)

    # Conv biases for l2/l3 and the Linear biases for l4/residual feed a
    # train-mode BatchNorm and are exactly cancelled by the mean subtraction,
    # so they are omitted (pure optimization, same forward semantics).
    return dict(
        # l1: Conv2d(4,32,3) + ReLU  — stored as the (36, 32) im2col weight.
        w1=_conv_weight_blocks(uconv(keys[0], 32, 4, 3)).reshape(9 * 4, 32),   # f32
        b1=ubias(keys[1], 32, 4 * 9),
        # l2: Conv2d(32,256,3,s2) + BN2d + ReLU   (weights bf16: HBM traffic)
        w2=_conv_weight_blocks(uconv(keys[2], 256, 32, 3)).astype(jnp.bfloat16),   # (9,32,256)
        g2=ones(256), be2=zeros(256),
        # l3: Conv2d(256,512,3,s2) + BN2d + ReLU
        w3=_conv_weight_blocks(uconv(keys[3], 512, 256, 3)).astype(jnp.bfloat16),  # (9,256,512)
        g3=ones(512), be3=zeros(512),
        # l4: Linear(512,128) + BN1d + ReLU
        w4=ulin(keys[4], 512, output_size),
        g4=ones(output_size), be4=zeros(output_size),
        # residual: Linear(400,128) + BN1d + ReLU
        wr=ulin(keys[5], 4 * 10 * 10, output_size),
        gr=ones(output_size), ber=zeros(output_size),
    )


# --------------------------------- forward ---------------------------------

def visual_cortex_forward(params, x):
    """x: (N, 4, 10, 10) NCHW float32 -> (N, 128)."""
    N = x.shape[0]
    out_size = params["w4"].shape[1]

    s2, s3 = _build_selection_matrices(N)
    # Minimal glue on the tiny raw input only; everything else lives in VMEM.
    x_pat = _im2col_l1(x)                                 # (N*64, 36) l1 patch rows
    x_flat = x.reshape(N, 4 * 10 * 10)                    # NCHW flatten (residual)

    args = (s2, s3, x_pat, x_flat,
            params["w1"], params["b1"],
            params["w2"], params["g2"], params["be2"],
            params["w3"], params["g3"], params["be3"],
            params["w4"], params["g4"], params["be4"],
            params["wr"], params["gr"], params["ber"])

    return pl.pallas_call(
        _fused_kernel,
        grid=(1,),
        in_specs=[_full_block(a) for a in args],
        out_specs=pl.BlockSpec((N, out_size), lambda i: (0, 0)),
        out_shape=jax.ShapeDtypeStruct((N, out_size), jnp.float32),
        compiler_params=pltpu.CompilerParams(
            dimension_semantics=("arbitrary",),
            vmem_limit_bytes=32 * 1024 * 1024,
        ),
    )(*args)


if __name__ == "__main__":
    key = jax.random.PRNGKey(0)
    kx, kp = jax.random.split(key)
    # Input must be (N, 4, 10, 10): the residual Linear expects 10*10*4 features
    # and the conv stack reduces 10x10 -> 1x1.  N >= 2 (train-mode BN).
    x = jax.random.normal(kx, (2, 4, 10, 10), dtype=jnp.float32)
    params = init_params(kp, output_size=128)

    fwd = jax.jit(visual_cortex_forward)
    out = fwd(params, x)
    out = jax.block_until_ready(out)
    assert out.shape == (2, 128) and out.dtype == jnp.float32
    assert bool(jnp.all(jnp.isfinite(out)))
    print("KERNEL_OK")
</pallas_src>

<mosaic_0001>
module attributes {stable_mosaic.version = 11 : i64} {
  func.func @_fused_kernel(%arg0: i32, %arg1: memref<9x18x128xbf16, #tpu.memory_space<vmem>>, %arg2: memref<9x2x18xbf16, #tpu.memory_space<vmem>>, %arg3: memref<128x36xf32, #tpu.memory_space<vmem>>, %arg4: memref<2x400xf32, #tpu.memory_space<vmem>>, %arg5: memref<36x32xf32, #tpu.memory_space<vmem>>, %arg6: memref<1x32xf32, #tpu.memory_space<vmem>>, %arg7: memref<9x32x256xbf16, #tpu.memory_space<vmem>>, %arg8: memref<1x256xf32, #tpu.memory_space<vmem>>, %arg9: memref<1x256xf32, #tpu.memory_space<vmem>>, %arg10: memref<9x256x512xbf16, #tpu.memory_space<vmem>>, %arg11: memref<1x512xf32, #tpu.memory_space<vmem>>, %arg12: memref<1x512xf32, #tpu.memory_space<vmem>>, %arg13: memref<512x128xf32, #tpu.memory_space<vmem>>, %arg14: memref<1x128xf32, #tpu.memory_space<vmem>>, %arg15: memref<1x128xf32, #tpu.memory_space<vmem>>, %arg16: memref<400x128xf32, #tpu.memory_space<vmem>>, %arg17: memref<1x128xf32, #tpu.memory_space<vmem>>, %arg18: memref<1x128xf32, #tpu.memory_space<vmem>>, %arg19: memref<2x128xf32, #tpu.memory_space<vmem>>) attributes {dimension_semantics = [#tpu.dimension_semantics<arbitrary>], iteration_bounds = array<i64: 1>, scalar_prefetch = 0 : i64, scratch_operands = 0 : i64, tpu.core_type = #tpu.core_type<tc>, window_params = [{pipeline_mode = #tpu.pipeline_mode<synchronous>, transform_indices = @transform_0, window_bounds = array<i64: 9, 18, 128>}, {pipeline_mode = #tpu.pipeline_mode<synchronous>, transform_indices = @transform_1, window_bounds = array<i64: 9, 2, 18>}, {pipeline_mode = #tpu.pipeline_mode<synchronous>, transform_indices = @transform_2, window_bounds = array<i64: 128, 36>}, {pipeline_mode = #tpu.pipeline_mode<synchronous>, transform_indices = @transform_3, window_bounds = array<i64: 2, 400>}, {pipeline_mode = #tpu.pipeline_mode<synchronous>, transform_indices = @transform_4, window_bounds = array<i64: 36, 32>}, {pipeline_mode = #tpu.pipeline_mode<synchronous>, transform_indices = @transform_5, window_bounds = array<i64: 1, 32>}, {pipeline_mode = #tpu.pipeline_mode<synchronous>, transform_indices = @transform_6, window_bounds = array<i64: 9, 32, 256>}, {pipeline_mode = #tpu.pipeline_mode<synchronous>, transform_indices = @transform_7, window_bounds = array<i64: 1, 256>}, {pipeline_mode = #tpu.pipeline_mode<synchronous>, transform_indices = @transform_8, window_bounds = array<i64: 1, 256>}, {pipeline_mode = #tpu.pipeline_mode<synchronous>, transform_indices = @transform_9, window_bounds = array<i64: 9, 256, 512>}, {pipeline_mode = #tpu.pipeline_mode<synchronous>, transform_indices = @transform_10, window_bounds = array<i64: 1, 512>}, {pipeline_mode = #tpu.pipeline_mode<synchronous>, transform_indices = @transform_11, window_bounds = array<i64: 1, 512>}, {pipeline_mode = #tpu.pipeline_mode<synchronous>, transform_indices = @transform_12, window_bounds = array<i64: 512, 128>}, {pipeline_mode = #tpu.pipeline_mode<synchronous>, transform_indices = @transform_13, window_bounds = array<i64: 1, 128>}, {pipeline_mode = #tpu.pipeline_mode<synchronous>, transform_indices = @transform_14, window_bounds = array<i64: 1, 128>}, {pipeline_mode = #tpu.pipeline_mode<synchronous>, transform_indices = @transform_15, window_bounds = array<i64: 400, 128>}, {pipeline_mode = #tpu.pipeline_mode<synchronous>, transform_indices = @transform_16, window_bounds = array<i64: 1, 128>}, {pipeline_mode = #tpu.pipeline_mode<synchronous>, transform_indices = @transform_17, window_bounds = array<i64: 1, 128>}, {pipeline_mode = #tpu.pipeline_mode<synchronous>, transform_indices = @transform_18, window_bounds = array<i64: 2, 128>}]} {
    %c0 = arith.constant 0 : index
    %c0_0 = arith.constant 0 : index
    %0 = vector.load %arg3[%c0, %c0_0] : memref<128x36xf32, #tpu.memory_space<vmem>>, vector<128x36xf32>
    %c0_1 = arith.constant 0 : index
    %c0_2 = arith.constant 0 : index
    %1 = vector.load %arg5[%c0_1, %c0_2] : memref<36x32xf32, #tpu.memory_space<vmem>>, vector<36x32xf32>
    %cst = arith.constant dense<0.000000e+00> : vector<128x32xf32>
    %2 = tpu.matmul %0, %1, %cst {dimension_numbers = #tpu.dot_dimension_numbers<[1], [0], [0], [1], [0, 0, 1, 1], [], []>} : vector<128x36xf32>, vector<36x32xf32>, vector<128x32xf32> -> vector<128x32xf32>
    %c0_3 = arith.constant 0 : index
    %c0_4 = arith.constant 0 : index
    %3 = vector.load %arg6[%c0_3, %c0_4] : memref<1x32xf32, #tpu.memory_space<vmem>>, vector<1x32xf32>
    %4 = vector.broadcast %3 : vector<1x32xf32> to vector<128x32xf32>
    %5 = arith.addf %2, %4 : vector<128x32xf32>
    %cst_5 = arith.constant 0.000000e+00 : f32
    %6 = vector.broadcast %cst_5 : f32 to vector<128x32xf32>
    %7 = arith.maximumf %5, %6 : vector<128x32xf32>
    %8 = arith.truncf %7 : vector<128x32xf32> to vector<128x32xbf16>
    %c0_6 = arith.constant 0 : index
    %c0_7 = arith.constant 0 : index
    %c0_8 = arith.constant 0 : index
    %9 = vector.load %arg1[%c0_6, %c0_7, %c0_8] : memref<9x18x128xbf16, #tpu.memory_space<vmem>>, vector<1x18x128xbf16>
    %10 = vector.shape_cast %9 : vector<1x18x128xbf16> to vector<18x128xbf16>
    %cst_9 = arith.constant dense<0.000000e+00> : vector<18x32xf32>
    %11 = tpu.matmul %10, %8, %cst_9 {dimension_numbers = #tpu.dot_dimension_numbers<[1], [0], [0], [1], [0, 0, 1, 1], [], []>} : vector<18x128xbf16>, vector<128x32xbf16>, vector<18x32xf32> -> vector<18x32xf32>
    %12 = arith.truncf %11 : vector<18x32xf32> to vector<18x32xbf16>
    %c0_10 = arith.constant 0 : index
    %c0_11 = arith.constant 0 : index
    %c0_12 = arith.constant 0 : index
    %13 = vector.load %arg7[%c0_10, %c0_11, %c0_12] : memref<9x32x256xbf16, #tpu.memory_space<vmem>>, vector<1x32x256xbf16>
    %14 = vector.shape_cast %13 : vector<1x32x256xbf16> to vector<32x256xbf16>
    %cst_13 = arith.constant dense<0.000000e+00> : vector<18x256xf32>
    %15 = tpu.matmul %12, %14, %cst_13 {dimension_numbers = #tpu.dot_dimension_numbers<[1], [0], [0], [1], [0, 0, 1, 1], [], []>} : vector<18x32xbf16>, vector<32x256xbf16>, vector<18x256xf32> -> vector<18x256xf32>
    %c1 = arith.constant 1 : index
    %c0_14 = arith.constant 0 : index
    %c0_15 = arith.constant 0 : index
    %16 = vector.load %arg1[%c1, %c0_14, %c0_15] : memref<9x18x128xbf16, #tpu.memory_space<vmem>>, vector<1x18x128xbf16>
    %17 = vector.shape_cast %16 : vector<1x18x128xbf16> to vector<18x128xbf16>
    %cst_16 = arith.constant dense<0.000000e+00> : vector<18x32xf32>
    %18 = tpu.matmul %17, %8, %cst_16 {dimension_numbers = #tpu.dot_dimension_numbers<[1], [0], [0], [1], [0, 0, 1, 1], [], []>} : vector<18x128xbf16>, vector<128x32xbf16>, vector<18x32xf32> -> vector<18x32xf32>
    %19 = arith.truncf %18 : vector<18x32xf32> to vector<18x32xbf16>
    %c1_17 = arith.constant 1 : index
    %c0_18 = arith.constant 0 : index
    %c0_19 = arith.constant 0 : index
    %20 = vector.load %arg7[%c1_17, %c0_18, %c0_19] : memref<9x32x256xbf16, #tpu.memory_space<vmem>>, vector<1x32x256xbf16>
    %21 = vector.shape_cast %20 : vector<1x32x256xbf16> to vector<32x256xbf16>
    %cst_20 = arith.constant dense<0.000000e+00> : vector<18x256xf32>
    %22 = tpu.matmul %19, %21, %cst_20 {dimension_numbers = #tpu.dot_dimension_numbers<[1], [0], [0], [1], [0, 0, 1, 1], [], []>} : vector<18x32xbf16>, vector<32x256xbf16>, vector<18x256xf32> -> vector<18x256xf32>
    %23 = arith.addf %15, %22 : vector<18x256xf32>
    %c2 = arith.constant 2 : index
    %c0_21 = arith.constant 0 : index
    %c0_22 = arith.constant 0 : index
    %24 = vector.load %arg1[%c2, %c0_21, %c0_22] : memref<9x18x128xbf16, #tpu.memory_space<vmem>>, vector<1x18x128xbf16>
    %25 = vector.shape_cast %24 : vector<1x18x128xbf16> to vector<18x128xbf16>
    %cst_23 = arith.constant dense<0.000000e+00> : vector<18x32xf32>
    %26 = tpu.matmul %25, %8, %cst_23 {dimension_numbers = #tpu.dot_dimension_numbers<[1], [0], [0], [1], [0, 0, 1, 1], [], []>} : vector<18x128xbf16>, vector<128x32xbf16>, vector<18x32xf32> -> vector<18x32xf32>
    %27 = arith.truncf %26 : vector<18x32xf32> to vector<18x32xbf16>
    %c2_24 = arith.constant 2 : index
    %c0_25 = arith.constant 0 : index
    %c0_26 = arith.constant 0 : index
    %28 = vector.load %arg7[%c2_24, %c0_25, %c0_26] : memref<9x32x256xbf16, #tpu.memory_space<vmem>>, vector<1x32x256xbf16>
    %29 = vector.shape_cast %28 : vector<1x32x256xbf16> to vector<32x256xbf16>
    %cst_27 = arith.constant dense<0.000000e+00> : vector<18x256xf32>
    %30 = tpu.matmul %27, %29, %cst_27 {dimension_numbers = #tpu.dot_dimension_numbers<[1], [0], [0], [1], [0, 0, 1, 1], [], []>} : vector<18x32xbf16>, vector<32x256xbf16>, vector<18x256xf32> -> vector<18x256xf32>
    %31 = arith.addf %23, %30 : vector<18x256xf32>
    %c3 = arith.constant 3 : index
    %c0_28 = arith.constant 0 : index
    %c0_29 = arith.constant 0 : index
    %32 = vector.load %arg1[%c3, %c0_28, %c0_29] : memref<9x18x128xbf16, #tpu.memory_space<vmem>>, vector<1x18x128xbf16>
    %33 = vector.shape_cast %32 : vector<1x18x128xbf16> to vector<18x128xbf16>
    %cst_30 = arith.constant dense<0.000000e+00> : vector<18x32xf32>
    %34 = tpu.matmul %33, %8, %cst_30 {dimension_numbers = #tpu.dot_dimension_numbers<[1], [0], [0], [1], [0, 0, 1, 1], [], []>} : vector<18x128xbf16>, vector<128x32xbf16>, vector<18x32xf32> -> vector<18x32xf32>
    %35 = arith.truncf %34 : vector<18x32xf32> to vector<18x32xbf16>
    %c3_31 = arith.constant 3 : index
    %c0_32 = arith.constant 0 : index
    %c0_33 = arith.constant 0 : index
    %36 = vector.load %arg7[%c3_31, %c0_32, %c0_33] : memref<9x32x256xbf16, #tpu.memory_space<vmem>>, vector<1x32x256xbf16>
    %37 = vector.shape_cast %36 : vector<1x32x256xbf16> to vector<32x256xbf16>
    %cst_34 = arith.constant dense<0.000000e+00> : vector<18x256xf32>
    %38 = tpu.matmul %35, %37, %cst_34 {dimension_numbers = #tpu.dot_dimension_numbers<[1], [0], [0], [1], [0, 0, 1, 1], [], []>} : vector<18x32xbf16>, vector<32x256xbf16>, vector<18x256xf32> -> vector<18x256xf32>
    %39 = arith.addf %31, %38 : vector<18x256xf32>
    %c4 = arith.constant 4 : index
    %c0_35 = arith.constant 0 : index
    %c0_36 = arith.constant 0 : index
    %40 = vector.load %arg1[%c4, %c0_35, %c0_36] : memref<9x18x128xbf16, #tpu.memory_space<vmem>>, vector<1x18x128xbf16>
    %41 = vector.shape_cast %40 : vector<1x18x128xbf16> to vector<18x128xbf16>
    %cst_37 = arith.constant dense<0.000000e+00> : vector<18x32xf32>
    %42 = tpu.matmul %41, %8, %cst_37 {dimension_numbers = #tpu.dot_dimension_numbers<[1], [0], [0], [1], [0, 0, 1, 1], [], []>} : vector<18x128xbf16>, vector<128x32xbf16>, vector<18x32xf32> -> vector<18x32xf32>
    %43 = arith.truncf %42 : vector<18x32xf32> to vector<18x32xbf16>
    %c4_38 = arith.constant 4 : index
    %c0_39 = arith.constant 0 : index
    %c0_40 = arith.constant 0 : index
    %44 = vector.load %arg7[%c4_38, %c0_39, %c0_40] : memref<9x32x256xbf16, #tpu.memory_space<vmem>>, vector<1x32x256xbf16>
    %45 = vector.shape_cast %44 : vector<1x32x256xbf16> to vector<32x256xbf16>
    %cst_41 = arith.constant dense<0.000000e+00> : vector<18x256xf32>
    %46 = tpu.matmul %43, %45, %cst_41 {dimension_numbers = #tpu.dot_dimension_numbers<[1], [0], [0], [1], [0, 0, 1, 1], [], []>} : vector<18x32xbf16>, vector<32x256xbf16>, vector<18x256xf32> -> vector<18x256xf32>
    %47 = arith.addf %39, %46 : vector<18x256xf32>
    %c5 = arith.constant 5 : index
    %c0_42 = arith.constant 0 : index
    %c0_43 = arith.constant 0 : index
    %48 = vector.load %arg1[%c5, %c0_42, %c0_43] : memref<9x18x128xbf16, #tpu.memory_space<vmem>>, vector<1x18x128xbf16>
    %49 = vector.shape_cast %48 : vector<1x18x128xbf16> to vector<18x128xbf16>
    %cst_44 = arith.constant dense<0.000000e+00> : vector<18x32xf32>
    %50 = tpu.matmul %49, %8, %cst_44 {dimension_numbers = #tpu.dot_dimension_numbers<[1], [0], [0], [1], [0, 0, 1, 1], [], []>} : vector<18x128xbf16>, vector<128x32xbf16>, vector<18x32xf32> -> vector<18x32xf32>
    %51 = arith.truncf %50 : vector<18x32xf32> to vector<18x32xbf16>
    %c5_45 = arith.constant 5 : index
    %c0_46 = arith.constant 0 : index
    %c0_47 = arith.constant 0 : index
    %52 = vector.load %arg7[%c5_45, %c0_46, %c0_47] : memref<9x32x256xbf16, #tpu.memory_space<vmem>>, vector<1x32x256xbf16>
    %53 = vector.shape_cast %52 : vector<1x32x256xbf16> to vector<32x256xbf16>
    %cst_48 = arith.constant dense<0.000000e+00> : vector<18x256xf32>
    %54 = tpu.matmul %51, %53, %cst_48 {dimension_numbers = #tpu.dot_dimension_numbers<[1], [0], [0], [1], [0, 0, 1, 1], [], []>} : vector<18x32xbf16>, vector<32x256xbf16>, vector<18x256xf32> -> vector<18x256xf32>
    %55 = arith.addf %47, %54 : vector<18x256xf32>
    %c6 = arith.constant 6 : index
    %c0_49 = arith.constant 0 : index
    %c0_50 = arith.constant 0 : index
    %56 = vector.load %arg1[%c6, %c0_49, %c0_50] : memref<9x18x128xbf16, #tpu.memory_space<vmem>>, vector<1x18x128xbf16>
    %57 = vector.shape_cast %56 : vector<1x18x128xbf16> to vector<18x128xbf16>
    %cst_51 = arith.constant dense<0.000000e+00> : vector<18x32xf32>
    %58 = tpu.matmul %57, %8, %cst_51 {dimension_numbers = #tpu.dot_dimension_numbers<[1], [0], [0], [1], [0, 0, 1, 1], [], []>} : vector<18x128xbf16>, vector<128x32xbf16>, vector<18x32xf32> -> vector<18x32xf32>
    %59 = arith.truncf %58 : vector<18x32xf32> to vector<18x32xbf16>
    %c6_52 = arith.constant 6 : index
    %c0_53 = arith.constant 0 : index
    %c0_54 = arith.constant 0 : index
    %60 = vector.load %arg7[%c6_52, %c0_53, %c0_54] : memref<9x32x256xbf16, #tpu.memory_space<vmem>>, vector<1x32x256xbf16>
    %61 = vector.shape_cast %60 : vector<1x32x256xbf16> to vector<32x256xbf16>
    %cst_55 = arith.constant dense<0.000000e+00> : vector<18x256xf32>
    %62 = tpu.matmul %59, %61, %cst_55 {dimension_numbers = #tpu.dot_dimension_numbers<[1], [0], [0], [1], [0, 0, 1, 1], [], []>} : vector<18x32xbf16>, vector<32x256xbf16>, vector<18x256xf32> -> vector<18x256xf32>
    %63 = arith.addf %55, %62 : vector<18x256xf32>
    %c7 = arith.constant 7 : index
    %c0_56 = arith.constant 0 : index
    %c0_57 = arith.constant 0 : index
    %64 = vector.load %arg1[%c7, %c0_56, %c0_57] : memref<9x18x128xbf16, #tpu.memory_space<vmem>>, vector<1x18x128xbf16>
    %65 = vector.shape_cast %64 : vector<1x18x128xbf16> to vector<18x128xbf16>
    %cst_58 = arith.constant dense<0.000000e+00> : vector<18x32xf32>
    %66 = tpu.matmul %65, %8, %cst_58 {dimension_numbers = #tpu.dot_dimension_numbers<[1], [0], [0], [1], [0, 0, 1, 1], [], []>} : vector<18x128xbf16>, vector<128x32xbf16>, vector<18x32xf32> -> vector<18x32xf32>
    %67 = arith.truncf %66 : vector<18x32xf32> to vector<18x32xbf16>
    %c7_59 = arith.constant 7 : index
    %c0_60 = arith.constant 0 : index
    %c0_61 = arith.constant 0 : index
    %68 = vector.load %arg7[%c7_59, %c0_60, %c0_61] : memref<9x32x256xbf16, #tpu.memory_space<vmem>>, vector<1x32x256xbf16>
    %69 = vector.shape_cast %68 : vector<1x32x256xbf16> to vector<32x256xbf16>
    %cst_62 = arith.constant dense<0.000000e+00> : vector<18x256xf32>
    %70 = tpu.matmul %67, %69, %cst_62 {dimension_numbers = #tpu.dot_dimension_numbers<[1], [0], [0], [1], [0, 0, 1, 1], [], []>} : vector<18x32xbf16>, vector<32x256xbf16>, vector<18x256xf32> -> vector<18x256xf32>
    %71 = arith.addf %63, %70 : vector<18x256xf32>
    %c8 = arith.constant 8 : index
    %c0_63 = arith.constant 0 : index
    %c0_64 = arith.constant 0 : index
    %72 = vector.load %arg1[%c8, %c0_63, %c0_64] : memref<9x18x128xbf16, #tpu.memory_space<vmem>>, vector<1x18x128xbf16>
    %73 = vector.shape_cast %72 : vector<1x18x128xbf16> to vector<18x128xbf16>
    %cst_65 = arith.constant dense<0.000000e+00> : vector<18x32xf32>
    %74 = tpu.matmul %73, %8, %cst_65 {dimension_numbers = #tpu.dot_dimension_numbers<[1], [0], [0], [1], [0, 0, 1, 1], [], []>} : vector<18x128xbf16>, vector<128x32xbf16>, vector<18x32xf32> -> vector<18x32xf32>
    %75 = arith.truncf %74 : vector<18x32xf32> to vector<18x32xbf16>
    %c8_66 = arith.constant 8 : index
    %c0_67 = arith.constant 0 : index
    %c0_68 = arith.constant 0 : index
    %76 = vector.load %arg7[%c8_66, %c0_67, %c0_68] : memref<9x32x256xbf16, #tpu.memory_space<vmem>>, vector<1x32x256xbf16>
    %77 = vector.shape_cast %76 : vector<1x32x256xbf16> to vector<32x256xbf16>
    %cst_69 = arith.constant dense<0.000000e+00> : vector<18x256xf32>
    %78 = tpu.matmul %75, %77, %cst_69 {dimension_numbers = #tpu.dot_dimension_numbers<[1], [0], [0], [1], [0, 0, 1, 1], [], []>} : vector<18x32xbf16>, vector<32x256xbf16>, vector<18x256xf32> -> vector<18x256xf32>
    %79 = arith.addf %71, %78 : vector<18x256xf32>
    %c0_70 = arith.constant 0 : index
    %c0_71 = arith.constant 0 : index
    %80 = vector.load %arg8[%c0_70, %c0_71] : memref<1x256xf32, #tpu.memory_space<vmem>>, vector<1x256xf32>
    %c0_72 = arith.constant 0 : index
    %c0_73 = arith.constant 0 : index
    %81 = vector.load %arg9[%c0_72, %c0_73] : memref<1x256xf32, #tpu.memory_space<vmem>>, vector<1x256xf32>
    %cst_74 = arith.constant dense<0.000000e+00> : vector<256xf32>
    %82 = vector.multi_reduction <add>, %79, %cst_74 [0] : vector<18x256xf32> to vector<256xf32>
    %83 = vector.shape_cast %82 : vector<256xf32> to vector<1x256xf32>
    %cst_75 = arith.constant 1.800000e+01 : f32
    %84 = vector.broadcast %cst_75 : f32 to vector<1x256xf32>
    %85 = arith.divf %83, %84 : vector<1x256xf32>
    %86 = vector.broadcast %85 : vector<1x256xf32> to vector<18x256xf32>
    %87 = arith.subf %79, %86 : vector<18x256xf32>
    %88 = arith.mulf %87, %87 : vector<18x256xf32>
    %cst_76 = arith.constant dense<0.000000e+00> : vector<256xf32>
    %89 = vector.multi_reduction <add>, %88, %cst_76 [0] : vector<18x256xf32> to vector<256xf32>
    %90 = vector.shape_cast %89 : vector<256xf32> to vector<1x256xf32>
    %cst_77 = arith.constant 1.800000e+01 : f32
    %91 = vector.broadcast %cst_77 : f32 to vector<1x256xf32>
    %92 = arith.divf %90, %91 : vector<1x256xf32>
    %cst_78 = arith.constant 9.99999974E-6 : f32
    %93 = vector.broadcast %cst_78 : f32 to vector<1x256xf32>
    %94 = arith.addf %92, %93 : vector<1x256xf32>
    %95 = math.rsqrt %94 : vector<1x256xf32>
    %96 = vector.broadcast %95 : vector<1x256xf32> to vector<18x256xf32>
    %97 = arith.mulf %87, %96 : vector<18x256xf32>
    %98 = vector.broadcast %80 : vector<1x256xf32> to vector<18x256xf32>
    %99 = arith.mulf %98, %97 : vector<18x256xf32>
    %100 = vector.broadcast %81 : vector<1x256xf32> to vector<18x256xf32>
    %101 = arith.addf %99, %100 : vector<18x256xf32>
    %cst_79 = arith.constant 0.000000e+00 : f32
    %102 = vector.broadcast %cst_79 : f32 to vector<18x256xf32>
    %103 = arith.maximumf %101, %102 : vector<18x256xf32>
    %104 = arith.truncf %103 : vector<18x256xf32> to vector<18x256xbf16>
    %c0_80 = arith.constant 0 : index
    %c0_81 = arith.constant 0 : index
    %c0_82 = arith.constant 0 : index
    %105 = vector.load %arg2[%c0_80, %c0_81, %c0_82] : memref<9x2x18xbf16, #tpu.memory_space<vmem>>, vector<1x2x18xbf16>
    %106 = vector.shape_cast %105 : vector<1x2x18xbf16> to vector<2x18xbf16>
    %cst_83 = arith.constant dense<0.000000e+00> : vector<2x256xf32>
    %107 = tpu.matmul %106, %104, %cst_83 {dimension_numbers = #tpu.dot_dimension_numbers<[1], [0], [0], [1], [0, 0, 1, 1], [], []>} : vector<2x18xbf16>, vector<18x256xbf16>, vector<2x256xf32> -> vector<2x256xf32>
    %108 = arith.truncf %107 : vector<2x256xf32> to vector<2x256xbf16>
    %c0_84 = arith.constant 0 : index
    %c0_85 = arith.constant 0 : index
    %c0_86 = arith.constant 0 : index
    %109 = vector.load %arg10[%c0_84, %c0_85, %c0_86] : memref<9x256x512xbf16, #tpu.memory_space<vmem>>, vector<1x256x512xbf16>
    %110 = vector.shape_cast %109 : vector<1x256x512xbf16> to vector<256x512xbf16>
    %cst_87 = arith.constant dense<0.000000e+00> : vector<2x512xf32>
    %111 = tpu.matmul %108, %110, %cst_87 {dimension_numbers = #tpu.dot_dimension_numbers<[1], [0], [0], [1], [0, 0, 1, 1], [], []>} : vector<2x256xbf16>, vector<256x512xbf16>, vector<2x512xf32> -> vector<2x512xf32>
    %c1_88 = arith.constant 1 : index
    %c0_89 = arith.constant 0 : index
    %c0_90 = arith.constant 0 : index
    %112 = vector.load %arg2[%c1_88, %c0_89, %c0_90] : memref<9x2x18xbf16, #tpu.memory_space<vmem>>, vector<1x2x18xbf16>
    %113 = vector.shape_cast %112 : vector<1x2x18xbf16> to vector<2x18xbf16>
    %cst_91 = arith.constant dense<0.000000e+00> : vector<2x256xf32>
    %114 = tpu.matmul %113, %104, %cst_91 {dimension_numbers = #tpu.dot_dimension_numbers<[1], [0], [0], [1], [0, 0, 1, 1], [], []>} : vector<2x18xbf16>, vector<18x256xbf16>, vector<2x256xf32> -> vector<2x256xf32>
    %115 = arith.truncf %114 : vector<2x256xf32> to vector<2x256xbf16>
    %c1_92 = arith.constant 1 : index
    %c0_93 = arith.constant 0 : index
    %c0_94 = arith.constant 0 : index
    %116 = vector.load %arg10[%c1_92, %c0_93, %c0_94] : memref<9x256x512xbf16, #tpu.memory_space<vmem>>, vector<1x256x512xbf16>
    %117 = vector.shape_cast %116 : vector<1x256x512xbf16> to vector<256x512xbf16>
    %cst_95 = arith.constant dense<0.000000e+00> : vector<2x512xf32>
    %118 = tpu.matmul %115, %117, %cst_95 {dimension_numbers = #tpu.dot_dimension_numbers<[1], [0], [0], [1], [0, 0, 1, 1], [], []>} : vector<2x256xbf16>, vector<256x512xbf16>, vector<2x512xf32> -> vector<2x512xf32>
    %119 = arith.addf %111, %118 : vector<2x512xf32>
    %c2_96 = arith.constant 2 : index
    %c0_97 = arith.constant 0 : index
    %c0_98 = arith.constant 0 : index
    %120 = vector.load %arg2[%c2_96, %c0_97, %c0_98] : memref<9x2x18xbf16, #tpu.memory_space<vmem>>, vector<1x2x18xbf16>
    %121 = vector.shape_cast %120 : vector<1x2x18xbf16> to vector<2x18xbf16>
    %cst_99 = arith.constant dense<0.000000e+00> : vector<2x256xf32>
    %122 = tpu.matmul %121, %104, %cst_99 {dimension_numbers = #tpu.dot_dimension_numbers<[1], [0], [0], [1], [0, 0, 1, 1], [], []>} : vector<2x18xbf16>, vector<18x256xbf16>, vector<2x256xf32> -> vector<2x256xf32>
    %123 = arith.truncf %122 : vector<2x256xf32> to vector<2x256xbf16>
    %c2_100 = arith.constant 2 : index
    %c0_101 = arith.constant 0 : index
    %c0_102 = arith.constant 0 : index
    %124 = vector.load %arg10[%c2_100, %c0_101, %c0_102] : memref<9x256x512xbf16, #tpu.memory_space<vmem>>, vector<1x256x512xbf16>
    %125 = vector.shape_cast %124 : vector<1x256x512xbf16> to vector<256x512xbf16>
    %cst_103 = arith.constant dense<0.000000e+00> : vector<2x512xf32>
    %126 = tpu.matmul %123, %125, %cst_103 {dimension_numbers = #tpu.dot_dimension_numbers<[1], [0], [0], [1], [0, 0, 1, 1], [], []>} : vector<2x256xbf16>, vector<256x512xbf16>, vector<2x512xf32> -> vector<2x512xf32>
    %127 = arith.addf %119, %126 : vector<2x512xf32>
    %c3_104 = arith.constant 3 : index
    %c0_105 = arith.constant 0 : index
    %c0_106 = arith.constant 0 : index
    %128 = vector.load %arg2[%c3_104, %c0_105, %c0_106] : memref<9x2x18xbf16, #tpu.memory_space<vmem>>, vector<1x2x18xbf16>
    %129 = vector.shape_cast %128 : vector<1x2x18xbf16> to vector<2x18xbf16>
    %cst_107 = arith.constant dense<0.000000e+00> : vector<2x256xf32>
    %130 = tpu.matmul %129, %104, %cst_107 {dimension_numbers = #tpu.dot_dimension_numbers<[1], [0], [0], [1], [0, 0, 1, 1], [], []>} : vector<2x18xbf16>, vector<18x256xbf16>, vector<2x256xf32> -> vector<2x256xf32>
    %131 = arith.truncf %130 : vector<2x256xf32> to vector<2x256xbf16>
    %c3_108 = arith.constant 3 : index
    %c0_109 = arith.constant 0 : index
    %c0_110 = arith.constant 0 : index
    %132 = vector.load %arg10[%c3_108, %c0_109, %c0_110] : memref<9x256x512xbf16, #tpu.memory_space<vmem>>, vector<1x256x512xbf16>
    %133 = vector.shape_cast %132 : vector<1x256x512xbf16> to vector<256x512xbf16>
    %cst_111 = arith.constant dense<0.000000e+00> : vector<2x512xf32>
    %134 = tpu.matmul %131, %133, %cst_111 {dimension_numbers = #tpu.dot_dimension_numbers<[1], [0], [0], [1], [0, 0, 1, 1], [], []>} : vector<2x256xbf16>, vector<256x512xbf16>, vector<2x512xf32> -> vector<2x512xf32>
    %135 = arith.addf %127, %134 : vector<2x512xf32>
    %c4_112 = arith.constant 4 : index
    %c0_113 = arith.constant 0 : index
    %c0_114 = arith.constant 0 : index
    %136 = vector.load %arg2[%c4_112, %c0_113, %c0_114] : memref<9x2x18xbf16, #tpu.memory_space<vmem>>, vector<1x2x18xbf16>
    %137 = vector.shape_cast %136 : vector<1x2x18xbf16> to vector<2x18xbf16>
    %cst_115 = arith.constant dense<0.000000e+00> : vector<2x256xf32>
    %138 = tpu.matmul %137, %104, %cst_115 {dimension_numbers = #tpu.dot_dimension_numbers<[1], [0], [0], [1], [0, 0, 1, 1], [], []>} : vector<2x18xbf16>, vector<18x256xbf16>, vector<2x256xf32> -> vector<2x256xf32>
    %139 = arith.truncf %138 : vector<2x256xf32> to vector<2x256xbf16>
    %c4_116 = arith.constant 4 : index
    %c0_117 = arith.constant 0 : index
    %c0_118 = arith.constant 0 : index
    %140 = vector.load %arg10[%c4_116, %c0_117, %c0_118] : memref<9x256x512xbf16, #tpu.memory_space<vmem>>, vector<1x256x512xbf16>
    %141 = vector.shape_cast %140 : vector<1x256x512xbf16> to vector<256x512xbf16>
    %cst_119 = arith.constant dense<0.000000e+00> : vector<2x512xf32>
    %142 = tpu.matmul %139, %141, %cst_119 {dimension_numbers = #tpu.dot_dimension_numbers<[1], [0], [0], [1], [0, 0, 1, 1], [], []>} : vector<2x256xbf16>, vector<256x512xbf16>, vector<2x512xf32> -> vector<2x512xf32>
    %143 = arith.addf %135, %142 : vector<2x512xf32>
    %c5_120 = arith.constant 5 : index
    %c0_121 = arith.constant 0 : index
    %c0_122 = arith.constant 0 : index
    %144 = vector.load %arg2[%c5_120, %c0_121, %c0_122] : memref<9x2x18xbf16, #tpu.memory_space<vmem>>, vector<1x2x18xbf16>
    %145 = vector.shape_cast %144 : vector<1x2x18xbf16> to vector<2x18xbf16>
    %cst_123 = arith.constant dense<0.000000e+00> : vector<2x256xf32>
    %146 = tpu.matmul %145, %104, %cst_123 {dimension_numbers = #tpu.dot_dimension_numbers<[1], [0], [0], [1], [0, 0, 1, 1], [], []>} : vector<2x18xbf16>, vector<18x256xbf16>, vector<2x256xf32> -> vector<2x256xf32>
    %147 = arith.truncf %146 : vector<2x256xf32> to vector<2x256xbf16>
    %c5_124 = arith.constant 5 : index
    %c0_125 = arith.constant 0 : index
    %c0_126 = arith.constant 0 : index
    %148 = vector.load %arg10[%c5_124, %c0_125, %c0_126] : memref<9x256x512xbf16, #tpu.memory_space<vmem>>, vector<1x256x512xbf16>
    %149 = vector.shape_cast %148 : vector<1x256x512xbf16> to vector<256x512xbf16>
    %cst_127 = arith.constant dense<0.000000e+00> : vector<2x512xf32>
    %150 = tpu.matmul %147, %149, %cst_127 {dimension_numbers = #tpu.dot_dimension_numbers<[1], [0], [0], [1], [0, 0, 1, 1], [], []>} : vector<2x256xbf16>, vector<256x512xbf16>, vector<2x512xf32> -> vector<2x512xf32>
    %151 = arith.addf %143, %150 : vector<2x512xf32>
    %c6_128 = arith.constant 6 : index
    %c0_129 = arith.constant 0 : index
    %c0_130 = arith.constant 0 : index
    %152 = vector.load %arg2[%c6_128, %c0_129, %c0_130] : memref<9x2x18xbf16, #tpu.memory_space<vmem>>, vector<1x2x18xbf16>
    %153 = vector.shape_cast %152 : vector<1x2x18xbf16> to vector<2x18xbf16>
    %cst_131 = arith.constant dense<0.000000e+00> : vector<2x256xf32>
    %154 = tpu.matmul %153, %104, %cst_131 {dimension_numbers = #tpu.dot_dimension_numbers<[1], [0], [0], [1], [0, 0, 1, 1], [], []>} : vector<2x18xbf16>, vector<18x256xbf16>, vector<2x256xf32> -> vector<2x256xf32>
    %155 = arith.truncf %154 : vector<2x256xf32> to vector<2x256xbf16>
    %c6_132 = arith.constant 6 : index
    %c0_133 = arith.constant 0 : index
    %c0_134 = arith.constant 0 : index
    %156 = vector.load %arg10[%c6_132, %c0_133, %c0_134] : memref<9x256x512xbf16, #tpu.memory_space<vmem>>, vector<1x256x512xbf16>
    %157 = vector.shape_cast %156 : vector<1x256x512xbf16> to vector<256x512xbf16>
    %cst_135 = arith.constant dense<0.000000e+00> : vector<2x512xf32>
    %158 = tpu.matmul %155, %157, %cst_135 {dimension_numbers = #tpu.dot_dimension_numbers<[1], [0], [0], [1], [0, 0, 1, 1], [], []>} : vector<2x256xbf16>, vector<256x512xbf16>, vector<2x512xf32> -> vector<2x512xf32>
    %159 = arith.addf %151, %158 : vector<2x512xf32>
    %c7_136 = arith.constant 7 : index
    %c0_137 = arith.constant 0 : index
    %c0_138 = arith.constant 0 : index
    %160 = vector.load %arg2[%c7_136, %c0_137, %c0_138] : memref<9x2x18xbf16, #tpu.memory_space<vmem>>, vector<1x2x18xbf16>
    %161 = vector.shape_cast %160 : vector<1x2x18xbf16> to vector<2x18xbf16>
    %cst_139 = arith.constant dense<0.000000e+00> : vector<2x256xf32>
    %162 = tpu.matmul %161, %104, %cst_139 {dimension_numbers = #tpu.dot_dimension_numbers<[1], [0], [0], [1], [0, 0, 1, 1], [], []>} : vector<2x18xbf16>, vector<18x256xbf16>, vector<2x256xf32> -> vector<2x256xf32>
    %163 = arith.truncf %162 : vector<2x256xf32> to vector<2x256xbf16>
    %c7_140 = arith.constant 7 : index
    %c0_141 = arith.constant 0 : index
    %c0_142 = arith.constant 0 : index
    %164 = vector.load %arg10[%c7_140, %c0_141, %c0_142] : memref<9x256x512xbf16, #tpu.memory_space<vmem>>, vector<1x256x512xbf16>
    %165 = vector.shape_cast %164 : vector<1x256x512xbf16> to vector<256x512xbf16>
    %cst_143 = arith.constant dense<0.000000e+00> : vector<2x512xf32>
    %166 = tpu.matmul %163, %165, %cst_143 {dimension_numbers = #tpu.dot_dimension_numbers<[1], [0], [0], [1], [0, 0, 1, 1], [], []>} : vector<2x256xbf16>, vector<256x512xbf16>, vector<2x512xf32> -> vector<2x512xf32>
    %167 = arith.addf %159, %166 : vector<2x512xf32>
    %c8_144 = arith.constant 8 : index
    %c0_145 = arith.constant 0 : index
    %c0_146 = arith.constant 0 : index
    %168 = vector.load %arg2[%c8_144, %c0_145, %c0_146] : memref<9x2x18xbf16, #tpu.memory_space<vmem>>, vector<1x2x18xbf16>
    %169 = vector.shape_cast %168 : vector<1x2x18xbf16> to vector<2x18xbf16>
    %cst_147 = arith.constant dense<0.000000e+00> : vector<2x256xf32>
    %170 = tpu.matmul %169, %104, %cst_147 {dimension_numbers = #tpu.dot_dimension_numbers<[1], [0], [0], [1], [0, 0, 1, 1], [], []>} : vector<2x18xbf16>, vector<18x256xbf16>, vector<2x256xf32> -> vector<2x256xf32>
    %171 = arith.truncf %170 : vector<2x256xf32> to vector<2x256xbf16>
    %c8_148 = arith.constant 8 : index
    %c0_149 = arith.constant 0 : index
    %c0_150 = arith.constant 0 : index
    %172 = vector.load %arg10[%c8_148, %c0_149, %c0_150] : memref<9x256x512xbf16, #tpu.memory_space<vmem>>, vector<1x256x512xbf16>
    %173 = vector.shape_cast %172 : vector<1x256x512xbf16> to vector<256x512xbf16>
    %cst_151 = arith.constant dense<0.000000e+00> : vector<2x512xf32>
    %174 = tpu.matmul %171, %173, %cst_151 {dimension_numbers = #tpu.dot_dimension_numbers<[1], [0], [0], [1], [0, 0, 1, 1], [], []>} : vector<2x256xbf16>, vector<256x512xbf16>, vector<2x512xf32> -> vector<2x512xf32>
    %175 = arith.addf %167, %174 : vector<2x512xf32>
    %c0_152 = arith.constant 0 : index
    %c0_153 = arith.constant 0 : index
    %176 = vector.load %arg11[%c0_152, %c0_153] : memref<1x512xf32, #tpu.memory_space<vmem>>, vector<1x512xf32>
    %c0_154 = arith.constant 0 : index
    %c0_155 = arith.constant 0 : index
    %177 = vector.load %arg12[%c0_154, %c0_155] : memref<1x512xf32, #tpu.memory_space<vmem>>, vector<1x512xf32>
    %cst_156 = arith.constant dense<0.000000e+00> : vector<512xf32>
    %178 = vector.multi_reduction <add>, %175, %cst_156 [0] : vector<2x512xf32> to vector<512xf32>
    %179 = vector.shape_cast %178 : vector<512xf32> to vector<1x512xf32>
    %cst_157 = arith.constant 2.000000e+00 : f32
    %180 = vector.broadcast %cst_157 : f32 to vector<1x512xf32>
    %181 = arith.divf %179, %180 : vector<1x512xf32>
    %182 = vector.broadcast %181 : vector<1x512xf32> to vector<2x512xf32>
    %183 = arith.subf %175, %182 : vector<2x512xf32>
    %184 = arith.mulf %183, %183 : vector<2x512xf32>
    %cst_158 = arith.constant dense<0.000000e+00> : vector<512xf32>
    %185 = vector.multi_reduction <add>, %184, %cst_158 [0] : vector<2x512xf32> to vector<512xf32>
    %186 = vector.shape_cast %185 : vector<512xf32> to vector<1x512xf32>
    %cst_159 = arith.constant 2.000000e+00 : f32
    %187 = vector.broadcast %cst_159 : f32 to vector<1x512xf32>
    %188 = arith.divf %186, %187 : vector<1x512xf32>
    %cst_160 = arith.constant 9.99999974E-6 : f32
    %189 = vector.broadcast %cst_160 : f32 to vector<1x512xf32>
    %190 = arith.addf %188, %189 : vector<1x512xf32>
    %191 = math.rsqrt %190 : vector<1x512xf32>
    %192 = vector.broadcast %191 : vector<1x512xf32> to vector<2x512xf32>
    %193 = arith.mulf %183, %192 : vector<2x512xf32>
    %194 = vector.broadcast %176 : vector<1x512xf32> to vector<2x512xf32>
    %195 = arith.mulf %194, %193 : vector<2x512xf32>
    %196 = vector.broadcast %177 : vector<1x512xf32> to vector<2x512xf32>
    %197 = arith.addf %195, %196 : vector<2x512xf32>
    %cst_161 = arith.constant 0.000000e+00 : f32
    %198 = vector.broadcast %cst_161 : f32 to vector<2x512xf32>
    %199 = arith.maximumf %197, %198 : vector<2x512xf32>
    %c0_162 = arith.constant 0 : index
    %c0_163 = arith.constant 0 : index
    %200 = vector.load %arg4[%c0_162, %c0_163] : memref<2x400xf32, #tpu.memory_space<vmem>>, vector<2x400xf32>
    %c0_164 = arith.constant 0 : index
    %c0_165 = arith.constant 0 : index
    %201 = vector.load %arg16[%c0_164, %c0_165] : memref<400x128xf32, #tpu.memory_space<vmem>>, vector<400x128xf32>
    %cst_166 = arith.constant dense<0.000000e+00> : vector<2x128xf32>
    %202 = tpu.matmul %200, %201, %cst_166 {dimension_numbers = #tpu.dot_dimension_numbers<[1], [0], [0], [1], [0, 0, 1, 1], [], []>} : vector<2x400xf32>, vector<400x128xf32>, vector<2x128xf32> -> vector<2x128xf32>
    %c0_167 = arith.constant 0 : index
    %c0_168 = arith.constant 0 : index
    %203 = vector.load %arg17[%c0_167, %c0_168] : memref<1x128xf32, #tpu.memory_space<vmem>>, vector<1x128xf32>
    %c0_169 = arith.constant 0 : index
    %c0_170 = arith.constant 0 : index
    %204 = vector.load %arg18[%c0_169, %c0_170] : memref<1x128xf32, #tpu.memory_space<vmem>>, vector<1x128xf32>
    %cst_171 = arith.constant dense<0.000000e+00> : vector<128xf32>
    %205 = vector.multi_reduction <add>, %202, %cst_171 [0] : vector<2x128xf32> to vector<128xf32>
    %206 = vector.shape_cast %205 : vector<128xf32> to vector<1x128xf32>
    %cst_172 = arith.constant 2.000000e+00 : f32
    %207 = vector.broadcast %cst_172 : f32 to vector<1x128xf32>
    %208 = arith.divf %206, %207 : vector<1x128xf32>
    %209 = vector.broadcast %208 : vector<1x128xf32> to vector<2x128xf32>
    %210 = arith.subf %202, %209 : vector<2x128xf32>
    %211 = arith.mulf %210, %210 : vector<2x128xf32>
    %cst_173 = arith.constant dense<0.000000e+00> : vector<128xf32>
    %212 = vector.multi_reduction <add>, %211, %cst_173 [0] : vector<2x128xf32> to vector<128xf32>
    %213 = vector.shape_cast %212 : vector<128xf32> to vector<1x128xf32>
    %cst_174 = arith.constant 2.000000e+00 : f32
    %214 = vector.broadcast %cst_174 : f32 to vector<1x128xf32>
    %215 = arith.divf %213, %214 : vector<1x128xf32>
    %cst_175 = arith.constant 9.99999974E-6 : f32
    %216 = vector.broadcast %cst_175 : f32 to vector<1x128xf32>
    %217 = arith.addf %215, %216 : vector<1x128xf32>
    %218 = math.rsqrt %217 : vector<1x128xf32>
    %219 = vector.broadcast %218 : vector<1x128xf32> to vector<2x128xf32>
    %220 = arith.mulf %210, %219 : vector<2x128xf32>
    %221 = vector.broadcast %203 : vector<1x128xf32> to vector<2x128xf32>
    %222 = arith.mulf %221, %220 : vector<2x128xf32>
    %223 = vector.broadcast %204 : vector<1x128xf32> to vector<2x128xf32>
    %224 = arith.addf %222, %223 : vector<2x128xf32>
    %cst_176 = arith.constant 0.000000e+00 : f32
    %225 = vector.broadcast %cst_176 : f32 to vector<2x128xf32>
    %226 = arith.maximumf %224, %225 : vector<2x128xf32>
    %c0_177 = arith.constant 0 : index
    %c0_178 = arith.constant 0 : index
    %227 = vector.load %arg13[%c0_177, %c0_178] : memref<512x128xf32, #tpu.memory_space<vmem>>, vector<512x128xf32>
    %cst_179 = arith.constant dense<0.000000e+00> : vector<2x128xf32>
    %228 = tpu.matmul %199, %227, %cst_179 {dimension_numbers = #tpu.dot_dimension_numbers<[1], [0], [0], [1], [0, 0, 1, 1], [], []>} : vector<2x512xf32>, vector<512x128xf32>, vector<2x128xf32> -> vector<2x128xf32>
    %c0_180 = arith.constant 0 : index
    %c0_181 = arith.constant 0 : index
    %229 = vector.load %arg14[%c0_180, %c0_181] : memref<1x128xf32, #tpu.memory_space<vmem>>, vector<1x128xf32>
    %c0_182 = arith.constant 0 : index
    %c0_183 = arith.constant 0 : index
    %230 = vector.load %arg15[%c0_182, %c0_183] : memref<1x128xf32, #tpu.memory_space<vmem>>, vector<1x128xf32>
    %cst_184 = arith.constant dense<0.000000e+00> : vector<128xf32>
    %231 = vector.multi_reduction <add>, %228, %cst_184 [0] : vector<2x128xf32> to vector<128xf32>
    %232 = vector.shape_cast %231 : vector<128xf32> to vector<1x128xf32>
    %cst_185 = arith.constant 2.000000e+00 : f32
    %233 = vector.broadcast %cst_185 : f32 to vector<1x128xf32>
    %234 = arith.divf %232, %233 : vector<1x128xf32>
    %235 = vector.broadcast %234 : vector<1x128xf32> to vector<2x128xf32>
    %236 = arith.subf %228, %235 : vector<2x128xf32>
    %237 = arith.mulf %236, %236 : vector<2x128xf32>
    %cst_186 = arith.constant dense<0.000000e+00> : vector<128xf32>
    %238 = vector.multi_reduction <add>, %237, %cst_186 [0] : vector<2x128xf32> to vector<128xf32>
    %239 = vector.shape_cast %238 : vector<128xf32> to vector<1x128xf32>
    %cst_187 = arith.constant 2.000000e+00 : f32
    %240 = vector.broadcast %cst_187 : f32 to vector<1x128xf32>
    %241 = arith.divf %239, %240 : vector<1x128xf32>
    %cst_188 = arith.constant 9.99999974E-6 : f32
    %242 = vector.broadcast %cst_188 : f32 to vector<1x128xf32>
    %243 = arith.addf %241, %242 : vector<1x128xf32>
    %244 = math.rsqrt %243 : vector<1x128xf32>
    %245 = vector.broadcast %244 : vector<1x128xf32> to vector<2x128xf32>
    %246 = arith.mulf %236, %245 : vector<2x128xf32>
    %247 = vector.broadcast %229 : vector<1x128xf32> to vector<2x128xf32>
    %248 = arith.mulf %247, %246 : vector<2x128xf32>
    %249 = vector.broadcast %230 : vector<1x128xf32> to vector<2x128xf32>
    %250 = arith.addf %248, %249 : vector<2x128xf32>
    %cst_189 = arith.constant 0.000000e+00 : f32
    %251 = vector.broadcast %cst_189 : f32 to vector<2x128xf32>
    %252 = arith.maximumf %250, %251 : vector<2x128xf32>
    %253 = arith.addf %252, %226 : vector<2x128xf32>
    %c0_190 = arith.constant 0 : index
    %c0_191 = arith.constant 0 : index
    %254 = vector.load %arg19[%c0_190, %c0_191] : memref<2x128xf32, #tpu.memory_space<vmem>>, vector<2x128xf32>
    tpu.vector_store %arg19[%c0_190, %c0_191], %253 {strides = array<i32>} : memref<2x128xf32, #tpu.memory_space<vmem>>, vector<2x128xf32>,
    return
  }
  func.func @transform_0(%arg0: i32) -> (i32, i32, i32) {
    %c0_i32 = arith.constant 0 : i32
    %c0_i32_0 = arith.constant 0 : i32
    %c0_i32_1 = arith.constant 0 : i32
    %c0_i32_2 = arith.constant 0 : i32
    return %c0_i32, %c0_i32_0, %c0_i32_1 : i32, i32, i32
  }
  func.func @transform_1(%arg0: i32) -> (i32, i32, i32) {
    %c0_i32 = arith.constant 0 : i32
    %c0_i32_0 = arith.constant 0 : i32
    %c0_i32_1 = arith.constant 0 : i32
    %c0_i32_2 = arith.constant 0 : i32
    return %c0_i32, %c0_i32_0, %c0_i32_1 : i32, i32, i32
  }
  func.func @transform_2(%arg0: i32) -> (i32, i32) {
    %c0_i32 = arith.constant 0 : i32
    %c0_i32_0 = arith.constant 0 : i32
    %c0_i32_1 = arith.constant 0 : i32
    return %c0_i32, %c0_i32_0 : i32, i32
  }
  func.func @transform_3(%arg0: i32) -> (i32, i32) {
    %c0_i32 = arith.constant 0 : i32
    %c0_i32_0 = arith.constant 0 : i32
    %c0_i32_1 = arith.constant 0 : i32
    return %c0_i32, %c0_i32_0 : i32, i32
  }
  func.func @transform_4(%arg0: i32) -> (i32, i32) {
    %c0_i32 = arith.constant 0 : i32
    %c0_i32_0 = arith.constant 0 : i32
    %c0_i32_1 = arith.constant 0 : i32
    return %c0_i32, %c0_i32_0 : i32, i32
  }
  func.func @transform_5(%arg0: i32) -> (i32, i32) {
    %c0_i32 = arith.constant 0 : i32
    %c0_i32_0 = arith.constant 0 : i32
    %c0_i32_1 = arith.constant 0 : i32
    return %c0_i32, %c0_i32_0 : i32, i32
  }
  func.func @transform_6(%arg0: i32) -> (i32, i32, i32) {
    %c0_i32 = arith.constant 0 : i32
    %c0_i32_0 = arith.constant 0 : i32
    %c0_i32_1 = arith.constant 0 : i32
    %c0_i32_2 = arith.constant 0 : i32
    return %c0_i32, %c0_i32_0, %c0_i32_1 : i32, i32, i32
  }
  func.func @transform_7(%arg0: i32) -> (i32, i32) {
    %c0_i32 = arith.constant 0 : i32
    %c0_i32_0 = arith.constant 0 : i32
    %c0_i32_1 = arith.constant 0 : i32
    return %c0_i32, %c0_i32_0 : i32, i32
  }
  func.func @transform_8(%arg0: i32) -> (i32, i32) {
    %c0_i32 = arith.constant 0 : i32
    %c0_i32_0 = arith.constant 0 : i32
    %c0_i32_1 = arith.constant 0 : i32
    return %c0_i32, %c0_i32_0 : i32, i32
  }
  func.func @transform_9(%arg0: i32) -> (i32, i32, i32) {
    %c0_i32 = arith.constant 0 : i32
    %c0_i32_0 = arith.constant 0 : i32
    %c0_i32_1 = arith.constant 0 : i32
    %c0_i32_2 = arith.constant 0 : i32
    return %c0_i32, %c0_i32_0, %c0_i32_1 : i32, i32, i32
  }
  func.func @transform_10(%arg0: i32) -> (i32, i32) {
    %c0_i32 = arith.constant 0 : i32
    %c0_i32_0 = arith.constant 0 : i32
    %c0_i32_1 = arith.constant 0 : i32
    return %c0_i32, %c0_i32_0 : i32, i32
  }
  func.func @transform_11(%arg0: i32) -> (i32, i32) {
    %c0_i32 = arith.constant 0 : i32
    %c0_i32_0 = arith.constant 0 : i32
    %c0_i32_1 = arith.constant 0 : i32
    return %c0_i32, %c0_i32_0 : i32, i32
  }
  func.func @transform_12(%arg0: i32) -> (i32, i32) {
    %c0_i32 = arith.constant 0 : i32
    %c0_i32_0 = arith.constant 0 : i32
    %c0_i32_1 = arith.constant 0 : i32
    return %c0_i32, %c0_i32_0 : i32, i32
  }
  func.func @transform_13(%arg0: i32) -> (i32, i32) {
    %c0_i32 = arith.constant 0 : i32
    %c0_i32_0 = arith.constant 0 : i32
    %c0_i32_1 = arith.constant 0 : i32
    return %c0_i32, %c0_i32_0 : i32, i32
  }
  func.func @transform_14(%arg0: i32) -> (i32, i32) {
    %c0_i32 = arith.constant 0 : i32
    %c0_i32_0 = arith.constant 0 : i32
    %c0_i32_1 = arith.constant 0 : i32
    return %c0_i32, %c0_i32_0 : i32, i32
  }
  func.func @transform_15(%arg0: i32) -> (i32, i32) {
    %c0_i32 = arith.constant 0 : i32
    %c0_i32_0 = arith.constant 0 : i32
    %c0_i32_1 = arith.constant 0 : i32
    return %c0_i32, %c0_i32_0 : i32, i32
  }
  func.func @transform_16(%arg0: i32) -> (i32, i32) {
    %c0_i32 = arith.constant 0 : i32
    %c0_i32_0 = arith.constant 0 : i32
    %c0_i32_1 = arith.constant 0 : i32
    return %c0_i32, %c0_i32_0 : i32, i32
  }
  func.func @transform_17(%arg0: i32) -> (i32, i32) {
    %c0_i32 = arith.constant 0 : i32
    %c0_i32_0 = arith.constant 0 : i32
    %c0_i32_1 = arith.constant 0 : i32
    return %c0_i32, %c0_i32_0 : i32, i32
  }
  func.func @transform_18(%arg0: i32) -> (i32, i32) {
    %c0_i32 = arith.constant 0 : i32
    %c0_i32_0 = arith.constant 0 : i32
    %c0_i32_1 = arith.constant 0 : i32
    return %c0_i32, %c0_i32_0 : i32, i32
  }
}

</mosaic_0001>

<llo_original>
// kernel: visual_cortex_forward.1
$region0: #{visual_cortex_forward.1}
  #allocation0 [shape = 'u32[]', space=smem, size = 0x4, offset = 0x4, fixed_abs, tag = 'smem constant byte address 0x4 - core index']
  #allocation1 [shape = 'u32[144,128]{1,0:T(1,128)}', space=vmem, size = 0x12000, scoped, tag = 'internal scratch']
  %s0 = inlined_call_operand.hbm [shape: bf16[9,18,128], index: 0, kind: input, shape index: {}]
  %s1 = inlined_call_operand.hbm [shape: bf16[9,2,18], index: 1, kind: input, shape index: {}]
  %s2 = inlined_call_operand.vmem [shape: f32[128,36], index: 2, kind: input, shape index: {}]
  %s3 = inlined_call_operand.vmem [shape: f32[2,400], index: 3, kind: input, shape index: {}]
  %s4 = inlined_call_operand.vmem [shape: f32[36,32], index: 4, kind: input, shape index: {}]
  %s5 = inlined_call_operand.hbm [shape: f32[1,32], index: 5, kind: input, shape index: {}]
  %s6 = inlined_call_operand.hbm [shape: bf16[9,32,256], index: 6, kind: input, shape index: {}]
  %s7 = inlined_call_operand.hbm [shape: f32[1,256], index: 7, kind: input, shape index: {}]
  %s8 = inlined_call_operand.hbm [shape: f32[1,256], index: 8, kind: input, shape index: {}]
  %s9 = inlined_call_operand.hbm [shape: bf16[9,256,512], index: 9, kind: input, shape index: {}]
  %s10 = inlined_call_operand.hbm [shape: f32[1,512], index: 10, kind: input, shape index: {}]
  %s11 = inlined_call_operand.hbm [shape: f32[1,512], index: 11, kind: input, shape index: {}]
  %s12 = inlined_call_operand.hbm [shape: f32[512,128], index: 12, kind: input, shape index: {}]
  %s13 = inlined_call_operand.hbm [shape: f32[1,128], index: 13, kind: input, shape index: {}]
  %s14 = inlined_call_operand.hbm [shape: f32[1,128], index: 14, kind: input, shape index: {}]
  %s15 = inlined_call_operand.hbm [shape: f32[400,128], index: 15, kind: input, shape index: {}]
  %s16 = inlined_call_operand.hbm [shape: f32[1,128], index: 16, kind: input, shape index: {}]
  %s17 = inlined_call_operand.hbm [shape: f32[1,128], index: 17, kind: input, shape index: {}]
  %s18 = inlined_call_operand.hbm [shape: f32[2,128], index: 18, kind: output, shape index: {}]
  %s19 = sld [smem:[#allocation0]]
  $region142: #{visual_cortex_forward.1} parent=0
    _
  %s21 = ssub.s32 1, %s19
  %s22 = scalar_select 0, %s21, %s19
  $region1: #{visual_cortex_forward.1} parent=0
    #allocation2 [shape = 'u8[55296]{0}', space=vmem, size = 0xd800, scoped, tag = 'input window, operand 0, single buffered']
    #allocation3 [shape = 's32[1]{0}', space=sflag, size = 0x4, scoped, tag = 'scoped memory for visual_cortex_forward.1']
    #allocation4 [shape = 's32[1]{0}', space=sflag, size = 0x4, scoped, tag = 'scoped memory for visual_cortex_forward.1']
    #allocation5 [shape = 'u8[4608]{0}', space=vmem, size = 0x1400, scoped, tag = 'input window, operand 1, single buffered']
    #allocation6 [shape = 's32[1]{0}', space=sflag, size = 0x4, scoped, tag = 'scoped memory for visual_cortex_forward.1']
    #allocation7 [shape = 'u8[512]{0}', space=vmem, size = 0x400, scoped, tag = 'input window, operand 5, single buffered']
    #allocation8 [shape = 'u8[147456]{0}', space=vmem, size = 0x24000, scoped, tag = 'input window, operand 6, single buffered']
    #allocation9 [shape = 's32[1]{0}', space=sflag, size = 0x4, scoped, tag = 'scoped memory for visual_cortex_forward.1']
    #allocation10 [shape = 'u8[1024]{0}', space=vmem, size = 0x400, scoped, tag = 'input window, operand 7, single buffered']
    #allocation11 [shape = 'u8[1024]{0}', space=vmem, size = 0x400, scoped, tag = 'input window, operand 8, single buffered']
    #allocation12 [shape = 's32[1]{0}', space=sflag, size = 0x4, scoped, tag = 'scoped memory for visual_cortex_forward.1']
    #allocation13 [shape = 'u8[2359296]{0}', space=vmem, size = 0x240000, scoped, tag = 'input window, operand 9, single buffered']
    #allocation14 [shape = 'u8[2048]{0}', space=vmem, size = 0x800, scoped, tag = 'input window, operand 10, single buffered']
    #allocation15 [shape = 's32[1]{0}', space=sflag, size = 0x4, scoped, tag = 'scoped memory for visual_cortex_forward.1']
    #allocation16 [shape = 'u8[2048]{0}', space=vmem, size = 0x800, scoped, tag = 'input window, operand 11, single buffered']
    #allocation17 [shape = 'u8[262144]{0}', space=vmem, size = 0x40000, scoped, tag = 'input window, operand 12, single buffered']
    #allocation18 [shape = 's32[1]{0}', space=sflag, size = 0x4, scoped, tag = 'scoped memory for visual_cortex_forward.1']
    #allocation19 [shape = 'u8[512]{0}', space=vmem, size = 0x400, scoped, tag = 'input window, operand 13, single buffered']
    #allocation20 [shape = 'u8[512]{0}', space=vmem, size = 0x400, scoped, tag = 'input window, operand 14, single buffered']
    #allocation21 [shape = 's32[1]{0}', space=sflag, size = 0x4, scoped, tag = 'scoped memory for visual_cortex_forward.1']
    #allocation22 [shape = 'u8[204800]{0}', space=vmem, size = 0x32000, scoped, tag = 'input window, operand 15, single buffered']
    #allocation23 [shape = 'u8[512]{0}', space=vmem, size = 0x400, scoped, tag = 'input window, operand 16, single buffered']
    #allocation24 [shape = 's32[1]{0}', space=sflag, size = 0x4, scoped, tag = 'scoped memory for visual_cortex_forward.1']
    #allocation25 [shape = 'u8[512]{0}', space=vmem, size = 0x400, scoped, tag = 'input window, operand 17, single buffered']
    #allocation26 [shape = 'u8[1024]{0}', space=vmem, size = 0x400, scoped, tag = 'output window, operand 0, single buffered']
    %23 = vsyncpa [#allocation3], 0
    %24 = vsyncpa [#allocation6], 0
    %25 = vsyncpa [#allocation9], 0
    %26 = vsyncpa [#allocation12], 0
    %27 = vsyncpa [#allocation15], 0
    %28 = vsyncpa [#allocation18], 0
    %29 = vsyncpa [#allocation21], 0
    %30 = vsyncpa [#allocation24], 0
    %31 = vsyncpa [#allocation4], 0
    // Predicated region
    $region2: #{visual_cortex_forward.1} parent=1 // pred_check
      _
    $region3: #{visual_cortex_forward.1} parent=1 // pred_check_branch
      %33 = sbr.rel (0) target = $region5
    $region4: #{visual_cortex_forward.1} parent=1 // pred_region
      %s35 = ssub.s32 1728, 1728
      %36 = vsyncadd [#allocation3], %s35
      %s37 = sshll.u32 [#allocation2], 4
      %s38 = int_to_ptr.vmem [resolvable:$true] %s37
      %43 = dma.hbm_to_vmem [thread:$0]  %s0, 1728, %s38, [#allocation3], 64, 64, 4
    $region5: #{visual_cortex_forward.1} parent=1 // pred_fallthru
      _
    // Predicated region
    $region6: #{visual_cortex_forward.1} parent=1 // pred_check
      _
    $region7: #{visual_cortex_forward.1} parent=1 // pred_check_branch
      %45 = sbr.rel (0) target = $region9
    $region8: #{visual_cortex_forward.1} parent=1 // pred_region
      %s47 = ssub.s32 144, 144
      %48 = vsyncadd [#allocation6], %s47
      %s49 = sshll.u32 [#allocation5], 4
      %s50 = int_to_ptr.vmem [resolvable:$true] %s49
      %55 = dma.hbm_to_vmem [thread:$0]  %s1, 144, %s50, [#allocation6], 16, 16, 1
    $region9: #{visual_cortex_forward.1} parent=1 // pred_fallthru
      _
    // Predicated region
    $region10: #{visual_cortex_forward.1} parent=1 // pred_check
      _
    $region11: #{visual_cortex_forward.1} parent=1 // pred_check_branch
      %57 = sbr.rel (0) target = $region13
    $region12: #{visual_cortex_forward.1} parent=1 // pred_region
      _
    $region13: #{visual_cortex_forward.1} parent=1 // pred_fallthru
      _
    // Predicated region
    $region14: #{visual_cortex_forward.1} parent=1 // pred_check
      _
    $region15: #{visual_cortex_forward.1} parent=1 // pred_check_branch
      %59 = sbr.rel (0) target = $region17
    $region16: #{visual_cortex_forward.1} parent=1 // pred_region
      _
    $region17: #{visual_cortex_forward.1} parent=1 // pred_fallthru
      _
    // Predicated region
    $region18: #{visual_cortex_forward.1} parent=1 // pred_check
      _
    $region19: #{visual_cortex_forward.1} parent=1 // pred_check_branch
      %61 = sbr.rel (0) target = $region21
    $region20: #{visual_cortex_forward.1} parent=1 // pred_region
      _
    $region21: #{visual_cortex_forward.1} parent=1 // pred_fallthru
      _
    // Predicated region
    $region22: #{visual_cortex_forward.1} parent=1 // pred_check
      _
    $region23: #{visual_cortex_forward.1} parent=1 // pred_check_branch
      %63 = sbr.rel (0) target = $region25
    $region24: #{visual_cortex_forward.1} parent=1 // pred_region
      %s65 = ssub.s32 16, 16
      %66 = vsyncadd [#allocation6], %s65
      %s68 = sshll.u32 [#allocation7], 4
      %s69 = int_to_ptr.vmem [resolvable:$true] %s68
      %71 = dma.hbm_to_vmem [thread:$0]  %s5, 16, %s69, [#allocation6]
    $region25: #{visual_cortex_forward.1} parent=1 // pred_fallthru
      _
    // Predicated region
    $region26: #{visual_cortex_forward.1} parent=1 // pred_check
      _
    $region27: #{visual_cortex_forward.1} parent=1 // pred_check_branch
      %73 = sbr.rel (0) target = $region29
    $region28: #{visual_cortex_forward.1} parent=1 // pred_region
      %s75 = ssub.s32 4608, 4608
      %76 = vsyncadd [#allocation9], %s75
      %s77 = sshll.u32 [#allocation8], 4
      %s78 = int_to_ptr.vmem [resolvable:$true] %s77
      %83 = dma.hbm_to_vmem [thread:$0]  %s6, 4608, %s78, [#allocation9], 128, 128, 8
    $region29: #{visual_cortex_forward.1} parent=1 // pred_fallthru
      _
    // Predicated region
    $region30: #{visual_cortex_forward.1} parent=1 // pred_check
      _
    $region31: #{visual_cortex_forward.1} parent=1 // pred_check_branch
      %85 = sbr.rel (0) target = $region33
    $region32: #{visual_cortex_forward.1} parent=1 // pred_region
      %s87 = ssub.s32 32, 32
      %88 = vsyncadd [#allocation9], %s87
      %s90 = sshll.u32 [#allocation10], 4
      %s91 = int_to_ptr.vmem [resolvable:$true] %s90
      %93 = dma.hbm_to_vmem [thread:$0]  %s7, 32, %s91, [#allocation9]
    $region33: #{visual_cortex_forward.1} parent=1 // pred_fallthru
      _
    // Predicated region
    $region34: #{visual_cortex_forward.1} parent=1 // pred_check
      _
    $region35: #{visual_cortex_forward.1} parent=1 // pred_check_branch
      %95 = sbr.rel (0) target = $region37
    $region36: #{visual_cortex_forward.1} parent=1 // pred_region
      %s97 = ssub.s32 32, 32
      %98 = vsyncadd [#allocation12], %s97
      %s100 = sshll.u32 [#allocation11], 4
      %s101 = int_to_ptr.vmem [resolvable:$true] %s100
      %103 = dma.hbm_to_vmem [thread:$0]  %s8, 32, %s101, [#allocation12]
    $region37: #{visual_cortex_forward.1} parent=1 // pred_fallthru
      _
    // Predicated region
    $region38: #{visual_cortex_forward.1} parent=1 // pred_check
      _
    $region39: #{visual_cortex_forward.1} parent=1 // pred_check_branch
      %105 = sbr.rel (0) target = $region41
    $region40: #{visual_cortex_forward.1} parent=1 // pred_region
      %s107 = ssub.s32 73728, 73728
      %108 = vsyncadd [#allocation12], %s107
      %s109 = sshll.u32 [#allocation13], 4
      %s110 = int_to_ptr.vmem [resolvable:$true] %s109
      %115 = dma.hbm_to_vmem [thread:$0]  %s9, 73728, %s110, [#allocation12], 256, 256, 16
    $region41: #{visual_cortex_forward.1} parent=1 // pred_fallthru
      _
    // Predicated region
    $region42: #{visual_cortex_forward.1} parent=1 // pred_check
      _
    $region43: #{visual_cortex_forward.1} parent=1 // pred_check_branch
      %117 = sbr.rel (0) target = $region45
    $region44: #{visual_cortex_forward.1} parent=1 // pred_region
      %s119 = ssub.s32 64, 64
      %120 = vsyncadd [#allocation15], %s119
      %s122 = sshll.u32 [#allocation14], 4
      %s123 = int_to_ptr.vmem [resolvable:$true] %s122
      %125 = dma.hbm_to_vmem [thread:$0]  %s10, 64, %s123, [#allocation15]
    $region45: #{visual_cortex_forward.1} parent=1 // pred_fallthru
      _
    // Predicated region
    $region46: #{visual_cortex_forward.1} parent=1 // pred_check
      _
    $region47: #{visual_cortex_forward.1} parent=1 // pred_check_branch
      %127 = sbr.rel (0) target = $region49
    $region48: #{visual_cortex_forward.1} parent=1 // pred_region
      %s129 = ssub.s32 64, 64
      %130 = vsyncadd [#allocation15], %s129
      %s132 = sshll.u32 [#allocation16], 4
      %s133 = int_to_ptr.vmem [resolvable:$true] %s132
      %135 = dma.hbm_to_vmem [thread:$0]  %s11, 64, %s133, [#allocation15]
    $region49: #{visual_cortex_forward.1} parent=1 // pred_fallthru
      _
    // Predicated region
    $region50: #{visual_cortex_forward.1} parent=1 // pred_check
      _
    $region51: #{visual_cortex_forward.1} parent=1 // pred_check_branch
      %137 = sbr.rel (0) target = $region53
    $region52: #{visual_cortex_forward.1} parent=1 // pred_region
      %s139 = ssub.s32 8192, 8192
      %140 = vsyncadd [#allocation18], %s139
      %s141 = sshll.u32 [#allocation17], 4
      %s142 = int_to_ptr.vmem [resolvable:$true] %s141
      %147 = dma.hbm_to_vmem [thread:$0]  %s12, 8192, %s142, [#allocation18], 128, 128, 8
    $region53: #{visual_cortex_forward.1} parent=1 // pred_fallthru
      _
    // Predicated region
    $region54: #{visual_cortex_forward.1} parent=1 // pred_check
      _
    $region55: #{visual_cortex_forward.1} parent=1 // pred_check_branch
      %149 = sbr.rel (0) target = $region57
    $region56: #{visual_cortex_forward.1} parent=1 // pred_region
      %s151 = ssub.s32 16, 16
      %152 = vsyncadd [#allocation18], %s151
      %s154 = sshll.u32 [#allocation19], 4
      %s155 = int_to_ptr.vmem [resolvable:$true] %s154
      %157 = dma.hbm_to_vmem [thread:$0]  %s13, 16, %s155, [#allocation18]
    $region57: #{visual_cortex_forward.1} parent=1 // pred_fallthru
      _
    // Predicated region
    $region58: #{visual_cortex_forward.1} parent=1 // pred_check
      _
    $region59: #{visual_cortex_forward.1} parent=1 // pred_check_branch
      %159 = sbr.rel (0) target = $region61
    $region60: #{visual_cortex_forward.1} parent=1 // pred_region
      %s161 = ssub.s32 16, 16
      %162 = vsyncadd [#allocation21], %s161
      %s164 = sshll.u32 [#allocation20], 4
      %s165 = int_to_ptr.vmem [resolvable:$true] %s164
      %167 = dma.hbm_to_vmem [thread:$0]  %s14, 16, %s165, [#allocation21]
    $region61: #{visual_cortex_forward.1} parent=1 // pred_fallthru
      _
    // Predicated region
    $region62: #{visual_cortex_forward.1} parent=1 // pred_check
      _
    $region63: #{visual_cortex_forward.1} parent=1 // pred_check_branch
      %169 = sbr.rel (0) target = $region65
    $region64: #{visual_cortex_forward.1} parent=1 // pred_region
      %s171 = ssub.s32 6400, 6400
      %172 = vsyncadd [#allocation21], %s171
      %s173 = sshll.u32 [#allocation22], 4
      %s174 = int_to_ptr.vmem [resolvable:$true] %s173
      %179 = dma.hbm_to_vmem [thread:$0]  %s15, 6400, %s174, [#allocation21], 128, 128, 8
    $region65: #{visual_cortex_forward.1} parent=1 // pred_fallthru
      _
    // Predicated region
    $region66: #{visual_cortex_forward.1} parent=1 // pred_check
      _
    $region67: #{visual_cortex_forward.1} parent=1 // pred_check_branch
      %181 = sbr.rel (0) target = $region69
    $region68: #{visual_cortex_forward.1} parent=1 // pred_region
      %s183 = ssub.s32 16, 16
      %184 = vsyncadd [#allocation24], %s183
      %s186 = sshll.u32 [#allocation23], 4
      %s187 = int_to_ptr.vmem [resolvable:$true] %s186
      %189 = dma.hbm_to_vmem [thread:$0]  %s16, 16, %s187, [#allocation24]
    $region69: #{visual_cortex_forward.1} parent=1 // pred_fallthru
      _
    // Predicated region
    $region70: #{visual_cortex_forward.1} parent=1 // pred_check
      _
    $region71: #{visual_cortex_forward.1} parent=1 // pred_check_branch
      %191 = sbr.rel (0) target = $region73
    $region72: #{visual_cortex_forward.1} parent=1 // pred_region
      %s193 = ssub.s32 16, 16
      %194 = vsyncadd [#allocation24], %s193
      %s196 = sshll.u32 [#allocation25], 4
      %s197 = int_to_ptr.vmem [resolvable:$true] %s196
      %199 = dma.hbm_to_vmem [thread:$0]  %s17, 16, %s197, [#allocation24]
    $region73: #{visual_cortex_forward.1} parent=1 // pred_fallthru
      _
    // Predicated region
    $region74: #{visual_cortex_forward.1} parent=1 // pred_check
      _
    $region75: #{visual_cortex_forward.1} parent=1 // pred_check_branch
      %201 = sbr.rel (0) target = $region77
    $region76: #{visual_cortex_forward.1} parent=1 // pred_region
      %202 = dma.done [#allocation3], 1728
    $region77: #{visual_cortex_forward.1} parent=1 // pred_fallthru
      _
    // Predicated region
    $region78: #{visual_cortex_forward.1} parent=1 // pred_check
      _
    $region79: #{visual_cortex_forward.1} parent=1 // pred_check_branch
      %204 = sbr.rel (0) target = $region81
    $region80: #{visual_cortex_forward.1} parent=1 // pred_region
      %205 = dma.done [#allocation6], 144
    $region81: #{visual_cortex_forward.1} parent=1 // pred_fallthru
      _
    // Predicated region
    $region82: #{visual_cortex_forward.1} parent=1 // pred_check
      _
    $region83: #{visual_cortex_forward.1} parent=1 // pred_check_branch
      %207 = sbr.rel (0) target = $region85
    $region84: #{visual_cortex_forward.1} parent=1 // pred_region
      %208 = dma.done [#allocation6], 16
    $region85: #{visual_cortex_forward.1} parent=1 // pred_fallthru
      _
    // Predicated region
    $region86: #{visual_cortex_forward.1} parent=1 // pred_check
      _
    $region87: #{visual_cortex_forward.1} parent=1 // pred_check_branch
      %210 = sbr.rel (0) target = $region89
    $region88: #{visual_cortex_forward.1} parent=1 // pred_region
      %211 = dma.done [#allocation9], 4608
    $region89: #{visual_cortex_forward.1} parent=1 // pred_fallthru
      _
    // Predicated region
    $region90: #{visual_cortex_forward.1} parent=1 // pred_check
      _
    $region91: #{visual_cortex_forward.1} parent=1 // pred_check_branch
      %213 = sbr.rel (0) target = $region93
    $region92: #{visual_cortex_forward.1} parent=1 // pred_region
      %214 = dma.done [#allocation9], 32
    $region93: #{visual_cortex_forward.1} parent=1 // pred_fallthru
      _
    // Predicated region
    $region94: #{visual_cortex_forward.1} parent=1 // pred_check
      _
    $region95: #{visual_cortex_forward.1} parent=1 // pred_check_branch
      %216 = sbr.rel (0) target = $region97
    $region96: #{visual_cortex_forward.1} parent=1 // pred_region
      %217 = dma.done [#allocation12], 32
    $region97: #{visual_cortex_forward.1} parent=1 // pred_fallthru
      _
    // Predicated region
    $region98: #{visual_cortex_forward.1} parent=1 // pred_check
      _
    $region99: #{visual_cortex_forward.1} parent=1 // pred_check_branch
      %219 = sbr.rel (0) target = $region101
    $region100: #{visual_cortex_forward.1} parent=1 // pred_region
      %220 = dma.done [#allocation12], 73728
    $region101: #{visual_cortex_forward.1} parent=1 // pred_fallthru
      _
    // Predicated region
    $region102: #{visual_cortex_forward.1} parent=1 // pred_check
      _
    $region103: #{visual_cortex_forward.1} parent=1 // pred_check_branch
      %222 = sbr.rel (0) target = $region105
    $region104: #{visual_cortex_forward.1} parent=1 // pred_region
      %223 = dma.done [#allocation15], 64
    $region105: #{visual_cortex_forward.1} parent=1 // pred_fallthru
      _
    // Predicated region
    $region106: #{visual_cortex_forward.1} parent=1 // pred_check
      _
    $region107: #{visual_cortex_forward.1} parent=1 // pred_check_branch
      %225 = sbr.rel (0) target = $region109
    $region108: #{visual_cortex_forward.1} parent=1 // pred_region
      %226 = dma.done [#allocation15], 64
    $region109: #{visual_cortex_forward.1} parent=1 // pred_fallthru
      _
    // Predicated region
    $region110: #{visual_cortex_forward.1} parent=1 // pred_check
      _
    $region111: #{visual_cortex_forward.1} parent=1 // pred_check_branch
      %228 = sbr.rel (0) target = $region113
    $region112: #{visual_cortex_forward.1} parent=1 // pred_region
      %229 = dma.done [#allocation18], 8192
    $region113: #{visual_cortex_forward.1} parent=1 // pred_fallthru
      _
    // Predicated region
    $region114: #{visual_cortex_forward.1} parent=1 // pred_check
      _
    $region115: #{visual_cortex_forward.1} parent=1 // pred_check_branch
      %231 = sbr.rel (0) target = $region117
    $region116: #{visual_cortex_forward.1} parent=1 // pred_region
      %232 = dma.done [#allocation18], 16
    $region117: #{visual_cortex_forward.1} parent=1 // pred_fallthru
      _
    // Predicated region
    $region118: #{visual_cortex_forward.1} parent=1 // pred_check
      _
    $region119: #{visual_cortex_forward.1} parent=1 // pred_check_branch
      %234 = sbr.rel (0) target = $region121
    $region120: #{visual_cortex_forward.1} parent=1 // pred_region
      %235 = dma.done [#allocation21], 16
    $region121: #{visual_cortex_forward.1} parent=1 // pred_fallthru
      _
    // Predicated region
    $region122: #{visual_cortex_forward.1} parent=1 // pred_check
      _
    $region123: #{visual_cortex_forward.1} parent=1 // pred_check_branch
      %237 = sbr.rel (0) target = $region125
    $region124: #{visual_cortex_forward.1} parent=1 // pred_region
      %238 = dma.done [#allocation21], 6400
    $region125: #{visual_cortex_forward.1} parent=1 // pred_fallthru
      _
    // Predicated region
    $region126: #{visual_cortex_forward.1} parent=1 // pred_check
      _
    $region127: #{visual_cortex_forward.1} parent=1 // pred_check_branch
      %240 = sbr.rel (0) target = $region129
    $region128: #{visual_cortex_forward.1} parent=1 // pred_region
      %241 = dma.done [#allocation24], 16
    $region129: #{visual_cortex_forward.1} parent=1 // pred_fallthru
      _
    // Predicated region
    $region130: #{visual_cortex_forward.1} parent=1 // pred_check
      _
    $region131: #{visual_cortex_forward.1} parent=1 // pred_check_branch
      %243 = sbr.rel (0) target = $region133
    $region132: #{visual_cortex_forward.1} parent=1 // pred_region
      %244 = dma.done [#allocation24], 16
    $region133: #{visual_cortex_forward.1} parent=1 // pred_fallthru
      _
    %v246 = vld [vmem:[%s2] sm:$0xff]
    %v247 = vld [vmem:[%s2 + $0x8] sm:$0xff]
    %v248 = vld [vmem:[%s2 + $0x10] sm:$0xff]
    %v249 = vld [vmem:[%s2 + $0x18] sm:$0xff]
    %v250 = vld [vmem:[%s2 + $0x20] sm:$0xff]
    %v251 = vld [vmem:[%s2 + $0x28] sm:$0xff]
    %v252 = vld [vmem:[%s2 + $0x30] sm:$0xff]
    %v253 = vld [vmem:[%s2 + $0x38] sm:$0xff]
    %v254 = vld [vmem:[%s2 + $0x40] sm:$0xff]
    %v255 = vld [vmem:[%s2 + $0x48] sm:$0xff]
    %v256 = vld [vmem:[%s2 + $0x50] sm:$0xff]
    %v257 = vld [vmem:[%s2 + $0x58] sm:$0xff]
    %v258 = vld [vmem:[%s2 + $0x60] sm:$0xff]
    %v259 = vld [vmem:[%s2 + $0x68] sm:$0xff]
    %v260 = vld [vmem:[%s2 + $0x70] sm:$0xff]
    %v261 = vld [vmem:[%s2 + $0x78] sm:$0xff]
    %v262 = vld [vmem:[%s4] sm:$0xff]
    %v263 = vld [vmem:[%s4 + $0x8] sm:$0xff]
    %v264 = vld [vmem:[%s4 + $0x10] sm:$0xff]
    %v265 = vld [vmem:[%s4 + $0x18] sm:$0xff]
    %v266 = vld [vmem:[%s4 + $0x20] sm:$0xf]
    %v267 = vld [vmem:[#allocation7] sm:$0x1]
    %v269 = vlaneseq
    %v270 = vshrl.u32 %v269, 7
    %v271 = vsub.s32 0, %v270
    %v272 = vrot.slane %v267, %v271
    %vm274 = vcmask 293888
    %v276 = vsel %vm274, %v246, 0
    %v279 = vsel %vm274, %v247, 0
    %v282 = vsel %vm274, %v248, 0
    %v285 = vsel %vm274, %v249, 0
    %v288 = vsel %vm274, %v250, 0
    %v291 = vsel %vm274, %v251, 0
    %v294 = vsel %vm274, %v252, 0
    %v297 = vsel %vm274, %v253, 0
    %v300 = vsel %vm274, %v254, 0
    %v303 = vsel %vm274, %v255, 0
    %v306 = vsel %vm274, %v256, 0
    %v309 = vsel %vm274, %v257, 0
    %v312 = vsel %vm274, %v258, 0
    %v315 = vsel %vm274, %v259, 0
    %v318 = vsel %vm274, %v260, 0
    %v321 = vsel %vm274, %v261, 0
    %vm323 = vcmask 1043456
    %v325 = vsel %vm323, %v266, 0
    %327 = vmatprep.subr.mxu0 0.0
    %328 = vmatpush1.msra.mxu0 %v262
    %329 = vmatprep.subr.mxu0 0.0
    %330 = vmatpush1.msra.mxu0 %v263
    %331 = vmatprep.subr.mxu0 0.0
    %332 = vmatpush1.msra.mxu0 %v264
    %333 = vmatprep.subr.mxu0 0.0
    %334 = vmatpush1.msra.mxu0 %v265
    %335 = vmatprep.subr.mxu0 0.0
    %336 = vmatpush1.msra.mxu0 %v325
    %337 = vmatprep.subr.mxu0 0.0
    %338 = vmatpush1.msra.mxu0 0.0
    %339 = vmatprep.subr.mxu0 0.0
    %340 = vmatpush1.msra.mxu0 0.0
    %341 = vmatprep.subr.mxu0 0.0
    %342 = vmatpush1.msra.mxu0 0.0
    %343 = vmatprep.subr.mxu0 0.0
    %344 = vmatpush1.msra.mxu0 0.0
    %345 = vmatprep.subr.mxu0 0.0
    %346 = vmatpush1.msra.mxu0 0.0
    %347 = vmatprep.subr.mxu0 0.0
    %348 = vmatpush1.msra.mxu0 0.0
    %349 = vmatprep.subr.mxu0 0.0
    %350 = vmatpush1.msra.mxu0 0.0
    %351 = vmatprep.subr.mxu0 0.0
    %352 = vmatpush1.msra.mxu0 0.0
    %353 = vmatprep.subr.mxu0 0.0
    %354 = vmatpush1.msra.mxu0 0.0
    %355 = vmatprep.subr.mxu0 0.0
    %356 = vmatpush1.msra.mxu0 0.0
    %357 = vmatprep.subr.mxu0 0.0
    %358 = vmatpush1.msra.mxu0 0.0
    %359 = vmatprep.subr.mxu0 0.0
    %360 = vmatpush1.msra.mxu0 0.0
    %361 = vmatprep.subr.mxu0 0.0
    %362 = vmatpush1.msra.mxu0 0.0
    %363 = vmatprep.subr.mxu0 0.0
    %364 = vmatpush1.msra.mxu0 0.0
    %365 = vmatprep.subr.mxu0 0.0
    %366 = vmatpush1.msra.mxu0 0.0
    %367 = vmatprep.subr.mxu0 0.0
    %368 = vmatpush1.msra.mxu0 0.0
    %369 = vmatprep.subr.mxu0 0.0
    %370 = vmatpush1.msra.mxu0 0.0
    %371 = vmatprep.subr.mxu0 0.0
    %372 = vmatpush1.msra.mxu0 0.0
    %373 = vmatprep.subr.mxu0 0.0
    %374 = vmatpush1.msra.mxu0 0.0
    %375 = vmatprep.subr.mxu0 0.0
    %376 = vmatpush1.msra.mxu0 0.0
    %377 = vmatprep.subr.mxu0 0.0
    %378 = vmatpush1.msra.mxu0 0.0
    %379 = vmatprep.subr.mxu0 0.0
    %380 = vmatpush1.msra.mxu0 0.0
    %381 = vmatprep.subr.mxu0 0.0
    %382 = vmatpush1.msra.mxu0 0.0
    %383 = vmatprep.subr.mxu0 0.0
    %384 = vmatpush1.msra.mxu0 0.0
    %385 = vmatprep.subr.mxu0 0.0
    %386 = vmatpush1.msra.mxu0 0.0
    %387 = vmatprep.subr.mxu0 0.0
    %388 = vmatpush1.msra.mxu0 0.0
    %389 = vmatprep.subr.mxu0 0.0
    %390 = vmatpush1.msra.mxu0 0.0
    %391 = vmatprep.mubr.f32.mxu0 0.0
    %392 = vmatmul.mubr.f32.gmra.mrb[0].mxu0 %v276
    %v393 = vpop.f32.mrb[0].mxu0
    %v394 = vadd.f32 %v272, %v393
    %v395 = vpop.f32.mrb[0].mxu0
    %396 = vmatprep.mubr.f32.mxu0 0.0
    %397 = vmatmul.mubr.f32.gmra.mrb[0].mxu0 %v279
    %v398 = vpop.f32.mrb[0].mxu0
    %v399 = vadd.f32 %v272, %v398
    %v400 = vpop.f32.mrb[0].mxu0
    %401 = vmatprep.mubr.f32.mxu0 0.0
    %402 = vmatmul.mubr.f32.gmra.mrb[0].mxu0 %v282
    %v403 = vpop.f32.mrb[0].mxu0
    %v404 = vadd.f32 %v272, %v403
    %v405 = vpop.f32.mrb[0].mxu0
    %406 = vmatprep.mubr.f32.mxu0 0.0
    %407 = vmatmul.mubr.f32.gmra.mrb[0].mxu0 %v285
    %v408 = vpop.f32.mrb[0].mxu0
    %v409 = vadd.f32 %v272, %v408
    %v410 = vpop.f32.mrb[0].mxu0
    %411 = vmatprep.mubr.f32.mxu0 0.0
    %412 = vmatmul.mubr.f32.gmra.mrb[0].mxu0 %v288
    %v413 = vpop.f32.mrb[0].mxu0
    %v414 = vadd.f32 %v272, %v413
    %v415 = vpop.f32.mrb[0].mxu0
    %416 = vmatprep.mubr.f32.mxu0 0.0
    %417 = vmatmul.mubr.f32.gmra.mrb[0].mxu0 %v291
    %v418 = vpop.f32.mrb[0].mxu0
    %v419 = vadd.f32 %v272, %v418
    %v420 = vpop.f32.mrb[0].mxu0
    %421 = vmatprep.mubr.f32.mxu0 0.0
    %422 = vmatmul.mubr.f32.gmra.mrb[0].mxu0 %v294
    %v423 = vpop.f32.mrb[0].mxu0
    %v424 = vadd.f32 %v272, %v423
    %v425 = vpop.f32.mrb[0].mxu0
    %426 = vmatprep.mubr.f32.mxu0 0.0
    %427 = vmatmul.mubr.f32.gmra.mrb[0].mxu0 %v297
    %v428 = vpop.f32.mrb[0].mxu0
    %v429 = vadd.f32 %v272, %v428
    %v430 = vpop.f32.mrb[0].mxu0
    %431 = vmatprep.mubr.f32.mxu0 0.0
    %432 = vmatmul.mubr.f32.gmra.mrb[0].mxu0 %v300
    %v433 = vpop.f32.mrb[0].mxu0
    %v434 = vadd.f32 %v272, %v433
    %v435 = vpop.f32.mrb[0].mxu0
    %436 = vmatprep.mubr.f32.mxu0 0.0
    %437 = vmatmul.mubr.f32.gmra.mrb[0].mxu0 %v303
    %v438 = vpop.f32.mrb[0].mxu0
    %v439 = vadd.f32 %v272, %v438
    %v440 = vpop.f32.mrb[0].mxu0
    %441 = vmatprep.mubr.f32.mxu0 0.0
    %442 = vmatmul.mubr.f32.gmra.mrb[0].mxu0 %v306
    %v443 = vpop.f32.mrb[0].mxu0
    %v444 = vadd.f32 %v272, %v443
    %v445 = vpop.f32.mrb[0].mxu0
    %446 = vmatprep.mubr.f32.mxu0 0.0
    %447 = vmatmul.mubr.f32.gmra.mrb[0].mxu0 %v309
    %v448 = vpop.f32.mrb[0].mxu0
    %v449 = vadd.f32 %v272, %v448
    %v450 = vpop.f32.mrb[0].mxu0
    %451 = vmatprep.mubr.f32.mxu0 0.0
    %452 = vmatmul.mubr.f32.gmra.mrb[0].mxu0 %v312
    %v453 = vpop.f32.mrb[0].mxu0
    %v454 = vadd.f32 %v272, %v453
    %v455 = vpop.f32.mrb[0].mxu0
    %456 = vmatprep.mubr.f32.mxu0 0.0
    %457 = vmatmul.mubr.f32.gmra.mrb[0].mxu0 %v315
    %v458 = vpop.f32.mrb[0].mxu0
    %v459 = vadd.f32 %v272, %v458
    %v460 = vpop.f32.mrb[0].mxu0
    %461 = vmatprep.mubr.f32.mxu0 0.0
    %462 = vmatmul.mubr.f32.gmra.mrb[0].mxu0 %v318
    %v463 = vpop.f32.mrb[0].mxu0
    %v464 = vadd.f32 %v272, %v463
    %v465 = vpop.f32.mrb[0].mxu0
    %466 = vmatprep.mubr.f32.mxu0 0.0
    %467 = vmatmul.mubr.f32.gmra.mrb[0].mxu0 %v321
    %v468 = vpop.f32.mrb[0].mxu0
    %v469 = vadd.f32 %v272, %v468
    %v470 = vpop.f32.mrb[0].mxu0
    %471 = vdwg.mxu0
    %v472 = vmax.f32 %v394, 0.0
    %v473 = vmax.f32 %v399, 0.0
    %v474 = vmax.f32 %v404, 0.0
    %v475 = vmax.f32 %v409, 0.0
    %v476 = vmax.f32 %v414, 0.0
    %v477 = vmax.f32 %v419, 0.0
    %v478 = vmax.f32 %v424, 0.0
    %v479 = vmax.f32 %v429, 0.0
    %v480 = vmax.f32 %v434, 0.0
    %v481 = vmax.f32 %v439, 0.0
    %v482 = vmax.f32 %v444, 0.0
    %v483 = vmax.f32 %v449, 0.0
    %v484 = vmax.f32 %v454, 0.0
    %v485 = vmax.f32 %v459, 0.0
    %v486 = vmax.f32 %v464, 0.0
    %v487 = vmax.f32 %v469, 0.0
    %v488 = vpack.c.bf16 %v473, %v472
    %v489 = vpack.c.bf16 %v475, %v474
    %v490 = vpack.c.bf16 %v477, %v476
    %v491 = vpack.c.bf16 %v479, %v478
    %v492 = vpack.c.bf16 %v481, %v480
    %v493 = vpack.c.bf16 %v483, %v482
    %v494 = vpack.c.bf16 %v485, %v484
    %v495 = vpack.c.bf16 %v487, %v486
    %v496 = vld [vmem:[#allocation2] sm:$0xf]
    %v497 = vld [vmem:[#allocation2 + $0x4] sm:$0xf]
    %v498 = vld [vmem:[#allocation2 + $0x8] sm:$0x1]
    %v502 = vunpack.c.l.b16 %v496
    %v503 = vunpack.c.l.b16 %v497
    %v504 = vunpack.c.l.b16 %v498
    %v505 = vpack.c.b16 %v503, %v502
    %v506 = vpack.c.b16 %v504, %v504
    %509 = vmatprep.subr.bf16.mxu0 0
    %510 = vmatpush1.bf16.msra.mxu0 %v488
    %511 = vmatprep.subr.bf16.mxu0 0
    %512 = vmatpush1.bf16.msra.mxu0 %v489
    %513 = vmatprep.subr.bf16.mxu0 0
    %514 = vmatpush1.bf16.msra.mxu0 %v490
    %515 = vmatprep.subr.bf16.mxu0 0
    %516 = vmatpush1.bf16.msra.mxu0 %v491
    %517 = vmatprep.subr.bf16.mxu0 0
    %518 = vmatpush1.bf16.msra.mxu0 %v492
    %519 = vmatprep.subr.bf16.mxu0 0
    %520 = vmatpush1.bf16.msra.mxu0 %v493
    %521 = vmatprep.subr.bf16.mxu0 0
    %522 = vmatpush1.bf16.msra.mxu0 %v494
    %523 = vmatprep.subr.bf16.mxu0 0
    %524 = vmatpush1.bf16.msra.mxu0 %v495
    %525 = vmatprep.subr.bf16.mxu0 0
    %526 = vmatpush1.bf16.msra.mxu0 0
    %527 = vmatprep.subr.bf16.mxu0 0
    %528 = vmatpush1.bf16.msra.mxu0 0
    %529 = vmatprep.subr.bf16.mxu0 0
    %530 = vmatpush1.bf16.msra.mxu0 0
    %531 = vmatprep.subr.bf16.mxu0 0
    %532 = vmatpush1.bf16.msra.mxu0 0
    %533 = vmatprep.subr.bf16.mxu0 0
    %534 = vmatpush1.bf16.msra.mxu0 0
    %535 = vmatprep.subr.bf16.mxu0 0
    %536 = vmatpush1.bf16.msra.mxu0 0
    %537 = vmatprep.subr.bf16.mxu0 0
    %538 = vmatpush1.bf16.msra.mxu0 0
    %539 = vmatprep.subr.bf16.mxu0 0
    %540 = vmatpush1.bf16.msra.mxu0 0
    %541 = vmatprep.mubr.bf16.mxu0 0
    %542 = vmatmul.mubr.bf16.gmra.mrb[0].mxu0 %v505
    %v543 = vpop.f32.mrb[0].mxu0
    %v544 = vadd.f32 0.0, %v543
    %v545 = vpop.f32.mrb[0].mxu0
    %v546 = vpop.f32.mrb[0].mxu0
    %v547 = vadd.f32 0.0, %v546
    %v548 = vpop.f32.mrb[0].mxu0
    %549 = vmatprep.mubr.bf16.mxu0 0
    %550 = vmatmul.mubr.bf16.gmra.mrb[0].mxu0 %v506
    %v551 = vpop.f32.mrb[0].mxu0
    %v552 = vadd.f32 0.0, %v551
    %v553 = vpop.f32.mrb[0].mxu0
    %v554 = vpop.f32.mrb[0].mxu0
    %v555 = vpop.f32.mrb[0].mxu0
    %556 = vdwg.mxu0
    %v557 = vpack.c.bf16 %v547, %v544
    %v558 = vpack.c.bf16 %v552, %v552
    %v559 = vld [vmem:[#allocation8] sm:$0xff]
    %v560 = vld [vmem:[#allocation8 + $0x8] sm:$0xff]
    %v561 = vld [vmem:[#allocation8 + $0x10] sm:$0xff]
    %v562 = vld [vmem:[#allocation8 + $0x18] sm:$0xff]
    %s563 = scalar_lea.vmem [#allocation2], 12
    %v564 = vld [vmem:[%s563] sm:$0xf]
    %v565 = vld [vmem:[%s563 + $0x4] sm:$0xf]
    %v566 = vld [vmem:[%s563 + $0x8] sm:$0x1]
    %v570 = vunpack.c.l.b16 %v564
    %v571 = vunpack.c.l.b16 %v565
    %v572 = vunpack.c.l.b16 %v566
    %v573 = vpack.c.b16 %v571, %v570
    %v574 = vpack.c.b16 %v572, %v572
    %577 = vmatprep.subr.bf16.mxu0 0
    %578 = vmatpush1.bf16.msra.mxu0 %v488
    %579 = vmatprep.subr.bf16.mxu0 0
    %580 = vmatpush1.bf16.msra.mxu0 %v489
    %581 = vmatprep.subr.bf16.mxu0 0
    %582 = vmatpush1.bf16.msra.mxu0 %v490
    %583 = vmatprep.subr.bf16.mxu0 0
    %584 = vmatpush1.bf16.msra.mxu0 %v491
    %585 = vmatprep.subr.bf16.mxu0 0
    %586 = vmatpush1.bf16.msra.mxu0 %v492
    %587 = vmatprep.subr.bf16.mxu0 0
    %588 = vmatpush1.bf16.msra.mxu0 %v493
    %589 = vmatprep.subr.bf16.mxu0 0
    %590 = vmatpush1.bf16.msra.mxu0 %v494
    %591 = vmatprep.subr.bf16.mxu0 0
    %592 = vmatpush1.bf16.msra.mxu0 %v495
    %593 = vmatprep.subr.bf16.mxu0 0
    %594 = vmatpush1.bf16.msra.mxu0 0
    %595 = vmatprep.subr.bf16.mxu0 0
    %596 = vmatpush1.bf16.msra.mxu0 0
    %597 = vmatprep.subr.bf16.mxu0 0
    %598 = vmatpush1.bf16.msra.mxu0 0
    %599 = vmatprep.subr.bf16.mxu0 0
    %600 = vmatpush1.bf16.msra.mxu0 0
    %601 = vmatprep.subr.bf16.mxu0 0
    %602 = vmatpush1.bf16.msra.mxu0 0
    %603 = vmatprep.subr.bf16.mxu0 0
    %604 = vmatpush1.bf16.msra.mxu0 0
    %605 = vmatprep.subr.bf16.mxu0 0
    %606 = vmatpush1.bf16.msra.mxu0 0
    %607 = vmatprep.subr.bf16.mxu0 0
    %608 = vmatpush1.bf16.msra.mxu0 0
    %609 = vmatprep.mubr.bf16.mxu0 0
    %610 = vmatmul.mubr.bf16.gmra.mrb[0].mxu0 %v573
    %v611 = vpop.f32.mrb[0].mxu0
    %v612 = vadd.f32 0.0, %v611
    %v613 = vpop.f32.mrb[0].mxu0
    %v614 = vpop.f32.mrb[0].mxu0
    %v615 = vadd.f32 0.0, %v614
    %v616 = vpop.f32.mrb[0].mxu0
    %617 = vmatprep.mubr.bf16.mxu0 0
    %618 = vmatmul.mubr.bf16.gmra.mrb[0].mxu0 %v574
    %v619 = vpop.f32.mrb[0].mxu0
    %v620 = vadd.f32 0.0, %v619
    %v621 = vpop.f32.mrb[0].mxu0
    %v622 = vpop.f32.mrb[0].mxu0
    %v623 = vpop.f32.mrb[0].mxu0
    %624 = vdwg.mxu0
    %v625 = vpack.c.bf16 %v615, %v612
    %v626 = vpack.c.bf16 %v620, %v620
    %s627 = scalar_lea.vmem [#allocation8], 32
    %v628 = vld [vmem:[%s627] sm:$0xff]
    %v629 = vld [vmem:[%s627 + $0x8] sm:$0xff]
    %v630 = vld [vmem:[%s627 + $0x10] sm:$0xff]
    %v631 = vld [vmem:[%s627 + $0x18] sm:$0xff]
    %v636 = vunpack.c.l.b16 %v628
    %v637 = vunpack.c.h.b16 %v628
    %v638 = vunpack.c.l.b16 %v629
    %v639 = vunpack.c.h.b16 %v629
    %v640 = vunpack.c.l.b16 %v630
    %v641 = vunpack.c.h.b16 %v630
    %v642 = vunpack.c.l.b16 %v631
    %v643 = vunpack.c.h.b16 %v631
    %v644 = vpack.c.b16 %v638, %v636
    %v645 = vpack.c.b16 %v639, %v637
    %v646 = vpack.c.b16 %v642, %v640
    %v647 = vpack.c.b16 %v643, %v641
    %vm652 = vcmask 261120
    %v654 = vsel %vm652, %v625, 0
    %v657 = vsel %vm652, %v626, 0
    %659 = vmatprep.subr.bf16.mxu0 %v645
    %660 = vmatpush1.bf16.msra.mxu0 %v644
    %661 = vmatprep.subr.bf16.mxu0 %v647
    %662 = vmatpush1.bf16.msra.mxu0 %v646
    %663 = vmatprep.subr.bf16.mxu0 0
    %664 = vmatpush1.bf16.msra.mxu0 0
    %665 = vmatprep.subr.bf16.mxu0 0
    %666 = vmatpush1.bf16.msra.mxu0 0
    %667 = vmatprep.subr.bf16.mxu0 0
    %668 = vmatpush1.bf16.msra.mxu0 0
    %669 = vmatprep.subr.bf16.mxu0 0
    %670 = vmatpush1.bf16.msra.mxu0 0
    %671 = vmatprep.subr.bf16.mxu0 0
    %672 = vmatpush1.bf16.msra.mxu0 0
    %673 = vmatprep.subr.bf16.mxu0 0
    %674 = vmatpush1.bf16.msra.mxu0 0
    %675 = vmatprep.subr.bf16.mxu0 0
    %676 = vmatpush1.bf16.msra.mxu0 0
    %677 = vmatprep.subr.bf16.mxu0 0
    %678 = vmatpush1.bf16.msra.mxu0 0
    %679 = vmatprep.subr.bf16.mxu0 0
    %680 = vmatpush1.bf16.msra.mxu0 0
    %681 = vmatprep.subr.bf16.mxu0 0
    %682 = vmatpush1.bf16.msra.mxu0 0
    %683 = vmatprep.subr.bf16.mxu0 0
    %684 = vmatpush1.bf16.msra.mxu0 0
    %685 = vmatprep.subr.bf16.mxu0 0
    %686 = vmatpush1.bf16.msra.mxu0 0
    %687 = vmatprep.subr.bf16.mxu0 0
    %688 = vmatpush1.bf16.msra.mxu0 0
    %689 = vmatprep.subr.bf16.mxu0 0
    %690 = vmatpush1.bf16.msra.mxu0 0
    %691 = vmatprep.mubr.bf16.mxu0 0
    %692 = vmatmul.mubr.bf16.gmra.mrb[0].mxu0 %v654
    %v693 = vpop.f32.mrb[0].mxu0
    %v694 = vadd.f32 0.0, %v693
    %v695 = vpop.f32.mrb[0].mxu0
    %v696 = vadd.f32 0.0, %v695
    %v697 = vpop.f32.mrb[0].mxu0
    %v698 = vadd.f32 0.0, %v697
    %v699 = vpop.f32.mrb[0].mxu0
    %v700 = vadd.f32 0.0, %v699
    %701 = vmatprep.mubr.bf16.mxu0 0
    %702 = vmatmul.mubr.bf16.gmra.mrb[0].mxu0 %v657
    %v703 = vpop.f32.mrb[0].mxu0
    %v704 = vadd.f32 0.0, %v703
    %v705 = vpop.f32.mrb[0].mxu0
    %v706 = vadd.f32 0.0, %v705
    %v707 = vpop.f32.mrb[0].mxu0
    %v708 = vpop.f32.mrb[0].mxu0
    %709 = vdwg.mxu0
    %v714 = vunpack.c.l.b16 %v559
    %v715 = vunpack.c.h.b16 %v559
    %v716 = vunpack.c.l.b16 %v560
    %v717 = vunpack.c.h.b16 %v560
    %v718 = vunpack.c.l.b16 %v561
    %v719 = vunpack.c.h.b16 %v561
    %v720 = vunpack.c.l.b16 %v562
    %v721 = vunpack.c.h.b16 %v562
    %v722 = vpack.c.b16 %v716, %v714
    %v723 = vpack.c.b16 %v717, %v715
    %v724 = vpack.c.b16 %v720, %v718
    %v725 = vpack.c.b16 %v721, %v719
    %v731 = vsel %vm652, %v557, 0
    %v734 = vsel %vm652, %v558, 0
    %736 = vmatprep.subr.bf16.mxu0 %v723
    %737 = vmatpush1.bf16.msra.mxu0 %v722
    %738 = vmatprep.subr.bf16.mxu0 %v725
    %739 = vmatpush1.bf16.msra.mxu0 %v724
    %740 = vmatprep.subr.bf16.mxu0 0
    %741 = vmatpush1.bf16.msra.mxu0 0
    %742 = vmatprep.subr.bf16.mxu0 0
    %743 = vmatpush1.bf16.msra.mxu0 0
    %744 = vmatprep.subr.bf16.mxu0 0
    %745 = vmatpush1.bf16.msra.mxu0 0
    %746 = vmatprep.subr.bf16.mxu0 0
    %747 = vmatpush1.bf16.msra.mxu0 0
    %748 = vmatprep.subr.bf16.mxu0 0
    %749 = vmatpush1.bf16.msra.mxu0 0
    %750 = vmatprep.subr.bf16.mxu0 0
    %751 = vmatpush1.bf16.msra.mxu0 0
    %752 = vmatprep.subr.bf16.mxu0 0
    %753 = vmatpush1.bf16.msra.mxu0 0
    %754 = vmatprep.subr.bf16.mxu0 0
    %755 = vmatpush1.bf16.msra.mxu0 0
    %756 = vmatprep.subr.bf16.mxu0 0
    %757 = vmatpush1.bf16.msra.mxu0 0
    %758 = vmatprep.subr.bf16.mxu0 0
    %759 = vmatpush1.bf16.msra.mxu0 0
    %760 = vmatprep.subr.bf16.mxu0 0
    %761 = vmatpush1.bf16.msra.mxu0 0
    %762 = vmatprep.subr.bf16.mxu0 0
    %763 = vmatpush1.bf16.msra.mxu0 0
    %764 = vmatprep.subr.bf16.mxu0 0
    %765 = vmatpush1.bf16.msra.mxu0 0
    %766 = vmatprep.subr.bf16.mxu0 0
    %767 = vmatpush1.bf16.msra.mxu0 0
    %768 = vmatprep.mubr.bf16.mxu0 0
    %769 = vmatmul.mubr.bf16.gmra.mrb[0].mxu0 %v731
    %v770 = vpop.f32.mrb[0].mxu0
    %v771 = vadd.f32 %v694, %v770
    %v772 = vpop.f32.mrb[0].mxu0
    %v773 = vadd.f32 %v696, %v772
    %v774 = vpop.f32.mrb[0].mxu0
    %v775 = vadd.f32 %v698, %v774
    %v776 = vpop.f32.mrb[0].mxu0
    %v777 = vadd.f32 %v700, %v776
    %778 = vmatprep.mubr.bf16.mxu0 0
    %779 = vmatmul.mubr.bf16.gmra.mrb[0].mxu0 %v734
    %v780 = vpop.f32.mrb[0].mxu0
    %v781 = vadd.f32 %v704, %v780
    %v782 = vpop.f32.mrb[0].mxu0
    %v783 = vadd.f32 %v706, %v782
    %v784 = vpop.f32.mrb[0].mxu0
    %v785 = vpop.f32.mrb[0].mxu0
    %786 = vdwg.mxu0
    %s787 = scalar_lea.vmem [#allocation2], 24
    %v788 = vld [vmem:[%s787] sm:$0xf]
    %v789 = vld [vmem:[%s787 + $0x4] sm:$0xf]
    %v790 = vld [vmem:[%s787 + $0x8] sm:$0x1]
    %v794 = vunpack.c.l.b16 %v788
    %v795 = vunpack.c.l.b16 %v789
    %v796 = vunpack.c.l.b16 %v790
    %v797 = vpack.c.b16 %v795, %v794
    %v798 = vpack.c.b16 %v796, %v796
    %801 = vmatprep.subr.bf16.mxu0 0
    %802 = vmatpush1.bf16.msra.mxu0 %v488
    %803 = vmatprep.subr.bf16.mxu0 0
    %804 = vmatpush1.bf16.msra.mxu0 %v489
    %805 = vmatprep.subr.bf16.mxu0 0
    %806 = vmatpush1.bf16.msra.mxu0 %v490
    %807 = vmatprep.subr.bf16.mxu0 0
    %808 = vmatpush1.bf16.msra.mxu0 %v491
    %809 = vmatprep.subr.bf16.mxu0 0
    %810 = vmatpush1.bf16.msra.mxu0 %v492
    %811 = vmatprep.subr.bf16.mxu0 0
    %812 = vmatpush1.bf16.msra.mxu0 %v493
    %813 = vmatprep.subr.bf16.mxu0 0
    %814 = vmatpush1.bf16.msra.mxu0 %v494
    %815 = vmatprep.subr.bf16.mxu0 0
    %816 = vmatpush1.bf16.msra.mxu0 %v495
    %817 = vmatprep.subr.bf16.mxu0 0
    %818 = vmatpush1.bf16.msra.mxu0 0
    %819 = vmatprep.subr.bf16.mxu0 0
    %820 = vmatpush1.bf16.msra.mxu0 0
    %821 = vmatprep.subr.bf16.mxu0 0
    %822 = vmatpush1.bf16.msra.mxu0 0
    %823 = vmatprep.subr.bf16.mxu0 0
    %824 = vmatpush1.bf16.msra.mxu0 0
    %825 = vmatprep.subr.bf16.mxu0 0
    %826 = vmatpush1.bf16.msra.mxu0 0
    %827 = vmatprep.subr.bf16.mxu0 0
    %828 = vmatpush1.bf16.msra.mxu0 0
    %829 = vmatprep.subr.bf16.mxu0 0
    %830 = vmatpush1.bf16.msra.mxu0 0
    %831 = vmatprep.subr.bf16.mxu0 0
    %832 = vmatpush1.bf16.msra.mxu0 0
    %833 = vmatprep.mubr.bf16.mxu0 0
    %834 = vmatmul.mubr.bf16.gmra.mrb[0].mxu0 %v797
    %v835 = vpop.f32.mrb[0].mxu0
    %v836 = vadd.f32 0.0, %v835
    %v837 = vpop.f32.mrb[0].mxu0
    %v838 = vpop.f32.mrb[0].mxu0
    %v839 = vadd.f32 0.0, %v838
    %v840 = vpop.f32.mrb[0].mxu0
    %841 = vmatprep.mubr.bf16.mxu0 0
    %842 = vmatmul.mubr.bf16.gmra.mrb[0].mxu0 %v798
    %v843 = vpop.f32.mrb[0].mxu0
    %v844 = vadd.f32 0.0, %v843
    %v845 = vpop.f32.mrb[0].mxu0
    %v846 = vpop.f32.mrb[0].mxu0
    %v847 = vpop.f32.mrb[0].mxu0
    %848 = vdwg.mxu0
    %v849 = vpack.c.bf16 %v839, %v836
    %v850 = vpack.c.bf16 %v844, %v844
    %s851 = scalar_lea.vmem [#allocation8], 64
    %v852 = vld [vmem:[%s851] sm:$0xff]
    %v853 = vld [vmem:[%s851 + $0x8] sm:$0xff]
    %v854 = vld [vmem:[%s851 + $0x10] sm:$0xff]
    %v855 = vld [vmem:[%s851 + $0x18] sm:$0xff]
    %v860 = vunpack.c.l.b16 %v852
    %v861 = vunpack.c.h.b16 %v852
    %v862 = vunpack.c.l.b16 %v853
    %v863 = vunpack.c.h.b16 %v853
    %v864 = vunpack.c.l.b16 %v854
    %v865 = vunpack.c.h.b16 %v854
    %v866 = vunpack.c.l.b16 %v855
    %v867 = vunpack.c.h.b16 %v855
    %v868 = vpack.c.b16 %v862, %v860
    %v869 = vpack.c.b16 %v863, %v861
    %v870 = vpack.c.b16 %v866, %v864
    %v871 = vpack.c.b16 %v867, %v865
    %v877 = vsel %vm652, %v849, 0
    %v880 = vsel %vm652, %v850, 0
    %882 = vmatprep.subr.bf16.mxu0 %v869
    %883 = vmatpush1.bf16.msra.mxu0 %v868
    %884 = vmatprep.subr.bf16.mxu0 %v871
    %885 = vmatpush1.bf16.msra.mxu0 %v870
    %886 = vmatprep.subr.bf16.mxu0 0
    %887 = vmatpush1.bf16.msra.mxu0 0
    %888 = vmatprep.subr.bf16.mxu0 0
    %889 = vmatpush1.bf16.msra.mxu0 0
    %890 = vmatprep.subr.bf16.mxu0 0
    %891 = vmatpush1.bf16.msra.mxu0 0
    %892 = vmatprep.subr.bf16.mxu0 0
    %893 = vmatpush1.bf16.msra.mxu0 0
    %894 = vmatprep.subr.bf16.mxu0 0
    %895 = vmatpush1.bf16.msra.mxu0 0
    %896 = vmatprep.subr.bf16.mxu0 0
    %897 = vmatpush1.bf16.msra.mxu0 0
    %898 = vmatprep.subr.bf16.mxu0 0
    %899 = vmatpush1.bf16.msra.mxu0 0
    %900 = vmatprep.subr.bf16.mxu0 0
    %901 = vmatpush1.bf16.msra.mxu0 0
    %902 = vmatprep.subr.bf16.mxu0 0
    %903 = vmatpush1.bf16.msra.mxu0 0
    %904 = vmatprep.subr.bf16.mxu0 0
    %905 = vmatpush1.bf16.msra.mxu0 0
    %906 = vmatprep.subr.bf16.mxu0 0
    %907 = vmatpush1.bf16.msra.mxu0 0
    %908 = vmatprep.subr.bf16.mxu0 0
    %909 = vmatpush1.bf16.msra.mxu0 0
    %910 = vmatprep.subr.bf16.mxu0 0
    %911 = vmatpush1.bf16.msra.mxu0 0
    %912 = vmatprep.subr.bf16.mxu0 0
    %913 = vmatpush1.bf16.msra.mxu0 0
    %914 = vmatprep.mubr.bf16.mxu0 0
    %915 = vmatmul.mubr.bf16.gmra.mrb[0].mxu0 %v877
    %v916 = vpop.f32.mrb[0].mxu0
    %v917 = vadd.f32 0.0, %v916
    %v918 = vpop.f32.mrb[0].mxu0
    %v919 = vadd.f32 0.0, %v918
    %v920 = vpop.f32.mrb[0].mxu0
    %v921 = vadd.f32 0.0, %v920
    %v922 = vpop.f32.mrb[0].mxu0
    %v923 = vadd.f32 0.0, %v922
    %924 = vmatprep.mubr.bf16.mxu0 0
    %925 = vmatmul.mubr.bf16.gmra.mrb[0].mxu0 %v880
    %v926 = vpop.f32.mrb[0].mxu0
    %v927 = vadd.f32 0.0, %v926
    %v928 = vpop.f32.mrb[0].mxu0
    %v929 = vadd.f32 0.0, %v928
    %v930 = vpop.f32.mrb[0].mxu0
    %v931 = vpop.f32.mrb[0].mxu0
    %932 = vdwg.mxu0
    %v933 = vadd.f32 %v771, %v917
    %v934 = vadd.f32 %v773, %v919
    %v935 = vadd.f32 %v775, %v921
    %v936 = vadd.f32 %v777, %v923
    %v937 = vadd.f32 %v781, %v927
    %v938 = vadd.f32 %v783, %v929
    %s939 = scalar_lea.vmem [#allocation2], 36
    %v940 = vld [vmem:[%s939] sm:$0xf]
    %v941 = vld [vmem:[%s939 + $0x4] sm:$0xf]
    %v942 = vld [vmem:[%s939 + $0x8] sm:$0x1]
    %v946 = vunpack.c.l.b16 %v940
    %v947 = vunpack.c.l.b16 %v941
    %v948 = vunpack.c.l.b16 %v942
    %v949 = vpack.c.b16 %v947, %v946
    %v950 = vpack.c.b16 %v948, %v948
    %953 = vmatprep.subr.bf16.mxu0 0
    %954 = vmatpush1.bf16.msra.mxu0 %v488
    %955 = vmatprep.subr.bf16.mxu0 0
    %956 = vmatpush1.bf16.msra.mxu0 %v489
    %957 = vmatprep.subr.bf16.mxu0 0
    %958 = vmatpush1.bf16.msra.mxu0 %v490
    %959 = vmatprep.subr.bf16.mxu0 0
    %960 = vmatpush1.bf16.msra.mxu0 %v491
    %961 = vmatprep.subr.bf16.mxu0 0
    %962 = vmatpush1.bf16.msra.mxu0 %v492
    %963 = vmatprep.subr.bf16.mxu0 0
    %964 = vmatpush1.bf16.msra.mxu0 %v493
    %965 = vmatprep.subr.bf16.mxu0 0
    %966 = vmatpush1.bf16.msra.mxu0 %v494
    %967 = vmatprep.subr.bf16.mxu0 0
    %968 = vmatpush1.bf16.msra.mxu0 %v495
    %969 = vmatprep.subr.bf16.mxu0 0
    %970 = vmatpush1.bf16.msra.mxu0 0
    %971 = vmatprep.subr.bf16.mxu0 0
    %972 = vmatpush1.bf16.msra.mxu0 0
    %973 = vmatprep.subr.bf16.mxu0 0
    %974 = vmatpush1.bf16.msra.mxu0 0
    %975 = vmatprep.subr.bf16.mxu0 0
    %976 = vmatpush1.bf16.msra.mxu0 0
    %977 = vmatprep.subr.bf16.mxu0 0
    %978 = vmatpush1.bf16.msra.mxu0 0
    %979 = vmatprep.subr.bf16.mxu0 0
    %980 = vmatpush1.bf16.msra.mxu0 0
    %981 = vmatprep.subr.bf16.mxu0 0
    %982 = vmatpush1.bf16.msra.mxu0 0
    %983 = vmatprep.subr.bf16.mxu0 0
    %984 = vmatpush1.bf16.msra.mxu0 0
    %985 = vmatprep.mubr.bf16.mxu0 0
    %986 = vmatmul.mubr.bf16.gmra.mrb[0].mxu0 %v949
    %v987 = vpop.f32.mrb[0].mxu0
    %v988 = vadd.f32 0.0, %v987
    %v989 = vpop.f32.mrb[0].mxu0
    %v990 = vpop.f32.mrb[0].mxu0
    %v991 = vadd.f32 0.0, %v990
    %v992 = vpop.f32.mrb[0].mxu0
    %993 = vmatprep.mubr.bf16.mxu0 0
    %994 = vmatmul.mubr.bf16.gmra.mrb[0].mxu0 %v950
    %v995 = vpop.f32.mrb[0].mxu0
    %v996 = vadd.f32 0.0, %v995
    %v997 = vpop.f32.mrb[0].mxu0
    %v998 = vpop.f32.mrb[0].mxu0
    %v999 = vpop.f32.mrb[0].mxu0
    %1000 = vdwg.mxu0
    %v1001 = vpack.c.bf16 %v991, %v988
    %v1002 = vpack.c.bf16 %v996, %v996
    %s1003 = scalar_lea.vmem [#allocation8], 96
    %v1004 = vld [vmem:[%s1003] sm:$0xff]
    %v1005 = vld [vmem:[%s1003 + $0x8] sm:$0xff]
    %v1006 = vld [vmem:[%s1003 + $0x10] sm:$0xff]
    %v1007 = vld [vmem:[%s1003 + $0x18] sm:$0xff]
    %v1012 = vunpack.c.l.b16 %v1004
    %v1013 = vunpack.c.h.b16 %v1004
    %v1014 = vunpack.c.l.b16 %v1005
    %v1015 = vunpack.c.h.b16 %v1005
    %v1016 = vunpack.c.l.b16 %v1006
    %v1017 = vunpack.c.h.b16 %v1006
    %v1018 = vunpack.c.l.b16 %v1007
    %v1019 = vunpack.c.h.b16 %v1007
    %v1020 = vpack.c.b16 %v1014, %v1012
    %v1021 = vpack.c.b16 %v1015, %v1013
    %v1022 = vpack.c.b16 %v1018, %v1016
    %v1023 = vpack.c.b16 %v1019, %v1017
    %v1029 = vsel %vm652, %v1001, 0
    %v1032 = vsel %vm652, %v1002, 0
    %1034 = vmatprep.subr.bf16.mxu0 %v1021
    %1035 = vmatpush1.bf16.msra.mxu0 %v1020
    %1036 = vmatprep.subr.bf16.mxu0 %v1023
    %1037 = vmatpush1.bf16.msra.mxu0 %v1022
    %1038 = vmatprep.subr.bf16.mxu0 0
    %1039 = vmatpush1.bf16.msra.mxu0 0
    %1040 = vmatprep.subr.bf16.mxu0 0
    %1041 = vmatpush1.bf16.msra.mxu0 0
    %1042 = vmatprep.subr.bf16.mxu0 0
    %1043 = vmatpush1.bf16.msra.mxu0 0
    %1044 = vmatprep.subr.bf16.mxu0 0
    %1045 = vmatpush1.bf16.msra.mxu0 0
    %1046 = vmatprep.subr.bf16.mxu0 0
    %1047 = vmatpush1.bf16.msra.mxu0 0
    %1048 = vmatprep.subr.bf16.mxu0 0
    %1049 = vmatpush1.bf16.msra.mxu0 0
    %1050 = vmatprep.subr.bf16.mxu0 0
    %1051 = vmatpush1.bf16.msra.mxu0 0
    %1052 = vmatprep.subr.bf16.mxu0 0
    %1053 = vmatpush1.bf16.msra.mxu0 0
    %1054 = vmatprep.subr.bf16.mxu0 0
    %1055 = vmatpush1.bf16.msra.mxu0 0
    %1056 = vmatprep.subr.bf16.mxu0 0
    %1057 = vmatpush1.bf16.msra.mxu0 0
    %1058 = vmatprep.subr.bf16.mxu0 0
    %1059 = vmatpush1.bf16.msra.mxu0 0
    %1060 = vmatprep.subr.bf16.mxu0 0
    %1061 = vmatpush1.bf16.msra.mxu0 0
    %1062 = vmatprep.subr.bf16.mxu0 0
    %1063 = vmatpush1.bf16.msra.mxu0 0
    %1064 = vmatprep.subr.bf16.mxu0 0
    %1065 = vmatpush1.bf16.msra.mxu0 0
    %1066 = vmatprep.mubr.bf16.mxu0 0
    %1067 = vmatmul.mubr.bf16.gmra.mrb[0].mxu0 %v1029
    %v1068 = vpop.f32.mrb[0].mxu0
    %v1069 = vadd.f32 0.0, %v1068
    %v1070 = vpop.f32.mrb[0].mxu0
    %v1071 = vadd.f32 0.0, %v1070
    %v1072 = vpop.f32.mrb[0].mxu0
    %v1073 = vadd.f32 0.0, %v1072
    %v1074 = vpop.f32.mrb[0].mxu0
    %v1075 = vadd.f32 0.0, %v1074
    %1076 = vmatprep.mubr.bf16.mxu0 0
    %1077 = vmatmul.mubr.bf16.gmra.mrb[0].mxu0 %v1032
    %v1078 = vpop.f32.mrb[0].mxu0
    %v1079 = vadd.f32 0.0, %v1078
    %v1080 = vpop.f32.mrb[0].mxu0
    %v1081 = vadd.f32 0.0, %v1080
    %v1082 = vpop.f32.mrb[0].mxu0
    %v1083 = vpop.f32.mrb[0].mxu0
    %1084 = vdwg.mxu0
    %v1085 = vadd.f32 %v933, %v1069
    %v1086 = vadd.f32 %v934, %v1071
    %v1087 = vadd.f32 %v935, %v1073
    %v1088 = vadd.f32 %v936, %v1075
    %v1089 = vadd.f32 %v937, %v1079
    %v1090 = vadd.f32 %v938, %v1081
    %s1091 = scalar_lea.vmem [#allocation2], 48
    %v1092 = vld [vmem:[%s1091] sm:$0xf]
    %v1093 = vld [vmem:[%s1091 + $0x4] sm:$0xf]
    %v1094 = vld [vmem:[%s1091 + $0x8] sm:$0x1]
    %v1098 = vunpack.c.l.b16 %v1092
    %v1099 = vunpack.c.l.b16 %v1093
    %v1100 = vunpack.c.l.b16 %v1094
    %v1101 = vpack.c.b16 %v1099, %v1098
    %v1102 = vpack.c.b16 %v1100, %v1100
    %1105 = vmatprep.subr.bf16.mxu0 0
    %1106 = vmatpush1.bf16.msra.mxu0 %v488
    %1107 = vmatprep.subr.bf16.mxu0 0
    %1108 = vmatpush1.bf16.msra.mxu0 %v489
    %1109 = vmatprep.subr.bf16.mxu0 0
    %1110 = vmatpush1.bf16.msra.mxu0 %v490
    %1111 = vmatprep.subr.bf16.mxu0 0
    %1112 = vmatpush1.bf16.msra.mxu0 %v491
    %1113 = vmatprep.subr.bf16.mxu0 0
    %1114 = vmatpush1.bf16.msra.mxu0 %v492
    %1115 = vmatprep.subr.bf16.mxu0 0
    %1116 = vmatpush1.bf16.msra.mxu0 %v493
    %1117 = vmatprep.subr.bf16.mxu0 0
    %1118 = vmatpush1.bf16.msra.mxu0 %v494
    %1119 = vmatprep.subr.bf16.mxu0 0
    %1120 = vmatpush1.bf16.msra.mxu0 %v495
    %1121 = vmatprep.subr.bf16.mxu0 0
    %1122 = vmatpush1.bf16.msra.mxu0 0
    %1123 = vmatprep.subr.bf16.mxu0 0
    %1124 = vmatpush1.bf16.msra.mxu0 0
    %1125 = vmatprep.subr.bf16.mxu0 0
    %1126 = vmatpush1.bf16.msra.mxu0 0
    %1127 = vmatprep.subr.bf16.mxu0 0
    %1128 = vmatpush1.bf16.msra.mxu0 0
    %1129 = vmatprep.subr.bf16.mxu0 0
    %1130 = vmatpush1.bf16.msra.mxu0 0
    %1131 = vmatprep.subr.bf16.mxu0 0
    %1132 = vmatpush1.bf16.msra.mxu0 0
    %1133 = vmatprep.subr.bf16.mxu0 0
    %1134 = vmatpush1.bf16.msra.mxu0 0
    %1135 = vmatprep.subr.bf16.mxu0 0
    %1136 = vmatpush1.bf16.msra.mxu0 0
    %1137 = vmatprep.mubr.bf16.mxu0 0
    %1138 = vmatmul.mubr.bf16.gmra.mrb[0].mxu0 %v1101
    %v1139 = vpop.f32.mrb[0].mxu0
    %v1140 = vadd.f32 0.0, %v1139
    %v1141 = vpop.f32.mrb[0].mxu0
    %v1142 = vpop.f32.mrb[0].mxu0
    %v1143 = vadd.f32 0.0, %v1142
    %v1144 = vpop.f32.mrb[0].mxu0
    %1145 = vmatprep.mubr.bf16.mxu0 0
    %1146 = vmatmul.mubr.bf16.gmra.mrb[0].mxu0 %v1102
    %v1147 = vpop.f32.mrb[0].mxu0
    %v1148 = vadd.f32 0.0, %v1147
    %v1149 = vpop.f32.mrb[0].mxu0
    %v1150 = vpop.f32.mrb[0].mxu0
    %v1151 = vpop.f32.mrb[0].mxu0
    %1152 = vdwg.mxu0
    %v1153 = vpack.c.bf16 %v1143, %v1140
    %v1154 = vpack.c.bf16 %v1148, %v1148
    %s1155 = scalar_lea.vmem [#allocation8], 128
    %v1156 = vld [vmem:[%s1155] sm:$0xff]
    %v1157 = vld [vmem:[%s1155 + $0x8] sm:$0xff]
    %v1158 = vld [vmem:[%s1155 + $0x10] sm:$0xff]
    %v1159 = vld [vmem:[%s1155 + $0x18] sm:$0xff]
    %v1164 = vunpack.c.l.b16 %v1156
    %v1165 = vunpack.c.h.b16 %v1156
    %v1166 = vunpack.c.l.b16 %v1157
    %v1167 = vunpack.c.h.b16 %v1157
    %v1168 = vunpack.c.l.b16 %v1158
    %v1169 = vunpack.c.h.b16 %v1158
    %v1170 = vunpack.c.l.b16 %v1159
    %v1171 = vunpack.c.h.b16 %v1159
    %v1172 = vpack.c.b16 %v1166, %v1164
    %v1173 = vpack.c.b16 %v1167, %v1165
    %v1174 = vpack.c.b16 %v1170, %v1168
    %v1175 = vpack.c.b16 %v1171, %v1169
    %v1181 = vsel %vm652, %v1153, 0
    %v1184 = vsel %vm652, %v1154, 0
    %1186 = vmatprep.subr.bf16.mxu0 %v1173
    %1187 = vmatpush1.bf16.msra.mxu0 %v1172
    %1188 = vmatprep.subr.bf16.mxu0 %v1175
    %1189 = vmatpush1.bf16.msra.mxu0 %v1174
    %1190 = vmatprep.subr.bf16.mxu0 0
    %1191 = vmatpush1.bf16.msra.mxu0 0
    %1192 = vmatprep.subr.bf16.mxu0 0
    %1193 = vmatpush1.bf16.msra.mxu0 0
    %1194 = vmatprep.subr.bf16.mxu0 0
    %1195 = vmatpush1.bf16.msra.mxu0 0
    %1196 = vmatprep.subr.bf16.mxu0 0
    %1197 = vmatpush1.bf16.msra.mxu0 0
    %1198 = vmatprep.subr.bf16.mxu0 0
    %1199 = vmatpush1.bf16.msra.mxu0 0
    %1200 = vmatprep.subr.bf16.mxu0 0
    %1201 = vmatpush1.bf16.msra.mxu0 0
    %1202 = vmatprep.subr.bf16.mxu0 0
    %1203 = vmatpush1.bf16.msra.mxu0 0
    %1204 = vmatprep.subr.bf16.mxu0 0
    %1205 = vmatpush1.bf16.msra.mxu0 0
    %1206 = vmatprep.subr.bf16.mxu0 0
    %1207 = vmatpush1.bf16.msra.mxu0 0
    %1208 = vmatprep.subr.bf16.mxu0 0
    %1209 = vmatpush1.bf16.msra.mxu0 0
    %1210 = vmatprep.subr.bf16.mxu0 0
    %1211 = vmatpush1.bf16.msra.mxu0 0
    %1212 = vmatprep.subr.bf16.mxu0 0
    %1213 = vmatpush1.bf16.msra.mxu0 0
    %1214 = vmatprep.subr.bf16.mxu0 0
    %1215 = vmatpush1.bf16.msra.mxu0 0
    %1216 = vmatprep.subr.bf16.mxu0 0
    %1217 = vmatpush1.bf16.msra.mxu0 0
    %1218 = vmatprep.mubr.bf16.mxu0 0
    %1219 = vmatmul.mubr.bf16.gmra.mrb[0].mxu0 %v1181
    %v1220 = vpop.f32.mrb[0].mxu0
    %v1221 = vadd.f32 0.0, %v1220
    %v1222 = vpop.f32.mrb[0].mxu0
    %v1223 = vadd.f32 0.0, %v1222
    %v1224 = vpop.f32.mrb[0].mxu0
    %v1225 = vadd.f32 0.0, %v1224
    %v1226 = vpop.f32.mrb[0].mxu0
    %v1227 = vadd.f32 0.0, %v1226
    %1228 = vmatprep.mubr.bf16.mxu0 0
    %1229 = vmatmul.mubr.bf16.gmra.mrb[0].mxu0 %v1184
    %v1230 = vpop.f32.mrb[0].mxu0
    %v1231 = vadd.f32 0.0, %v1230
    %v1232 = vpop.f32.mrb[0].mxu0
    %v1233 = vadd.f32 0.0, %v1232
    %v1234 = vpop.f32.mrb[0].mxu0
    %v1235 = vpop.f32.mrb[0].mxu0
    %1236 = vdwg.mxu0
    %v1237 = vadd.f32 %v1085, %v1221
    %v1238 = vadd.f32 %v1086, %v1223
    %v1239 = vadd.f32 %v1087, %v1225
    %v1240 = vadd.f32 %v1088, %v1227
    %v1241 = vadd.f32 %v1089, %v1231
    %v1242 = vadd.f32 %v1090, %v1233
    %s1243 = scalar_lea.vmem [#allocation2], 60
    %v1244 = vld [vmem:[%s1243] sm:$0xf]
    %v1245 = vld [vmem:[%s1243 + $0x4] sm:$0xf]
    %v1246 = vld [vmem:[%s1243 + $0x8] sm:$0x1]
    %v1250 = vunpack.c.l.b16 %v1244
    %v1251 = vunpack.c.l.b16 %v1245
    %v1252 = vunpack.c.l.b16 %v1246
    %v1253 = vpack.c.b16 %v1251, %v1250
    %v1254 = vpack.c.b16 %v1252, %v1252
    %1257 = vmatprep.subr.bf16.mxu0 0
    %1258 = vmatpush1.bf16.msra.mxu0 %v488
    %1259 = vmatprep.subr.bf16.mxu0 0
    %1260 = vmatpush1.bf16.msra.mxu0 %v489
    %1261 = vmatprep.subr.bf16.mxu0 0
    %1262 = vmatpush1.bf16.msra.mxu0 %v490
    %1263 = vmatprep.subr.bf16.mxu0 0
    %1264 = vmatpush1.bf16.msra.mxu0 %v491
    %1265 = vmatprep.subr.bf16.mxu0 0
    %1266 = vmatpush1.bf16.msra.mxu0 %v492
    %1267 = vmatprep.subr.bf16.mxu0 0
    %1268 = vmatpush1.bf16.msra.mxu0 %v493
    %1269 = vmatprep.subr.bf16.mxu0 0
    %1270 = vmatpush1.bf16.msra.mxu0 %v494
    %1271 = vmatprep.subr.bf16.mxu0 0
    %1272 = vmatpush1.bf16.msra.mxu0 %v495
    %1273 = vmatprep.subr.bf16.mxu0 0
    %1274 = vmatpush1.bf16.msra.mxu0 0
    %1275 = vmatprep.subr.bf16.mxu0 0
    %1276 = vmatpush1.bf16.msra.mxu0 0
    %1277 = vmatprep.subr.bf16.mxu0 0
    %1278 = vmatpush1.bf16.msra.mxu0 0
    %1279 = vmatprep.subr.bf16.mxu0 0
    %1280 = vmatpush1.bf16.msra.mxu0 0
    %1281 = vmatprep.subr.bf16.mxu0 0
    %1282 = vmatpush1.bf16.msra.mxu0 0
    %1283 = vmatprep.subr.bf16.mxu0 0
    %1284 = vmatpush1.bf16.msra.mxu0 0
    %1285 = vmatprep.subr.bf16.mxu0 0
    %1286 = vmatpush1.bf16.msra.mxu0 0
    %1287 = vmatprep.subr.bf16.mxu0 0
    %1288 = vmatpush1.bf16.msra.mxu0 0
    %1289 = vmatprep.mubr.bf16.mxu0 0
    %1290 = vmatmul.mubr.bf16.gmra.mrb[0].mxu0 %v1253
    %v1291 = vpop.f32.mrb[0].mxu0
    %v1292 = vadd.f32 0.0, %v1291
    %v1293 = vpop.f32.mrb[0].mxu0
    %v1294 = vpop.f32.mrb[0].mxu0
    %v1295 = vadd.f32 0.0, %v1294
    %v1296 = vpop.f32.mrb[0].mxu0
    %1297 = vmatprep.mubr.bf16.mxu0 0
    %1298 = vmatmul.mubr.bf16.gmra.mrb[0].mxu0 %v1254
    %v1299 = vpop.f32.mrb[0].mxu0
    %v1300 = vadd.f32 0.0, %v1299
    %v1301 = vpop.f32.mrb[0].mxu0
    %v1302 = vpop.f32.mrb[0].mxu0
    %v1303 = vpop.f32.mrb[0].mxu0
    %1304 = vdwg.mxu0
    %v1305 = vpack.c.bf16 %v1295, %v1292
    %v1306 = vpack.c.bf16 %v1300, %v1300
    %s1307 = scalar_lea.vmem [#allocation8], 160
    %v1308 = vld [vmem:[%s1307] sm:$0xff]
    %v1309 = vld [vmem:[%s1307 + $0x8] sm:$0xff]
    %v1310 = vld [vmem:[%s1307 + $0x10] sm:$0xff]
    %v1311 = vld [vmem:[%s1307 + $0x18] sm:$0xff]
    %v1316 = vunpack.c.l.b16 %v1308
    %v1317 = vunpack.c.h.b16 %v1308
    %v1318 = vunpack.c.l.b16 %v1309
    %v1319 = vunpack.c.h.b16 %v1309
    %v1320 = vunpack.c.l.b16 %v1310
    %v1321 = vunpack.c.h.b16 %v1310
    %v1322 = vunpack.c.l.b16 %v1311
    %v1323 = vunpack.c.h.b16 %v1311
    %v1324 = vpack.c.b16 %v1318, %v1316
    %v1325 = vpack.c.b16 %v1319, %v1317
    %v1326 = vpack.c.b16 %v1322, %v1320
    %v1327 = vpack.c.b16 %v1323, %v1321
    %v1333 = vsel %vm652, %v1305, 0
    %v1336 = vsel %vm652, %v1306, 0
    %1338 = vmatprep.subr.bf16.mxu0 %v1325
    %1339 = vmatpush1.bf16.msra.mxu0 %v1324
    %1340 = vmatprep.subr.bf16.mxu0 %v1327
    %1341 = vmatpush1.bf16.msra.mxu0 %v1326
    %1342 = vmatprep.subr.bf16.mxu0 0
    %1343 = vmatpush1.bf16.msra.mxu0 0
    %1344 = vmatprep.subr.bf16.mxu0 0
    %1345 = vmatpush1.bf16.msra.mxu0 0
    %1346 = vmatprep.subr.bf16.mxu0 0
    %1347 = vmatpush1.bf16.msra.mxu0 0
    %1348 = vmatprep.subr.bf16.mxu0 0
    %1349 = vmatpush1.bf16.msra.mxu0 0
    %1350 = vmatprep.subr.bf16.mxu0 0
    %1351 = vmatpush1.bf16.msra.mxu0 0
    %1352 = vmatprep.subr.bf16.mxu0 0
    %1353 = vmatpush1.bf16.msra.mxu0 0
    %1354 = vmatprep.subr.bf16.mxu0 0
    %1355 = vmatpush1.bf16.msra.mxu0 0
    %1356 = vmatprep.subr.bf16.mxu0 0
    %1357 = vmatpush1.bf16.msra.mxu0 0
    %1358 = vmatprep.subr.bf16.mxu0 0
    %1359 = vmatpush1.bf16.msra.mxu0 0
    %1360 = vmatprep.subr.bf16.mxu0 0
    %1361 = vmatpush1.bf16.msra.mxu0 0
    %1362 = vmatprep.subr.bf16.mxu0 0
    %1363 = vmatpush1.bf16.msra.mxu0 0
    %1364 = vmatprep.subr.bf16.mxu0 0
    %1365 = vmatpush1.bf16.msra.mxu0 0
    %1366 = vmatprep.subr.bf16.mxu0 0
    %1367 = vmatpush1.bf16.msra.mxu0 0
    %1368 = vmatprep.subr.bf16.mxu0 0
    %1369 = vmatpush1.bf16.msra.mxu0 0
    %1370 = vmatprep.mubr.bf16.mxu0 0
    %1371 = vmatmul.mubr.bf16.gmra.mrb[0].mxu0 %v1333
    %v1372 = vpop.f32.mrb[0].mxu0
    %v1373 = vadd.f32 0.0, %v1372
    %v1374 = vpop.f32.mrb[0].mxu0
    %v1375 = vadd.f32 0.0, %v1374
    %v1376 = vpop.f32.mrb[0].mxu0
    %v1377 = vadd.f32 0.0, %v1376
    %v1378 = vpop.f32.mrb[0].mxu0
    %v1379 = vadd.f32 0.0, %v1378
    %1380 = vmatprep.mubr.bf16.mxu0 0
    %1381 = vmatmul.mubr.bf16.gmra.mrb[0].mxu0 %v1336
    %v1382 = vpop.f32.mrb[0].mxu0
    %v1383 = vadd.f32 0.0, %v1382
    %v1384 = vpop.f32.mrb[0].mxu0
    %v1385 = vadd.f32 0.0, %v1384
    %v1386 = vpop.f32.mrb[0].mxu0
    %v1387 = vpop.f32.mrb[0].mxu0
    %1388 = vdwg.mxu0
    %v1389 = vadd.f32 %v1237, %v1373
    %v1390 = vadd.f32 %v1238, %v1375
    %v1391 = vadd.f32 %v1239, %v1377
    %v1392 = vadd.f32 %v1240, %v1379
    %v1393 = vadd.f32 %v1241, %v1383
    %v1394 = vadd.f32 %v1242, %v1385
    %s1395 = scalar_lea.vmem [#allocation2], 72
    %v1396 = vld [vmem:[%s1395] sm:$0xf]
    %v1397 = vld [vmem:[%s1395 + $0x4] sm:$0xf]
    %v1398 = vld [vmem:[%s1395 + $0x8] sm:$0x1]
    %v1402 = vunpack.c.l.b16 %v1396
    %v1403 = vunpack.c.l.b16 %v1397
    %v1404 = vunpack.c.l.b16 %v1398
    %v1405 = vpack.c.b16 %v1403, %v1402
    %v1406 = vpack.c.b16 %v1404, %v1404
    %1409 = vmatprep.subr.bf16.mxu0 0
    %1410 = vmatpush1.bf16.msra.mxu0 %v488
    %1411 = vmatprep.subr.bf16.mxu0 0
    %1412 = vmatpush1.bf16.msra.mxu0 %v489
    %1413 = vmatprep.subr.bf16.mxu0 0
    %1414 = vmatpush1.bf16.msra.mxu0 %v490
    %1415 = vmatprep.subr.bf16.mxu0 0
    %1416 = vmatpush1.bf16.msra.mxu0 %v491
    %1417 = vmatprep.subr.bf16.mxu0 0
    %1418 = vmatpush1.bf16.msra.mxu0 %v492
    %1419 = vmatprep.subr.bf16.mxu0 0
    %1420 = vmatpush1.bf16.msra.mxu0 %v493
    %1421 = vmatprep.subr.bf16.mxu0 0
    %1422 = vmatpush1.bf16.msra.mxu0 %v494
    %1423 = vmatprep.subr.bf16.mxu0 0
    %1424 = vmatpush1.bf16.msra.mxu0 %v495
    %1425 = vmatprep.subr.bf16.mxu0 0
    %1426 = vmatpush1.bf16.msra.mxu0 0
    %1427 = vmatprep.subr.bf16.mxu0 0
    %1428 = vmatpush1.bf16.msra.mxu0 0
    %1429 = vmatprep.subr.bf16.mxu0 0
    %1430 = vmatpush1.bf16.msra.mxu0 0
    %1431 = vmatprep.subr.bf16.mxu0 0
    %1432 = vmatpush1.bf16.msra.mxu0 0
    %1433 = vmatprep.subr.bf16.mxu0 0
    %1434 = vmatpush1.bf16.msra.mxu0 0
    %1435 = vmatprep.subr.bf16.mxu0 0
    %1436 = vmatpush1.bf16.msra.mxu0 0
    %1437 = vmatprep.subr.bf16.mxu0 0
    %1438 = vmatpush1.bf16.msra.mxu0 0
    %1439 = vmatprep.subr.bf16.mxu0 0
    %1440 = vmatpush1.bf16.msra.mxu0 0
    %1441 = vmatprep.mubr.bf16.mxu0 0
    %1442 = vmatmul.mubr.bf16.gmra.mrb[0].mxu0 %v1405
    %v1443 = vpop.f32.mrb[0].mxu0
    %v1444 = vadd.f32 0.0, %v1443
    %v1445 = vpop.f32.mrb[0].mxu0
    %v1446 = vpop.f32.mrb[0].mxu0
    %v1447 = vadd.f32 0.0, %v1446
    %v1448 = vpop.f32.mrb[0].mxu0
    %1449 = vmatprep.mubr.bf16.mxu0 0
    %1450 = vmatmul.mubr.bf16.gmra.mrb[0].mxu0 %v1406
    %v1451 = vpop.f32.mrb[0].mxu0
    %v1452 = vadd.f32 0.0, %v1451
    %v1453 = vpop.f32.mrb[0].mxu0
    %v1454 = vpop.f32.mrb[0].mxu0
    %v1455 = vpop.f32.mrb[0].mxu0
    %1456 = vdwg.mxu0
    %v1457 = vpack.c.bf16 %v1447, %v1444
    %v1458 = vpack.c.bf16 %v1452, %v1452
    %s1459 = scalar_lea.vmem [#allocation8], 192
    %v1460 = vld [vmem:[%s1459] sm:$0xff]
    %v1461 = vld [vmem:[%s1459 + $0x8] sm:$0xff]
    %v1462 = vld [vmem:[%s1459 + $0x10] sm:$0xff]
    %v1463 = vld [vmem:[%s1459 + $0x18] sm:$0xff]
    %v1468 = vunpack.c.l.b16 %v1460
    %v1469 = vunpack.c.h.b16 %v1460
    %v1470 = vunpack.c.l.b16 %v1461
    %v1471 = vunpack.c.h.b16 %v1461
    %v1472 = vunpack.c.l.b16 %v1462
    %v1473 = vunpack.c.h.b16 %v1462
    %v1474 = vunpack.c.l.b16 %v1463
    %v1475 = vunpack.c.h.b16 %v1463
    %v1476 = vpack.c.b16 %v1470, %v1468
    %v1477 = vpack.c.b16 %v1471, %v1469
    %v1478 = vpack.c.b16 %v1474, %v1472
    %v1479 = vpack.c.b16 %v1475, %v1473
    %v1485 = vsel %vm652, %v1457, 0
    %v1488 = vsel %vm652, %v1458, 0
    %1490 = vmatprep.subr.bf16.mxu0 %v1477
    %1491 = vmatpush1.bf16.msra.mxu0 %v1476
    %1492 = vmatprep.subr.bf16.mxu0 %v1479
    %1493 = vmatpush1.bf16.msra.mxu0 %v1478
    %1494 = vmatprep.subr.bf16.mxu0 0
    %1495 = vmatpush1.bf16.msra.mxu0 0
    %1496 = vmatprep.subr.bf16.mxu0 0
    %1497 = vmatpush1.bf16.msra.mxu0 0
    %1498 = vmatprep.subr.bf16.mxu0 0
    %1499 = vmatpush1.bf16.msra.mxu0 0
    %1500 = vmatprep.subr.bf16.mxu0 0
    %1501 = vmatpush1.bf16.msra.mxu0 0
    %1502 = vmatprep.subr.bf16.mxu0 0
    %1503 = vmatpush1.bf16.msra.mxu0 0
    %1504 = vmatprep.subr.bf16.mxu0 0
    %1505 = vmatpush1.bf16.msra.mxu0 0
    %1506 = vmatprep.subr.bf16.mxu0 0
    %1507 = vmatpush1.bf16.msra.mxu0 0
    %1508 = vmatprep.subr.bf16.mxu0 0
    %1509 = vmatpush1.bf16.msra.mxu0 0
    %1510 = vmatprep.subr.bf16.mxu0 0
    %1511 = vmatpush1.bf16.msra.mxu0 0
    %1512 = vmatprep.subr.bf16.mxu0 0
    %1513 = vmatpush1.bf16.msra.mxu0 0
    %1514 = vmatprep.subr.bf16.mxu0 0
    %1515 = vmatpush1.bf16.msra.mxu0 0
    %1516 = vmatprep.subr.bf16.mxu0 0
    %1517 = vmatpush1.bf16.msra.mxu0 0
    %1518 = vmatprep.subr.bf16.mxu0 0
    %1519 = vmatpush1.bf16.msra.mxu0 0
    %1520 = vmatprep.subr.bf16.mxu0 0
    %1521 = vmatpush1.bf16.msra.mxu0 0
    %1522 = vmatprep.mubr.bf16.mxu0 0
    %1523 = vmatmul.mubr.bf16.gmra.mrb[0].mxu0 %v1485
    %v1524 = vpop.f32.mrb[0].mxu0
    %v1525 = vadd.f32 0.0, %v1524
    %v1526 = vpop.f32.mrb[0].mxu0
    %v1527 = vadd.f32 0.0, %v1526
    %v1528 = vpop.f32.mrb[0].mxu0
    %v1529 = vadd.f32 0.0, %v1528
    %v1530 = vpop.f32.mrb[0].mxu0
    %v1531 = vadd.f32 0.0, %v1530
    %1532 = vmatprep.mubr.bf16.mxu0 0
    %1533 = vmatmul.mubr.bf16.gmra.mrb[0].mxu0 %v1488
    %v1534 = vpop.f32.mrb[0].mxu0
    %v1535 = vadd.f32 0.0, %v1534
    %v1536 = vpop.f32.mrb[0].mxu0
    %v1537 = vadd.f32 0.0, %v1536
    %v1538 = vpop.f32.mrb[0].mxu0
    %v1539 = vpop.f32.mrb[0].mxu0
    %1540 = vdwg.mxu0
    %v1541 = vadd.f32 %v1389, %v1525
    %v1542 = vadd.f32 %v1390, %v1527
    %v1543 = vadd.f32 %v1391, %v1529
    %v1544 = vadd.f32 %v1392, %v1531
    %v1545 = vadd.f32 %v1393, %v1535
    %v1546 = vadd.f32 %v1394, %v1537
    %s1547 = scalar_lea.vmem [#allocation2], 84
    %v1548 = vld [vmem:[%s1547] sm:$0xf]
    %v1549 = vld [vmem:[%s1547 + $0x4] sm:$0xf]
    %v1550 = vld [vmem:[%s1547 + $0x8] sm:$0x1]
    %v1554 = vunpack.c.l.b16 %v1548
    %v1555 = vunpack.c.l.b16 %v1549
    %v1556 = vunpack.c.l.b16 %v1550
    %v1557 = vpack.c.b16 %v1555, %v1554
    %v1558 = vpack.c.b16 %v1556, %v1556
    %1561 = vmatprep.subr.bf16.mxu0 0
    %1562 = vmatpush1.bf16.msra.mxu0 %v488
    %1563 = vmatprep.subr.bf16.mxu0 0
    %1564 = vmatpush1.bf16.msra.mxu0 %v489
    %1565 = vmatprep.subr.bf16.mxu0 0
    %1566 = vmatpush1.bf16.msra.mxu0 %v490
    %1567 = vmatprep.subr.bf16.mxu0 0
    %1568 = vmatpush1.bf16.msra.mxu0 %v491
    %1569 = vmatprep.subr.bf16.mxu0 0
    %1570 = vmatpush1.bf16.msra.mxu0 %v492
    %1571 = vmatprep.subr.bf16.mxu0 0
    %1572 = vmatpush1.bf16.msra.mxu0 %v493
    %1573 = vmatprep.subr.bf16.mxu0 0
    %1574 = vmatpush1.bf16.msra.mxu0 %v494
    %1575 = vmatprep.subr.bf16.mxu0 0
    %1576 = vmatpush1.bf16.msra.mxu0 %v495
    %1577 = vmatprep.subr.bf16.mxu0 0
    %1578 = vmatpush1.bf16.msra.mxu0 0
    %1579 = vmatprep.subr.bf16.mxu0 0
    %1580 = vmatpush1.bf16.msra.mxu0 0
    %1581 = vmatprep.subr.bf16.mxu0 0
    %1582 = vmatpush1.bf16.msra.mxu0 0
    %1583 = vmatprep.subr.bf16.mxu0 0
    %1584 = vmatpush1.bf16.msra.mxu0 0
    %1585 = vmatprep.subr.bf16.mxu0 0
    %1586 = vmatpush1.bf16.msra.mxu0 0
    %1587 = vmatprep.subr.bf16.mxu0 0
    %1588 = vmatpush1.bf16.msra.mxu0 0
    %1589 = vmatprep.subr.bf16.mxu0 0
    %1590 = vmatpush1.bf16.msra.mxu0 0
    %1591 = vmatprep.subr.bf16.mxu0 0
    %1592 = vmatpush1.bf16.msra.mxu0 0
    %1593 = vmatprep.mubr.bf16.mxu0 0
    %1594 = vmatmul.mubr.bf16.gmra.mrb[0].mxu0 %v1557
    %v1595 = vpop.f32.mrb[0].mxu0
    %v1596 = vadd.f32 0.0, %v1595
    %v1597 = vpop.f32.mrb[0].mxu0
    %v1598 = vpop.f32.mrb[0].mxu0
    %v1599 = vadd.f32 0.0, %v1598
    %v1600 = vpop.f32.mrb[0].mxu0
    %1601 = vmatprep.mubr.bf16.mxu0 0
    %1602 = vmatmul.mubr.bf16.gmra.mrb[0].mxu0 %v1558
    %v1603 = vpop.f32.mrb[0].mxu0
    %v1604 = vadd.f32 0.0, %v1603
    %v1605 = vpop.f32.mrb[0].mxu0
    %v1606 = vpop.f32.mrb[0].mxu0
    %v1607 = vpop.f32.mrb[0].mxu0
    %1608 = vdwg.mxu0
    %v1609 = vpack.c.bf16 %v1599, %v1596
    %v1610 = vpack.c.bf16 %v1604, %v1604
    %s1611 = scalar_lea.vmem [#allocation8], 224
    %v1612 = vld [vmem:[%s1611] sm:$0xff]
    %v1613 = vld [vmem:[%s1611 + $0x8] sm:$0xff]
    %v1614 = vld [vmem:[%s1611 + $0x10] sm:$0xff]
    %v1615 = vld [vmem:[%s1611 + $0x18] sm:$0xff]
    %v1620 = vunpack.c.l.b16 %v1612
    %v1621 = vunpack.c.h.b16 %v1612
    %v1622 = vunpack.c.l.b16 %v1613
    %v1623 = vunpack.c.h.b16 %v1613
    %v1624 = vunpack.c.l.b16 %v1614
    %v1625 = vunpack.c.h.b16 %v1614
    %v1626 = vunpack.c.l.b16 %v1615
    %v1627 = vunpack.c.h.b16 %v1615
    %v1628 = vpack.c.b16 %v1622, %v1620
    %v1629 = vpack.c.b16 %v1623, %v1621
    %v1630 = vpack.c.b16 %v1626, %v1624
    %v1631 = vpack.c.b16 %v1627, %v1625
    %v1637 = vsel %vm652, %v1609, 0
    %v1640 = vsel %vm652, %v1610, 0
    %1642 = vmatprep.subr.bf16.mxu0 %v1629
    %1643 = vmatpush1.bf16.msra.mxu0 %v1628
    %1644 = vmatprep.subr.bf16.mxu0 %v1631
    %1645 = vmatpush1.bf16.msra.mxu0 %v1630
    %1646 = vmatprep.subr.bf16.mxu0 0
    %1647 = vmatpush1.bf16.msra.mxu0 0
    %1648 = vmatprep.subr.bf16.mxu0 0
    %1649 = vmatpush1.bf16.msra.mxu0 0
    %1650 = vmatprep.subr.bf16.mxu0 0
    %1651 = vmatpush1.bf16.msra.mxu0 0
    %1652 = vmatprep.subr.bf16.mxu0 0
    %1653 = vmatpush1.bf16.msra.mxu0 0
    %1654 = vmatprep.subr.bf16.mxu0 0
    %1655 = vmatpush1.bf16.msra.mxu0 0
    %1656 = vmatprep.subr.bf16.mxu0 0
    %1657 = vmatpush1.bf16.msra.mxu0 0
    %1658 = vmatprep.subr.bf16.mxu0 0
    %1659 = vmatpush1.bf16.msra.mxu0 0
    %1660 = vmatprep.subr.bf16.mxu0 0
    %1661 = vmatpush1.bf16.msra.mxu0 0
    %1662 = vmatprep.subr.bf16.mxu0 0
    %1663 = vmatpush1.bf16.msra.mxu0 0
    %1664 = vmatprep.subr.bf16.mxu0 0
    %1665 = vmatpush1.bf16.msra.mxu0 0
    %1666 = vmatprep.subr.bf16.mxu0 0
    %1667 = vmatpush1.bf16.msra.mxu0 0
    %1668 = vmatprep.subr.bf16.mxu0 0
    %1669 = vmatpush1.bf16.msra.mxu0 0
    %1670 = vmatprep.subr.bf16.mxu0 0
    %1671 = vmatpush1.bf16.msra.mxu0 0
    %1672 = vmatprep.subr.bf16.mxu0 0
    %1673 = vmatpush1.bf16.msra.mxu0 0
    %1674 = vmatprep.mubr.bf16.mxu0 0
    %1675 = vmatmul.mubr.bf16.gmra.mrb[0].mxu0 %v1637
    %v1676 = vpop.f32.mrb[0].mxu0
    %v1677 = vadd.f32 0.0, %v1676
    %v1678 = vpop.f32.mrb[0].mxu0
    %v1679 = vadd.f32 0.0, %v1678
    %v1680 = vpop.f32.mrb[0].mxu0
    %v1681 = vadd.f32 0.0, %v1680
    %v1682 = vpop.f32.mrb[0].mxu0
    %v1683 = vadd.f32 0.0, %v1682
    %1684 = vmatprep.mubr.bf16.mxu0 0
    %1685 = vmatmul.mubr.bf16.gmra.mrb[0].mxu0 %v1640
    %v1686 = vpop.f32.mrb[0].mxu0
    %v1687 = vadd.f32 0.0, %v1686
    %v1688 = vpop.f32.mrb[0].mxu0
    %v1689 = vadd.f32 0.0, %v1688
    %v1690 = vpop.f32.mrb[0].mxu0
    %v1691 = vpop.f32.mrb[0].mxu0
    %1692 = vdwg.mxu0
    %v1693 = vadd.f32 %v1541, %v1677
    %v1694 = vadd.f32 %v1542, %v1679
    %v1695 = vadd.f32 %v1543, %v1681
    %v1696 = vadd.f32 %v1544, %v1683
    %v1697 = vadd.f32 %v1545, %v1687
    %v1698 = vadd.f32 %v1546, %v1689
    %s1699 = scalar_lea.vmem [#allocation2], 96
    %v1700 = vld [vmem:[%s1699] sm:$0xf]
    %v1701 = vld [vmem:[%s1699 + $0x4] sm:$0xf]
    %v1702 = vld [vmem:[%s1699 + $0x8] sm:$0x1]
    %v1706 = vunpack.c.l.b16 %v1700
    %v1707 = vunpack.c.l.b16 %v1701
    %v1708 = vunpack.c.l.b16 %v1702
    %v1709 = vpack.c.b16 %v1707, %v1706
    %v1710 = vpack.c.b16 %v1708, %v1708
    %1713 = vmatprep.subr.bf16.mxu0 0
    %1714 = vmatpush1.bf16.msra.mxu0 %v488
    %1715 = vmatprep.subr.bf16.mxu0 0
    %1716 = vmatpush1.bf16.msra.mxu0 %v489
    %1717 = vmatprep.subr.bf16.mxu0 0
    %1718 = vmatpush1.bf16.msra.mxu0 %v490
    %1719 = vmatprep.subr.bf16.mxu0 0
    %1720 = vmatpush1.bf16.msra.mxu0 %v491
    %1721 = vmatprep.subr.bf16.mxu0 0
    %1722 = vmatpush1.bf16.msra.mxu0 %v492
    %1723 = vmatprep.subr.bf16.mxu0 0
    %1724 = vmatpush1.bf16.msra.mxu0 %v493
    %1725 = vmatprep.subr.bf16.mxu0 0
    %1726 = vmatpush1.bf16.msra.mxu0 %v494
    %1727 = vmatprep.subr.bf16.mxu0 0
    %1728 = vmatpush1.bf16.msra.mxu0 %v495
    %1729 = vmatprep.subr.bf16.mxu0 0
    %1730 = vmatpush1.bf16.msra.mxu0 0
    %1731 = vmatprep.subr.bf16.mxu0 0
    %1732 = vmatpush1.bf16.msra.mxu0 0
    %1733 = vmatprep.subr.bf16.mxu0 0
    %1734 = vmatpush1.bf16.msra.mxu0 0
    %1735 = vmatprep.subr.bf16.mxu0 0
    %1736 = vmatpush1.bf16.msra.mxu0 0
    %1737 = vmatprep.subr.bf16.mxu0 0
    %1738 = vmatpush1.bf16.msra.mxu0 0
    %1739 = vmatprep.subr.bf16.mxu0 0
    %1740 = vmatpush1.bf16.msra.mxu0 0
    %1741 = vmatprep.subr.bf16.mxu0 0
    %1742 = vmatpush1.bf16.msra.mxu0 0
    %1743 = vmatprep.subr.bf16.mxu0 0
    %1744 = vmatpush1.bf16.msra.mxu0 0
    %1745 = vmatprep.mubr.bf16.mxu0 0
    %1746 = vmatmul.mubr.bf16.gmra.mrb[0].mxu0 %v1709
    %v1747 = vpop.f32.mrb[0].mxu0
    %v1748 = vadd.f32 0.0, %v1747
    %v1749 = vpop.f32.mrb[0].mxu0
    %v1750 = vpop.f32.mrb[0].mxu0
    %v1751 = vadd.f32 0.0, %v1750
    %v1752 = vpop.f32.mrb[0].mxu0
    %1753 = vmatprep.mubr.bf16.mxu0 0
    %1754 = vmatmul.mubr.bf16.gmra.mrb[0].mxu0 %v1710
    %v1755 = vpop.f32.mrb[0].mxu0
    %v1756 = vadd.f32 0.0, %v1755
    %v1757 = vpop.f32.mrb[0].mxu0
    %v1758 = vpop.f32.mrb[0].mxu0
    %v1759 = vpop.f32.mrb[0].mxu0
    %1760 = vdwg.mxu0
    %v1761 = vpack.c.bf16 %v1751, %v1748
    %v1762 = vpack.c.bf16 %v1756, %v1756
    %s1763 = scalar_lea.vmem [#allocation8], 256
    %v1764 = vld [vmem:[%s1763] sm:$0xff]
    %v1765 = vld [vmem:[%s1763 + $0x8] sm:$0xff]
    %v1766 = vld [vmem:[%s1763 + $0x10] sm:$0xff]
    %v1767 = vld [vmem:[%s1763 + $0x18] sm:$0xff]
    %v1772 = vunpack.c.l.b16 %v1764
    %v1773 = vunpack.c.h.b16 %v1764
    %v1774 = vunpack.c.l.b16 %v1765
    %v1775 = vunpack.c.h.b16 %v1765
    %v1776 = vunpack.c.l.b16 %v1766
    %v1777 = vunpack.c.h.b16 %v1766
    %v1778 = vunpack.c.l.b16 %v1767
    %v1779 = vunpack.c.h.b16 %v1767
    %v1780 = vpack.c.b16 %v1774, %v1772
    %v1781 = vpack.c.b16 %v1775, %v1773
    %v1782 = vpack.c.b16 %v1778, %v1776
    %v1783 = vpack.c.b16 %v1779, %v1777
    %v1789 = vsel %vm652, %v1761, 0
    %v1792 = vsel %vm652, %v1762, 0
    %1794 = vmatprep.subr.bf16.mxu0 %v1781
    %1795 = vmatpush1.bf16.msra.mxu0 %v1780
    %1796 = vmatprep.subr.bf16.mxu0 %v1783
    %1797 = vmatpush1.bf16.msra.mxu0 %v1782
    %1798 = vmatprep.subr.bf16.mxu0 0
    %1799 = vmatpush1.bf16.msra.mxu0 0
    %1800 = vmatprep.subr.bf16.mxu0 0
    %1801 = vmatpush1.bf16.msra.mxu0 0
    %1802 = vmatprep.subr.bf16.mxu0 0
    %1803 = vmatpush1.bf16.msra.mxu0 0
    %1804 = vmatprep.subr.bf16.mxu0 0
    %1805 = vmatpush1.bf16.msra.mxu0 0
    %1806 = vmatprep.subr.bf16.mxu0 0
    %1807 = vmatpush1.bf16.msra.mxu0 0
    %1808 = vmatprep.subr.bf16.mxu0 0
    %1809 = vmatpush1.bf16.msra.mxu0 0
    %1810 = vmatprep.subr.bf16.mxu0 0
    %1811 = vmatpush1.bf16.msra.mxu0 0
    %1812 = vmatprep.subr.bf16.mxu0 0
    %1813 = vmatpush1.bf16.msra.mxu0 0
    %1814 = vmatprep.subr.bf16.mxu0 0
    %1815 = vmatpush1.bf16.msra.mxu0 0
    %1816 = vmatprep.subr.bf16.mxu0 0
    %1817 = vmatpush1.bf16.msra.mxu0 0
    %1818 = vmatprep.subr.bf16.mxu0 0
    %1819 = vmatpush1.bf16.msra.mxu0 0
    %1820 = vmatprep.subr.bf16.mxu0 0
    %1821 = vmatpush1.bf16.msra.mxu0 0
    %1822 = vmatprep.subr.bf16.mxu0 0
    %1823 = vmatpush1.bf16.msra.mxu0 0
    %1824 = vmatprep.subr.bf16.mxu0 0
    %1825 = vmatpush1.bf16.msra.mxu0 0
    %1826 = vmatprep.mubr.bf16.mxu0 0
    %1827 = vmatmul.mubr.bf16.gmra.mrb[0].mxu0 %v1789
    %v1828 = vpop.f32.mrb[0].mxu0
    %v1829 = vadd.f32 0.0, %v1828
    %v1830 = vpop.f32.mrb[0].mxu0
    %v1831 = vadd.f32 0.0, %v1830
    %v1832 = vpop.f32.mrb[0].mxu0
    %v1833 = vadd.f32 0.0, %v1832
    %v1834 = vpop.f32.mrb[0].mxu0
    %v1835 = vadd.f32 0.0, %v1834
    %1836 = vmatprep.mubr.bf16.mxu0 0
    %1837 = vmatmul.mubr.bf16.gmra.mrb[0].mxu0 %v1792
    %v1838 = vpop.f32.mrb[0].mxu0
    %v1839 = vadd.f32 0.0, %v1838
    %v1840 = vpop.f32.mrb[0].mxu0
    %v1841 = vadd.f32 0.0, %v1840
    %v1842 = vpop.f32.mrb[0].mxu0
    %v1843 = vpop.f32.mrb[0].mxu0
    %1844 = vdwg.mxu0
    %v1845 = vadd.f32 %v1693, %v1829
    %v1846 = vadd.f32 %v1694, %v1831
    %v1847 = vadd.f32 %v1695, %v1833
    %v1848 = vadd.f32 %v1696, %v1835
    %v1849 = vadd.f32 %v1697, %v1839
    %v1850 = vadd.f32 %v1698, %v1841
    %v1851 = vld [vmem:[#allocation10] sm:$0x3]
    %v1852 = vld [vmem:[#allocation11] sm:$0x3]
    %v1853 = vadd.f32 %v1845, %v1847
    %vm1854 = vcmask 1041408
    %v1855 = vsel %vm1854, %v1849, 0.0
    %v1856 = vadd.f32 %v1853, %v1855
    %v1857 = vrot.slane %v1856, 4
    %v1858 = vadd.f32 %v1856, %v1857
    %v1859 = vrot.slane %v1858, 2
    %v1860 = vadd.f32 %v1858, %v1859
    %v1861 = vrot.slane %v1860, 1
    %v1862 = vadd.f32 %v1860, %v1861
    %v1863 = vadd.f32 %v1846, %v1848
    %v1864 = vsel %vm1854, %v1850, 0.0
    %v1865 = vadd.f32 %v1863, %v1864
    %v1866 = vrot.slane %v1865, 4
    %v1867 = vadd.f32 %v1865, %v1866
    %v1868 = vrot.slane %v1867, 2
    %v1869 = vadd.f32 %v1867, %v1868
    %v1870 = vrot.slane %v1869, 1
    %v1871 = vadd.f32 %v1869, %v1870
    %v1872 = vrcp.pop 18.0
    %v1873 = vmul.f32 %v1862, %v1872
    %v1874 = vmul.f32 %v1871, %v1872
    %v1875 = vsub.f32 %v1845, %v1873
    %v1876 = vsub.f32 %v1846, %v1874
    %v1877 = vsub.f32 %v1847, %v1873
    %v1878 = vsub.f32 %v1848, %v1874
    %v1879 = vsub.f32 %v1849, %v1873
    %v1880 = vsub.f32 %v1850, %v1874
    %v1881 = vmul.f32 %v1875, %v1875
    %v1882 = vmul.f32 %v1876, %v1876
    %v1883 = vmul.f32 %v1877, %v1877
    %v1884 = vmul.f32 %v1878, %v1878
    %v1885 = vmul.f32 %v1879, %v1879
    %v1886 = vmul.f32 %v1880, %v1880
    %v1887 = vadd.f32 %v1881, %v1883
    %v1888 = vsel %vm1854, %v1885, 0.0
    %v1889 = vadd.f32 %v1887, %v1888
    %v1890 = vrot.slane %v1889, 4
    %v1891 = vadd.f32 %v1889, %v1890
    %v1892 = vrot.slane %v1891, 2
    %v1893 = vadd.f32 %v1891, %v1892
    %v1894 = vrot.slane %v1893, 1
    %v1895 = vadd.f32 %v1893, %v1894
    %v1896 = vadd.f32 %v1882, %v1884
    %v1897 = vsel %vm1854, %v1886, 0.0
    %v1898 = vadd.f32 %v1896, %v1897
    %v1899 = vrot.slane %v1898, 4
    %v1900 = vadd.f32 %v1898, %v1899
    %v1901 = vrot.slane %v1900, 2
    %v1902 = vadd.f32 %v1900, %v1901
    %v1903 = vrot.slane %v1902, 1
    %v1904 = vadd.f32 %v1902, %v1903
    %v1905 = vmul.f32 %v1895, %v1872
    %v1906 = vmul.f32 %v1904, %v1872
    %v1907 = vadd.f32 %v1905, 1e-05
    %v1908 = vadd.f32 %v1906, 1e-05
    %v1909 = vrsqrt.pop %v1907
    %v1910 = vrsqrt.pop %v1908
    %v1911 = vmul.f32 %v1875, %v1909
    %v1912 = vmul.f32 %v1876, %v1910
    %v1913 = vmul.f32 %v1877, %v1909
    %v1914 = vmul.f32 %v1878, %v1910
    %v1915 = vmul.f32 %v1879, %v1909
    %v1916 = vmul.f32 %v1880, %v1910
    %v1918 = vlaneseq
    %v1919 = vshrl.u32 %v1918, 7
    %v1920 = vsub.s32 0, %v1919
    %v1921 = vrot.slane %v1851, %v1920
    %v1922 = vlaneseq
    %v1923 = vshrl.u32 %v1922, 7
    %v1924 = vsub.s32 1, %v1923
    %v1925 = vrot.slane %v1851, %v1924
    %v1928 = vmul.f32 %v1921, %v1911
    %v1929 = vmul.f32 %v1925, %v1912
    %v1930 = vmul.f32 %v1921, %v1913
    %v1931 = vmul.f32 %v1925, %v1914
    %v1932 = vmul.f32 %v1921, %v1915
    %v1933 = vmul.f32 %v1925, %v1916
    %v1935 = vlaneseq
    %v1936 = vshrl.u32 %v1935, 7
    %v1937 = vsub.s32 0, %v1936
    %v1938 = vrot.slane %v1852, %v1937
    %v1939 = vlaneseq
    %v1940 = vshrl.u32 %v1939, 7
    %v1941 = vsub.s32 1, %v1940
    %v1942 = vrot.slane %v1852, %v1941
    %v1945 = vadd.f32 %v1928, %v1938
    %v1946 = vadd.f32 %v1929, %v1942
    %v1947 = vadd.f32 %v1930, %v1938
    %v1948 = vadd.f32 %v1931, %v1942
    %v1949 = vadd.f32 %v1932, %v1938
    %v1950 = vadd.f32 %v1933, %v1942
    %v1951 = vmax.f32 %v1945, 0.0
    %v1952 = vmax.f32 %v1946, 0.0
    %v1953 = vmax.f32 %v1947, 0.0
    %v1954 = vmax.f32 %v1948, 0.0
    %v1955 = vmax.f32 %v1949, 0.0
    %v1956 = vmax.f32 %v1950, 0.0
    %v1957 = vpack.c.bf16 %v1953, %v1951
    %v1958 = vpack.c.bf16 %v1954, %v1952
    %v1959 = vpack.c.bf16 %v1955, %v1955
    %v1960 = vpack.c.bf16 %v1956, %v1956
    %v1961 = vld [vmem:[#allocation5] sm:$0x1]
    %vm1962 = vcmask 146432
    %v1964 = vsel %vm1962, %v1961, 0
    %vm1966 = vcmask 1040384
    %v1968 = vsel %vm1966, %v1959, 0
    %v1971 = vsel %vm1966, %v1960, 0
    %1973 = vmatprep.subr.bf16.mxu0 %v1958
    %1974 = vmatpush1.bf16.msra.mxu0 %v1957
    %1975 = vmatprep.subr.bf16.mxu0 %v1971
    %1976 = vmatpush1.bf16.msra.mxu0 %v1968
    %1977 = vmatprep.subr.bf16.mxu0 0
    %1978 = vmatpush1.bf16.msra.mxu0 0
    %1979 = vmatprep.subr.bf16.mxu0 0
    %1980 = vmatpush1.bf16.msra.mxu0 0
    %1981 = vmatprep.subr.bf16.mxu0 0
    %1982 = vmatpush1.bf16.msra.mxu0 0
    %1983 = vmatprep.subr.bf16.mxu0 0
    %1984 = vmatpush1.bf16.msra.mxu0 0
    %1985 = vmatprep.subr.bf16.mxu0 0
    %1986 = vmatpush1.bf16.msra.mxu0 0
    %1987 = vmatprep.subr.bf16.mxu0 0
    %1988 = vmatpush1.bf16.msra.mxu0 0
    %1989 = vmatprep.subr.bf16.mxu0 0
    %1990 = vmatpush1.bf16.msra.mxu0 0
    %1991 = vmatprep.subr.bf16.mxu0 0
    %1992 = vmatpush1.bf16.msra.mxu0 0
    %1993 = vmatprep.subr.bf16.mxu0 0
    %1994 = vmatpush1.bf16.msra.mxu0 0
    %1995 = vmatprep.subr.bf16.mxu0 0
    %1996 = vmatpush1.bf16.msra.mxu0 0
    %1997 = vmatprep.subr.bf16.mxu0 0
    %1998 = vmatpush1.bf16.msra.mxu0 0
    %1999 = vmatprep.subr.bf16.mxu0 0
    %2000 = vmatpush1.bf16.msra.mxu0 0
    %2001 = vmatprep.subr.bf16.mxu0 0
    %2002 = vmatpush1.bf16.msra.mxu0 0
    %2003 = vmatprep.subr.bf16.mxu0 0
    %2004 = vmatpush1.bf16.msra.mxu0 0
    %2005 = vmatprep.mubr.bf16.mxu0 0
    %2006 = vmatmul.mubr.bf16.gmra.mrb[0].mxu0 %v1964
    %v2007 = vpop.f32.mrb[0].mxu0
    %v2008 = vadd.f32 0.0, %v2007
    %v2009 = vpop.f32.mrb[0].mxu0
    %v2010 = vadd.f32 0.0, %v2009
    %v2011 = vpop.f32.mrb[0].mxu0
    %v2012 = vpop.f32.mrb[0].mxu0
    %2013 = vdwg.mxu0
    %v2014 = vpack.c.bf16 %v2008, %v2008
    %v2015 = vpack.c.bf16 %v2010, %v2010
    %v2016 = vld [vmem:[#allocation13] sm:$0xff]
    %v2017 = vld [vmem:[#allocation13 + $0x8] sm:$0xff]
    %v2018 = vld [vmem:[#allocation13 + $0x10] sm:$0xff]
    %v2019 = vld [vmem:[#allocation13 + $0x18] sm:$0xff]
    %v2020 = vld [vmem:[#allocation13 + $0x20] sm:$0xff]
    %v2021 = vld [vmem:[#allocation13 + $0x28] sm:$0xff]
    %v2022 = vld [vmem:[#allocation13 + $0x30] sm:$0xff]
    %v2023 = vld [vmem:[#allocation13 + $0x38] sm:$0xff]
    %v2024 = vld [vmem:[#allocation13 + $0x40] sm:$0xff]
    %v2025 = vld [vmem:[#allocation13 + $0x48] sm:$0xff]
    %v2026 = vld [vmem:[#allocation13 + $0x50] sm:$0xff]
    %v2027 = vld [vmem:[#allocation13 + $0x58] sm:$0xff]
    %v2028 = vld [vmem:[#allocation13 + $0x60] sm:$0xff]
    %v2029 = vld [vmem:[#allocation13 + $0x68] sm:$0xff]
    %v2030 = vld [vmem:[#allocation13 + $0x70] sm:$0xff]
    %v2031 = vld [vmem:[#allocation13 + $0x78] sm:$0xff]
    %v2032 = vld [vmem:[#allocation13 + $0x80] sm:$0xff]
    %v2033 = vld [vmem:[#allocation13 + $0x88] sm:$0xff]
    %v2034 = vld [vmem:[#allocation13 + $0x90] sm:$0xff]
    %v2035 = vld [vmem:[#allocation13 + $0x98] sm:$0xff]
    %v2036 = vld [vmem:[#allocation13 + $0xa0] sm:$0xff]
    %v2037 = vld [vmem:[#allocation13 + $0xa8] sm:$0xff]
    %v2038 = vld [vmem:[#allocation13 + $0xb0] sm:$0xff]
    %v2039 = vld [vmem:[#allocation13 + $0xb8] sm:$0xff]
    %v2040 = vld [vmem:[#allocation13 + $0xc0] sm:$0xff]
    %v2041 = vld [vmem:[#allocation13 + $0xc8] sm:$0xff]
    %v2042 = vld [vmem:[#allocation13 + $0xd0] sm:$0xff]
    %v2043 = vld [vmem:[#allocation13 + $0xd8] sm:$0xff]
    %v2044 = vld [vmem:[#allocation13 + $0xe0] sm:$0xff]
    %v2045 = vld [vmem:[#allocation13 + $0xe8] sm:$0xff]
    %v2046 = vld [vmem:[#allocation13 + $0xf0] sm:$0xff]
    %v2047 = vld [vmem:[#allocation13 + $0xf8] sm:$0xff]
    %v2048 = vld [vmem:[#allocation13 + $0x100] sm:$0xff]
    %v2049 = vld [vmem:[#allocation13 + $0x108] sm:$0xff]
    %v2050 = vld [vmem:[#allocation13 + $0x110] sm:$0xff]
    %v2051 = vld [vmem:[#allocation13 + $0x118] sm:$0xff]
    %v2052 = vld [vmem:[#allocation13 + $0x120] sm:$0xff]
    %v2053 = vld [vmem:[#allocation13 + $0x128] sm:$0xff]
    %v2054 = vld [vmem:[#allocation13 + $0x130] sm:$0xff]
    %v2055 = vld [vmem:[#allocation13 + $0x138] sm:$0xff]
    %v2056 = vld [vmem:[#allocation13 + $0x140] sm:$0xff]
    %v2057 = vld [vmem:[#allocation13 + $0x148] sm:$0xff]
    %v2058 = vld [vmem:[#allocation13 + $0x150] sm:$0xff]
    %v2059 = vld [vmem:[#allocation13 + $0x158] sm:$0xff]
    %v2060 = vld [vmem:[#allocation13 + $0x160] sm:$0xff]
    %v2061 = vld [vmem:[#allocation13 + $0x168] sm:$0xff]
    %v2062 = vld [vmem:[#allocation13 + $0x170] sm:$0xff]
    %v2063 = vld [vmem:[#allocation13 + $0x178] sm:$0xff]
    %v2064 = vld [vmem:[#allocation13 + $0x180] sm:$0xff]
    %v2065 = vld [vmem:[#allocation13 + $0x188] sm:$0xff]
    %v2066 = vld [vmem:[#allocation13 + $0x190] sm:$0xff]
    %v2067 = vld [vmem:[#allocation13 + $0x198] sm:$0xff]
    %v2068 = vld [vmem:[#allocation13 + $0x1a0] sm:$0xff]
    %v2069 = vld [vmem:[#allocation13 + $0x1a8] sm:$0xff]
    %v2070 = vld [vmem:[#allocation13 + $0x1b0] sm:$0xff]
    %v2071 = vld [vmem:[#allocation13 + $0x1b8] sm:$0xff]
    %v2072 = vld [vmem:[#allocation13 + $0x1c0] sm:$0xff]
    %v2073 = vld [vmem:[#allocation13 + $0x1c8] sm:$0xff]
    %v2074 = vld [vmem:[#allocation13 + $0x1d0] sm:$0xff]
    %v2075 = vld [vmem:[#allocation13 + $0x1d8] sm:$0xff]
    %v2076 = vld [vmem:[#allocation13 + $0x1e0] sm:$0xff]
    %v2077 = vld [vmem:[#allocation13 + $0x1e8] sm:$0xff]
    %v2078 = vld [vmem:[#allocation13 + $0x1f0] sm:$0xff]
    %v2079 = vld [vmem:[#allocation13 + $0x1f8] sm:$0xff]
    %s2080 = scalar_lea.vmem [#allocation5], 1
    %v2081 = vld [vmem:[%s2080] sm:$0x1]
    %v2083 = vsel %vm1962, %v2081, 0
    %2085 = vmatprep.subr.bf16.mxu0 %v1958
    %2086 = vmatpush1.bf16.msra.mxu0 %v1957
    %2087 = vmatprep.subr.bf16.mxu0 %v1971
    %2088 = vmatpush1.bf16.msra.mxu0 %v1968
    %2089 = vmatprep.subr.bf16.mxu0 0
    %2090 = vmatpush1.bf16.msra.mxu0 0
    %2091 = vmatprep.subr.bf16.mxu0 0
    %2092 = vmatpush1.bf16.msra.mxu0 0
    %2093 = vmatprep.subr.bf16.mxu0 0
    %2094 = vmatpush1.bf16.msra.mxu0 0
    %2095 = vmatprep.subr.bf16.mxu0 0
    %2096 = vmatpush1.bf16.msra.mxu0 0
    %2097 = vmatprep.subr.bf16.mxu0 0
    %2098 = vmatpush1.bf16.msra.mxu0 0
    %2099 = vmatprep.subr.bf16.mxu0 0
    %2100 = vmatpush1.bf16.msra.mxu0 0
    %2101 = vmatprep.subr.bf16.mxu0 0
    %2102 = vmatpush1.bf16.msra.mxu0 0
    %2103 = vmatprep.subr.bf16.mxu0 0
    %2104 = vmatpush1.bf16.msra.mxu0 0
    %2105 = vmatprep.subr.bf16.mxu0 0
    %2106 = vmatpush1.bf16.msra.mxu0 0
    %2107 = vmatprep.subr.bf16.mxu0 0
    %2108 = vmatpush1.bf16.msra.mxu0 0
    %2109 = vmatprep.subr.bf16.mxu0 0
    %2110 = vmatpush1.bf16.msra.mxu0 0
    %2111 = vmatprep.subr.bf16.mxu0 0
    %2112 = vmatpush1.bf16.msra.mxu0 0
    %2113 = vmatprep.subr.bf16.mxu0 0
    %2114 = vmatpush1.bf16.msra.mxu0 0
    %2115 = vmatprep.subr.bf16.mxu0 0
    %2116 = vmatpush1.bf16.msra.mxu0 0
    %2117 = vmatprep.mubr.bf16.mxu0 0
    %2118 = vmatmul.mubr.bf16.gmra.mrb[0].mxu0 %v2083
    %v2119 = vpop.f32.mrb[0].mxu0
    %v2120 = vadd.f32 0.0, %v2119
    %v2121 = vpop.f32.mrb[0].mxu0
    %v2122 = vadd.f32 0.0, %v2121
    %v2123 = vpop.f32.mrb[0].mxu0
    %v2124 = vpop.f32.mrb[0].mxu0
    %2125 = vdwg.mxu0
    %v2126 = vpack.c.bf16 %v2120, %v2120
    %v2127 = vpack.c.bf16 %v2122, %v2122
    %s2128 = scalar_lea.vmem [#allocation13], 512
    %v2129 = vld [vmem:[%s2128] sm:$0xff]
    %v2130 = vld [vmem:[%s2128 + $0x8] sm:$0xff]
    %v2131 = vld [vmem:[%s2128 + $0x10] sm:$0xff]
    %v2132 = vld [vmem:[%s2128 + $0x18] sm:$0xff]
    %v2133 = vld [vmem:[%s2128 + $0x20] sm:$0xff]
    %v2134 = vld [vmem:[%s2128 + $0x28] sm:$0xff]
    %v2135 = vld [vmem:[%s2128 + $0x30] sm:$0xff]
    %v2136 = vld [vmem:[%s2128 + $0x38] sm:$0xff]
    %v2137 = vld [vmem:[%s2128 + $0x40] sm:$0xff]
    %v2138 = vld [vmem:[%s2128 + $0x48] sm:$0xff]
    %v2139 = vld [vmem:[%s2128 + $0x50] sm:$0xff]
    %v2140 = vld [vmem:[%s2128 + $0x58] sm:$0xff]
    %v2141 = vld [vmem:[%s2128 + $0x60] sm:$0xff]
    %v2142 = vld [vmem:[%s2128 + $0x68] sm:$0xff]
    %v2143 = vld [vmem:[%s2128 + $0x70] sm:$0xff]
    %v2144 = vld [vmem:[%s2128 + $0x78] sm:$0xff]
    %v2145 = vld [vmem:[%s2128 + $0x80] sm:$0xff]
    %v2146 = vld [vmem:[%s2128 + $0x88] sm:$0xff]
    %v2147 = vld [vmem:[%s2128 + $0x90] sm:$0xff]
    %v2148 = vld [vmem:[%s2128 + $0x98] sm:$0xff]
    %v2149 = vld [vmem:[%s2128 + $0xa0] sm:$0xff]
    %v2150 = vld [vmem:[%s2128 + $0xa8] sm:$0xff]
    %v2151 = vld [vmem:[%s2128 + $0xb0] sm:$0xff]
    %v2152 = vld [vmem:[%s2128 + $0xb8] sm:$0xff]
    %v2153 = vld [vmem:[%s2128 + $0xc0] sm:$0xff]
    %v2154 = vld [vmem:[%s2128 + $0xc8] sm:$0xff]
    %v2155 = vld [vmem:[%s2128 + $0xd0] sm:$0xff]
    %v2156 = vld [vmem:[%s2128 + $0xd8] sm:$0xff]
    %v2157 = vld [vmem:[%s2128 + $0xe0] sm:$0xff]
    %v2158 = vld [vmem:[%s2128 + $0xe8] sm:$0xff]
    %v2159 = vld [vmem:[%s2128 + $0xf0] sm:$0xff]
    %v2160 = vld [vmem:[%s2128 + $0xf8] sm:$0xff]
    %v2161 = vld [vmem:[%s2128 + $0x100] sm:$0xff]
    %v2162 = vld [vmem:[%s2128 + $0x108] sm:$0xff]
    %v2163 = vld [vmem:[%s2128 + $0x110] sm:$0xff]
    %v2164 = vld [vmem:[%s2128 + $0x118] sm:$0xff]
    %v2165 = vld [vmem:[%s2128 + $0x120] sm:$0xff]
    %v2166 = vld [vmem:[%s2128 + $0x128] sm:$0xff]
    %v2167 = vld [vmem:[%s2128 + $0x130] sm:$0xff]
    %v2168 = vld [vmem:[%s2128 + $0x138] sm:$0xff]
    %v2169 = vld [vmem:[%s2128 + $0x140] sm:$0xff]
    %v2170 = vld [vmem:[%s2128 + $0x148] sm:$0xff]
    %v2171 = vld [vmem:[%s2128 + $0x150] sm:$0xff]
    %v2172 = vld [vmem:[%s2128 + $0x158] sm:$0xff]
    %v2173 = vld [vmem:[%s2128 + $0x160] sm:$0xff]
    %v2174 = vld [vmem:[%s2128 + $0x168] sm:$0xff]
    %v2175 = vld [vmem:[%s2128 + $0x170] sm:$0xff]
    %v2176 = vld [vmem:[%s2128 + $0x178] sm:$0xff]
    %v2177 = vld [vmem:[%s2128 + $0x180] sm:$0xff]
    %v2178 = vld [vmem:[%s2128 + $0x188] sm:$0xff]
    %v2179 = vld [vmem:[%s2128 + $0x190] sm:$0xff]
    %v2180 = vld [vmem:[%s2128 + $0x198] sm:$0xff]
    %v2181 = vld [vmem:[%s2128 + $0x1a0] sm:$0xff]
    %v2182 = vld [vmem:[%s2128 + $0x1a8] sm:$0xff]
    %v2183 = vld [vmem:[%s2128 + $0x1b0] sm:$0xff]
    %v2184 = vld [vmem:[%s2128 + $0x1b8] sm:$0xff]
    %v2185 = vld [vmem:[%s2128 + $0x1c0] sm:$0xff]
    %v2186 = vld [vmem:[%s2128 + $0x1c8] sm:$0xff]
    %v2187 = vld [vmem:[%s2128 + $0x1d0] sm:$0xff]
    %v2188 = vld [vmem:[%s2128 + $0x1d8] sm:$0xff]
    %v2189 = vld [vmem:[%s2128 + $0x1e0] sm:$0xff]
    %v2190 = vld [vmem:[%s2128 + $0x1e8] sm:$0xff]
    %v2191 = vld [vmem:[%s2128 + $0x1f0] sm:$0xff]
    %v2192 = vld [vmem:[%s2128 + $0x1f8] sm:$0xff]
    %v2257 = vunpack.c.l.b16 %v2129
    %v2258 = vunpack.c.h.b16 %v2129
    %v2259 = vunpack.c.l.b16 %v2130
    %v2260 = vunpack.c.h.b16 %v2130
    %v2261 = vunpack.c.l.b16 %v2131
    %v2262 = vunpack.c.h.b16 %v2131
    %v2263 = vunpack.c.l.b16 %v2132
    %v2264 = vunpack.c.h.b16 %v2132
    %v2265 = vunpack.c.l.b16 %v2133
    %v2266 = vunpack.c.h.b16 %v2133
    %v2267 = vunpack.c.l.b16 %v2134
    %v2268 = vunpack.c.h.b16 %v2134
    %v2269 = vunpack.c.l.b16 %v2135
    %v2270 = vunpack.c.h.b16 %v2135
    %v2271 = vunpack.c.l.b16 %v2136
    %v2272 = vunpack.c.h.b16 %v2136
    %v2273 = vunpack.c.l.b16 %v2137
    %v2274 = vunpack.c.h.b16 %v2137
    %v2275 = vunpack.c.l.b16 %v2138
    %v2276 = vunpack.c.h.b16 %v2138
    %v2277 = vunpack.c.l.b16 %v2139
    %v2278 = vunpack.c.h.b16 %v2139
    %v2279 = vunpack.c.l.b16 %v2140
    %v2280 = vunpack.c.h.b16 %v2140
    %v2281 = vunpack.c.l.b16 %v2141
    %v2282 = vunpack.c.h.b16 %v2141
    %v2283 = vunpack.c.l.b16 %v2142
    %v2284 = vunpack.c.h.b16 %v2142
    %v2285 = vunpack.c.l.b16 %v2143
    %v2286 = vunpack.c.h.b16 %v2143
    %v2287 = vunpack.c.l.b16 %v2144
    %v2288 = vunpack.c.h.b16 %v2144
    %v2289 = vunpack.c.l.b16 %v2145
    %v2290 = vunpack.c.h.b16 %v2145
    %v2291 = vunpack.c.l.b16 %v2146
    %v2292 = vunpack.c.h.b16 %v2146
    %v2293 = vunpack.c.l.b16 %v2147
    %v2294 = vunpack.c.h.b16 %v2147
    %v2295 = vunpack.c.l.b16 %v2148
    %v2296 = vunpack.c.h.b16 %v2148
    %v2297 = vunpack.c.l.b16 %v2149
    %v2298 = vunpack.c.h.b16 %v2149
    %v2299 = vunpack.c.l.b16 %v2150
    %v2300 = vunpack.c.h.b16 %v2150
    %v2301 = vunpack.c.l.b16 %v2151
    %v2302 = vunpack.c.h.b16 %v2151
    %v2303 = vunpack.c.l.b16 %v2152
    %v2304 = vunpack.c.h.b16 %v2152
    %v2305 = vunpack.c.l.b16 %v2153
    %v2306 = vunpack.c.h.b16 %v2153
    %v2307 = vunpack.c.l.b16 %v2154
    %v2308 = vunpack.c.h.b16 %v2154
    %v2309 = vunpack.c.l.b16 %v2155
    %v2310 = vunpack.c.h.b16 %v2155
    %v2311 = vunpack.c.l.b16 %v2156
    %v2312 = vunpack.c.h.b16 %v2156
    %v2313 = vunpack.c.l.b16 %v2157
    %v2314 = vunpack.c.h.b16 %v2157
    %v2315 = vunpack.c.l.b16 %v2158
    %v2316 = vunpack.c.h.b16 %v2158
    %v2317 = vunpack.c.l.b16 %v2159
    %v2318 = vunpack.c.h.b16 %v2159
    %v2319 = vunpack.c.l.b16 %v2160
    %v2320 = vunpack.c.h.b16 %v2160
    %v2321 = vunpack.c.l.b16 %v2161
    %v2322 = vunpack.c.h.b16 %v2161
    %v2323 = vunpack.c.l.b16 %v2162
    %v2324 = vunpack.c.h.b16 %v2162
    %v2325 = vunpack.c.l.b16 %v2163
    %v2326 = vunpack.c.h.b16 %v2163
    %v2327 = vunpack.c.l.b16 %v2164
    %v2328 = vunpack.c.h.b16 %v2164
    %v2329 = vunpack.c.l.b16 %v2165
    %v2330 = vunpack.c.h.b16 %v2165
    %v2331 = vunpack.c.l.b16 %v2166
    %v2332 = vunpack.c.h.b16 %v2166
    %v2333 = vunpack.c.l.b16 %v2167
    %v2334 = vunpack.c.h.b16 %v2167
    %v2335 = vunpack.c.l.b16 %v2168
    %v2336 = vunpack.c.h.b16 %v2168
    %v2337 = vunpack.c.l.b16 %v2169
    %v2338 = vunpack.c.h.b16 %v2169
    %v2339 = vunpack.c.l.b16 %v2170
    %v2340 = vunpack.c.h.b16 %v2170
    %v2341 = vunpack.c.l.b16 %v2171
    %v2342 = vunpack.c.h.b16 %v2171
    %v2343 = vunpack.c.l.b16 %v2172
    %v2344 = vunpack.c.h.b16 %v2172
    %v2345 = vunpack.c.l.b16 %v2173
    %v2346 = vunpack.c.h.b16 %v2173
    %v2347 = vunpack.c.l.b16 %v2174
    %v2348 = vunpack.c.h.b16 %v2174
    %v2349 = vunpack.c.l.b16 %v2175
    %v2350 = vunpack.c.h.b16 %v2175
    %v2351 = vunpack.c.l.b16 %v2176
    %v2352 = vunpack.c.h.b16 %v2176
    %v2353 = vunpack.c.l.b16 %v2177
    %v2354 = vunpack.c.h.b16 %v2177
    %v2355 = vunpack.c.l.b16 %v2178
    %v2356 = vunpack.c.h.b16 %v2178
    %v2357 = vunpack.c.l.b16 %v2179
    %v2358 = vunpack.c.h.b16 %v2179
    %v2359 = vunpack.c.l.b16 %v2180
    %v2360 = vunpack.c.h.b16 %v2180
    %v2361 = vunpack.c.l.b16 %v2181
    %v2362 = vunpack.c.h.b16 %v2181
    %v2363 = vunpack.c.l.b16 %v2182
    %v2364 = vunpack.c.h.b16 %v2182
    %v2365 = vunpack.c.l.b16 %v2183
    %v2366 = vunpack.c.h.b16 %v2183
    %v2367 = vunpack.c.l.b16 %v2184
    %v2368 = vunpack.c.h.b16 %v2184
    %v2369 = vunpack.c.l.b16 %v2185
    %v2370 = vunpack.c.h.b16 %v2185
    %v2371 = vunpack.c.l.b16 %v2186
    %v2372 = vunpack.c.h.b16 %v2186
    %v2373 = vunpack.c.l.b16 %v2187
    %v2374 = vunpack.c.h.b16 %v2187
    %v2375 = vunpack.c.l.b16 %v2188
    %v2376 = vunpack.c.h.b16 %v2188
    %v2377 = vunpack.c.l.b16 %v2189
    %v2378 = vunpack.c.h.b16 %v2189
    %v2379 = vunpack.c.l.b16 %v2190
    %v2380 = vunpack.c.h.b16 %v2190
    %v2381 = vunpack.c.l.b16 %v2191
    %v2382 = vunpack.c.h.b16 %v2191
    %v2383 = vunpack.c.l.b16 %v2192
    %v2384 = vunpack.c.h.b16 %v2192
    %v2385 = vpack.c.b16 %v2261, %v2257
    %v2386 = vpack.c.b16 %v2262, %v2258
    %v2387 = vpack.c.b16 %v2263, %v2259
    %v2388 = vpack.c.b16 %v2264, %v2260
    %v2389 = vpack.c.b16 %v2269, %v2265
    %v2390 = vpack.c.b16 %v2270, %v2266
    %v2391 = vpack.c.b16 %v2271, %v2267
    %v2392 = vpack.c.b16 %v2272, %v2268
    %v2393 = vpack.c.b16 %v2277, %v2273
    %v2394 = vpack.c.b16 %v2278, %v2274
    %v2395 = vpack.c.b16 %v2279, %v2275
    %v2396 = vpack.c.b16 %v2280, %v2276
    %v2397 = vpack.c.b16 %v2285, %v2281
    %v2398 = vpack.c.b16 %v2286, %v2282
    %v2399 = vpack.c.b16 %v2287, %v2283
    %v2400 = vpack.c.b16 %v2288, %v2284
    %v2401 = vpack.c.b16 %v2293, %v2289
    %v2402 = vpack.c.b16 %v2294, %v2290
    %v2403 = vpack.c.b16 %v2295, %v2291
    %v2404 = vpack.c.b16 %v2296, %v2292
    %v2405 = vpack.c.b16 %v2301, %v2297
    %v2406 = vpack.c.b16 %v2302, %v2298
    %v2407 = vpack.c.b16 %v2303, %v2299
    %v2408 = vpack.c.b16 %v2304, %v2300
    %v2409 = vpack.c.b16 %v2309, %v2305
    %v2410 = vpack.c.b16 %v2310, %v2306
    %v2411 = vpack.c.b16 %v2311, %v2307
    %v2412 = vpack.c.b16 %v2312, %v2308
    %v2413 = vpack.c.b16 %v2317, %v2313
    %v2414 = vpack.c.b16 %v2318, %v2314
    %v2415 = vpack.c.b16 %v2319, %v2315
    %v2416 = vpack.c.b16 %v2320, %v2316
    %v2417 = vpack.c.b16 %v2325, %v2321
    %v2418 = vpack.c.b16 %v2326, %v2322
    %v2419 = vpack.c.b16 %v2327, %v2323
    %v2420 = vpack.c.b16 %v2328, %v2324
    %v2421 = vpack.c.b16 %v2333, %v2329
    %v2422 = vpack.c.b16 %v2334, %v2330
    %v2423 = vpack.c.b16 %v2335, %v2331
    %v2424 = vpack.c.b16 %v2336, %v2332
    %v2425 = vpack.c.b16 %v2341, %v2337
    %v2426 = vpack.c.b16 %v2342, %v2338
    %v2427 = vpack.c.b16 %v2343, %v2339
    %v2428 = vpack.c.b16 %v2344, %v2340
    %v2429 = vpack.c.b16 %v2349, %v2345
    %v2430 = vpack.c.b16 %v2350, %v2346
    %v2431 = vpack.c.b16 %v2351, %v2347
    %v2432 = vpack.c.b16 %v2352, %v2348
    %v2433 = vpack.c.b16 %v2357, %v2353
    %v2434 = vpack.c.b16 %v2358, %v2354
    %v2435 = vpack.c.b16 %v2359, %v2355
    %v2436 = vpack.c.b16 %v2360, %v2356
    %v2437 = vpack.c.b16 %v2365, %v2361
    %v2438 = vpack.c.b16 %v2366, %v2362
    %v2439 = vpack.c.b16 %v2367, %v2363
    %v2440 = vpack.c.b16 %v2368, %v2364
    %v2441 = vpack.c.b16 %v2373, %v2369
    %v2442 = vpack.c.b16 %v2374, %v2370
    %v2443 = vpack.c.b16 %v2375, %v2371
    %v2444 = vpack.c.b16 %v2376, %v2372
    %v2445 = vpack.c.b16 %v2381, %v2377
    %v2446 = vpack.c.b16 %v2382, %v2378
    %v2447 = vpack.c.b16 %v2383, %v2379
    %v2448 = vpack.c.b16 %v2384, %v2380
    %2513 = vmatprep.subr.bf16.mxu0 %v2386
    %2514 = vmatpush1.bf16.msra.mxu0 %v2385
    %2515 = vmatprep.subr.bf16.mxu0 %v2390
    %2516 = vmatpush1.bf16.msra.mxu0 %v2389
    %2517 = vmatprep.subr.bf16.mxu0 %v2394
    %2518 = vmatpush1.bf16.msra.mxu0 %v2393
    %2519 = vmatprep.subr.bf16.mxu0 %v2398
    %2520 = vmatpush1.bf16.msra.mxu0 %v2397
    %2521 = vmatprep.subr.bf16.mxu0 %v2402
    %2522 = vmatpush1.bf16.msra.mxu0 %v2401
    %2523 = vmatprep.subr.bf16.mxu0 %v2406
    %2524 = vmatpush1.bf16.msra.mxu0 %v2405
    %2525 = vmatprep.subr.bf16.mxu0 %v2410
    %2526 = vmatpush1.bf16.msra.mxu0 %v2409
    %2527 = vmatprep.subr.bf16.mxu0 %v2414
    %2528 = vmatpush1.bf16.msra.mxu0 %v2413
    %2529 = vmatprep.subr.bf16.mxu0 %v2418
    %2530 = vmatpush1.bf16.msra.mxu0 %v2417
    %2531 = vmatprep.subr.bf16.mxu0 %v2422
    %2532 = vmatpush1.bf16.msra.mxu0 %v2421
    %2533 = vmatprep.subr.bf16.mxu0 %v2426
    %2534 = vmatpush1.bf16.msra.mxu0 %v2425
    %2535 = vmatprep.subr.bf16.mxu0 %v2430
    %2536 = vmatpush1.bf16.msra.mxu0 %v2429
    %2537 = vmatprep.subr.bf16.mxu0 %v2434
    %2538 = vmatpush1.bf16.msra.mxu0 %v2433
    %2539 = vmatprep.subr.bf16.mxu0 %v2438
    %2540 = vmatpush1.bf16.msra.mxu0 %v2437
    %2541 = vmatprep.subr.bf16.mxu0 %v2442
    %2542 = vmatpush1.bf16.msra.mxu0 %v2441
    %2543 = vmatprep.subr.bf16.mxu0 %v2446
    %2544 = vmatpush1.bf16.msra.mxu0 %v2445
    %2545 = vmatprep.mubr.bf16.mxu0 %v2127
    %2546 = vmatmul.mubr.bf16.gmra.mrb[0].mxu0 %v2126
    %v2547 = vpop.f32.mrb[0].mxu0
    %v2548 = vadd.f32 0.0, %v2547
    %v2549 = vpop.f32.mrb[0].mxu0
    %v2550 = vadd.f32 0.0, %v2549
    %v2551 = vpop.f32.mrb[0].mxu0
    %v2552 = vpop.f32.mrb[0].mxu0
    %2553 = vdwg.mxu0
    %2554 = vmatprep.subr.bf16.mxu0 %v2388
    %2555 = vmatpush1.bf16.msra.mxu0 %v2387
    %2556 = vmatprep.subr.bf16.mxu0 %v2392
    %2557 = vmatpush1.bf16.msra.mxu0 %v2391
    %2558 = vmatprep.subr.bf16.mxu0 %v2396
    %2559 = vmatpush1.bf16.msra.mxu0 %v2395
    %2560 = vmatprep.subr.bf16.mxu0 %v2400
    %2561 = vmatpush1.bf16.msra.mxu0 %v2399
    %2562 = vmatprep.subr.bf16.mxu0 %v2404
    %2563 = vmatpush1.bf16.msra.mxu0 %v2403
    %2564 = vmatprep.subr.bf16.mxu0 %v2408
    %2565 = vmatpush1.bf16.msra.mxu0 %v2407
    %2566 = vmatprep.subr.bf16.mxu0 %v2412
    %2567 = vmatpush1.bf16.msra.mxu0 %v2411
    %2568 = vmatprep.subr.bf16.mxu0 %v2416
    %2569 = vmatpush1.bf16.msra.mxu0 %v2415
    %2570 = vmatprep.subr.bf16.mxu0 %v2420
    %2571 = vmatpush1.bf16.msra.mxu0 %v2419
    %2572 = vmatprep.subr.bf16.mxu0 %v2424
    %2573 = vmatpush1.bf16.msra.mxu0 %v2423
    %2574 = vmatprep.subr.bf16.mxu0 %v2428
    %2575 = vmatpush1.bf16.msra.mxu0 %v2427
    %2576 = vmatprep.subr.bf16.mxu0 %v2432
    %2577 = vmatpush1.bf16.msra.mxu0 %v2431
    %2578 = vmatprep.subr.bf16.mxu0 %v2436
    %2579 = vmatpush1.bf16.msra.mxu0 %v2435
    %2580 = vmatprep.subr.bf16.mxu0 %v2440
    %2581 = vmatpush1.bf16.msra.mxu0 %v2439
    %2582 = vmatprep.subr.bf16.mxu0 %v2444
    %2583 = vmatpush1.bf16.msra.mxu0 %v2443
    %2584 = vmatprep.subr.bf16.mxu0 %v2448
    %2585 = vmatpush1.bf16.msra.mxu0 %v2447
    %2586 = vmatprep.mubr.bf16.mxu0 %v2127
    %2587 = vmatmul.mubr.bf16.gmra.mrb[0].mxu0 %v2126
    %v2588 = vpop.f32.mrb[0].mxu0
    %v2589 = vadd.f32 0.0, %v2588
    %v2590 = vpop.f32.mrb[0].mxu0
    %v2591 = vadd.f32 0.0, %v2590
    %v2592 = vpop.f32.mrb[0].mxu0
    %v2593 = vpop.f32.mrb[0].mxu0
    %2594 = vdwg.mxu0
    %v2659 = vunpack.c.l.b16 %v2016
    %v2660 = vunpack.c.h.b16 %v2016
    %v2661 = vunpack.c.l.b16 %v2017
    %v2662 = vunpack.c.h.b16 %v2017
    %v2663 = vunpack.c.l.b16 %v2018
    %v2664 = vunpack.c.h.b16 %v2018
    %v2665 = vunpack.c.l.b16 %v2019
    %v2666 = vunpack.c.h.b16 %v2019
    %v2667 = vunpack.c.l.b16 %v2020
    %v2668 = vunpack.c.h.b16 %v2020
    %v2669 = vunpack.c.l.b16 %v2021
    %v2670 = vunpack.c.h.b16 %v2021
    %v2671 = vunpack.c.l.b16 %v2022
    %v2672 = vunpack.c.h.b16 %v2022
    %v2673 = vunpack.c.l.b16 %v2023
    %v2674 = vunpack.c.h.b16 %v2023
    %v2675 = vunpack.c.l.b16 %v2024
    %v2676 = vunpack.c.h.b16 %v2024
    %v2677 = vunpack.c.l.b16 %v2025
    %v2678 = vunpack.c.h.b16 %v2025
    %v2679 = vunpack.c.l.b16 %v2026
    %v2680 = vunpack.c.h.b16 %v2026
    %v2681 = vunpack.c.l.b16 %v2027
    %v2682 = vunpack.c.h.b16 %v2027
    %v2683 = vunpack.c.l.b16 %v2028
    %v2684 = vunpack.c.h.b16 %v2028
    %v2685 = vunpack.c.l.b16 %v2029
    %v2686 = vunpack.c.h.b16 %v2029
    %v2687 = vunpack.c.l.b16 %v2030
    %v2688 = vunpack.c.h.b16 %v2030
    %v2689 = vunpack.c.l.b16 %v2031
    %v2690 = vunpack.c.h.b16 %v2031
    %v2691 = vunpack.c.l.b16 %v2032
    %v2692 = vunpack.c.h.b16 %v2032
    %v2693 = vunpack.c.l.b16 %v2033
    %v2694 = vunpack.c.h.b16 %v2033
    %v2695 = vunpack.c.l.b16 %v2034
    %v2696 = vunpack.c.h.b16 %v2034
    %v2697 = vunpack.c.l.b16 %v2035
    %v2698 = vunpack.c.h.b16 %v2035
    %v2699 = vunpack.c.l.b16 %v2036
    %v2700 = vunpack.c.h.b16 %v2036
    %v2701 = vunpack.c.l.b16 %v2037
    %v2702 = vunpack.c.h.b16 %v2037
    %v2703 = vunpack.c.l.b16 %v2038
    %v2704 = vunpack.c.h.b16 %v2038
    %v2705 = vunpack.c.l.b16 %v2039
    %v2706 = vunpack.c.h.b16 %v2039
    %v2707 = vunpack.c.l.b16 %v2040
    %v2708 = vunpack.c.h.b16 %v2040
    %v2709 = vunpack.c.l.b16 %v2041
    %v2710 = vunpack.c.h.b16 %v2041
    %v2711 = vunpack.c.l.b16 %v2042
    %v2712 = vunpack.c.h.b16 %v2042
    %v2713 = vunpack.c.l.b16 %v2043
    %v2714 = vunpack.c.h.b16 %v2043
    %v2715 = vunpack.c.l.b16 %v2044
    %v2716 = vunpack.c.h.b16 %v2044
    %v2717 = vunpack.c.l.b16 %v2045
    %v2718 = vunpack.c.h.b16 %v2045
    %v2719 = vunpack.c.l.b16 %v2046
    %v2720 = vunpack.c.h.b16 %v2046
    %v2721 = vunpack.c.l.b16 %v2047
    %v2722 = vunpack.c.h.b16 %v2047
    %v2723 = vunpack.c.l.b16 %v2048
    %v2724 = vunpack.c.h.b16 %v2048
    %v2725 = vunpack.c.l.b16 %v2049
    %v2726 = vunpack.c.h.b16 %v2049
    %v2727 = vunpack.c.l.b16 %v2050
    %v2728 = vunpack.c.h.b16 %v2050
    %v2729 = vunpack.c.l.b16 %v2051
    %v2730 = vunpack.c.h.b16 %v2051
    %v2731 = vunpack.c.l.b16 %v2052
    %v2732 = vunpack.c.h.b16 %v2052
    %v2733 = vunpack.c.l.b16 %v2053
    %v2734 = vunpack.c.h.b16 %v2053
    %v2735 = vunpack.c.l.b16 %v2054
    %v2736 = vunpack.c.h.b16 %v2054
    %v2737 = vunpack.c.l.b16 %v2055
    %v2738 = vunpack.c.h.b16 %v2055
    %v2739 = vunpack.c.l.b16 %v2056
    %v2740 = vunpack.c.h.b16 %v2056
    %v2741 = vunpack.c.l.b16 %v2057
    %v2742 = vunpack.c.h.b16 %v2057
    %v2743 = vunpack.c.l.b16 %v2058
    %v2744 = vunpack.c.h.b16 %v2058
    %v2745 = vunpack.c.l.b16 %v2059
    %v2746 = vunpack.c.h.b16 %v2059
    %v2747 = vunpack.c.l.b16 %v2060
    %v2748 = vunpack.c.h.b16 %v2060
    %v2749 = vunpack.c.l.b16 %v2061
    %v2750 = vunpack.c.h.b16 %v2061
    %v2751 = vunpack.c.l.b16 %v2062
    %v2752 = vunpack.c.h.b16 %v2062
    %v2753 = vunpack.c.l.b16 %v2063
    %v2754 = vunpack.c.h.b16 %v2063
    %v2755 = vunpack.c.l.b16 %v2064
    %v2756 = vunpack.c.h.b16 %v2064
    %v2757 = vunpack.c.l.b16 %v2065
    %v2758 = vunpack.c.h.b16 %v2065
    %v2759 = vunpack.c.l.b16 %v2066
    %v2760 = vunpack.c.h.b16 %v2066
    %v2761 = vunpack.c.l.b16 %v2067
    %v2762 = vunpack.c.h.b16 %v2067
    %v2763 = vunpack.c.l.b16 %v2068
    %v2764 = vunpack.c.h.b16 %v2068
    %v2765 = vunpack.c.l.b16 %v2069
    %v2766 = vunpack.c.h.b16 %v2069
    %v2767 = vunpack.c.l.b16 %v2070
    %v2768 = vunpack.c.h.b16 %v2070
    %v2769 = vunpack.c.l.b16 %v2071
    %v2770 = vunpack.c.h.b16 %v2071
    %v2771 = vunpack.c.l.b16 %v2072
    %v2772 = vunpack.c.h.b16 %v2072
    %v2773 = vunpack.c.l.b16 %v2073
    %v2774 = vunpack.c.h.b16 %v2073
    %v2775 = vunpack.c.l.b16 %v2074
    %v2776 = vunpack.c.h.b16 %v2074
    %v2777 = vunpack.c.l.b16 %v2075
    %v2778 = vunpack.c.h.b16 %v2075
    %v2779 = vunpack.c.l.b16 %v2076
    %v2780 = vunpack.c.h.b16 %v2076
    %v2781 = vunpack.c.l.b16 %v2077
    %v2782 = vunpack.c.h.b16 %v2077
    %v2783 = vunpack.c.l.b16 %v2078
    %v2784 = vunpack.c.h.b16 %v2078
    %v2785 = vunpack.c.l.b16 %v2079
    %v2786 = vunpack.c.h.b16 %v2079
    %v2787 = vpack.c.b16 %v2663, %v2659
    %v2788 = vpack.c.b16 %v2664, %v2660
    %v2789 = vpack.c.b16 %v2665, %v2661
    %v2790 = vpack.c.b16 %v2666, %v2662
    %v2791 = vpack.c.b16 %v2671, %v2667
    %v2792 = vpack.c.b16 %v2672, %v2668
    %v2793 = vpack.c.b16 %v2673, %v2669
    %v2794 = vpack.c.b16 %v2674, %v2670
    %v2795 = vpack.c.b16 %v2679, %v2675
    %v2796 = vpack.c.b16 %v2680, %v2676
    %v2797 = vpack.c.b16 %v2681, %v2677
    %v2798 = vpack.c.b16 %v2682, %v2678
    %v2799 = vpack.c.b16 %v2687, %v2683
    %v2800 = vpack.c.b16 %v2688, %v2684
    %v2801 = vpack.c.b16 %v2689, %v2685
    %v2802 = vpack.c.b16 %v2690, %v2686
    %v2803 = vpack.c.b16 %v2695, %v2691
    %v2804 = vpack.c.b16 %v2696, %v2692
    %v2805 = vpack.c.b16 %v2697, %v2693
    %v2806 = vpack.c.b16 %v2698, %v2694
    %v2807 = vpack.c.b16 %v2703, %v2699
    %v2808 = vpack.c.b16 %v2704, %v2700
    %v2809 = vpack.c.b16 %v2705, %v2701
    %v2810 = vpack.c.b16 %v2706, %v2702
    %v2811 = vpack.c.b16 %v2711, %v2707
    %v2812 = vpack.c.b16 %v2712, %v2708
    %v2813 = vpack.c.b16 %v2713, %v2709
    %v2814 = vpack.c.b16 %v2714, %v2710
    %v2815 = vpack.c.b16 %v2719, %v2715
    %v2816 = vpack.c.b16 %v2720, %v2716
    %v2817 = vpack.c.b16 %v2721, %v2717
    %v2818 = vpack.c.b16 %v2722, %v2718
    %v2819 = vpack.c.b16 %v2727, %v2723
    %v2820 = vpack.c.b16 %v2728, %v2724
    %v2821 = vpack.c.b16 %v2729, %v2725
    %v2822 = vpack.c.b16 %v2730, %v2726
    %v2823 = vpack.c.b16 %v2735, %v2731
    %v2824 = vpack.c.b16 %v2736, %v2732
    %v2825 = vpack.c.b16 %v2737, %v2733
    %v2826 = vpack.c.b16 %v2738, %v2734
    %v2827 = vpack.c.b16 %v2743, %v2739
    %v2828 = vpack.c.b16 %v2744, %v2740
    %v2829 = vpack.c.b16 %v2745, %v2741
    %v2830 = vpack.c.b16 %v2746, %v2742
    %v2831 = vpack.c.b16 %v2751, %v2747
    %v2832 = vpack.c.b16 %v2752, %v2748
    %v2833 = vpack.c.b16 %v2753, %v2749
    %v2834 = vpack.c.b16 %v2754, %v2750
    %v2835 = vpack.c.b16 %v2759, %v2755
    %v2836 = vpack.c.b16 %v2760, %v2756
    %v2837 = vpack.c.b16 %v2761, %v2757
    %v2838 = vpack.c.b16 %v2762, %v2758
    %v2839 = vpack.c.b16 %v2767, %v2763
    %v2840 = vpack.c.b16 %v2768, %v2764
    %v2841 = vpack.c.b16 %v2769, %v2765
    %v2842 = vpack.c.b16 %v2770, %v2766
    %v2843 = vpack.c.b16 %v2775, %v2771
    %v2844 = vpack.c.b16 %v2776, %v2772
    %v2845 = vpack.c.b16 %v2777, %v2773
    %v2846 = vpack.c.b16 %v2778, %v2774
    %v2847 = vpack.c.b16 %v2783, %v2779
    %v2848 = vpack.c.b16 %v2784, %v2780
    %v2849 = vpack.c.b16 %v2785, %v2781
    %v2850 = vpack.c.b16 %v2786, %v2782
    %2915 = vmatprep.subr.bf16.mxu0 %v2788
    %2916 = vmatpush1.bf16.msra.mxu0 %v2787
    %2917 = vmatprep.subr.bf16.mxu0 %v2792
    %2918 = vmatpush1.bf16.msra.mxu0 %v2791
    %2919 = vmatprep.subr.bf16.mxu0 %v2796
    %2920 = vmatpush1.bf16.msra.mxu0 %v2795
    %2921 = vmatprep.subr.bf16.mxu0 %v2800
    %2922 = vmatpush1.bf16.msra.mxu0 %v2799
    %2923 = vmatprep.subr.bf16.mxu0 %v2804
    %2924 = vmatpush1.bf16.msra.mxu0 %v2803
    %2925 = vmatprep.subr.bf16.mxu0 %v2808
    %2926 = vmatpush1.bf16.msra.mxu0 %v2807
    %2927 = vmatprep.subr.bf16.mxu0 %v2812
    %2928 = vmatpush1.bf16.msra.mxu0 %v2811
    %2929 = vmatprep.subr.bf16.mxu0 %v2816
    %2930 = vmatpush1.bf16.msra.mxu0 %v2815
    %2931 = vmatprep.subr.bf16.mxu0 %v2820
    %2932 = vmatpush1.bf16.msra.mxu0 %v2819
    %2933 = vmatprep.subr.bf16.mxu0 %v2824
    %2934 = vmatpush1.bf16.msra.mxu0 %v2823
    %2935 = vmatprep.subr.bf16.mxu0 %v2828
    %2936 = vmatpush1.bf16.msra.mxu0 %v2827
    %2937 = vmatprep.subr.bf16.mxu0 %v2832
    %2938 = vmatpush1.bf16.msra.mxu0 %v2831
    %2939 = vmatprep.subr.bf16.mxu0 %v2836
    %2940 = vmatpush1.bf16.msra.mxu0 %v2835
    %2941 = vmatprep.subr.bf16.mxu0 %v2840
    %2942 = vmatpush1.bf16.msra.mxu0 %v2839
    %2943 = vmatprep.subr.bf16.mxu0 %v2844
    %2944 = vmatpush1.bf16.msra.mxu0 %v2843
    %2945 = vmatprep.subr.bf16.mxu0 %v2848
    %2946 = vmatpush1.bf16.msra.mxu0 %v2847
    %2947 = vmatprep.mubr.bf16.mxu0 %v2015
    %2948 = vmatmul.mubr.bf16.gmra.mrb[0].mxu0 %v2014
    %v2949 = vpop.f32.mrb[0].mxu0
    %v2950 = vadd.f32 %v2548, %v2949
    %v2951 = vpop.f32.mrb[0].mxu0
    %v2952 = vadd.f32 %v2550, %v2951
    %v2953 = vpop.f32.mrb[0].mxu0
    %v2954 = vpop.f32.mrb[0].mxu0
    %2955 = vdwg.mxu0
    %2956 = vmatprep.subr.bf16.mxu0 %v2790
    %2957 = vmatpush1.bf16.msra.mxu0 %v2789
    %2958 = vmatprep.subr.bf16.mxu0 %v2794
    %2959 = vmatpush1.bf16.msra.mxu0 %v2793
    %2960 = vmatprep.subr.bf16.mxu0 %v2798
    %2961 = vmatpush1.bf16.msra.mxu0 %v2797
    %2962 = vmatprep.subr.bf16.mxu0 %v2802
    %2963 = vmatpush1.bf16.msra.mxu0 %v2801
    %2964 = vmatprep.subr.bf16.mxu0 %v2806
    %2965 = vmatpush1.bf16.msra.mxu0 %v2805
    %2966 = vmatprep.subr.bf16.mxu0 %v2810
    %2967 = vmatpush1.bf16.msra.mxu0 %v2809
    %2968 = vmatprep.subr.bf16.mxu0 %v2814
    %2969 = vmatpush1.bf16.msra.mxu0 %v2813
    %2970 = vmatprep.subr.bf16.mxu0 %v2818
    %2971 = vmatpush1.bf16.msra.mxu0 %v2817
    %2972 = vmatprep.subr.bf16.mxu0 %v2822
    %2973 = vmatpush1.bf16.msra.mxu0 %v2821
    %2974 = vmatprep.subr.bf16.mxu0 %v2826
    %2975 = vmatpush1.bf16.msra.mxu0 %v2825
    %2976 = vmatprep.subr.bf16.mxu0 %v2830
    %2977 = vmatpush1.bf16.msra.mxu0 %v2829
    %2978 = vmatprep.subr.bf16.mxu0 %v2834
    %2979 = vmatpush1.bf16.msra.mxu0 %v2833
    %2980 = vmatprep.subr.bf16.mxu0 %v2838
    %2981 = vmatpush1.bf16.msra.mxu0 %v2837
    %2982 = vmatprep.subr.bf16.mxu0 %v2842
    %2983 = vmatpush1.bf16.msra.mxu0 %v2841
    %2984 = vmatprep.subr.bf16.mxu0 %v2846
    %2985 = vmatpush1.bf16.msra.mxu0 %v2845
    %2986 = vmatprep.subr.bf16.mxu0 %v2850
    %2987 = vmatpush1.bf16.msra.mxu0 %v2849
    %2988 = vmatprep.mubr.bf16.mxu0 %v2015
    %2989 = vmatmul.mubr.bf16.gmra.mrb[0].mxu0 %v2014
    %v2990 = vpop.f32.mrb[0].mxu0
    %v2991 = vadd.f32 %v2589, %v2990
    %v2992 = vpop.f32.mrb[0].mxu0
    %v2993 = vadd.f32 %v2591, %v2992
    %v2994 = vpop.f32.mrb[0].mxu0
    %v2995 = vpop.f32.mrb[0].mxu0
    %2996 = vdwg.mxu0
    %s2997 = scalar_lea.vmem [#allocation5], 2
    %v2998 = vld [vmem:[%s2997] sm:$0x1]
    %v3000 = vsel %vm1962, %v2998, 0
    %3002 = vmatprep.subr.bf16.mxu0 %v1958
    %3003 = vmatpush1.bf16.msra.mxu0 %v1957
    %3004 = vmatprep.subr.bf16.mxu0 %v1971
    %3005 = vmatpush1.bf16.msra.mxu0 %v1968
    %3006 = vmatprep.subr.bf16.mxu0 0
    %3007 = vmatpush1.bf16.msra.mxu0 0
    %3008 = vmatprep.subr.bf16.mxu0 0
    %3009 = vmatpush1.bf16.msra.mxu0 0
    %3010 = vmatprep.subr.bf16.mxu0 0
    %3011 = vmatpush1.bf16.msra.mxu0 0
    %3012 = vmatprep.subr.bf16.mxu0 0
    %3013 = vmatpush1.bf16.msra.mxu0 0
    %3014 = vmatprep.subr.bf16.mxu0 0
    %3015 = vmatpush1.bf16.msra.mxu0 0
    %3016 = vmatprep.subr.bf16.mxu0 0
    %3017 = vmatpush1.bf16.msra.mxu0 0
    %3018 = vmatprep.subr.bf16.mxu0 0
    %3019 = vmatpush1.bf16.msra.mxu0 0
    %3020 = vmatprep.subr.bf16.mxu0 0
    %3021 = vmatpush1.bf16.msra.mxu0 0
    %3022 = vmatprep.subr.bf16.mxu0 0
    %3023 = vmatpush1.bf16.msra.mxu0 0
    %3024 = vmatprep.subr.bf16.mxu0 0
    %3025 = vmatpush1.bf16.msra.mxu0 0
    %3026 = vmatprep.subr.bf16.mxu0 0
    %3027 = vmatpush1.bf16.msra.mxu0 0
    %3028 = vmatprep.subr.bf16.mxu0 0
    %3029 = vmatpush1.bf16.msra.mxu0 0
    %3030 = vmatprep.subr.bf16.mxu0 0
    %3031 = vmatpush1.bf16.msra.mxu0 0
    %3032 = vmatprep.subr.bf16.mxu0 0
    %3033 = vmatpush1.bf16.msra.mxu0 0
    %3034 = vmatprep.mubr.bf16.mxu0 0
    %3035 = vmatmul.mubr.bf16.gmra.mrb[0].mxu0 %v3000
    %v3036 = vpop.f32.mrb[0].mxu0
    %v3037 = vadd.f32 0.0, %v3036
    %v3038 = vpop.f32.mrb[0].mxu0
    %v3039 = vadd.f32 0.0, %v3038
    %v3040 = vpop.f32.mrb[0].mxu0
    %v3041 = vpop.f32.mrb[0].mxu0
    %3042 = vdwg.mxu0
    %v3043 = vpack.c.bf16 %v3037, %v3037
    %v3044 = vpack.c.bf16 %v3039, %v3039
    %s3045 = scalar_lea.vmem [#allocation13], 1024
    %v3046 = vld [vmem:[%s3045] sm:$0xff]
    %v3047 = vld [vmem:[%s3045 + $0x8] sm:$0xff]
    %v3048 = vld [vmem:[%s3045 + $0x10] sm:$0xff]
    %v3049 = vld [vmem:[%s3045 + $0x18] sm:$0xff]
    %v3050 = vld [vmem:[%s3045 + $0x20] sm:$0xff]
    %v3051 = vld [vmem:[%s3045 + $0x28] sm:$0xff]
    %v3052 = vld [vmem:[%s3045 + $0x30] sm:$0xff]
    %v3053 = vld [vmem:[%s3045 + $0x38] sm:$0xff]
    %v3054 = vld [vmem:[%s3045 + $0x40] sm:$0xff]
    %v3055 = vld [vmem:[%s3045 + $0x48] sm:$0xff]
    %v3056 = vld [vmem:[%s3045 + $0x50] sm:$0xff]
    %v3057 = vld [vmem:[%s3045 + $0x58] sm:$0xff]
    %v3058 = vld [vmem:[%s3045 + $0x60] sm:$0xff]
    %v3059 = vld [vmem:[%s3045 + $0x68] sm:$0xff]
    %v3060 = vld [vmem:[%s3045 + $0x70] sm:$0xff]
    %v3061 = vld [vmem:[%s3045 + $0x78] sm:$0xff]
    %v3062 = vld [vmem:[%s3045 + $0x80] sm:$0xff]
    %v3063 = vld [vmem:[%s3045 + $0x88] sm:$0xff]
    %v3064 = vld [vmem:[%s3045 + $0x90] sm:$0xff]
    %v3065 = vld [vmem:[%s3045 + $0x98] sm:$0xff]
    %v3066 = vld [vmem:[%s3045 + $0xa0] sm:$0xff]
    %v3067 = vld [vmem:[%s3045 + $0xa8] sm:$0xff]
    %v3068 = vld [vmem:[%s3045 + $0xb0] sm:$0xff]
    %v3069 = vld [vmem:[%s3045 + $0xb8] sm:$0xff]
    %v3070 = vld [vmem:[%s3045 + $0xc0] sm:$0xff]
    %v3071 = vld [vmem:[%s3045 + $0xc8] sm:$0xff]
    %v3072 = vld [vmem:[%s3045 + $0xd0] sm:$0xff]
    %v3073 = vld [vmem:[%s3045 + $0xd8] sm:$0xff]
    %v3074 = vld [vmem:[%s3045 + $0xe0] sm:$0xff]
    %v3075 = vld [vmem:[%s3045 + $0xe8] sm:$0xff]
    %v3076 = vld [vmem:[%s3045 + $0xf0] sm:$0xff]
    %v3077 = vld [vmem:[%s3045 + $0xf8] sm:$0xff]
    %v3078 = vld [vmem:[%s3045 + $0x100] sm:$0xff]
    %v3079 = vld [vmem:[%s3045 + $0x108] sm:$0xff]
    %v3080 = vld [vmem:[%s3045 + $0x110] sm:$0xff]
    %v3081 = vld [vmem:[%s3045 + $0x118] sm:$0xff]
    %v3082 = vld [vmem:[%s3045 + $0x120] sm:$0xff]
    %v3083 = vld [vmem:[%s3045 + $0x128] sm:$0xff]
    %v3084 = vld [vmem:[%s3045 + $0x130] sm:$0xff]
    %v3085 = vld [vmem:[%s3045 + $0x138] sm:$0xff]
    %v3086 = vld [vmem:[%s3045 + $0x140] sm:$0xff]
    %v3087 = vld [vmem:[%s3045 + $0x148] sm:$0xff]
    %v3088 = vld [vmem:[%s3045 + $0x150] sm:$0xff]
    %v3089 = vld [vmem:[%s3045 + $0x158] sm:$0xff]
    %v3090 = vld [vmem:[%s3045 + $0x160] sm:$0xff]
    %v3091 = vld [vmem:[%s3045 + $0x168] sm:$0xff]
    %v3092 = vld [vmem:[%s3045 + $0x170] sm:$0xff]
    %v3093 = vld [vmem:[%s3045 + $0x178] sm:$0xff]
    %v3094 = vld [vmem:[%s3045 + $0x180] sm:$0xff]
    %v3095 = vld [vmem:[%s3045 + $0x188] sm:$0xff]
    %v3096 = vld [vmem:[%s3045 + $0x190] sm:$0xff]
    %v3097 = vld [vmem:[%s3045 + $0x198] sm:$0xff]
    %v3098 = vld [vmem:[%s3045 + $0x1a0] sm:$0xff]
    %v3099 = vld [vmem:[%s3045 + $0x1a8] sm:$0xff]
    %v3100 = vld [vmem:[%s3045 + $0x1b0] sm:$0xff]
    %v3101 = vld [vmem:[%s3045 + $0x1b8] sm:$0xff]
    %v3102 = vld [vmem:[%s3045 + $0x1c0] sm:$0xff]
    %v3103 = vld [vmem:[%s3045 + $0x1c8] sm:$0xff]
    %v3104 = vld [vmem:[%s3045 + $0x1d0] sm:$0xff]
    %v3105 = vld [vmem:[%s3045 + $0x1d8] sm:$0xff]
    %v3106 = vld [vmem:[%s3045 + $0x1e0] sm:$0xff]
    %v3107 = vld [vmem:[%s3045 + $0x1e8] sm:$0xff]
    %v3108 = vld [vmem:[%s3045 + $0x1f0] sm:$0xff]
    %v3109 = vld [vmem:[%s3045 + $0x1f8] sm:$0xff]
    %v3174 = vunpack.c.l.b16 %v3046
    %v3175 = vunpack.c.h.b16 %v3046
    %v3176 = vunpack.c.l.b16 %v3047
    %v3177 = vunpack.c.h.b16 %v3047
    %v3178 = vunpack.c.l.b16 %v3048
    %v3179 = vunpack.c.h.b16 %v3048
    %v3180 = vunpack.c.l.b16 %v3049
    %v3181 = vunpack.c.h.b16 %v3049
    %v3182 = vunpack.c.l.b16 %v3050
    %v3183 = vunpack.c.h.b16 %v3050
    %v3184 = vunpack.c.l.b16 %v3051
    %v3185 = vunpack.c.h.b16 %v3051
    %v3186 = vunpack.c.l.b16 %v3052
    %v3187 = vunpack.c.h.b16 %v3052
    %v3188 = vunpack.c.l.b16 %v3053
    %v3189 = vunpack.c.h.b16 %v3053
    %v3190 = vunpack.c.l.b16 %v3054
    %v3191 = vunpack.c.h.b16 %v3054
    %v3192 = vunpack.c.l.b16 %v3055
    %v3193 = vunpack.c.h.b16 %v3055
    %v3194 = vunpack.c.l.b16 %v3056
    %v3195 = vunpack.c.h.b16 %v3056
    %v3196 = vunpack.c.l.b16 %v3057
    %v3197 = vunpack.c.h.b16 %v3057
    %v3198 = vunpack.c.l.b16 %v3058
    %v3199 = vunpack.c.h.b16 %v3058
    %v3200 = vunpack.c.l.b16 %v3059
    %v3201 = vunpack.c.h.b16 %v3059
    %v3202 = vunpack.c.l.b16 %v3060
    %v3203 = vunpack.c.h.b16 %v3060
    %v3204 = vunpack.c.l.b16 %v3061
    %v3205 = vunpack.c.h.b16 %v3061
    %v3206 = vunpack.c.l.b16 %v3062
    %v3207 = vunpack.c.h.b16 %v3062
    %v3208 = vunpack.c.l.b16 %v3063
    %v3209 = vunpack.c.h.b16 %v3063
    %v3210 = vunpack.c.l.b16 %v3064
    %v3211 = vunpack.c.h.b16 %v3064
    %v3212 = vunpack.c.l.b16 %v3065
    %v3213 = vunpack.c.h.b16 %v3065
    %v3214 = vunpack.c.l.b16 %v3066
    %v3215 = vunpack.c.h.b16 %v3066
    %v3216 = vunpack.c.l.b16 %v3067
    %v3217 = vunpack.c.h.b16 %v3067
    %v3218 = vunpack.c.l.b16 %v3068
    %v3219 = vunpack.c.h.b16 %v3068
    %v3220 = vunpack.c.l.b16 %v3069
    %v3221 = vunpack.c.h.b16 %v3069
    %v3222 = vunpack.c.l.b16 %v3070
    %v3223 = vunpack.c.h.b16 %v3070
    %v3224 = vunpack.c.l.b16 %v3071
    %v3225 = vunpack.c.h.b16 %v3071
    %v3226 = vunpack.c.l.b16 %v3072
    %v3227 = vunpack.c.h.b16 %v3072
    %v3228 = vunpack.c.l.b16 %v3073
    %v3229 = vunpack.c.h.b16 %v3073
    %v3230 = vunpack.c.l.b16 %v3074
    %v3231 = vunpack.c.h.b16 %v3074
    %v3232 = vunpack.c.l.b16 %v3075
    %v3233 = vunpack.c.h.b16 %v3075
    %v3234 = vunpack.c.l.b16 %v3076
    %v3235 = vunpack.c.h.b16 %v3076
    %v3236 = vunpack.c.l.b16 %v3077
    %v3237 = vunpack.c.h.b16 %v3077
    %v3238 = vunpack.c.l.b16 %v3078
    %v3239 = vunpack.c.h.b16 %v3078
    %v3240 = vunpack.c.l.b16 %v3079
    %v3241 = vunpack.c.h.b16 %v3079
    %v3242 = vunpack.c.l.b16 %v3080
    %v3243 = vunpack.c.h.b16 %v3080
    %v3244 = vunpack.c.l.b16 %v3081
    %v3245 = vunpack.c.h.b16 %v3081
    %v3246 = vunpack.c.l.b16 %v3082
    %v3247 = vunpack.c.h.b16 %v3082
    %v3248 = vunpack.c.l.b16 %v3083
    %v3249 = vunpack.c.h.b16 %v3083
    %v3250 = vunpack.c.l.b16 %v3084
    %v3251 = vunpack.c.h.b16 %v3084
    %v3252 = vunpack.c.l.b16 %v3085
    %v3253 = vunpack.c.h.b16 %v3085
    %v3254 = vunpack.c.l.b16 %v3086
    %v3255 = vunpack.c.h.b16 %v3086
    %v3256 = vunpack.c.l.b16 %v3087
    %v3257 = vunpack.c.h.b16 %v3087
    %v3258 = vunpack.c.l.b16 %v3088
    %v3259 = vunpack.c.h.b16 %v3088
    %v3260 = vunpack.c.l.b16 %v3089
    %v3261 = vunpack.c.h.b16 %v3089
    %v3262 = vunpack.c.l.b16 %v3090
    %v3263 = vunpack.c.h.b16 %v3090
    %v3264 = vunpack.c.l.b16 %v3091
    %v3265 = vunpack.c.h.b16 %v3091
    %v3266 = vunpack.c.l.b16 %v3092
    %v3267 = vunpack.c.h.b16 %v3092
    %v3268 = vunpack.c.l.b16 %v3093
    %v3269 = vunpack.c.h.b16 %v3093
    %v3270 = vunpack.c.l.b16 %v3094
    %v3271 = vunpack.c.h.b16 %v3094
    %v3272 = vunpack.c.l.b16 %v3095
    %v3273 = vunpack.c.h.b16 %v3095
    %v3274 = vunpack.c.l.b16 %v3096
    %v3275 = vunpack.c.h.b16 %v3096
    %v3276 = vunpack.c.l.b16 %v3097
    %v3277 = vunpack.c.h.b16 %v3097
    %v3278 = vunpack.c.l.b16 %v3098
    %v3279 = vunpack.c.h.b16 %v3098
    %v3280 = vunpack.c.l.b16 %v3099
    %v3281 = vunpack.c.h.b16 %v3099
    %v3282 = vunpack.c.l.b16 %v3100
    %v3283 = vunpack.c.h.b16 %v3100
    %v3284 = vunpack.c.l.b16 %v3101
    %v3285 = vunpack.c.h.b16 %v3101
    %v3286 = vunpack.c.l.b16 %v3102
    %v3287 = vunpack.c.h.b16 %v3102
    %v3288 = vunpack.c.l.b16 %v3103
    %v3289 = vunpack.c.h.b16 %v3103
    %v3290 = vunpack.c.l.b16 %v3104
    %v3291 = vunpack.c.h.b16 %v3104
    %v3292 = vunpack.c.l.b16 %v3105
    %v3293 = vunpack.c.h.b16 %v3105
    %v3294 = vunpack.c.l.b16 %v3106
    %v3295 = vunpack.c.h.b16 %v3106
    %v3296 = vunpack.c.l.b16 %v3107
    %v3297 = vunpack.c.h.b16 %v3107
    %v3298 = vunpack.c.l.b16 %v3108
    %v3299 = vunpack.c.h.b16 %v3108
    %v3300 = vunpack.c.l.b16 %v3109
    %v3301 = vunpack.c.h.b16 %v3109
    %v3302 = vpack.c.b16 %v3178, %v3174
    %v3303 = vpack.c.b16 %v3179, %v3175
    %v3304 = vpack.c.b16 %v3180, %v3176
    %v3305 = vpack.c.b16 %v3181, %v3177
    %v3306 = vpack.c.b16 %v3186, %v3182
    %v3307 = vpack.c.b16 %v3187, %v3183
    %v3308 = vpack.c.b16 %v3188, %v3184
    %v3309 = vpack.c.b16 %v3189, %v3185
    %v3310 = vpack.c.b16 %v3194, %v3190
    %v3311 = vpack.c.b16 %v3195, %v3191
    %v3312 = vpack.c.b16 %v3196, %v3192
    %v3313 = vpack.c.b16 %v3197, %v3193
    %v3314 = vpack.c.b16 %v3202, %v3198
    %v3315 = vpack.c.b16 %v3203, %v3199
    %v3316 = vpack.c.b16 %v3204, %v3200
    %v3317 = vpack.c.b16 %v3205, %v3201
    %v3318 = vpack.c.b16 %v3210, %v3206
    %v3319 = vpack.c.b16 %v3211, %v3207
    %v3320 = vpack.c.b16 %v3212, %v3208
    %v3321 = vpack.c.b16 %v3213, %v3209
    %v3322 = vpack.c.b16 %v3218, %v3214
    %v3323 = vpack.c.b16 %v3219, %v3215
    %v3324 = vpack.c.b16 %v3220, %v3216
    %v3325 = vpack.c.b16 %v3221, %v3217
    %v3326 = vpack.c.b16 %v3226, %v3222
    %v3327 = vpack.c.b16 %v3227, %v3223
    %v3328 = vpack.c.b16 %v3228, %v3224
    %v3329 = vpack.c.b16 %v3229, %v3225
    %v3330 = vpack.c.b16 %v3234, %v3230
    %v3331 = vpack.c.b16 %v3235, %v3231
    %v3332 = vpack.c.b16 %v3236, %v3232
    %v3333 = vpack.c.b16 %v3237, %v3233
    %v3334 = vpack.c.b16 %v3242, %v3238
    %v3335 = vpack.c.b16 %v3243, %v3239
    %v3336 = vpack.c.b16 %v3244, %v3240
    %v3337 = vpack.c.b16 %v3245, %v3241
    %v3338 = vpack.c.b16 %v3250, %v3246
    %v3339 = vpack.c.b16 %v3251, %v3247
    %v3340 = vpack.c.b16 %v3252, %v3248
    %v3341 = vpack.c.b16 %v3253, %v3249
    %v3342 = vpack.c.b16 %v3258, %v3254
    %v3343 = vpack.c.b16 %v3259, %v3255
    %v3344 = vpack.c.b16 %v3260, %v3256
    %v3345 = vpack.c.b16 %v3261, %v3257
    %v3346 = vpack.c.b16 %v3266, %v3262
    %v3347 = vpack.c.b16 %v3267, %v3263
    %v3348 = vpack.c.b16 %v3268, %v3264
    %v3349 = vpack.c.b16 %v3269, %v3265
    %v3350 = vpack.c.b16 %v3274, %v3270
    %v3351 = vpack.c.b16 %v3275, %v3271
    %v3352 = vpack.c.b16 %v3276, %v3272
    %v3353 = vpack.c.b16 %v3277, %v3273
    %v3354 = vpack.c.b16 %v3282, %v3278
    %v3355 = vpack.c.b16 %v3283, %v3279
    %v3356 = vpack.c.b16 %v3284, %v3280
    %v3357 = vpack.c.b16 %v3285, %v3281
    %v3358 = vpack.c.b16 %v3290, %v3286
    %v3359 = vpack.c.b16 %v3291, %v3287
    %v3360 = vpack.c.b16 %v3292, %v3288
    %v3361 = vpack.c.b16 %v3293, %v3289
    %v3362 = vpack.c.b16 %v3298, %v3294
    %v3363 = vpack.c.b16 %v3299, %v3295
    %v3364 = vpack.c.b16 %v3300, %v3296
    %v3365 = vpack.c.b16 %v3301, %v3297
    %3430 = vmatprep.subr.bf16.mxu0 %v3303
    %3431 = vmatpush1.bf16.msra.mxu0 %v3302
    %3432 = vmatprep.subr.bf16.mxu0 %v3307
    %3433 = vmatpush1.bf16.msra.mxu0 %v3306
    %3434 = vmatprep.subr.bf16.mxu0 %v3311
    %3435 = vmatpush1.bf16.msra.mxu0 %v3310
    %3436 = vmatprep.subr.bf16.mxu0 %v3315
    %3437 = vmatpush1.bf16.msra.mxu0 %v3314
    %3438 = vmatprep.subr.bf16.mxu0 %v3319
    %3439 = vmatpush1.bf16.msra.mxu0 %v3318
    %3440 = vmatprep.subr.bf16.mxu0 %v3323
    %3441 = vmatpush1.bf16.msra.mxu0 %v3322
    %3442 = vmatprep.subr.bf16.mxu0 %v3327
    %3443 = vmatpush1.bf16.msra.mxu0 %v3326
    %3444 = vmatprep.subr.bf16.mxu0 %v3331
    %3445 = vmatpush1.bf16.msra.mxu0 %v3330
    %3446 = vmatprep.subr.bf16.mxu0 %v3335
    %3447 = vmatpush1.bf16.msra.mxu0 %v3334
    %3448 = vmatprep.subr.bf16.mxu0 %v3339
    %3449 = vmatpush1.bf16.msra.mxu0 %v3338
    %3450 = vmatprep.subr.bf16.mxu0 %v3343
    %3451 = vmatpush1.bf16.msra.mxu0 %v3342
    %3452 = vmatprep.subr.bf16.mxu0 %v3347
    %3453 = vmatpush1.bf16.msra.mxu0 %v3346
    %3454 = vmatprep.subr.bf16.mxu0 %v3351
    %3455 = vmatpush1.bf16.msra.mxu0 %v3350
    %3456 = vmatprep.subr.bf16.mxu0 %v3355
    %3457 = vmatpush1.bf16.msra.mxu0 %v3354
    %3458 = vmatprep.subr.bf16.mxu0 %v3359
    %3459 = vmatpush1.bf16.msra.mxu0 %v3358
    %3460 = vmatprep.subr.bf16.mxu0 %v3363
    %3461 = vmatpush1.bf16.msra.mxu0 %v3362
    %3462 = vmatprep.mubr.bf16.mxu0 %v3044
    %3463 = vmatmul.mubr.bf16.gmra.mrb[0].mxu0 %v3043
    %v3464 = vpop.f32.mrb[0].mxu0
    %v3465 = vadd.f32 0.0, %v3464
    %v3466 = vpop.f32.mrb[0].mxu0
    %v3467 = vadd.f32 0.0, %v3466
    %v3468 = vpop.f32.mrb[0].mxu0
    %v3469 = vpop.f32.mrb[0].mxu0
    %3470 = vdwg.mxu0
    %3471 = vmatprep.subr.bf16.mxu0 %v3305
    %3472 = vmatpush1.bf16.msra.mxu0 %v3304
    %3473 = vmatprep.subr.bf16.mxu0 %v3309
    %3474 = vmatpush1.bf16.msra.mxu0 %v3308
    %3475 = vmatprep.subr.bf16.mxu0 %v3313
    %3476 = vmatpush1.bf16.msra.mxu0 %v3312
    %3477 = vmatprep.subr.bf16.mxu0 %v3317
    %3478 = vmatpush1.bf16.msra.mxu0 %v3316
    %3479 = vmatprep.subr.bf16.mxu0 %v3321
    %3480 = vmatpush1.bf16.msra.mxu0 %v3320
    %3481 = vmatprep.subr.bf16.mxu0 %v3325
    %3482 = vmatpush1.bf16.msra.mxu0 %v3324
    %3483 = vmatprep.subr.bf16.mxu0 %v3329
    %3484 = vmatpush1.bf16.msra.mxu0 %v3328
    %3485 = vmatprep.subr.bf16.mxu0 %v3333
    %3486 = vmatpush1.bf16.msra.mxu0 %v3332
    %3487 = vmatprep.subr.bf16.mxu0 %v3337
    %3488 = vmatpush1.bf16.msra.mxu0 %v3336
    %3489 = vmatprep.subr.bf16.mxu0 %v3341
    %3490 = vmatpush1.bf16.msra.mxu0 %v3340
    %3491 = vmatprep.subr.bf16.mxu0 %v3345
    %3492 = vmatpush1.bf16.msra.mxu0 %v3344
    %3493 = vmatprep.subr.bf16.mxu0 %v3349
    %3494 = vmatpush1.bf16.msra.mxu0 %v3348
    %3495 = vmatprep.subr.bf16.mxu0 %v3353
    %3496 = vmatpush1.bf16.msra.mxu0 %v3352
    %3497 = vmatprep.subr.bf16.mxu0 %v3357
    %3498 = vmatpush1.bf16.msra.mxu0 %v3356
    %3499 = vmatprep.subr.bf16.mxu0 %v3361
    %3500 = vmatpush1.bf16.msra.mxu0 %v3360
    %3501 = vmatprep.subr.bf16.mxu0 %v3365
    %3502 = vmatpush1.bf16.msra.mxu0 %v3364
    %3503 = vmatprep.mubr.bf16.mxu0 %v3044
    %3504 = vmatmul.mubr.bf16.gmra.mrb[0].mxu0 %v3043
    %v3505 = vpop.f32.mrb[0].mxu0
    %v3506 = vadd.f32 0.0, %v3505
    %v3507 = vpop.f32.mrb[0].mxu0
    %v3508 = vadd.f32 0.0, %v3507
    %v3509 = vpop.f32.mrb[0].mxu0
    %v3510 = vpop.f32.mrb[0].mxu0
    %3511 = vdwg.mxu0
    %v3512 = vadd.f32 %v2950, %v3465
    %v3513 = vadd.f32 %v2952, %v3467
    %v3514 = vadd.f32 %v2991, %v3506
    %v3515 = vadd.f32 %v2993, %v3508
    %s3516 = scalar_lea.vmem [#allocation5], 3
    %v3517 = vld [vmem:[%s3516] sm:$0x1]
    %v3519 = vsel %vm1962, %v3517, 0
    %3521 = vmatprep.subr.bf16.mxu0 %v1958
    %3522 = vmatpush1.bf16.msra.mxu0 %v1957
    %3523 = vmatprep.subr.bf16.mxu0 %v1971
    %3524 = vmatpush1.bf16.msra.mxu0 %v1968
    %3525 = vmatprep.subr.bf16.mxu0 0
    %3526 = vmatpush1.bf16.msra.mxu0 0
    %3527 = vmatprep.subr.bf16.mxu0 0
    %3528 = vmatpush1.bf16.msra.mxu0 0
    %3529 = vmatprep.subr.bf16.mxu0 0
    %3530 = vmatpush1.bf16.msra.mxu0 0
    %3531 = vmatprep.subr.bf16.mxu0 0
    %3532 = vmatpush1.bf16.msra.mxu0 0
    %3533 = vmatprep.subr.bf16.mxu0 0
    %3534 = vmatpush1.bf16.msra.mxu0 0
    %3535 = vmatprep.subr.bf16.mxu0 0
    %3536 = vmatpush1.bf16.msra.mxu0 0
    %3537 = vmatprep.subr.bf16.mxu0 0
    %3538 = vmatpush1.bf16.msra.mxu0 0
    %3539 = vmatprep.subr.bf16.mxu0 0
    %3540 = vmatpush1.bf16.msra.mxu0 0
    %3541 = vmatprep.subr.bf16.mxu0 0
    %3542 = vmatpush1.bf16.msra.mxu0 0
    %3543 = vmatprep.subr.bf16.mxu0 0
    %3544 = vmatpush1.bf16.msra.mxu0 0
    %3545 = vmatprep.subr.bf16.mxu0 0
    %3546 = vmatpush1.bf16.msra.mxu0 0
    %3547 = vmatprep.subr.bf16.mxu0 0
    %3548 = vmatpush1.bf16.msra.mxu0 0
    %3549 = vmatprep.subr.bf16.mxu0 0
    %3550 = vmatpush1.bf16.msra.mxu0 0
    %3551 = vmatprep.subr.bf16.mxu0 0
    %3552 = vmatpush1.bf16.msra.mxu0 0
    %3553 = vmatprep.mubr.bf16.mxu0 0
    %3554 = vmatmul.mubr.bf16.gmra.mrb[0].mxu0 %v3519
    %v3555 = vpop.f32.mrb[0].mxu0
    %v3556 = vadd.f32 0.0, %v3555
    %v3557 = vpop.f32.mrb[0].mxu0
    %v3558 = vadd.f32 0.0, %v3557
    %v3559 = vpop.f32.mrb[0].mxu0
    %v3560 = vpop.f32.mrb[0].mxu0
    %3561 = vdwg.mxu0
    %v3562 = vpack.c.bf16 %v3556, %v3556
    %v3563 = vpack.c.bf16 %v3558, %v3558
    %s3564 = scalar_lea.vmem [#allocation13], 1536
    %v3565 = vld [vmem:[%s3564] sm:$0xff]
    %v3566 = vld [vmem:[%s3564 + $0x8] sm:$0xff]
    %v3567 = vld [vmem:[%s3564 + $0x10] sm:$0xff]
    %v3568 = vld [vmem:[%s3564 + $0x18] sm:$0xff]
    %v3569 = vld [vmem:[%s3564 + $0x20] sm:$0xff]
    %v3570 = vld [vmem:[%s3564 + $0x28] sm:$0xff]
    %v3571 = vld [vmem:[%s3564 + $0x30] sm:$0xff]
    %v3572 = vld [vmem:[%s3564 + $0x38] sm:$0xff]
    %v3573 = vld [vmem:[%s3564 + $0x40] sm:$0xff]
    %v3574 = vld [vmem:[%s3564 + $0x48] sm:$0xff]
    %v3575 = vld [vmem:[%s3564 + $0x50] sm:$0xff]
    %v3576 = vld [vmem:[%s3564 + $0x58] sm:$0xff]
    %v3577 = vld [vmem:[%s3564 + $0x60] sm:$0xff]
    %v3578 = vld [vmem:[%s3564 + $0x68] sm:$0xff]
    %v3579 = vld [vmem:[%s3564 + $0x70] sm:$0xff]
    %v3580 = vld [vmem:[%s3564 + $0x78] sm:$0xff]
    %v3581 = vld [vmem:[%s3564 + $0x80] sm:$0xff]
    %v3582 = vld [vmem:[%s3564 + $0x88] sm:$0xff]
    %v3583 = vld [vmem:[%s3564 + $0x90] sm:$0xff]
    %v3584 = vld [vmem:[%s3564 + $0x98] sm:$0xff]
    %v3585 = vld [vmem:[%s3564 + $0xa0] sm:$0xff]
    %v3586 = vld [vmem:[%s3564 + $0xa8] sm:$0xff]
    %v3587 = vld [vmem:[%s3564 + $0xb0] sm:$0xff]
    %v3588 = vld [vmem:[%s3564 + $0xb8] sm:$0xff]
    %v3589 = vld [vmem:[%s3564 + $0xc0] sm:$0xff]
    %v3590 = vld [vmem:[%s3564 + $0xc8] sm:$0xff]
    %v3591 = vld [vmem:[%s3564 + $0xd0] sm:$0xff]
    %v3592 = vld [vmem:[%s3564 + $0xd8] sm:$0xff]
    %v3593 = vld [vmem:[%s3564 + $0xe0] sm:$0xff]
    %v3594 = vld [vmem:[%s3564 + $0xe8] sm:$0xff]
    %v3595 = vld [vmem:[%s3564 + $0xf0] sm:$0xff]
    %v3596 = vld [vmem:[%s3564 + $0xf8] sm:$0xff]
    %v3597 = vld [vmem:[%s3564 + $0x100] sm:$0xff]
    %v3598 = vld [vmem:[%s3564 + $0x108] sm:$0xff]
    %v3599 = vld [vmem:[%s3564 + $0x110] sm:$0xff]
    %v3600 = vld [vmem:[%s3564 + $0x118] sm:$0xff]
    %v3601 = vld [vmem:[%s3564 + $0x120] sm:$0xff]
    %v3602 = vld [vmem:[%s3564 + $0x128] sm:$0xff]
    %v3603 = vld [vmem:[%s3564 + $0x130] sm:$0xff]
    %v3604 = vld [vmem:[%s3564 + $0x138] sm:$0xff]
    %v3605 = vld [vmem:[%s3564 + $0x140] sm:$0xff]
    %v3606 = vld [vmem:[%s3564 + $0x148] sm:$0xff]
    %v3607 = vld [vmem:[%s3564 + $0x150] sm:$0xff]
    %v3608 = vld [vmem:[%s3564 + $0x158] sm:$0xff]
    %v3609 = vld [vmem:[%s3564 + $0x160] sm:$0xff]
    %v3610 = vld [vmem:[%s3564 + $0x168] sm:$0xff]
    %v3611 = vld [vmem:[%s3564 + $0x170] sm:$0xff]
    %v3612 = vld [vmem:[%s3564 + $0x178] sm:$0xff]
    %v3613 = vld [vmem:[%s3564 + $0x180] sm:$0xff]
    %v3614 = vld [vmem:[%s3564 + $0x188] sm:$0xff]
    %v3615 = vld [vmem:[%s3564 + $0x190] sm:$0xff]
    %v3616 = vld [vmem:[%s3564 + $0x198] sm:$0xff]
    %v3617 = vld [vmem:[%s3564 + $0x1a0] sm:$0xff]
    %v3618 = vld [vmem:[%s3564 + $0x1a8] sm:$0xff]
    %v3619 = vld [vmem:[%s3564 + $0x1b0] sm:$0xff]
    %v3620 = vld [vmem:[%s3564 + $0x1b8] sm:$0xff]
    %v3621 = vld [vmem:[%s3564 + $0x1c0] sm:$0xff]
    %v3622 = vld [vmem:[%s3564 + $0x1c8] sm:$0xff]
    %v3623 = vld [vmem:[%s3564 + $0x1d0] sm:$0xff]
    %v3624 = vld [vmem:[%s3564 + $0x1d8] sm:$0xff]
    %v3625 = vld [vmem:[%s3564 + $0x1e0] sm:$0xff]
    %v3626 = vld [vmem:[%s3564 + $0x1e8] sm:$0xff]
    %v3627 = vld [vmem:[%s3564 + $0x1f0] sm:$0xff]
    %v3628 = vld [vmem:[%s3564 + $0x1f8] sm:$0xff]
    %v3693 = vunpack.c.l.b16 %v3565
    %v3694 = vunpack.c.h.b16 %v3565
    %v3695 = vunpack.c.l.b16 %v3566
    %v3696 = vunpack.c.h.b16 %v3566
    %v3697 = vunpack.c.l.b16 %v3567
    %v3698 = vunpack.c.h.b16 %v3567
    %v3699 = vunpack.c.l.b16 %v3568
    %v3700 = vunpack.c.h.b16 %v3568
    %v3701 = vunpack.c.l.b16 %v3569
    %v3702 = vunpack.c.h.b16 %v3569
    %v3703 = vunpack.c.l.b16 %v3570
    %v3704 = vunpack.c.h.b16 %v3570
    %v3705 = vunpack.c.l.b16 %v3571
    %v3706 = vunpack.c.h.b16 %v3571
    %v3707 = vunpack.c.l.b16 %v3572
    %v3708 = vunpack.c.h.b16 %v3572
    %v3709 = vunpack.c.l.b16 %v3573
    %v3710 = vunpack.c.h.b16 %v3573
    %v3711 = vunpack.c.l.b16 %v3574
    %v3712 = vunpack.c.h.b16 %v3574
    %v3713 = vunpack.c.l.b16 %v3575
    %v3714 = vunpack.c.h.b16 %v3575
    %v3715 = vunpack.c.l.b16 %v3576
    %v3716 = vunpack.c.h.b16 %v3576
    %v3717 = vunpack.c.l.b16 %v3577
    %v3718 = vunpack.c.h.b16 %v3577
    %v3719 = vunpack.c.l.b16 %v3578
    %v3720 = vunpack.c.h.b16 %v3578
    %v3721 = vunpack.c.l.b16 %v3579
    %v3722 = vunpack.c.h.b16 %v3579
    %v3723 = vunpack.c.l.b16 %v3580
    %v3724 = vunpack.c.h.b16 %v3580
    %v3725 = vunpack.c.l.b16 %v3581
    %v3726 = vunpack.c.h.b16 %v3581
    %v3727 = vunpack.c.l.b16 %v3582
    %v3728 = vunpack.c.h.b16 %v3582
    %v3729 = vunpack.c.l.b16 %v3583
    %v3730 = vunpack.c.h.b16 %v3583
    %v3731 = vunpack.c.l.b16 %v3584
    %v3732 = vunpack.c.h.b16 %v3584
    %v3733 = vunpack.c.l.b16 %v3585
    %v3734 = vunpack.c.h.b16 %v3585
    %v3735 = vunpack.c.l.b16 %v3586
    %v3736 = vunpack.c.h.b16 %v3586
    %v3737 = vunpack.c.l.b16 %v3587
    %v3738 = vunpack.c.h.b16 %v3587
    %v3739 = vunpack.c.l.b16 %v3588
    %v3740 = vunpack.c.h.b16 %v3588
    %v3741 = vunpack.c.l.b16 %v3589
    %v3742 = vunpack.c.h.b16 %v3589
    %v3743 = vunpack.c.l.b16 %v3590
    %v3744 = vunpack.c.h.b16 %v3590
    %v3745 = vunpack.c.l.b16 %v3591
    %v3746 = vunpack.c.h.b16 %v3591
    %v3747 = vunpack.c.l.b16 %v3592
    %v3748 = vunpack.c.h.b16 %v3592
    %v3749 = vunpack.c.l.b16 %v3593
    %v3750 = vunpack.c.h.b16 %v3593
    %v3751 = vunpack.c.l.b16 %v3594
    %v3752 = vunpack.c.h.b16 %v3594
    %v3753 = vunpack.c.l.b16 %v3595
    %v3754 = vunpack.c.h.b16 %v3595
    %v3755 = vunpack.c.l.b16 %v3596
    %v3756 = vunpack.c.h.b16 %v3596
    %v3757 = vunpack.c.l.b16 %v3597
    %v3758 = vunpack.c.h.b16 %v3597
    %v3759 = vunpack.c.l.b16 %v3598
    %v3760 = vunpack.c.h.b16 %v3598
    %v3761 = vunpack.c.l.b16 %v3599
    %v3762 = vunpack.c.h.b16 %v3599
    %v3763 = vunpack.c.l.b16 %v3600
    %v3764 = vunpack.c.h.b16 %v3600
    %v3765 = vunpack.c.l.b16 %v3601
    %v3766 = vunpack.c.h.b16 %v3601
    %v3767 = vunpack.c.l.b16 %v3602
    %v3768 = vunpack.c.h.b16 %v3602
    %v3769 = vunpack.c.l.b16 %v3603
    %v3770 = vunpack.c.h.b16 %v3603
    %v3771 = vunpack.c.l.b16 %v3604
    %v3772 = vunpack.c.h.b16 %v3604
    %v3773 = vunpack.c.l.b16 %v3605
    %v3774 = vunpack.c.h.b16 %v3605
    %v3775 = vunpack.c.l.b16 %v3606
    %v3776 = vunpack.c.h.b16 %v3606
    %v3777 = vunpack.c.l.b16 %v3607
    %v3778 = vunpack.c.h.b16 %v3607
    %v3779 = vunpack.c.l.b16 %v3608
    %v3780 = vunpack.c.h.b16 %v3608
    %v3781 = vunpack.c.l.b16 %v3609
    %v3782 = vunpack.c.h.b16 %v3609
    %v3783 = vunpack.c.l.b16 %v3610
    %v3784 = vunpack.c.h.b16 %v3610
    %v3785 = vunpack.c.l.b16 %v3611
    %v3786 = vunpack.c.h.b16 %v3611
    %v3787 = vunpack.c.l.b16 %v3612
    %v3788 = vunpack.c.h.b16 %v3612
    %v3789 = vunpack.c.l.b16 %v3613
    %v3790 = vunpack.c.h.b16 %v3613
    %v3791 = vunpack.c.l.b16 %v3614
    %v3792 = vunpack.c.h.b16 %v3614
    %v3793 = vunpack.c.l.b16 %v3615
    %v3794 = vunpack.c.h.b16 %v3615
    %v3795 = vunpack.c.l.b16 %v3616
    %v3796 = vunpack.c.h.b16 %v3616
    %v3797 = vunpack.c.l.b16 %v3617
    %v3798 = vunpack.c.h.b16 %v3617
    %v3799 = vunpack.c.l.b16 %v3618
    %v3800 = vunpack.c.h.b16 %v3618
    %v3801 = vunpack.c.l.b16 %v3619
    %v3802 = vunpack.c.h.b16 %v3619
    %v3803 = vunpack.c.l.b16 %v3620
    %v3804 = vunpack.c.h.b16 %v3620
    %v3805 = vunpack.c.l.b16 %v3621
    %v3806 = vunpack.c.h.b16 %v3621
    %v3807 = vunpack.c.l.b16 %v3622
    %v3808 = vunpack.c.h.b16 %v3622
    %v3809 = vunpack.c.l.b16 %v3623
    %v3810 = vunpack.c.h.b16 %v3623
    %v3811 = vunpack.c.l.b16 %v3624
    %v3812 = vunpack.c.h.b16 %v3624
    %v3813 = vunpack.c.l.b16 %v3625
    %v3814 = vunpack.c.h.b16 %v3625
    %v3815 = vunpack.c.l.b16 %v3626
    %v3816 = vunpack.c.h.b16 %v3626
    %v3817 = vunpack.c.l.b16 %v3627
    %v3818 = vunpack.c.h.b16 %v3627
    %v3819 = vunpack.c.l.b16 %v3628
    %v3820 = vunpack.c.h.b16 %v3628
    %v3821 = vpack.c.b16 %v3697, %v3693
    %v3822 = vpack.c.b16 %v3698, %v3694
    %v3823 = vpack.c.b16 %v3699, %v3695
    %v3824 = vpack.c.b16 %v3700, %v3696
    %v3825 = vpack.c.b16 %v3705, %v3701
    %v3826 = vpack.c.b16 %v3706, %v3702
    %v3827 = vpack.c.b16 %v3707, %v3703
    %v3828 = vpack.c.b16 %v3708, %v3704
    %v3829 = vpack.c.b16 %v3713, %v3709
    %v3830 = vpack.c.b16 %v3714, %v3710
    %v3831 = vpack.c.b16 %v3715, %v3711
    %v3832 = vpack.c.b16 %v3716, %v3712
    %v3833 = vpack.c.b16 %v3721, %v3717
    %v3834 = vpack.c.b16 %v3722, %v3718
    %v3835 = vpack.c.b16 %v3723, %v3719
    %v3836 = vpack.c.b16 %v3724, %v3720
    %v3837 = vpack.c.b16 %v3729, %v3725
    %v3838 = vpack.c.b16 %v3730, %v3726
    %v3839 = vpack.c.b16 %v3731, %v3727
    %v3840 = vpack.c.b16 %v3732, %v3728
    %v3841 = vpack.c.b16 %v3737, %v3733
    %v3842 = vpack.c.b16 %v3738, %v3734
    %v3843 = vpack.c.b16 %v3739, %v3735
    %v3844 = vpack.c.b16 %v3740, %v3736
    %v3845 = vpack.c.b16 %v3745, %v3741
    %v3846 = vpack.c.b16 %v3746, %v3742
    %v3847 = vpack.c.b16 %v3747, %v3743
    %v3848 = vpack.c.b16 %v3748, %v3744
    %v3849 = vpack.c.b16 %v3753, %v3749
    %v3850 = vpack.c.b16 %v3754, %v3750
    %v3851 = vpack.c.b16 %v3755, %v3751
    %v3852 = vpack.c.b16 %v3756, %v3752
    %v3853 = vpack.c.b16 %v3761, %v3757
    %v3854 = vpack.c.b16 %v3762, %v3758
    %v3855 = vpack.c.b16 %v3763, %v3759
    %v3856 = vpack.c.b16 %v3764, %v3760
    %v3857 = vpack.c.b16 %v3769, %v3765
    %v3858 = vpack.c.b16 %v3770, %v3766
    %v3859 = vpack.c.b16 %v3771, %v3767
    %v3860 = vpack.c.b16 %v3772, %v3768
    %v3861 = vpack.c.b16 %v3777, %v3773
    %v3862 = vpack.c.b16 %v3778, %v3774
    %v3863 = vpack.c.b16 %v3779, %v3775
    %v3864 = vpack.c.b16 %v3780, %v3776
    %v3865 = vpack.c.b16 %v3785, %v3781
    %v3866 = vpack.c.b16 %v3786, %v3782
    %v3867 = vpack.c.b16 %v3787, %v3783
    %v3868 = vpack.c.b16 %v3788, %v3784
    %v3869 = vpack.c.b16 %v3793, %v3789
    %v3870 = vpack.c.b16 %v3794, %v3790
    %v3871 = vpack.c.b16 %v3795, %v3791
    %v3872 = vpack.c.b16 %v3796, %v3792
    %v3873 = vpack.c.b16 %v3801, %v3797
    %v3874 = vpack.c.b16 %v3802, %v3798
    %v3875 = vpack.c.b16 %v3803, %v3799
    %v3876 = vpack.c.b16 %v3804, %v3800
    %v3877 = vpack.c.b16 %v3809, %v3805
    %v3878 = vpack.c.b16 %v3810, %v3806
    %v3879 = vpack.c.b16 %v3811, %v3807
    %v3880 = vpack.c.b16 %v3812, %v3808
    %v3881 = vpack.c.b16 %v3817, %v3813
    %v3882 = vpack.c.b16 %v3818, %v3814
    %v3883 = vpack.c.b16 %v3819, %v3815
    %v3884 = vpack.c.b16 %v3820, %v3816
    %3949 = vmatprep.subr.bf16.mxu0 %v3822
    %3950 = vmatpush1.bf16.msra.mxu0 %v3821
    %3951 = vmatprep.subr.bf16.mxu0 %v3826
    %3952 = vmatpush1.bf16.msra.mxu0 %v3825
    %3953 = vmatprep.subr.bf16.mxu0 %v3830
    %3954 = vmatpush1.bf16.msra.mxu0 %v3829
    %3955 = vmatprep.subr.bf16.mxu0 %v3834
    %3956 = vmatpush1.bf16.msra.mxu0 %v3833
    %3957 = vmatprep.subr.bf16.mxu0 %v3838
    %3958 = vmatpush1.bf16.msra.mxu0 %v3837
    %3959 = vmatprep.subr.bf16.mxu0 %v3842
    %3960 = vmatpush1.bf16.msra.mxu0 %v3841
    %3961 = vmatprep.subr.bf16.mxu0 %v3846
    %3962 = vmatpush1.bf16.msra.mxu0 %v3845
    %3963 = vmatprep.subr.bf16.mxu0 %v3850
    %3964 = vmatpush1.bf16.msra.mxu0 %v3849
    %3965 = vmatprep.subr.bf16.mxu0 %v3854
    %3966 = vmatpush1.bf16.msra.mxu0 %v3853
    %3967 = vmatprep.subr.bf16.mxu0 %v3858
    %3968 = vmatpush1.bf16.msra.mxu0 %v3857
    %3969 = vmatprep.subr.bf16.mxu0 %v3862
    %3970 = vmatpush1.bf16.msra.mxu0 %v3861
    %3971 = vmatprep.subr.bf16.mxu0 %v3866
    %3972 = vmatpush1.bf16.msra.mxu0 %v3865
    %3973 = vmatprep.subr.bf16.mxu0 %v3870
    %3974 = vmatpush1.bf16.msra.mxu0 %v3869
    %3975 = vmatprep.subr.bf16.mxu0 %v3874
    %3976 = vmatpush1.bf16.msra.mxu0 %v3873
    %3977 = vmatprep.subr.bf16.mxu0 %v3878
    %3978 = vmatpush1.bf16.msra.mxu0 %v3877
    %3979 = vmatprep.subr.bf16.mxu0 %v3882
    %3980 = vmatpush1.bf16.msra.mxu0 %v3881
    %3981 = vmatprep.mubr.bf16.mxu0 %v3563
    %3982 = vmatmul.mubr.bf16.gmra.mrb[0].mxu0 %v3562
    %v3983 = vpop.f32.mrb[0].mxu0
    %v3984 = vadd.f32 0.0, %v3983
    %v3985 = vpop.f32.mrb[0].mxu0
    %v3986 = vadd.f32 0.0, %v3985
    %v3987 = vpop.f32.mrb[0].mxu0
    %v3988 = vpop.f32.mrb[0].mxu0
    %3989 = vdwg.mxu0
    %3990 = vmatprep.subr.bf16.mxu0 %v3824
    %3991 = vmatpush1.bf16.msra.mxu0 %v3823
    %3992 = vmatprep.subr.bf16.mxu0 %v3828
    %3993 = vmatpush1.bf16.msra.mxu0 %v3827
    %3994 = vmatprep.subr.bf16.mxu0 %v3832
    %3995 = vmatpush1.bf16.msra.mxu0 %v3831
    %3996 = vmatprep.subr.bf16.mxu0 %v3836
    %3997 = vmatpush1.bf16.msra.mxu0 %v3835
    %3998 = vmatprep.subr.bf16.mxu0 %v3840
    %3999 = vmatpush1.bf16.msra.mxu0 %v3839
    %4000 = vmatprep.subr.bf16.mxu0 %v3844
    %4001 = vmatpush1.bf16.msra.mxu0 %v3843
    %4002 = vmatprep.subr.bf16.mxu0 %v3848
    %4003 = vmatpush1.bf16.msra.mxu0 %v3847
    %4004 = vmatprep.subr.bf16.mxu0 %v3852
    %4005 = vmatpush1.bf16.msra.mxu0 %v3851
    %4006 = vmatprep.subr.bf16.mxu0 %v3856
    %4007 = vmatpush1.bf16.msra.mxu0 %v3855
    %4008 = vmatprep.subr.bf16.mxu0 %v3860
    %4009 = vmatpush1.bf16.msra.mxu0 %v3859
    %4010 = vmatprep.subr.bf16.mxu0 %v3864
    %4011 = vmatpush1.bf16.msra.mxu0 %v3863
    %4012 = vmatprep.subr.bf16.mxu0 %v3868
    %4013 = vmatpush1.bf16.msra.mxu0 %v3867
    %4014 = vmatprep.subr.bf16.mxu0 %v3872
    %4015 = vmatpush1.bf16.msra.mxu0 %v3871
    %4016 = vmatprep.subr.bf16.mxu0 %v3876
    %4017 = vmatpush1.bf16.msra.mxu0 %v3875
    %4018 = vmatprep.subr.bf16.mxu0 %v3880
    %4019 = vmatpush1.bf16.msra.mxu0 %v3879
    %4020 = vmatprep.subr.bf16.mxu0 %v3884
    %4021 = vmatpush1.bf16.msra.mxu0 %v3883
    %4022 = vmatprep.mubr.bf16.mxu0 %v3563
    %4023 = vmatmul.mubr.bf16.gmra.mrb[0].mxu0 %v3562
    %v4024 = vpop.f32.mrb[0].mxu0
    %v4025 = vadd.f32 0.0, %v4024
    %v4026 = vpop.f32.mrb[0].mxu0
    %v4027 = vadd.f32 0.0, %v4026
    %v4028 = vpop.f32.mrb[0].mxu0
    %v4029 = vpop.f32.mrb[0].mxu0
    %4030 = vdwg.mxu0
    %v4031 = vadd.f32 %v3512, %v3984
    %v4032 = vadd.f32 %v3513, %v3986
    %v4033 = vadd.f32 %v3514, %v4025
    %v4034 = vadd.f32 %v3515, %v4027
    %s4035 = scalar_lea.vmem [#allocation5], 4
    %v4036 = vld [vmem:[%s4035] sm:$0x1]
    %v4038 = vsel %vm1962, %v4036, 0
    %4040 = vmatprep.subr.bf16.mxu0 %v1958
    %4041 = vmatpush1.bf16.msra.mxu0 %v1957
    %4042 = vmatprep.subr.bf16.mxu0 %v1971
    %4043 = vmatpush1.bf16.msra.mxu0 %v1968
    %4044 = vmatprep.subr.bf16.mxu0 0
    %4045 = vmatpush1.bf16.msra.mxu0 0
    %4046 = vmatprep.subr.bf16.mxu0 0
    %4047 = vmatpush1.bf16.msra.mxu0 0
    %4048 = vmatprep.subr.bf16.mxu0 0
    %4049 = vmatpush1.bf16.msra.mxu0 0
    %4050 = vmatprep.subr.bf16.mxu0 0
    %4051 = vmatpush1.bf16.msra.mxu0 0
    %4052 = vmatprep.subr.bf16.mxu0 0
    %4053 = vmatpush1.bf16.msra.mxu0 0
    %4054 = vmatprep.subr.bf16.mxu0 0
    %4055 = vmatpush1.bf16.msra.mxu0 0
    %4056 = vmatprep.subr.bf16.mxu0 0
    %4057 = vmatpush1.bf16.msra.mxu0 0
    %4058 = vmatprep.subr.bf16.mxu0 0
    %4059 = vmatpush1.bf16.msra.mxu0 0
    %4060 = vmatprep.subr.bf16.mxu0 0
    %4061 = vmatpush1.bf16.msra.mxu0 0
    %4062 = vmatprep.subr.bf16.mxu0 0
    %4063 = vmatpush1.bf16.msra.mxu0 0
    %4064 = vmatprep.subr.bf16.mxu0 0
    %4065 = vmatpush1.bf16.msra.mxu0 0
    %4066 = vmatprep.subr.bf16.mxu0 0
    %4067 = vmatpush1.bf16.msra.mxu0 0
    %4068 = vmatprep.subr.bf16.mxu0 0
    %4069 = vmatpush1.bf16.msra.mxu0 0
    %4070 = vmatprep.subr.bf16.mxu0 0
    %4071 = vmatpush1.bf16.msra.mxu0 0
    %4072 = vmatprep.mubr.bf16.mxu0 0
    %4073 = vmatmul.mubr.bf16.gmra.mrb[0].mxu0 %v4038
    %v4074 = vpop.f32.mrb[0].mxu0
    %v4075 = vadd.f32 0.0, %v4074
    %v4076 = vpop.f32.mrb[0].mxu0
    %v4077 = vadd.f32 0.0, %v4076
    %v4078 = vpop.f32.mrb[0].mxu0
    %v4079 = vpop.f32.mrb[0].mxu0
    %4080 = vdwg.mxu0
    %v4081 = vpack.c.bf16 %v4075, %v4075
    %v4082 = vpack.c.bf16 %v4077, %v4077
    %s4083 = scalar_lea.vmem [#allocation13], 2048
    %v4084 = vld [vmem:[%s4083] sm:$0xff]
    %v4085 = vld [vmem:[%s4083 + $0x8] sm:$0xff]
    %v4086 = vld [vmem:[%s4083 + $0x10] sm:$0xff]
    %v4087 = vld [vmem:[%s4083 + $0x18] sm:$0xff]
    %v4088 = vld [vmem:[%s4083 + $0x20] sm:$0xff]
    %v4089 = vld [vmem:[%s4083 + $0x28] sm:$0xff]
    %v4090 = vld [vmem:[%s4083 + $0x30] sm:$0xff]
    %v4091 = vld [vmem:[%s4083 + $0x38] sm:$0xff]
    %v4092 = vld [vmem:[%s4083 + $0x40] sm:$0xff]
    %v4093 = vld [vmem:[%s4083 + $0x48] sm:$0xff]
    %v4094 = vld [vmem:[%s4083 + $0x50] sm:$0xff]
    %v4095 = vld [vmem:[%s4083 + $0x58] sm:$0xff]
    %v4096 = vld [vmem:[%s4083 + $0x60] sm:$0xff]
    %v4097 = vld [vmem:[%s4083 + $0x68] sm:$0xff]
    %v4098 = vld [vmem:[%s4083 + $0x70] sm:$0xff]
    %v4099 = vld [vmem:[%s4083 + $0x78] sm:$0xff]
    %v4100 = vld [vmem:[%s4083 + $0x80] sm:$0xff]
    %v4101 = vld [vmem:[%s4083 + $0x88] sm:$0xff]
    %v4102 = vld [vmem:[%s4083 + $0x90] sm:$0xff]
    %v4103 = vld [vmem:[%s4083 + $0x98] sm:$0xff]
    %v4104 = vld [vmem:[%s4083 + $0xa0] sm:$0xff]
    %v4105 = vld [vmem:[%s4083 + $0xa8] sm:$0xff]
    %v4106 = vld [vmem:[%s4083 + $0xb0] sm:$0xff]
    %v4107 = vld [vmem:[%s4083 + $0xb8] sm:$0xff]
    %v4108 = vld [vmem:[%s4083 + $0xc0] sm:$0xff]
    %v4109 = vld [vmem:[%s4083 + $0xc8] sm:$0xff]
    %v4110 = vld [vmem:[%s4083 + $0xd0] sm:$0xff]
    %v4111 = vld [vmem:[%s4083 + $0xd8] sm:$0xff]
    %v4112 = vld [vmem:[%s4083 + $0xe0] sm:$0xff]
    %v4113 = vld [vmem:[%s4083 + $0xe8] sm:$0xff]
    %v4114 = vld [vmem:[%s4083 + $0xf0] sm:$0xff]
    %v4115 = vld [vmem:[%s4083 + $0xf8] sm:$0xff]
    %v4116 = vld [vmem:[%s4083 + $0x100] sm:$0xff]
    %v4117 = vld [vmem:[%s4083 + $0x108] sm:$0xff]
    %v4118 = vld [vmem:[%s4083 + $0x110] sm:$0xff]
    %v4119 = vld [vmem:[%s4083 + $0x118] sm:$0xff]
    %v4120 = vld [vmem:[%s4083 + $0x120] sm:$0xff]
    %v4121 = vld [vmem:[%s4083 + $0x128] sm:$0xff]
    %v4122 = vld [vmem:[%s4083 + $0x130] sm:$0xff]
    %v4123 = vld [vmem:[%s4083 + $0x138] sm:$0xff]
    %v4124 = vld [vmem:[%s4083 + $0x140] sm:$0xff]
    %v4125 = vld [vmem:[%s4083 + $0x148] sm:$0xff]
    %v4126 = vld [vmem:[%s4083 + $0x150] sm:$0xff]
    %v4127 = vld [vmem:[%s4083 + $0x158] sm:$0xff]
    %v4128 = vld [vmem:[%s4083 + $0x160] sm:$0xff]
    %v4129 = vld [vmem:[%s4083 + $0x168] sm:$0xff]
    %v4130 = vld [vmem:[%s4083 + $0x170] sm:$0xff]
    %v4131 = vld [vmem:[%s4083 + $0x178] sm:$0xff]
    %v4132 = vld [vmem:[%s4083 + $0x180] sm:$0xff]
    %v4133 = vld [vmem:[%s4083 + $0x188] sm:$0xff]
    %v4134 = vld [vmem:[%s4083 + $0x190] sm:$0xff]
    %v4135 = vld [vmem:[%s4083 + $0x198] sm:$0xff]
    %v4136 = vld [vmem:[%s4083 + $0x1a0] sm:$0xff]
    %v4137 = vld [vmem:[%s4083 + $0x1a8] sm:$0xff]
    %v4138 = vld [vmem:[%s4083 + $0x1b0] sm:$0xff]
    %v4139 = vld [vmem:[%s4083 + $0x1b8] sm:$0xff]
    %v4140 = vld [vmem:[%s4083 + $0x1c0] sm:$0xff]
    %v4141 = vld [vmem:[%s4083 + $0x1c8] sm:$0xff]
    %v4142 = vld [vmem:[%s4083 + $0x1d0] sm:$0xff]
    %v4143 = vld [vmem:[%s4083 + $0x1d8] sm:$0xff]
    %v4144 = vld [vmem:[%s4083 + $0x1e0] sm:$0xff]
    %v4145 = vld [vmem:[%s4083 + $0x1e8] sm:$0xff]
    %v4146 = vld [vmem:[%s4083 + $0x1f0] sm:$0xff]
    %v4147 = vld [vmem:[%s4083 + $0x1f8] sm:$0xff]
    %v4212 = vunpack.c.l.b16 %v4084
    %v4213 = vunpack.c.h.b16 %v4084
    %v4214 = vunpack.c.l.b16 %v4085
    %v4215 = vunpack.c.h.b16 %v4085
    %v4216 = vunpack.c.l.b16 %v4086
    %v4217 = vunpack.c.h.b16 %v4086
    %v4218 = vunpack.c.l.b16 %v4087
    %v4219 = vunpack.c.h.b16 %v4087
    %v4220 = vunpack.c.l.b16 %v4088
    %v4221 = vunpack.c.h.b16 %v4088
    %v4222 = vunpack.c.l.b16 %v4089
    %v4223 = vunpack.c.h.b16 %v4089
    %v4224 = vunpack.c.l.b16 %v4090
    %v4225 = vunpack.c.h.b16 %v4090
    %v4226 = vunpack.c.l.b16 %v4091
    %v4227 = vunpack.c.h.b16 %v4091
    %v4228 = vunpack.c.l.b16 %v4092
    %v4229 = vunpack.c.h.b16 %v4092
    %v4230 = vunpack.c.l.b16 %v4093
    %v4231 = vunpack.c.h.b16 %v4093
    %v4232 = vunpack.c.l.b16 %v4094
    %v4233 = vunpack.c.h.b16 %v4094
    %v4234 = vunpack.c.l.b16 %v4095
    %v4235 = vunpack.c.h.b16 %v4095
    %v4236 = vunpack.c.l.b16 %v4096
    %v4237 = vunpack.c.h.b16 %v4096
    %v4238 = vunpack.c.l.b16 %v4097
    %v4239 = vunpack.c.h.b16 %v4097
    %v4240 = vunpack.c.l.b16 %v4098
    %v4241 = vunpack.c.h.b16 %v4098
    %v4242 = vunpack.c.l.b16 %v4099
    %v4243 = vunpack.c.h.b16 %v4099
    %v4244 = vunpack.c.l.b16 %v4100
    %v4245 = vunpack.c.h.b16 %v4100
    %v4246 = vunpack.c.l.b16 %v4101
    %v4247 = vunpack.c.h.b16 %v4101
    %v4248 = vunpack.c.l.b16 %v4102
    %v4249 = vunpack.c.h.b16 %v4102
    %v4250 = vunpack.c.l.b16 %v4103
    %v4251 = vunpack.c.h.b16 %v4103
    %v4252 = vunpack.c.l.b16 %v4104
    %v4253 = vunpack.c.h.b16 %v4104
    %v4254 = vunpack.c.l.b16 %v4105
    %v4255 = vunpack.c.h.b16 %v4105
    %v4256 = vunpack.c.l.b16 %v4106
    %v4257 = vunpack.c.h.b16 %v4106
    %v4258 = vunpack.c.l.b16 %v4107
    %v4259 = vunpack.c.h.b16 %v4107
    %v4260 = vunpack.c.l.b16 %v4108
    %v4261 = vunpack.c.h.b16 %v4108
    %v4262 = vunpack.c.l.b16 %v4109
    %v4263 = vunpack.c.h.b16 %v4109
    %v4264 = vunpack.c.l.b16 %v4110
    %v4265 = vunpack.c.h.b16 %v4110
    %v4266 = vunpack.c.l.b16 %v4111
    %v4267 = vunpack.c.h.b16 %v4111
    %v4268 = vunpack.c.l.b16 %v4112
    %v4269 = vunpack.c.h.b16 %v4112
    %v4270 = vunpack.c.l.b16 %v4113
    %v4271 = vunpack.c.h.b16 %v4113
    %v4272 = vunpack.c.l.b16 %v4114
    %v4273 = vunpack.c.h.b16 %v4114
    %v4274 = vunpack.c.l.b16 %v4115
    %v4275 = vunpack.c.h.b16 %v4115
    %v4276 = vunpack.c.l.b16 %v4116
    %v4277 = vunpack.c.h.b16 %v4116
    %v4278 = vunpack.c.l.b16 %v4117
    %v4279 = vunpack.c.h.b16 %v4117
    %v4280 = vunpack.c.l.b16 %v4118
    %v4281 = vunpack.c.h.b16 %v4118
    %v4282 = vunpack.c.l.b16 %v4119
    %v4283 = vunpack.c.h.b16 %v4119
    %v4284 = vunpack.c.l.b16 %v4120
    %v4285 = vunpack.c.h.b16 %v4120
    %v4286 = vunpack.c.l.b16 %v4121
    %v4287 = vunpack.c.h.b16 %v4121
    %v4288 = vunpack.c.l.b16 %v4122
    %v4289 = vunpack.c.h.b16 %v4122
    %v4290 = vunpack.c.l.b16 %v4123
    %v4291 = vunpack.c.h.b16 %v4123
    %v4292 = vunpack.c.l.b16 %v4124
    %v4293 = vunpack.c.h.b16 %v4124
    %v4294 = vunpack.c.l.b16 %v4125
    %v4295 = vunpack.c.h.b16 %v4125
    %v4296 = vunpack.c.l.b16 %v4126
    %v4297 = vunpack.c.h.b16 %v4126
    %v4298 = vunpack.c.l.b16 %v4127
    %v4299 = vunpack.c.h.b16 %v4127
    %v4300 = vunpack.c.l.b16 %v4128
    %v4301 = vunpack.c.h.b16 %v4128
    %v4302 = vunpack.c.l.b16 %v4129
    %v4303 = vunpack.c.h.b16 %v4129
    %v4304 = vunpack.c.l.b16 %v4130
    %v4305 = vunpack.c.h.b16 %v4130
    %v4306 = vunpack.c.l.b16 %v4131
    %v4307 = vunpack.c.h.b16 %v4131
    %v4308 = vunpack.c.l.b16 %v4132
    %v4309 = vunpack.c.h.b16 %v4132
    %v4310 = vunpack.c.l.b16 %v4133
    %v4311 = vunpack.c.h.b16 %v4133
    %v4312 = vunpack.c.l.b16 %v4134
    %v4313 = vunpack.c.h.b16 %v4134
    %v4314 = vunpack.c.l.b16 %v4135
    %v4315 = vunpack.c.h.b16 %v4135
    %v4316 = vunpack.c.l.b16 %v4136
    %v4317 = vunpack.c.h.b16 %v4136
    %v4318 = vunpack.c.l.b16 %v4137
    %v4319 = vunpack.c.h.b16 %v4137
    %v4320 = vunpack.c.l.b16 %v4138
    %v4321 = vunpack.c.h.b16 %v4138
    %v4322 = vunpack.c.l.b16 %v4139
    %v4323 = vunpack.c.h.b16 %v4139
    %v4324 = vunpack.c.l.b16 %v4140
    %v4325 = vunpack.c.h.b16 %v4140
    %v4326 = vunpack.c.l.b16 %v4141
    %v4327 = vunpack.c.h.b16 %v4141
    %v4328 = vunpack.c.l.b16 %v4142
    %v4329 = vunpack.c.h.b16 %v4142
    %v4330 = vunpack.c.l.b16 %v4143
    %v4331 = vunpack.c.h.b16 %v4143
    %v4332 = vunpack.c.l.b16 %v4144
    %v4333 = vunpack.c.h.b16 %v4144
    %v4334 = vunpack.c.l.b16 %v4145
    %v4335 = vunpack.c.h.b16 %v4145
    %v4336 = vunpack.c.l.b16 %v4146
    %v4337 = vunpack.c.h.b16 %v4146
    %v4338 = vunpack.c.l.b16 %v4147
    %v4339 = vunpack.c.h.b16 %v4147
    %v4340 = vpack.c.b16 %v4216, %v4212
    %v4341 = vpack.c.b16 %v4217, %v4213
    %v4342 = vpack.c.b16 %v4218, %v4214
    %v4343 = vpack.c.b16 %v4219, %v4215
    %v4344 = vpack.c.b16 %v4224, %v4220
    %v4345 = vpack.c.b16 %v4225, %v4221
    %v4346 = vpack.c.b16 %v4226, %v4222
    %v4347 = vpack.c.b16 %v4227, %v4223
    %v4348 = vpack.c.b16 %v4232, %v4228
    %v4349 = vpack.c.b16 %v4233, %v4229
    %v4350 = vpack.c.b16 %v4234, %v4230
    %v4351 = vpack.c.b16 %v4235, %v4231
    %v4352 = vpack.c.b16 %v4240, %v4236
    %v4353 = vpack.c.b16 %v4241, %v4237
    %v4354 = vpack.c.b16 %v4242, %v4238
    %v4355 = vpack.c.b16 %v4243, %v4239
    %v4356 = vpack.c.b16 %v4248, %v4244
    %v4357 = vpack.c.b16 %v4249, %v4245
    %v4358 = vpack.c.b16 %v4250, %v4246
    %v4359 = vpack.c.b16 %v4251, %v4247
    %v4360 = vpack.c.b16 %v4256, %v4252
    %v4361 = vpack.c.b16 %v4257, %v4253
    %v4362 = vpack.c.b16 %v4258, %v4254
    %v4363 = vpack.c.b16 %v4259, %v4255
    %v4364 = vpack.c.b16 %v4264, %v4260
    %v4365 = vpack.c.b16 %v4265, %v4261
    %v4366 = vpack.c.b16 %v4266, %v4262
    %v4367 = vpack.c.b16 %v4267, %v4263
    %v4368 = vpack.c.b16 %v4272, %v4268
    %v4369 = vpack.c.b16 %v4273, %v4269
    %v4370 = vpack.c.b16 %v4274, %v4270
    %v4371 = vpack.c.b16 %v4275, %v4271
    %v4372 = vpack.c.b16 %v4280, %v4276
    %v4373 = vpack.c.b16 %v4281, %v4277
    %v4374 = vpack.c.b16 %v4282, %v4278
    %v4375 = vpack.c.b16 %v4283, %v4279
    %v4376 = vpack.c.b16 %v4288, %v4284
    %v4377 = vpack.c.b16 %v4289, %v4285
    %v4378 = vpack.c.b16 %v4290, %v4286
    %v4379 = vpack.c.b16 %v4291, %v4287
    %v4380 = vpack.c.b16 %v4296, %v4292
    %v4381 = vpack.c.b16 %v4297, %v4293
    %v4382 = vpack.c.b16 %v4298, %v4294
    %v4383 = vpack.c.b16 %v4299, %v4295
    %v4384 = vpack.c.b16 %v4304, %v4300
    %v4385 = vpack.c.b16 %v4305, %v4301
    %v4386 = vpack.c.b16 %v4306, %v4302
    %v4387 = vpack.c.b16 %v4307, %v4303
    %v4388 = vpack.c.b16 %v4312, %v4308
    %v4389 = vpack.c.b16 %v4313, %v4309
    %v4390 = vpack.c.b16 %v4314, %v4310
    %v4391 = vpack.c.b16 %v4315, %v4311
    %v4392 = vpack.c.b16 %v4320, %v4316
    %v4393 = vpack.c.b16 %v4321, %v4317
    %v4394 = vpack.c.b16 %v4322, %v4318
    %v4395 = vpack.c.b16 %v4323, %v4319
    %v4396 = vpack.c.b16 %v4328, %v4324
    %v4397 = vpack.c.b16 %v4329, %v4325
    %v4398 = vpack.c.b16 %v4330, %v4326
    %v4399 = vpack.c.b16 %v4331, %v4327
    %v4400 = vpack.c.b16 %v4336, %v4332
    %v4401 = vpack.c.b16 %v4337, %v4333
    %v4402 = vpack.c.b16 %v4338, %v4334
    %v4403 = vpack.c.b16 %v4339, %v4335
    %4468 = vmatprep.subr.bf16.mxu0 %v4341
    %4469 = vmatpush1.bf16.msra.mxu0 %v4340
    %4470 = vmatprep.subr.bf16.mxu0 %v4345
    %4471 = vmatpush1.bf16.msra.mxu0 %v4344
    %4472 = vmatprep.subr.bf16.mxu0 %v4349
    %4473 = vmatpush1.bf16.msra.mxu0 %v4348
    %4474 = vmatprep.subr.bf16.mxu0 %v4353
    %4475 = vmatpush1.bf16.msra.mxu0 %v4352
    %4476 = vmatprep.subr.bf16.mxu0 %v4357
    %4477 = vmatpush1.bf16.msra.mxu0 %v4356
    %4478 = vmatprep.subr.bf16.mxu0 %v4361
    %4479 = vmatpush1.bf16.msra.mxu0 %v4360
    %4480 = vmatprep.subr.bf16.mxu0 %v4365
    %4481 = vmatpush1.bf16.msra.mxu0 %v4364
    %4482 = vmatprep.subr.bf16.mxu0 %v4369
    %4483 = vmatpush1.bf16.msra.mxu0 %v4368
    %4484 = vmatprep.subr.bf16.mxu0 %v4373
    %4485 = vmatpush1.bf16.msra.mxu0 %v4372
    %4486 = vmatprep.subr.bf16.mxu0 %v4377
    %4487 = vmatpush1.bf16.msra.mxu0 %v4376
    %4488 = vmatprep.subr.bf16.mxu0 %v4381
    %4489 = vmatpush1.bf16.msra.mxu0 %v4380
    %4490 = vmatprep.subr.bf16.mxu0 %v4385
    %4491 = vmatpush1.bf16.msra.mxu0 %v4384
    %4492 = vmatprep.subr.bf16.mxu0 %v4389
    %4493 = vmatpush1.bf16.msra.mxu0 %v4388
    %4494 = vmatprep.subr.bf16.mxu0 %v4393
    %4495 = vmatpush1.bf16.msra.mxu0 %v4392
    %4496 = vmatprep.subr.bf16.mxu0 %v4397
    %4497 = vmatpush1.bf16.msra.mxu0 %v4396
    %4498 = vmatprep.subr.bf16.mxu0 %v4401
    %4499 = vmatpush1.bf16.msra.mxu0 %v4400
    %4500 = vmatprep.mubr.bf16.mxu0 %v4082
    %4501 = vmatmul.mubr.bf16.gmra.mrb[0].mxu0 %v4081
    %v4502 = vpop.f32.mrb[0].mxu0
    %v4503 = vadd.f32 0.0, %v4502
    %v4504 = vpop.f32.mrb[0].mxu0
    %v4505 = vadd.f32 0.0, %v4504
    %v4506 = vpop.f32.mrb[0].mxu0
    %v4507 = vpop.f32.mrb[0].mxu0
    %4508 = vdwg.mxu0
    %4509 = vmatprep.subr.bf16.mxu0 %v4343
    %4510 = vmatpush1.bf16.msra.mxu0 %v4342
    %4511 = vmatprep.subr.bf16.mxu0 %v4347
    %4512 = vmatpush1.bf16.msra.mxu0 %v4346
    %4513 = vmatprep.subr.bf16.mxu0 %v4351
    %4514 = vmatpush1.bf16.msra.mxu0 %v4350
    %4515 = vmatprep.subr.bf16.mxu0 %v4355
    %4516 = vmatpush1.bf16.msra.mxu0 %v4354
    %4517 = vmatprep.subr.bf16.mxu0 %v4359
    %4518 = vmatpush1.bf16.msra.mxu0 %v4358
    %4519 = vmatprep.subr.bf16.mxu0 %v4363
    %4520 = vmatpush1.bf16.msra.mxu0 %v4362
    %4521 = vmatprep.subr.bf16.mxu0 %v4367
    %4522 = vmatpush1.bf16.msra.mxu0 %v4366
    %4523 = vmatprep.subr.bf16.mxu0 %v4371
    %4524 = vmatpush1.bf16.msra.mxu0 %v4370
    %4525 = vmatprep.subr.bf16.mxu0 %v4375
    %4526 = vmatpush1.bf16.msra.mxu0 %v4374
    %4527 = vmatprep.subr.bf16.mxu0 %v4379
    %4528 = vmatpush1.bf16.msra.mxu0 %v4378
    %4529 = vmatprep.subr.bf16.mxu0 %v4383
    %4530 = vmatpush1.bf16.msra.mxu0 %v4382
    %4531 = vmatprep.subr.bf16.mxu0 %v4387
    %4532 = vmatpush1.bf16.msra.mxu0 %v4386
    %4533 = vmatprep.subr.bf16.mxu0 %v4391
    %4534 = vmatpush1.bf16.msra.mxu0 %v4390
    %4535 = vmatprep.subr.bf16.mxu0 %v4395
    %4536 = vmatpush1.bf16.msra.mxu0 %v4394
    %4537 = vmatprep.subr.bf16.mxu0 %v4399
    %4538 = vmatpush1.bf16.msra.mxu0 %v4398
    %4539 = vmatprep.subr.bf16.mxu0 %v4403
    %4540 = vmatpush1.bf16.msra.mxu0 %v4402
    %4541 = vmatprep.mubr.bf16.mxu0 %v4082
    %4542 = vmatmul.mubr.bf16.gmra.mrb[0].mxu0 %v4081
    %v4543 = vpop.f32.mrb[0].mxu0
    %v4544 = vadd.f32 0.0, %v4543
    %v4545 = vpop.f32.mrb[0].mxu0
    %v4546 = vadd.f32 0.0, %v4545
    %v4547 = vpop.f32.mrb[0].mxu0
    %v4548 = vpop.f32.mrb[0].mxu0
    %4549 = vdwg.mxu0
    %v4550 = vadd.f32 %v4031, %v4503
    %v4551 = vadd.f32 %v4032, %v4505
    %v4552 = vadd.f32 %v4033, %v4544
    %v4553 = vadd.f32 %v4034, %v4546
    %s4554 = scalar_lea.vmem [#allocation5], 5
    %v4555 = vld [vmem:[%s4554] sm:$0x1]
    %v4557 = vsel %vm1962, %v4555, 0
    %4559 = vmatprep.subr.bf16.mxu0 %v1958
    %4560 = vmatpush1.bf16.msra.mxu0 %v1957
    %4561 = vmatprep.subr.bf16.mxu0 %v1971
    %4562 = vmatpush1.bf16.msra.mxu0 %v1968
    %4563 = vmatprep.subr.bf16.mxu0 0
    %4564 = vmatpush1.bf16.msra.mxu0 0
    %4565 = vmatprep.subr.bf16.mxu0 0
    %4566 = vmatpush1.bf16.msra.mxu0 0
    %4567 = vmatprep.subr.bf16.mxu0 0
    %4568 = vmatpush1.bf16.msra.mxu0 0
    %4569 = vmatprep.subr.bf16.mxu0 0
    %4570 = vmatpush1.bf16.msra.mxu0 0
    %4571 = vmatprep.subr.bf16.mxu0 0
    %4572 = vmatpush1.bf16.msra.mxu0 0
    %4573 = vmatprep.subr.bf16.mxu0 0
    %4574 = vmatpush1.bf16.msra.mxu0 0
    %4575 = vmatprep.subr.bf16.mxu0 0
    %4576 = vmatpush1.bf16.msra.mxu0 0
    %4577 = vmatprep.subr.bf16.mxu0 0
    %4578 = vmatpush1.bf16.msra.mxu0 0
    %4579 = vmatprep.subr.bf16.mxu0 0
    %4580 = vmatpush1.bf16.msra.mxu0 0
    %4581 = vmatprep.subr.bf16.mxu0 0
    %4582 = vmatpush1.bf16.msra.mxu0 0
    %4583 = vmatprep.subr.bf16.mxu0 0
    %4584 = vmatpush1.bf16.msra.mxu0 0
    %4585 = vmatprep.subr.bf16.mxu0 0
    %4586 = vmatpush1.bf16.msra.mxu0 0
    %4587 = vmatprep.subr.bf16.mxu0 0
    %4588 = vmatpush1.bf16.msra.mxu0 0
    %4589 = vmatprep.subr.bf16.mxu0 0
    %4590 = vmatpush1.bf16.msra.mxu0 0
    %4591 = vmatprep.mubr.bf16.mxu0 0
    %4592 = vmatmul.mubr.bf16.gmra.mrb[0].mxu0 %v4557
    %v4593 = vpop.f32.mrb[0].mxu0
    %v4594 = vadd.f32 0.0, %v4593
    %v4595 = vpop.f32.mrb[0].mxu0
    %v4596 = vadd.f32 0.0, %v4595
    %v4597 = vpop.f32.mrb[0].mxu0
    %v4598 = vpop.f32.mrb[0].mxu0
    %4599 = vdwg.mxu0
    %v4600 = vpack.c.bf16 %v4594, %v4594
    %v4601 = vpack.c.bf16 %v4596, %v4596
    %s4602 = scalar_lea.vmem [#allocation13], 2560
    %v4603 = vld [vmem:[%s4602] sm:$0xff]
    %v4604 = vld [vmem:[%s4602 + $0x8] sm:$0xff]
    %v4605 = vld [vmem:[%s4602 + $0x10] sm:$0xff]
    %v4606 = vld [vmem:[%s4602 + $0x18] sm:$0xff]
    %v4607 = vld [vmem:[%s4602 + $0x20] sm:$0xff]
    %v4608 = vld [vmem:[%s4602 + $0x28] sm:$0xff]
    %v4609 = vld [vmem:[%s4602 + $0x30] sm:$0xff]
    %v4610 = vld [vmem:[%s4602 + $0x38] sm:$0xff]
    %v4611 = vld [vmem:[%s4602 + $0x40] sm:$0xff]
    %v4612 = vld [vmem:[%s4602 + $0x48] sm:$0xff]
    %v4613 = vld [vmem:[%s4602 + $0x50] sm:$0xff]
    %v4614 = vld [vmem:[%s4602 + $0x58] sm:$0xff]
    %v4615 = vld [vmem:[%s4602 + $0x60] sm:$0xff]
    %v4616 = vld [vmem:[%s4602 + $0x68] sm:$0xff]
    %v4617 = vld [vmem:[%s4602 + $0x70] sm:$0xff]
    %v4618 = vld [vmem:[%s4602 + $0x78] sm:$0xff]
    %v4619 = vld [vmem:[%s4602 + $0x80] sm:$0xff]
    %v4620 = vld [vmem:[%s4602 + $0x88] sm:$0xff]
    %v4621 = vld [vmem:[%s4602 + $0x90] sm:$0xff]
    %v4622 = vld [vmem:[%s4602 + $0x98] sm:$0xff]
    %v4623 = vld [vmem:[%s4602 + $0xa0] sm:$0xff]
    %v4624 = vld [vmem:[%s4602 + $0xa8] sm:$0xff]
    %v4625 = vld [vmem:[%s4602 + $0xb0] sm:$0xff]
    %v4626 = vld [vmem:[%s4602 + $0xb8] sm:$0xff]
    %v4627 = vld [vmem:[%s4602 + $0xc0] sm:$0xff]
    %v4628 = vld [vmem:[%s4602 + $0xc8] sm:$0xff]
    %v4629 = vld [vmem:[%s4602 + $0xd0] sm:$0xff]
    %v4630 = vld [vmem:[%s4602 + $0xd8] sm:$0xff]
    %v4631 = vld [vmem:[%s4602 + $0xe0] sm:$0xff]
    %v4632 = vld [vmem:[%s4602 + $0xe8] sm:$0xff]
    %v4633 = vld [vmem:[%s4602 + $0xf0] sm:$0xff]
    %v4634 = vld [vmem:[%s4602 + $0xf8] sm:$0xff]
    %v4635 = vld [vmem:[%s4602 + $0x100] sm:$0xff]
    %v4636 = vld [vmem:[%s4602 + $0x108] sm:$0xff]
    %v4637 = vld [vmem:[%s4602 + $0x110] sm:$0xff]
    %v4638 = vld [vmem:[%s4602 + $0x118] sm:$0xff]
    %v4639 = vld [vmem:[%s4602 + $0x120] sm:$0xff]
    %v4640 = vld [vmem:[%s4602 + $0x128] sm:$0xff]
    %v4641 = vld [vmem:[%s4602 + $0x130] sm:$0xff]
    %v4642 = vld [vmem:[%s4602 + $0x138] sm:$0xff]
    %v4643 = vld [vmem:[%s4602 + $0x140] sm:$0xff]
    %v4644 = vld [vmem:[%s4602 + $0x148] sm:$0xff]
    %v4645 = vld [vmem:[%s4602 + $0x150] sm:$0xff]
    %v4646 = vld [vmem:[%s4602 + $0x158] sm:$0xff]
    %v4647 = vld [vmem:[%s4602 + $0x160] sm:$0xff]
    %v4648 = vld [vmem:[%s4602 + $0x168] sm:$0xff]
    %v4649 = vld [vmem:[%s4602 + $0x170] sm:$0xff]
    %v4650 = vld [vmem:[%s4602 + $0x178] sm:$0xff]
    %v4651 = vld [vmem:[%s4602 + $0x180] sm:$0xff]
    %v4652 = vld [vmem:[%s4602 + $0x188] sm:$0xff]
    %v4653 = vld [vmem:[%s4602 + $0x190] sm:$0xff]
    %v4654 = vld [vmem:[%s4602 + $0x198] sm:$0xff]
    %v4655 = vld [vmem:[%s4602 + $0x1a0] sm:$0xff]
    %v4656 = vld [vmem:[%s4602 + $0x1a8] sm:$0xff]
    %v4657 = vld [vmem:[%s4602 + $0x1b0] sm:$0xff]
    %v4658 = vld [vmem:[%s4602 + $0x1b8] sm:$0xff]
    %v4659 = vld [vmem:[%s4602 + $0x1c0] sm:$0xff]
    %v4660 = vld [vmem:[%s4602 + $0x1c8] sm:$0xff]
    %v4661 = vld [vmem:[%s4602 + $0x1d0] sm:$0xff]
    %v4662 = vld [vmem:[%s4602 + $0x1d8] sm:$0xff]
    %v4663 = vld [vmem:[%s4602 + $0x1e0] sm:$0xff]
    %v4664 = vld [vmem:[%s4602 + $0x1e8] sm:$0xff]
    %v4665 = vld [vmem:[%s4602 + $0x1f0] sm:$0xff]
    %v4666 = vld [vmem:[%s4602 + $0x1f8] sm:$0xff]
    %v4731 = vunpack.c.l.b16 %v4603
    %v4732 = vunpack.c.h.b16 %v4603
    %v4733 = vunpack.c.l.b16 %v4604
    %v4734 = vunpack.c.h.b16 %v4604
    %v4735 = vunpack.c.l.b16 %v4605
    %v4736 = vunpack.c.h.b16 %v4605
    %v4737 = vunpack.c.l.b16 %v4606
    %v4738 = vunpack.c.h.b16 %v4606
    %v4739 = vunpack.c.l.b16 %v4607
    %v4740 = vunpack.c.h.b16 %v4607
    %v4741 = vunpack.c.l.b16 %v4608
    %v4742 = vunpack.c.h.b16 %v4608
    %v4743 = vunpack.c.l.b16 %v4609
    %v4744 = vunpack.c.h.b16 %v4609
    %v4745 = vunpack.c.l.b16 %v4610
    %v4746 = vunpack.c.h.b16 %v4610
    %v4747 = vunpack.c.l.b16 %v4611
    %v4748 = vunpack.c.h.b16 %v4611
    %v4749 = vunpack.c.l.b16 %v4612
    %v4750 = vunpack.c.h.b16 %v4612
    %v4751 = vunpack.c.l.b16 %v4613
    %v4752 = vunpack.c.h.b16 %v4613
    %v4753 = vunpack.c.l.b16 %v4614
    %v4754 = vunpack.c.h.b16 %v4614
    %v4755 = vunpack.c.l.b16 %v4615
    %v4756 = vunpack.c.h.b16 %v4615
    %v4757 = vunpack.c.l.b16 %v4616
    %v4758 = vunpack.c.h.b16 %v4616
    %v4759 = vunpack.c.l.b16 %v4617
    %v4760 = vunpack.c.h.b16 %v4617
    %v4761 = vunpack.c.l.b16 %v4618
    %v4762 = vunpack.c.h.b16 %v4618
    %v4763 = vunpack.c.l.b16 %v4619
    %v4764 = vunpack.c.h.b16 %v4619
    %v4765 = vunpack.c.l.b16 %v4620
    %v4766 = vunpack.c.h.b16 %v4620
    %v4767 = vunpack.c.l.b16 %v4621
    %v4768 = vunpack.c.h.b16 %v4621
    %v4769 = vunpack.c.l.b16 %v4622
    %v4770 = vunpack.c.h.b16 %v4622
    %v4771 = vunpack.c.l.b16 %v4623
    %v4772 = vunpack.c.h.b16 %v4623
    %v4773 = vunpack.c.l.b16 %v4624
    %v4774 = vunpack.c.h.b16 %v4624
    %v4775 = vunpack.c.l.b16 %v4625
    %v4776 = vunpack.c.h.b16 %v4625
    %v4777 = vunpack.c.l.b16 %v4626
    %v4778 = vunpack.c.h.b16 %v4626
    %v4779 = vunpack.c.l.b16 %v4627
    %v4780 = vunpack.c.h.b16 %v4627
    %v4781 = vunpack.c.l.b16 %v4628
    %v4782 = vunpack.c.h.b16 %v4628
    %v4783 = vunpack.c.l.b16 %v4629
    %v4784 = vunpack.c.h.b16 %v4629
    %v4785 = vunpack.c.l.b16 %v4630
    %v4786 = vunpack.c.h.b16 %v4630
    %v4787 = vunpack.c.l.b16 %v4631
    %v4788 = vunpack.c.h.b16 %v4631
    %v4789 = vunpack.c.l.b16 %v4632
    %v4790 = vunpack.c.h.b16 %v4632
    %v4791 = vunpack.c.l.b16 %v4633
    %v4792 = vunpack.c.h.b16 %v4633
    %v4793 = vunpack.c.l.b16 %v4634
    %v4794 = vunpack.c.h.b16 %v4634
    %v4795 = vunpack.c.l.b16 %v4635
    %v4796 = vunpack.c.h.b16 %v4635
    %v4797 = vunpack.c.l.b16 %v4636
    %v4798 = vunpack.c.h.b16 %v4636
    %v4799 = vunpack.c.l.b16 %v4637
    %v4800 = vunpack.c.h.b16 %v4637
    %v4801 = vunpack.c.l.b16 %v4638
    %v4802 = vunpack.c.h.b16 %v4638
    %v4803 = vunpack.c.l.b16 %v4639
    %v4804 = vunpack.c.h.b16 %v4639
    %v4805 = vunpack.c.l.b16 %v4640
    %v4806 = vunpack.c.h.b16 %v4640
    %v4807 = vunpack.c.l.b16 %v4641
    %v4808 = vunpack.c.h.b16 %v4641
    %v4809 = vunpack.c.l.b16 %v4642
    %v4810 = vunpack.c.h.b16 %v4642
    %v4811 = vunpack.c.l.b16 %v4643
    %v4812 = vunpack.c.h.b16 %v4643
    %v4813 = vunpack.c.l.b16 %v4644
    %v4814 = vunpack.c.h.b16 %v4644
    %v4815 = vunpack.c.l.b16 %v4645
    %v4816 = vunpack.c.h.b16 %v4645
    %v4817 = vunpack.c.l.b16 %v4646
    %v4818 = vunpack.c.h.b16 %v4646
    %v4819 = vunpack.c.l.b16 %v4647
    %v4820 = vunpack.c.h.b16 %v4647
    %v4821 = vunpack.c.l.b16 %v4648
    %v4822 = vunpack.c.h.b16 %v4648
    %v4823 = vunpack.c.l.b16 %v4649
    %v4824 = vunpack.c.h.b16 %v4649
    %v4825 = vunpack.c.l.b16 %v4650
    %v4826 = vunpack.c.h.b16 %v4650
    %v4827 = vunpack.c.l.b16 %v4651
    %v4828 = vunpack.c.h.b16 %v4651
    %v4829 = vunpack.c.l.b16 %v4652
    %v4830 = vunpack.c.h.b16 %v4652
    %v4831 = vunpack.c.l.b16 %v4653
    %v4832 = vunpack.c.h.b16 %v4653
    %v4833 = vunpack.c.l.b16 %v4654
    %v4834 = vunpack.c.h.b16 %v4654
    %v4835 = vunpack.c.l.b16 %v4655
    %v4836 = vunpack.c.h.b16 %v4655
    %v4837 = vunpack.c.l.b16 %v4656
    %v4838 = vunpack.c.h.b16 %v4656
    %v4839 = vunpack.c.l.b16 %v4657
    %v4840 = vunpack.c.h.b16 %v4657
    %v4841 = vunpack.c.l.b16 %v4658
    %v4842 = vunpack.c.h.b16 %v4658
    %v4843 = vunpack.c.l.b16 %v4659
    %v4844 = vunpack.c.h.b16 %v4659
    %v4845 = vunpack.c.l.b16 %v4660
    %v4846 = vunpack.c.h.b16 %v4660
    %v4847 = vunpack.c.l.b16 %v4661
    %v4848 = vunpack.c.h.b16 %v4661
    %v4849 = vunpack.c.l.b16 %v4662
    %v4850 = vunpack.c.h.b16 %v4662
    %v4851 = vunpack.c.l.b16 %v4663
    %v4852 = vunpack.c.h.b16 %v4663
    %v4853 = vunpack.c.l.b16 %v4664
    %v4854 = vunpack.c.h.b16 %v4664
    %v4855 = vunpack.c.l.b16 %v4665
    %v4856 = vunpack.c.h.b16 %v4665
    %v4857 = vunpack.c.l.b16 %v4666
    %v4858 = vunpack.c.h.b16 %v4666
    %v4859 = vpack.c.b16 %v4735, %v4731
    %v4860 = vpack.c.b16 %v4736, %v4732
    %v4861 = vpack.c.b16 %v4737, %v4733
    %v4862 = vpack.c.b16 %v4738, %v4734
    %v4863 = vpack.c.b16 %v4743, %v4739
    %v4864 = vpack.c.b16 %v4744, %v4740
    %v4865 = vpack.c.b16 %v4745, %v4741
    %v4866 = vpack.c.b16 %v4746, %v4742
    %v4867 = vpack.c.b16 %v4751, %v4747
    %v4868 = vpack.c.b16 %v4752, %v4748
    %v4869 = vpack.c.b16 %v4753, %v4749
    %v4870 = vpack.c.b16 %v4754, %v4750
    %v4871 = vpack.c.b16 %v4759, %v4755
    %v4872 = vpack.c.b16 %v4760, %v4756
    %v4873 = vpack.c.b16 %v4761, %v4757
    %v4874 = vpack.c.b16 %v4762, %v4758
    %v4875 = vpack.c.b16 %v4767, %v4763
    %v4876 = vpack.c.b16 %v4768, %v4764
    %v4877 = vpack.c.b16 %v4769, %v4765
    %v4878 = vpack.c.b16 %v4770, %v4766
    %v4879 = vpack.c.b16 %v4775, %v4771
    %v4880 = vpack.c.b16 %v4776, %v4772
    %v4881 = vpack.c.b16 %v4777, %v4773
    %v4882 = vpack.c.b16 %v4778, %v4774
    %v4883 = vpack.c.b16 %v4783, %v4779
    %v4884 = vpack.c.b16 %v4784, %v4780
    %v4885 = vpack.c.b16 %v4785, %v4781
    %v4886 = vpack.c.b16 %v4786, %v4782
    %v4887 = vpack.c.b16 %v4791, %v4787
    %v4888 = vpack.c.b16 %v4792, %v4788
    %v4889 = vpack.c.b16 %v4793, %v4789
    %v4890 = vpack.c.b16 %v4794, %v4790
    %v4891 = vpack.c.b16 %v4799, %v4795
    %v4892 = vpack.c.b16 %v4800, %v4796
    %v4893 = vpack.c.b16 %v4801, %v4797
    %v4894 = vpack.c.b16 %v4802, %v4798
    %v4895 = vpack.c.b16 %v4807, %v4803
    %v4896 = vpack.c.b16 %v4808, %v4804
    %v4897 = vpack.c.b16 %v4809, %v4805
    %v4898 = vpack.c.b16 %v4810, %v4806
    %v4899 = vpack.c.b16 %v4815, %v4811
    %v4900 = vpack.c.b16 %v4816, %v4812
    %v4901 = vpack.c.b16 %v4817, %v4813
    %v4902 = vpack.c.b16 %v4818, %v4814
    %v4903 = vpack.c.b16 %v4823, %v4819
    %v4904 = vpack.c.b16 %v4824, %v4820
    %v4905 = vpack.c.b16 %v4825, %v4821
    %v4906 = vpack.c.b16 %v4826, %v4822
    %v4907 = vpack.c.b16 %v4831, %v4827
    %v4908 = vpack.c.b16 %v4832, %v4828
    %v4909 = vpack.c.b16 %v4833, %v4829
    %v4910 = vpack.c.b16 %v4834, %v4830
    %v4911 = vpack.c.b16 %v4839, %v4835
    %v4912 = vpack.c.b16 %v4840, %v4836
    %v4913 = vpack.c.b16 %v4841, %v4837
    %v4914 = vpack.c.b16 %v4842, %v4838
    %v4915 = vpack.c.b16 %v4847, %v4843
    %v4916 = vpack.c.b16 %v4848, %v4844
    %v4917 = vpack.c.b16 %v4849, %v4845
    %v4918 = vpack.c.b16 %v4850, %v4846
    %v4919 = vpack.c.b16 %v4855, %v4851
    %v4920 = vpack.c.b16 %v4856, %v4852
    %v4921 = vpack.c.b16 %v4857, %v4853
    %v4922 = vpack.c.b16 %v4858, %v4854
    %4987 = vmatprep.subr.bf16.mxu0 %v4860
    %4988 = vmatpush1.bf16.msra.mxu0 %v4859
    %4989 = vmatprep.subr.bf16.mxu0 %v4864
    %4990 = vmatpush1.bf16.msra.mxu0 %v4863
    %4991 = vmatprep.subr.bf16.mxu0 %v4868
    %4992 = vmatpush1.bf16.msra.mxu0 %v4867
    %4993 = vmatprep.subr.bf16.mxu0 %v4872
    %4994 = vmatpush1.bf16.msra.mxu0 %v4871
    %4995 = vmatprep.subr.bf16.mxu0 %v4876
    %4996 = vmatpush1.bf16.msra.mxu0 %v4875
    %4997 = vmatprep.subr.bf16.mxu0 %v4880
    %4998 = vmatpush1.bf16.msra.mxu0 %v4879
    %4999 = vmatprep.subr.bf16.mxu0 %v4884
    %5000 = vmatpush1.bf16.msra.mxu0 %v4883
    %5001 = vmatprep.subr.bf16.mxu0 %v4888
    %5002 = vmatpush1.bf16.msra.mxu0 %v4887
    %5003 = vmatprep.subr.bf16.mxu0 %v4892
    %5004 = vmatpush1.bf16.msra.mxu0 %v4891
    %5005 = vmatprep.subr.bf16.mxu0 %v4896
    %5006 = vmatpush1.bf16.msra.mxu0 %v4895
    %5007 = vmatprep.subr.bf16.mxu0 %v4900
    %5008 = vmatpush1.bf16.msra.mxu0 %v4899
    %5009 = vmatprep.subr.bf16.mxu0 %v4904
    %5010 = vmatpush1.bf16.msra.mxu0 %v4903
    %5011 = vmatprep.subr.bf16.mxu0 %v4908
    %5012 = vmatpush1.bf16.msra.mxu0 %v4907
    %5013 = vmatprep.subr.bf16.mxu0 %v4912
    %5014 = vmatpush1.bf16.msra.mxu0 %v4911
    %5015 = vmatprep.subr.bf16.mxu0 %v4916
    %5016 = vmatpush1.bf16.msra.mxu0 %v4915
    %5017 = vmatprep.subr.bf16.mxu0 %v4920
    %5018 = vmatpush1.bf16.msra.mxu0 %v4919
    %5019 = vmatprep.mubr.bf16.mxu0 %v4601
    %5020 = vmatmul.mubr.bf16.gmra.mrb[0].mxu0 %v4600
    %v5021 = vpop.f32.mrb[0].mxu0
    %v5022 = vadd.f32 0.0, %v5021
    %v5023 = vpop.f32.mrb[0].mxu0
    %v5024 = vadd.f32 0.0, %v5023
    %v5025 = vpop.f32.mrb[0].mxu0
    %v5026 = vpop.f32.mrb[0].mxu0
    %5027 = vdwg.mxu0
    %5028 = vmatprep.subr.bf16.mxu0 %v4862
    %5029 = vmatpush1.bf16.msra.mxu0 %v4861
    %5030 = vmatprep.subr.bf16.mxu0 %v4866
    %5031 = vmatpush1.bf16.msra.mxu0 %v4865
    %5032 = vmatprep.subr.bf16.mxu0 %v4870
    %5033 = vmatpush1.bf16.msra.mxu0 %v4869
    %5034 = vmatprep.subr.bf16.mxu0 %v4874
    %5035 = vmatpush1.bf16.msra.mxu0 %v4873
    %5036 = vmatprep.subr.bf16.mxu0 %v4878
    %5037 = vmatpush1.bf16.msra.mxu0 %v4877
    %5038 = vmatprep.subr.bf16.mxu0 %v4882
    %5039 = vmatpush1.bf16.msra.mxu0 %v4881
    %5040 = vmatprep.subr.bf16.mxu0 %v4886
    %5041 = vmatpush1.bf16.msra.mxu0 %v4885
    %5042 = vmatprep.subr.bf16.mxu0 %v4890
    %5043 = vmatpush1.bf16.msra.mxu0 %v4889
    %5044 = vmatprep.subr.bf16.mxu0 %v4894
    %5045 = vmatpush1.bf16.msra.mxu0 %v4893
    %5046 = vmatprep.subr.bf16.mxu0 %v4898
    %5047 = vmatpush1.bf16.msra.mxu0 %v4897
    %5048 = vmatprep.subr.bf16.mxu0 %v4902
    %5049 = vmatpush1.bf16.msra.mxu0 %v4901
    %5050 = vmatprep.subr.bf16.mxu0 %v4906
    %5051 = vmatpush1.bf16.msra.mxu0 %v4905
    %5052 = vmatprep.subr.bf16.mxu0 %v4910
    %5053 = vmatpush1.bf16.msra.mxu0 %v4909
    %5054 = vmatprep.subr.bf16.mxu0 %v4914
    %5055 = vmatpush1.bf16.msra.mxu0 %v4913
    %5056 = vmatprep.subr.bf16.mxu0 %v4918
    %5057 = vmatpush1.bf16.msra.mxu0 %v4917
    %5058 = vmatprep.subr.bf16.mxu0 %v4922
    %5059 = vmatpush1.bf16.msra.mxu0 %v4921
    %5060 = vmatprep.mubr.bf16.mxu0 %v4601
    %5061 = vmatmul.mubr.bf16.gmra.mrb[0].mxu0 %v4600
    %v5062 = vpop.f32.mrb[0].mxu0
    %v5063 = vadd.f32 0.0, %v5062
    %v5064 = vpop.f32.mrb[0].mxu0
    %v5065 = vadd.f32 0.0, %v5064
    %v5066 = vpop.f32.mrb[0].mxu0
    %v5067 = vpop.f32.mrb[0].mxu0
    %5068 = vdwg.mxu0
    %v5069 = vadd.f32 %v4550, %v5022
    %v5070 = vadd.f32 %v4551, %v5024
    %v5071 = vadd.f32 %v4552, %v5063
    %v5072 = vadd.f32 %v4553, %v5065
    %s5073 = scalar_lea.vmem [#allocation5], 6
    %v5074 = vld [vmem:[%s5073] sm:$0x1]
    %v5076 = vsel %vm1962, %v5074, 0
    %5078 = vmatprep.subr.bf16.mxu0 %v1958
    %5079 = vmatpush1.bf16.msra.mxu0 %v1957
    %5080 = vmatprep.subr.bf16.mxu0 %v1971
    %5081 = vmatpush1.bf16.msra.mxu0 %v1968
    %5082 = vmatprep.subr.bf16.mxu0 0
    %5083 = vmatpush1.bf16.msra.mxu0 0
    %5084 = vmatprep.subr.bf16.mxu0 0
    %5085 = vmatpush1.bf16.msra.mxu0 0
    %5086 = vmatprep.subr.bf16.mxu0 0
    %5087 = vmatpush1.bf16.msra.mxu0 0
    %5088 = vmatprep.subr.bf16.mxu0 0
    %5089 = vmatpush1.bf16.msra.mxu0 0
    %5090 = vmatprep.subr.bf16.mxu0 0
    %5091 = vmatpush1.bf16.msra.mxu0 0
    %5092 = vmatprep.subr.bf16.mxu0 0
    %5093 = vmatpush1.bf16.msra.mxu0 0
    %5094 = vmatprep.subr.bf16.mxu0 0
    %5095 = vmatpush1.bf16.msra.mxu0 0
    %5096 = vmatprep.subr.bf16.mxu0 0
    %5097 = vmatpush1.bf16.msra.mxu0 0
    %5098 = vmatprep.subr.bf16.mxu0 0
    %5099 = vmatpush1.bf16.msra.mxu0 0
    %5100 = vmatprep.subr.bf16.mxu0 0
    %5101 = vmatpush1.bf16.msra.mxu0 0
    %5102 = vmatprep.subr.bf16.mxu0 0
    %5103 = vmatpush1.bf16.msra.mxu0 0
    %5104 = vmatprep.subr.bf16.mxu0 0
    %5105 = vmatpush1.bf16.msra.mxu0 0
    %5106 = vmatprep.subr.bf16.mxu0 0
    %5107 = vmatpush1.bf16.msra.mxu0 0
    %5108 = vmatprep.subr.bf16.mxu0 0
    %5109 = vmatpush1.bf16.msra.mxu0 0
    %5110 = vmatprep.mubr.bf16.mxu0 0
    %5111 = vmatmul.mubr.bf16.gmra.mrb[0].mxu0 %v5076
    %v5112 = vpop.f32.mrb[0].mxu0
    %v5113 = vadd.f32 0.0, %v5112
    %v5114 = vpop.f32.mrb[0].mxu0
    %v5115 = vadd.f32 0.0, %v5114
    %v5116 = vpop.f32.mrb[0].mxu0
    %v5117 = vpop.f32.mrb[0].mxu0
    %5118 = vdwg.mxu0
    %v5119 = vpack.c.bf16 %v5113, %v5113
    %v5120 = vpack.c.bf16 %v5115, %v5115
    %s5121 = scalar_lea.vmem [#allocation13], 3072
    %v5122 = vld [vmem:[%s5121] sm:$0xff]
    %v5123 = vld [vmem:[%s5121 + $0x8] sm:$0xff]
    %v5124 = vld [vmem:[%s5121 + $0x10] sm:$0xff]
    %v5125 = vld [vmem:[%s5121 + $0x18] sm:$0xff]
    %v5126 = vld [vmem:[%s5121 + $0x20] sm:$0xff]
    %v5127 = vld [vmem:[%s5121 + $0x28] sm:$0xff]
    %v5128 = vld [vmem:[%s5121 + $0x30] sm:$0xff]
    %v5129 = vld [vmem:[%s5121 + $0x38] sm:$0xff]
    %v5130 = vld [vmem:[%s5121 + $0x40] sm:$0xff]
    %v5131 = vld [vmem:[%s5121 + $0x48] sm:$0xff]
    %v5132 = vld [vmem:[%s5121 + $0x50] sm:$0xff]
    %v5133 = vld [vmem:[%s5121 + $0x58] sm:$0xff]
    %v5134 = vld [vmem:[%s5121 + $0x60] sm:$0xff]
    %v5135 = vld [vmem:[%s5121 + $0x68] sm:$0xff]
    %v5136 = vld [vmem:[%s5121 + $0x70] sm:$0xff]
    %v5137 = vld [vmem:[%s5121 + $0x78] sm:$0xff]
    %v5138 = vld [vmem:[%s5121 + $0x80] sm:$0xff]
    %v5139 = vld [vmem:[%s5121 + $0x88] sm:$0xff]
    %v5140 = vld [vmem:[%s5121 + $0x90] sm:$0xff]
    %v5141 = vld [vmem:[%s5121 + $0x98] sm:$0xff]
    %v5142 = vld [vmem:[%s5121 + $0xa0] sm:$0xff]
    %v5143 = vld [vmem:[%s5121 + $0xa8] sm:$0xff]
    %v5144 = vld [vmem:[%s5121 + $0xb0] sm:$0xff]
    %v5145 = vld [vmem:[%s5121 + $0xb8] sm:$0xff]
    %v5146 = vld [vmem:[%s5121 + $0xc0] sm:$0xff]
    %v5147 = vld [vmem:[%s5121 + $0xc8] sm:$0xff]
    %v5148 = vld [vmem:[%s5121 + $0xd0] sm:$0xff]
    %v5149 = vld [vmem:[%s5121 + $0xd8] sm:$0xff]
    %v5150 = vld [vmem:[%s5121 + $0xe0] sm:$0xff]
    %v5151 = vld [vmem:[%s5121 + $0xe8] sm:$0xff]
    %v5152 = vld [vmem:[%s5121 + $0xf0] sm:$0xff]
    %v5153 = vld [vmem:[%s5121 + $0xf8] sm:$0xff]
    %v5154 = vld [vmem:[%s5121 + $0x100] sm:$0xff]
    %v5155 = vld [vmem:[%s5121 + $0x108] sm:$0xff]
    %v5156 = vld [vmem:[%s5121 + $0x110] sm:$0xff]
    %v5157 = vld [vmem:[%s5121 + $0x118] sm:$0xff]
    %v5158 = vld [vmem:[%s5121 + $0x120] sm:$0xff]
    %v5159 = vld [vmem:[%s5121 + $0x128] sm:$0xff]
    %v5160 = vld [vmem:[%s5121 + $0x130] sm:$0xff]
    %v5161 = vld [vmem:[%s5121 + $0x138] sm:$0xff]
    %v5162 = vld [vmem:[%s5121 + $0x140] sm:$0xff]
    %v5163 = vld [vmem:[%s5121 + $0x148] sm:$0xff]
    %v5164 = vld [vmem:[%s5121 + $0x150] sm:$0xff]
    %v5165 = vld [vmem:[%s5121 + $0x158] sm:$0xff]
    %v5166 = vld [vmem:[%s5121 + $0x160] sm:$0xff]
    %v5167 = vld [vmem:[%s5121 + $0x168] sm:$0xff]
    %v5168 = vld [vmem:[%s5121 + $0x170] sm:$0xff]
    %v5169 = vld [vmem:[%s5121 + $0x178] sm:$0xff]
    %v5170 = vld [vmem:[%s5121 + $0x180] sm:$0xff]
    %v5171 = vld [vmem:[%s5121 + $0x188] sm:$0xff]
    %v5172 = vld [vmem:[%s5121 + $0x190] sm:$0xff]
    %v5173 = vld [vmem:[%s5121 + $0x198] sm:$0xff]
    %v5174 = vld [vmem:[%s5121 + $0x1a0] sm:$0xff]
    %v5175 = vld [vmem:[%s5121 + $0x1a8] sm:$0xff]
    %v5176 = vld [vmem:[%s5121 + $0x1b0] sm:$0xff]
    %v5177 = vld [vmem:[%s5121 + $0x1b8] sm:$0xff]
    %v5178 = vld [vmem:[%s5121 + $0x1c0] sm:$0xff]
    %v5179 = vld [vmem:[%s5121 + $0x1c8] sm:$0xff]
    %v5180 = vld [vmem:[%s5121 + $0x1d0] sm:$0xff]
    %v5181 = vld [vmem:[%s5121 + $0x1d8] sm:$0xff]
    %v5182 = vld [vmem:[%s5121 + $0x1e0] sm:$0xff]
    %v5183 = vld [vmem:[%s5121 + $0x1e8] sm:$0xff]
    %v5184 = vld [vmem:[%s5121 + $0x1f0] sm:$0xff]
    %v5185 = vld [vmem:[%s5121 + $0x1f8] sm:$0xff]
    %v5250 = vunpack.c.l.b16 %v5122
    %v5251 = vunpack.c.h.b16 %v5122
    %v5252 = vunpack.c.l.b16 %v5123
    %v5253 = vunpack.c.h.b16 %v5123
    %v5254 = vunpack.c.l.b16 %v5124
    %v5255 = vunpack.c.h.b16 %v5124
    %v5256 = vunpack.c.l.b16 %v5125
    %v5257 = vunpack.c.h.b16 %v5125
    %v5258 = vunpack.c.l.b16 %v5126
    %v5259 = vunpack.c.h.b16 %v5126
    %v5260 = vunpack.c.l.b16 %v5127
    %v5261 = vunpack.c.h.b16 %v5127
    %v5262 = vunpack.c.l.b16 %v5128
    %v5263 = vunpack.c.h.b16 %v5128
    %v5264 = vunpack.c.l.b16 %v5129
    %v5265 = vunpack.c.h.b16 %v5129
    %v5266 = vunpack.c.l.b16 %v5130
    %v5267 = vunpack.c.h.b16 %v5130
    %v5268 = vunpack.c.l.b16 %v5131
    %v5269 = vunpack.c.h.b16 %v5131
    %v5270 = vunpack.c.l.b16 %v5132
    %v5271 = vunpack.c.h.b16 %v5132
    %v5272 = vunpack.c.l.b16 %v5133
    %v5273 = vunpack.c.h.b16 %v5133
    %v5274 = vunpack.c.l.b16 %v5134
    %v5275 = vunpack.c.h.b16 %v5134
    %v5276 = vunpack.c.l.b16 %v5135
    %v5277 = vunpack.c.h.b16 %v5135
    %v5278 = vunpack.c.l.b16 %v5136
    %v5279 = vunpack.c.h.b16 %v5136
    %v5280 = vunpack.c.l.b16 %v5137
    %v5281 = vunpack.c.h.b16 %v5137
    %v5282 = vunpack.c.l.b16 %v5138
    %v5283 = vunpack.c.h.b16 %v5138
    %v5284 = vunpack.c.l.b16 %v5139
    %v5285 = vunpack.c.h.b16 %v5139
    %v5286 = vunpack.c.l.b16 %v5140
    %v5287 = vunpack.c.h.b16 %v5140
    %v5288 = vunpack.c.l.b16 %v5141
    %v5289 = vunpack.c.h.b16 %v5141
    %v5290 = vunpack.c.l.b16 %v5142
    %v5291 = vunpack.c.h.b16 %v5142
    %v5292 = vunpack.c.l.b16 %v5143
    %v5293 = vunpack.c.h.b16 %v5143
    %v5294 = vunpack.c.l.b16 %v5144
    %v5295 = vunpack.c.h.b16 %v5144
    %v5296 = vunpack.c.l.b16 %v5145
    %v5297 = vunpack.c.h.b16 %v5145
    %v5298 = vunpack.c.l.b16 %v5146
    %v5299 = vunpack.c.h.b16 %v5146
    %v5300 = vunpack.c.l.b16 %v5147
    %v5301 = vunpack.c.h.b16 %v5147
    %v5302 = vunpack.c.l.b16 %v5148
    %v5303 = vunpack.c.h.b16 %v5148
    %v5304 = vunpack.c.l.b16 %v5149
    %v5305 = vunpack.c.h.b16 %v5149
    %v5306 = vunpack.c.l.b16 %v5150
    %v5307 = vunpack.c.h.b16 %v5150
    %v5308 = vunpack.c.l.b16 %v5151
    %v5309 = vunpack.c.h.b16 %v5151
    %v5310 = vunpack.c.l.b16 %v5152
    %v5311 = vunpack.c.h.b16 %v5152
    %v5312 = vunpack.c.l.b16 %v5153
    %v5313 = vunpack.c.h.b16 %v5153
    %v5314 = vunpack.c.l.b16 %v5154
    %v5315 = vunpack.c.h.b16 %v5154
    %v5316 = vunpack.c.l.b16 %v5155
    %v5317 = vunpack.c.h.b16 %v5155
    %v5318 = vunpack.c.l.b16 %v5156
    %v5319 = vunpack.c.h.b16 %v5156
    %v5320 = vunpack.c.l.b16 %v5157
    %v5321 = vunpack.c.h.b16 %v5157
    %v5322 = vunpack.c.l.b16 %v5158
    %v5323 = vunpack.c.h.b16 %v5158
    %v5324 = vunpack.c.l.b16 %v5159
    %v5325 = vunpack.c.h.b16 %v5159
    %v5326 = vunpack.c.l.b16 %v5160
    %v5327 = vunpack.c.h.b16 %v5160
    %v5328 = vunpack.c.l.b16 %v5161
    %v5329 = vunpack.c.h.b16 %v5161
    %v5330 = vunpack.c.l.b16 %v5162
    %v5331 = vunpack.c.h.b16 %v5162
    %v5332 = vunpack.c.l.b16 %v5163
    %v5333 = vunpack.c.h.b16 %v5163
    %v5334 = vunpack.c.l.b16 %v5164
    %v5335 = vunpack.c.h.b16 %v5164
    %v5336 = vunpack.c.l.b16 %v5165
    %v5337 = vunpack.c.h.b16 %v5165
    %v5338 = vunpack.c.l.b16 %v5166
    %v5339 = vunpack.c.h.b16 %v5166
    %v5340 = vunpack.c.l.b16 %v5167
    %v5341 = vunpack.c.h.b16 %v5167
    %v5342 = vunpack.c.l.b16 %v5168
    %v5343 = vunpack.c.h.b16 %v5168
    %v5344 = vunpack.c.l.b16 %v5169
    %v5345 = vunpack.c.h.b16 %v5169
    %v5346 = vunpack.c.l.b16 %v5170
    %v5347 = vunpack.c.h.b16 %v5170
    %v5348 = vunpack.c.l.b16 %v5171
    %v5349 = vunpack.c.h.b16 %v5171
    %v5350 = vunpack.c.l.b16 %v5172
    %v5351 = vunpack.c.h.b16 %v5172
    %v5352 = vunpack.c.l.b16 %v5173
    %v5353 = vunpack.c.h.b16 %v5173
    %v5354 = vunpack.c.l.b16 %v5174
    %v5355 = vunpack.c.h.b16 %v5174
    %v5356 = vunpack.c.l.b16 %v5175
    %v5357 = vunpack.c.h.b16 %v5175
    %v5358 = vunpack.c.l.b16 %v5176
    %v5359 = vunpack.c.h.b16 %v5176
    %v5360 = vunpack.c.l.b16 %v5177
    %v5361 = vunpack.c.h.b16 %v5177
    %v5362 = vunpack.c.l.b16 %v5178
    %v5363 = vunpack.c.h.b16 %v5178
    %v5364 = vunpack.c.l.b16 %v5179
    %v5365 = vunpack.c.h.b16 %v5179
    %v5366 = vunpack.c.l.b16 %v5180
    %v5367 = vunpack.c.h.b16 %v5180
    %v5368 = vunpack.c.l.b16 %v5181
    %v5369 = vunpack.c.h.b16 %v5181
    %v5370 = vunpack.c.l.b16 %v5182
    %v5371 = vunpack.c.h.b16 %v5182
    %v5372 = vunpack.c.l.b16 %v5183
    %v5373 = vunpack.c.h.b16 %v5183
    %v5374 = vunpack.c.l.b16 %v5184
    %v5375 = vunpack.c.h.b16 %v5184
    %v5376 = vunpack.c.l.b16 %v5185
    %v5377 = vunpack.c.h.b16 %v5185
    %v5378 = vpack.c.b16 %v5254, %v5250
    %v5379 = vpack.c.b16 %v5255, %v5251
    %v5380 = vpack.c.b16 %v5256, %v5252
    %v5381 = vpack.c.b16 %v5257, %v5253
    %v5382 = vpack.c.b16 %v5262, %v5258
    %v5383 = vpack.c.b16 %v5263, %v5259
    %v5384 = vpack.c.b16 %v5264, %v5260
    %v5385 = vpack.c.b16 %v5265, %v5261
    %v5386 = vpack.c.b16 %v5270, %v5266
    %v5387 = vpack.c.b16 %v5271, %v5267
    %v5388 = vpack.c.b16 %v5272, %v5268
    %v5389 = vpack.c.b16 %v5273, %v5269
    %v5390 = vpack.c.b16 %v5278, %v5274
    %v5391 = vpack.c.b16 %v5279, %v5275
    %v5392 = vpack.c.b16 %v5280, %v5276
    %v5393 = vpack.c.b16 %v5281, %v5277
    %v5394 = vpack.c.b16 %v5286, %v5282
    %v5395 = vpack.c.b16 %v5287, %v5283
    %v5396 = vpack.c.b16 %v5288, %v5284
    %v5397 = vpack.c.b16 %v5289, %v5285
    %v5398 = vpack.c.b16 %v5294, %v5290
    %v5399 = vpack.c.b16 %v5295, %v5291
    %v5400 = vpack.c.b16 %v5296, %v5292
    %v5401 = vpack.c.b16 %v5297, %v5293
    %v5402 = vpack.c.b16 %v5302, %v5298
    %v5403 = vpack.c.b16 %v5303, %v5299
    %v5404 = vpack.c.b16 %v5304, %v5300
    %v5405 = vpack.c.b16 %v5305, %v5301
    %v5406 = vpack.c.b16 %v5310, %v5306
    %v5407 = vpack.c.b16 %v5311, %v5307
    %v5408 = vpack.c.b16 %v5312, %v5308
    %v5409 = vpack.c.b16 %v5313, %v5309
    %v5410 = vpack.c.b16 %v5318, %v5314
    %v5411 = vpack.c.b16 %v5319, %v5315
    %v5412 = vpack.c.b16 %v5320, %v5316
    %v5413 = vpack.c.b16 %v5321, %v5317
    %v5414 = vpack.c.b16 %v5326, %v5322
    %v5415 = vpack.c.b16 %v5327, %v5323
    %v5416 = vpack.c.b16 %v5328, %v5324
    %v5417 = vpack.c.b16 %v5329, %v5325
    %v5418 = vpack.c.b16 %v5334, %v5330
    %v5419 = vpack.c.b16 %v5335, %v5331
    %v5420 = vpack.c.b16 %v5336, %v5332
    %v5421 = vpack.c.b16 %v5337, %v5333
    %v5422 = vpack.c.b16 %v5342, %v5338
    %v5423 = vpack.c.b16 %v5343, %v5339
    %v5424 = vpack.c.b16 %v5344, %v5340
    %v5425 = vpack.c.b16 %v5345, %v5341
    %v5426 = vpack.c.b16 %v5350, %v5346
    %v5427 = vpack.c.b16 %v5351, %v5347
    %v5428 = vpack.c.b16 %v5352, %v5348
    %v5429 = vpack.c.b16 %v5353, %v5349
    %v5430 = vpack.c.b16 %v5358, %v5354
    %v5431 = vpack.c.b16 %v5359, %v5355
    %v5432 = vpack.c.b16 %v5360, %v5356
    %v5433 = vpack.c.b16 %v5361, %v5357
    %v5434 = vpack.c.b16 %v5366, %v5362
    %v5435 = vpack.c.b16 %v5367, %v5363
    %v5436 = vpack.c.b16 %v5368, %v5364
    %v5437 = vpack.c.b16 %v5369, %v5365
    %v5438 = vpack.c.b16 %v5374, %v5370
    %v5439 = vpack.c.b16 %v5375, %v5371
    %v5440 = vpack.c.b16 %v5376, %v5372
    %v5441 = vpack.c.b16 %v5377, %v5373
    %5506 = vmatprep.subr.bf16.mxu0 %v5379
    %5507 = vmatpush1.bf16.msra.mxu0 %v5378
    %5508 = vmatprep.subr.bf16.mxu0 %v5383
    %5509 = vmatpush1.bf16.msra.mxu0 %v5382
    %5510 = vmatprep.subr.bf16.mxu0 %v5387
    %5511 = vmatpush1.bf16.msra.mxu0 %v5386
    %5512 = vmatprep.subr.bf16.mxu0 %v5391
    %5513 = vmatpush1.bf16.msra.mxu0 %v5390
    %5514 = vmatprep.subr.bf16.mxu0 %v5395
    %5515 = vmatpush1.bf16.msra.mxu0 %v5394
    %5516 = vmatprep.subr.bf16.mxu0 %v5399
    %5517 = vmatpush1.bf16.msra.mxu0 %v5398
    %5518 = vmatprep.subr.bf16.mxu0 %v5403
    %5519 = vmatpush1.bf16.msra.mxu0 %v5402
    %5520 = vmatprep.subr.bf16.mxu0 %v5407
    %5521 = vmatpush1.bf16.msra.mxu0 %v5406
    %5522 = vmatprep.subr.bf16.mxu0 %v5411
    %5523 = vmatpush1.bf16.msra.mxu0 %v5410
    %5524 = vmatprep.subr.bf16.mxu0 %v5415
    %5525 = vmatpush1.bf16.msra.mxu0 %v5414
    %5526 = vmatprep.subr.bf16.mxu0 %v5419
    %5527 = vmatpush1.bf16.msra.mxu0 %v5418
    %5528 = vmatprep.subr.bf16.mxu0 %v5423
    %5529 = vmatpush1.bf16.msra.mxu0 %v5422
    %5530 = vmatprep.subr.bf16.mxu0 %v5427
    %5531 = vmatpush1.bf16.msra.mxu0 %v5426
    %5532 = vmatprep.subr.bf16.mxu0 %v5431
    %5533 = vmatpush1.bf16.msra.mxu0 %v5430
    %5534 = vmatprep.subr.bf16.mxu0 %v5435
    %5535 = vmatpush1.bf16.msra.mxu0 %v5434
    %5536 = vmatprep.subr.bf16.mxu0 %v5439
    %5537 = vmatpush1.bf16.msra.mxu0 %v5438
    %5538 = vmatprep.mubr.bf16.mxu0 %v5120
    %5539 = vmatmul.mubr.bf16.gmra.mrb[0].mxu0 %v5119
    %v5540 = vpop.f32.mrb[0].mxu0
    %v5541 = vadd.f32 0.0, %v5540
    %v5542 = vpop.f32.mrb[0].mxu0
    %v5543 = vadd.f32 0.0, %v5542
    %v5544 = vpop.f32.mrb[0].mxu0
    %v5545 = vpop.f32.mrb[0].mxu0
    %5546 = vdwg.mxu0
    %5547 = vmatprep.subr.bf16.mxu0 %v5381
    %5548 = vmatpush1.bf16.msra.mxu0 %v5380
    %5549 = vmatprep.subr.bf16.mxu0 %v5385
    %5550 = vmatpush1.bf16.msra.mxu0 %v5384
    %5551 = vmatprep.subr.bf16.mxu0 %v5389
    %5552 = vmatpush1.bf16.msra.mxu0 %v5388
    %5553 = vmatprep.subr.bf16.mxu0 %v5393
    %5554 = vmatpush1.bf16.msra.mxu0 %v5392
    %5555 = vmatprep.subr.bf16.mxu0 %v5397
    %5556 = vmatpush1.bf16.msra.mxu0 %v5396
    %5557 = vmatprep.subr.bf16.mxu0 %v5401
    %5558 = vmatpush1.bf16.msra.mxu0 %v5400
    %5559 = vmatprep.subr.bf16.mxu0 %v5405
    %5560 = vmatpush1.bf16.msra.mxu0 %v5404
    %5561 = vmatprep.subr.bf16.mxu0 %v5409
    %5562 = vmatpush1.bf16.msra.mxu0 %v5408
    %5563 = vmatprep.subr.bf16.mxu0 %v5413
    %5564 = vmatpush1.bf16.msra.mxu0 %v5412
    %5565 = vmatprep.subr.bf16.mxu0 %v5417
    %5566 = vmatpush1.bf16.msra.mxu0 %v5416
    %5567 = vmatprep.subr.bf16.mxu0 %v5421
    %5568 = vmatpush1.bf16.msra.mxu0 %v5420
    %5569 = vmatprep.subr.bf16.mxu0 %v5425
    %5570 = vmatpush1.bf16.msra.mxu0 %v5424
    %5571 = vmatprep.subr.bf16.mxu0 %v5429
    %5572 = vmatpush1.bf16.msra.mxu0 %v5428
    %5573 = vmatprep.subr.bf16.mxu0 %v5433
    %5574 = vmatpush1.bf16.msra.mxu0 %v5432
    %5575 = vmatprep.subr.bf16.mxu0 %v5437
    %5576 = vmatpush1.bf16.msra.mxu0 %v5436
    %5577 = vmatprep.subr.bf16.mxu0 %v5441
    %5578 = vmatpush1.bf16.msra.mxu0 %v5440
    %5579 = vmatprep.mubr.bf16.mxu0 %v5120
    %5580 = vmatmul.mubr.bf16.gmra.mrb[0].mxu0 %v5119
    %v5581 = vpop.f32.mrb[0].mxu0
    %v5582 = vadd.f32 0.0, %v5581
    %v5583 = vpop.f32.mrb[0].mxu0
    %v5584 = vadd.f32 0.0, %v5583
    %v5585 = vpop.f32.mrb[0].mxu0
    %v5586 = vpop.f32.mrb[0].mxu0
    %5587 = vdwg.mxu0
    %v5588 = vadd.f32 %v5069, %v5541
    %v5589 = vadd.f32 %v5070, %v5543
    %v5590 = vadd.f32 %v5071, %v5582
    %v5591 = vadd.f32 %v5072, %v5584
    %s5592 = scalar_lea.vmem [#allocation5], 7
    %v5593 = vld [vmem:[%s5592] sm:$0x1]
    %v5595 = vsel %vm1962, %v5593, 0
    %5597 = vmatprep.subr.bf16.mxu0 %v1958
    %5598 = vmatpush1.bf16.msra.mxu0 %v1957
    %5599 = vmatprep.subr.bf16.mxu0 %v1971
    %5600 = vmatpush1.bf16.msra.mxu0 %v1968
    %5601 = vmatprep.subr.bf16.mxu0 0
    %5602 = vmatpush1.bf16.msra.mxu0 0
    %5603 = vmatprep.subr.bf16.mxu0 0
    %5604 = vmatpush1.bf16.msra.mxu0 0
    %5605 = vmatprep.subr.bf16.mxu0 0
    %5606 = vmatpush1.bf16.msra.mxu0 0
    %5607 = vmatprep.subr.bf16.mxu0 0
    %5608 = vmatpush1.bf16.msra.mxu0 0
    %5609 = vmatprep.subr.bf16.mxu0 0
    %5610 = vmatpush1.bf16.msra.mxu0 0
    %5611 = vmatprep.subr.bf16.mxu0 0
    %5612 = vmatpush1.bf16.msra.mxu0 0
    %5613 = vmatprep.subr.bf16.mxu0 0
    %5614 = vmatpush1.bf16.msra.mxu0 0
    %5615 = vmatprep.subr.bf16.mxu0 0
    %5616 = vmatpush1.bf16.msra.mxu0 0
    %5617 = vmatprep.subr.bf16.mxu0 0
    %5618 = vmatpush1.bf16.msra.mxu0 0
    %5619 = vmatprep.subr.bf16.mxu0 0
    %5620 = vmatpush1.bf16.msra.mxu0 0
    %5621 = vmatprep.subr.bf16.mxu0 0
    %5622 = vmatpush1.bf16.msra.mxu0 0
    %5623 = vmatprep.subr.bf16.mxu0 0
    %5624 = vmatpush1.bf16.msra.mxu0 0
    %5625 = vmatprep.subr.bf16.mxu0 0
    %5626 = vmatpush1.bf16.msra.mxu0 0
    %5627 = vmatprep.subr.bf16.mxu0 0
    %5628 = vmatpush1.bf16.msra.mxu0 0
    %5629 = vmatprep.mubr.bf16.mxu0 0
    %5630 = vmatmul.mubr.bf16.gmra.mrb[0].mxu0 %v5595
    %v5631 = vpop.f32.mrb[0].mxu0
    %v5632 = vadd.f32 0.0, %v5631
    %v5633 = vpop.f32.mrb[0].mxu0
    %v5634 = vadd.f32 0.0, %v5633
    %v5635 = vpop.f32.mrb[0].mxu0
    %v5636 = vpop.f32.mrb[0].mxu0
    %5637 = vdwg.mxu0
    %v5638 = vpack.c.bf16 %v5632, %v5632
    %v5639 = vpack.c.bf16 %v5634, %v5634
    %s5640 = scalar_lea.vmem [#allocation13], 3584
    %v5641 = vld [vmem:[%s5640] sm:$0xff]
    %v5642 = vld [vmem:[%s5640 + $0x8] sm:$0xff]
    %v5643 = vld [vmem:[%s5640 + $0x10] sm:$0xff]
    %v5644 = vld [vmem:[%s5640 + $0x18] sm:$0xff]
    %v5645 = vld [vmem:[%s5640 + $0x20] sm:$0xff]
    %v5646 = vld [vmem:[%s5640 + $0x28] sm:$0xff]
    %v5647 = vld [vmem:[%s5640 + $0x30] sm:$0xff]
    %v5648 = vld [vmem:[%s5640 + $0x38] sm:$0xff]
    %v5649 = vld [vmem:[%s5640 + $0x40] sm:$0xff]
    %v5650 = vld [vmem:[%s5640 + $0x48] sm:$0xff]
    %v5651 = vld [vmem:[%s5640 + $0x50] sm:$0xff]
    %v5652 = vld [vmem:[%s5640 + $0x58] sm:$0xff]
    %v5653 = vld [vmem:[%s5640 + $0x60] sm:$0xff]
    %v5654 = vld [vmem:[%s5640 + $0x68] sm:$0xff]
    %v5655 = vld [vmem:[%s5640 + $0x70] sm:$0xff]
    %v5656 = vld [vmem:[%s5640 + $0x78] sm:$0xff]
    %v5657 = vld [vmem:[%s5640 + $0x80] sm:$0xff]
    %v5658 = vld [vmem:[%s5640 + $0x88] sm:$0xff]
    %v5659 = vld [vmem:[%s5640 + $0x90] sm:$0xff]
    %v5660 = vld [vmem:[%s5640 + $0x98] sm:$0xff]
    %v5661 = vld [vmem:[%s5640 + $0xa0] sm:$0xff]
    %v5662 = vld [vmem:[%s5640 + $0xa8] sm:$0xff]
    %v5663 = vld [vmem:[%s5640 + $0xb0] sm:$0xff]
    %v5664 = vld [vmem:[%s5640 + $0xb8] sm:$0xff]
    %v5665 = vld [vmem:[%s5640 + $0xc0] sm:$0xff]
    %v5666 = vld [vmem:[%s5640 + $0xc8] sm:$0xff]
    %v5667 = vld [vmem:[%s5640 + $0xd0] sm:$0xff]
    %v5668 = vld [vmem:[%s5640 + $0xd8] sm:$0xff]
    %v5669 = vld [vmem:[%s5640 + $0xe0] sm:$0xff]
    %v5670 = vld [vmem:[%s5640 + $0xe8] sm:$0xff]
    %v5671 = vld [vmem:[%s5640 + $0xf0] sm:$0xff]
    %v5672 = vld [vmem:[%s5640 + $0xf8] sm:$0xff]
    %v5673 = vld [vmem:[%s5640 + $0x100] sm:$0xff]
    %v5674 = vld [vmem:[%s5640 + $0x108] sm:$0xff]
    %v5675 = vld [vmem:[%s5640 + $0x110] sm:$0xff]
    %v5676 = vld [vmem:[%s5640 + $0x118] sm:$0xff]
    %v5677 = vld [vmem:[%s5640 + $0x120] sm:$0xff]
    %v5678 = vld [vmem:[%s5640 + $0x128] sm:$0xff]
    %v5679 = vld [vmem:[%s5640 + $0x130] sm:$0xff]
    %v5680 = vld [vmem:[%s5640 + $0x138] sm:$0xff]
    %v5681 = vld [vmem:[%s5640 + $0x140] sm:$0xff]
    %v5682 = vld [vmem:[%s5640 + $0x148] sm:$0xff]
    %v5683 = vld [vmem:[%s5640 + $0x150] sm:$0xff]
    %v5684 = vld [vmem:[%s5640 + $0x158] sm:$0xff]
    %v5685 = vld [vmem:[%s5640 + $0x160] sm:$0xff]
    %v5686 = vld [vmem:[%s5640 + $0x168] sm:$0xff]
    %v5687 = vld [vmem:[%s5640 + $0x170] sm:$0xff]
    %v5688 = vld [vmem:[%s5640 + $0x178] sm:$0xff]
    %v5689 = vld [vmem:[%s5640 + $0x180] sm:$0xff]
    %v5690 = vld [vmem:[%s5640 + $0x188] sm:$0xff]
    %v5691 = vld [vmem:[%s5640 + $0x190] sm:$0xff]
    %v5692 = vld [vmem:[%s5640 + $0x198] sm:$0xff]
    %v5693 = vld [vmem:[%s5640 + $0x1a0] sm:$0xff]
    %v5694 = vld [vmem:[%s5640 + $0x1a8] sm:$0xff]
    %v5695 = vld [vmem:[%s5640 + $0x1b0] sm:$0xff]
    %v5696 = vld [vmem:[%s5640 + $0x1b8] sm:$0xff]
    %v5697 = vld [vmem:[%s5640 + $0x1c0] sm:$0xff]
    %v5698 = vld [vmem:[%s5640 + $0x1c8] sm:$0xff]
    %v5699 = vld [vmem:[%s5640 + $0x1d0] sm:$0xff]
    %v5700 = vld [vmem:[%s5640 + $0x1d8] sm:$0xff]
    %v5701 = vld [vmem:[%s5640 + $0x1e0] sm:$0xff]
    %v5702 = vld [vmem:[%s5640 + $0x1e8] sm:$0xff]
    %v5703 = vld [vmem:[%s5640 + $0x1f0] sm:$0xff]
    %v5704 = vld [vmem:[%s5640 + $0x1f8] sm:$0xff]
    %v5769 = vunpack.c.l.b16 %v5641
    %v5770 = vunpack.c.h.b16 %v5641
    %v5771 = vunpack.c.l.b16 %v5642
    %v5772 = vunpack.c.h.b16 %v5642
    %v5773 = vunpack.c.l.b16 %v5643
    %v5774 = vunpack.c.h.b16 %v5643
    %v5775 = vunpack.c.l.b16 %v5644
    %v5776 = vunpack.c.h.b16 %v5644
    %v5777 = vunpack.c.l.b16 %v5645
    %v5778 = vunpack.c.h.b16 %v5645
    %v5779 = vunpack.c.l.b16 %v5646
    %v5780 = vunpack.c.h.b16 %v5646
    %v5781 = vunpack.c.l.b16 %v5647
    %v5782 = vunpack.c.h.b16 %v5647
    %v5783 = vunpack.c.l.b16 %v5648
    %v5784 = vunpack.c.h.b16 %v5648
    %v5785 = vunpack.c.l.b16 %v5649
    %v5786 = vunpack.c.h.b16 %v5649
    %v5787 = vunpack.c.l.b16 %v5650
    %v5788 = vunpack.c.h.b16 %v5650
    %v5789 = vunpack.c.l.b16 %v5651
    %v5790 = vunpack.c.h.b16 %v5651
    %v5791 = vunpack.c.l.b16 %v5652
    %v5792 = vunpack.c.h.b16 %v5652
    %v5793 = vunpack.c.l.b16 %v5653
    %v5794 = vunpack.c.h.b16 %v5653
    %v5795 = vunpack.c.l.b16 %v5654
    %v5796 = vunpack.c.h.b16 %v5654
    %v5797 = vunpack.c.l.b16 %v5655
    %v5798 = vunpack.c.h.b16 %v5655
    %v5799 = vunpack.c.l.b16 %v5656
    %v5800 = vunpack.c.h.b16 %v5656
    %v5801 = vunpack.c.l.b16 %v5657
    %v5802 = vunpack.c.h.b16 %v5657
    %v5803 = vunpack.c.l.b16 %v5658
    %v5804 = vunpack.c.h.b16 %v5658
    %v5805 = vunpack.c.l.b16 %v5659
    %v5806 = vunpack.c.h.b16 %v5659
    %v5807 = vunpack.c.l.b16 %v5660
    %v5808 = vunpack.c.h.b16 %v5660
    %v5809 = vunpack.c.l.b16 %v5661
    %v5810 = vunpack.c.h.b16 %v5661
    %v5811 = vunpack.c.l.b16 %v5662
    %v5812 = vunpack.c.h.b16 %v5662
    %v5813 = vunpack.c.l.b16 %v5663
    %v5814 = vunpack.c.h.b16 %v5663
    %v5815 = vunpack.c.l.b16 %v5664
    %v5816 = vunpack.c.h.b16 %v5664
    %v5817 = vunpack.c.l.b16 %v5665
    %v5818 = vunpack.c.h.b16 %v5665
    %v5819 = vunpack.c.l.b16 %v5666
    %v5820 = vunpack.c.h.b16 %v5666
    %v5821 = vunpack.c.l.b16 %v5667
    %v5822 = vunpack.c.h.b16 %v5667
    %v5823 = vunpack.c.l.b16 %v5668
    %v5824 = vunpack.c.h.b16 %v5668
    %v5825 = vunpack.c.l.b16 %v5669
    %v5826 = vunpack.c.h.b16 %v5669
    %v5827 = vunpack.c.l.b16 %v5670
    %v5828 = vunpack.c.h.b16 %v5670
    %v5829 = vunpack.c.l.b16 %v5671
    %v5830 = vunpack.c.h.b16 %v5671
    %v5831 = vunpack.c.l.b16 %v5672
    %v5832 = vunpack.c.h.b16 %v5672
    %v5833 = vunpack.c.l.b16 %v5673
    %v5834 = vunpack.c.h.b16 %v5673
    %v5835 = vunpack.c.l.b16 %v5674
    %v5836 = vunpack.c.h.b16 %v5674
    %v5837 = vunpack.c.l.b16 %v5675
    %v5838 = vunpack.c.h.b16 %v5675
    %v5839 = vunpack.c.l.b16 %v5676
    %v5840 = vunpack.c.h.b16 %v5676
    %v5841 = vunpack.c.l.b16 %v5677
    %v5842 = vunpack.c.h.b16 %v5677
    %v5843 = vunpack.c.l.b16 %v5678
    %v5844 = vunpack.c.h.b16 %v5678
    %v5845 = vunpack.c.l.b16 %v5679
    %v5846 = vunpack.c.h.b16 %v5679
    %v5847 = vunpack.c.l.b16 %v5680
    %v5848 = vunpack.c.h.b16 %v5680
    %v5849 = vunpack.c.l.b16 %v5681
    %v5850 = vunpack.c.h.b16 %v5681
    %v5851 = vunpack.c.l.b16 %v5682
    %v5852 = vunpack.c.h.b16 %v5682
    %v5853 = vunpack.c.l.b16 %v5683
    %v5854 = vunpack.c.h.b16 %v5683
    %v5855 = vunpack.c.l.b16 %v5684
    %v5856 = vunpack.c.h.b16 %v5684
    %v5857 = vunpack.c.l.b16 %v5685
    %v5858 = vunpack.c.h.b16 %v5685
    %v5859 = vunpack.c.l.b16 %v5686
    %v5860 = vunpack.c.h.b16 %v5686
    %v5861 = vunpack.c.l.b16 %v5687
    %v5862 = vunpack.c.h.b16 %v5687
    %v5863 = vunpack.c.l.b16 %v5688
    %v5864 = vunpack.c.h.b16 %v5688
    %v5865 = vunpack.c.l.b16 %v5689
    %v5866 = vunpack.c.h.b16 %v5689
    %v5867 = vunpack.c.l.b16 %v5690
    %v5868 = vunpack.c.h.b16 %v5690
    %v5869 = vunpack.c.l.b16 %v5691
    %v5870 = vunpack.c.h.b16 %v5691
    %v5871 = vunpack.c.l.b16 %v5692
    %v5872 = vunpack.c.h.b16 %v5692
    %v5873 = vunpack.c.l.b16 %v5693
    %v5874 = vunpack.c.h.b16 %v5693
    %v5875 = vunpack.c.l.b16 %v5694
    %v5876 = vunpack.c.h.b16 %v5694
    %v5877 = vunpack.c.l.b16 %v5695
    %v5878 = vunpack.c.h.b16 %v5695
    %v5879 = vunpack.c.l.b16 %v5696
    %v5880 = vunpack.c.h.b16 %v5696
    %v5881 = vunpack.c.l.b16 %v5697
    %v5882 = vunpack.c.h.b16 %v5697
    %v5883 = vunpack.c.l.b16 %v5698
    %v5884 = vunpack.c.h.b16 %v5698
    %v5885 = vunpack.c.l.b16 %v5699
    %v5886 = vunpack.c.h.b16 %v5699
    %v5887 = vunpack.c.l.b16 %v5700
    %v5888 = vunpack.c.h.b16 %v5700
    %v5889 = vunpack.c.l.b16 %v5701
    %v5890 = vunpack.c.h.b16 %v5701
    %v5891 = vunpack.c.l.b16 %v5702
    %v5892 = vunpack.c.h.b16 %v5702
    %v5893 = vunpack.c.l.b16 %v5703
    %v5894 = vunpack.c.h.b16 %v5703
    %v5895 = vunpack.c.l.b16 %v5704
    %v5896 = vunpack.c.h.b16 %v5704
    %v5897 = vpack.c.b16 %v5773, %v5769
    %v5898 = vpack.c.b16 %v5774, %v5770
    %v5899 = vpack.c.b16 %v5775, %v5771
    %v5900 = vpack.c.b16 %v5776, %v5772
    %v5901 = vpack.c.b16 %v5781, %v5777
    %v5902 = vpack.c.b16 %v5782, %v5778
    %v5903 = vpack.c.b16 %v5783, %v5779
    %v5904 = vpack.c.b16 %v5784, %v5780
    %v5905 = vpack.c.b16 %v5789, %v5785
    %v5906 = vpack.c.b16 %v5790, %v5786
    %v5907 = vpack.c.b16 %v5791, %v5787
    %v5908 = vpack.c.b16 %v5792, %v5788
    %v5909 = vpack.c.b16 %v5797, %v5793
    %v5910 = vpack.c.b16 %v5798, %v5794
    %v5911 = vpack.c.b16 %v5799, %v5795
    %v5912 = vpack.c.b16 %v5800, %v5796
    %v5913 = vpack.c.b16 %v5805, %v5801
    %v5914 = vpack.c.b16 %v5806, %v5802
    %v5915 = vpack.c.b16 %v5807, %v5803
    %v5916 = vpack.c.b16 %v5808, %v5804
    %v5917 = vpack.c.b16 %v5813, %v5809
    %v5918 = vpack.c.b16 %v5814, %v5810
    %v5919 = vpack.c.b16 %v5815, %v5811
    %v5920 = vpack.c.b16 %v5816, %v5812
    %v5921 = vpack.c.b16 %v5821, %v5817
    %v5922 = vpack.c.b16 %v5822, %v5818
    %v5923 = vpack.c.b16 %v5823, %v5819
    %v5924 = vpack.c.b16 %v5824, %v5820
    %v5925 = vpack.c.b16 %v5829, %v5825
    %v5926 = vpack.c.b16 %v5830, %v5826
    %v5927 = vpack.c.b16 %v5831, %v5827
    %v5928 = vpack.c.b16 %v5832, %v5828
    %v5929 = vpack.c.b16 %v5837, %v5833
    %v5930 = vpack.c.b16 %v5838, %v5834
    %v5931 = vpack.c.b16 %v5839, %v5835
    %v5932 = vpack.c.b16 %v5840, %v5836
    %v5933 = vpack.c.b16 %v5845, %v5841
    %v5934 = vpack.c.b16 %v5846, %v5842
    %v5935 = vpack.c.b16 %v5847, %v5843
    %v5936 = vpack.c.b16 %v5848, %v5844
    %v5937 = vpack.c.b16 %v5853, %v5849
    %v5938 = vpack.c.b16 %v5854, %v5850
    %v5939 = vpack.c.b16 %v5855, %v5851
    %v5940 = vpack.c.b16 %v5856, %v5852
    %v5941 = vpack.c.b16 %v5861, %v5857
    %v5942 = vpack.c.b16 %v5862, %v5858
    %v5943 = vpack.c.b16 %v5863, %v5859
    %v5944 = vpack.c.b16 %v5864, %v5860
    %v5945 = vpack.c.b16 %v5869, %v5865
    %v5946 = vpack.c.b16 %v5870, %v5866
    %v5947 = vpack.c.b16 %v5871, %v5867
    %v5948 = vpack.c.b16 %v5872, %v5868
    %v5949 = vpack.c.b16 %v5877, %v5873
    %v5950 = vpack.c.b16 %v5878, %v5874
    %v5951 = vpack.c.b16 %v5879, %v5875
    %v5952 = vpack.c.b16 %v5880, %v5876
    %v5953 = vpack.c.b16 %v5885, %v5881
    %v5954 = vpack.c.b16 %v5886, %v5882
    %v5955 = vpack.c.b16 %v5887, %v5883
    %v5956 = vpack.c.b16 %v5888, %v5884
    %v5957 = vpack.c.b16 %v5893, %v5889
    %v5958 = vpack.c.b16 %v5894, %v5890
    %v5959 = vpack.c.b16 %v5895, %v5891
    %v5960 = vpack.c.b16 %v5896, %v5892
    %6025 = vmatprep.subr.bf16.mxu0 %v5898
    %6026 = vmatpush1.bf16.msra.mxu0 %v5897
    %6027 = vmatprep.subr.bf16.mxu0 %v5902
    %6028 = vmatpush1.bf16.msra.mxu0 %v5901
    %6029 = vmatprep.subr.bf16.mxu0 %v5906
    %6030 = vmatpush1.bf16.msra.mxu0 %v5905
    %6031 = vmatprep.subr.bf16.mxu0 %v5910
    %6032 = vmatpush1.bf16.msra.mxu0 %v5909
    %6033 = vmatprep.subr.bf16.mxu0 %v5914
    %6034 = vmatpush1.bf16.msra.mxu0 %v5913
    %6035 = vmatprep.subr.bf16.mxu0 %v5918
    %6036 = vmatpush1.bf16.msra.mxu0 %v5917
    %6037 = vmatprep.subr.bf16.mxu0 %v5922
    %6038 = vmatpush1.bf16.msra.mxu0 %v5921
    %6039 = vmatprep.subr.bf16.mxu0 %v5926
    %6040 = vmatpush1.bf16.msra.mxu0 %v5925
    %6041 = vmatprep.subr.bf16.mxu0 %v5930
    %6042 = vmatpush1.bf16.msra.mxu0 %v5929
    %6043 = vmatprep.subr.bf16.mxu0 %v5934
    %6044 = vmatpush1.bf16.msra.mxu0 %v5933
    %6045 = vmatprep.subr.bf16.mxu0 %v5938
    %6046 = vmatpush1.bf16.msra.mxu0 %v5937
    %6047 = vmatprep.subr.bf16.mxu0 %v5942
    %6048 = vmatpush1.bf16.msra.mxu0 %v5941
    %6049 = vmatprep.subr.bf16.mxu0 %v5946
    %6050 = vmatpush1.bf16.msra.mxu0 %v5945
    %6051 = vmatprep.subr.bf16.mxu0 %v5950
    %6052 = vmatpush1.bf16.msra.mxu0 %v5949
    %6053 = vmatprep.subr.bf16.mxu0 %v5954
    %6054 = vmatpush1.bf16.msra.mxu0 %v5953
    %6055 = vmatprep.subr.bf16.mxu0 %v5958
    %6056 = vmatpush1.bf16.msra.mxu0 %v5957
    %6057 = vmatprep.mubr.bf16.mxu0 %v5639
    %6058 = vmatmul.mubr.bf16.gmra.mrb[0].mxu0 %v5638
    %v6059 = vpop.f32.mrb[0].mxu0
    %v6060 = vadd.f32 0.0, %v6059
    %v6061 = vpop.f32.mrb[0].mxu0
    %v6062 = vadd.f32 0.0, %v6061
    %v6063 = vpop.f32.mrb[0].mxu0
    %v6064 = vpop.f32.mrb[0].mxu0
    %6065 = vdwg.mxu0
    %6066 = vmatprep.subr.bf16.mxu0 %v5900
    %6067 = vmatpush1.bf16.msra.mxu0 %v5899
    %6068 = vmatprep.subr.bf16.mxu0 %v5904
    %6069 = vmatpush1.bf16.msra.mxu0 %v5903
    %6070 = vmatprep.subr.bf16.mxu0 %v5908
    %6071 = vmatpush1.bf16.msra.mxu0 %v5907
    %6072 = vmatprep.subr.bf16.mxu0 %v5912
    %6073 = vmatpush1.bf16.msra.mxu0 %v5911
    %6074 = vmatprep.subr.bf16.mxu0 %v5916
    %6075 = vmatpush1.bf16.msra.mxu0 %v5915
    %6076 = vmatprep.subr.bf16.mxu0 %v5920
    %6077 = vmatpush1.bf16.msra.mxu0 %v5919
    %6078 = vmatprep.subr.bf16.mxu0 %v5924
    %6079 = vmatpush1.bf16.msra.mxu0 %v5923
    %6080 = vmatprep.subr.bf16.mxu0 %v5928
    %6081 = vmatpush1.bf16.msra.mxu0 %v5927
    %6082 = vmatprep.subr.bf16.mxu0 %v5932
    %6083 = vmatpush1.bf16.msra.mxu0 %v5931
    %6084 = vmatprep.subr.bf16.mxu0 %v5936
    %6085 = vmatpush1.bf16.msra.mxu0 %v5935
    %6086 = vmatprep.subr.bf16.mxu0 %v5940
    %6087 = vmatpush1.bf16.msra.mxu0 %v5939
    %6088 = vmatprep.subr.bf16.mxu0 %v5944
    %6089 = vmatpush1.bf16.msra.mxu0 %v5943
    %6090 = vmatprep.subr.bf16.mxu0 %v5948
    %6091 = vmatpush1.bf16.msra.mxu0 %v5947
    %6092 = vmatprep.subr.bf16.mxu0 %v5952
    %6093 = vmatpush1.bf16.msra.mxu0 %v5951
    %6094 = vmatprep.subr.bf16.mxu0 %v5956
    %6095 = vmatpush1.bf16.msra.mxu0 %v5955
    %6096 = vmatprep.subr.bf16.mxu0 %v5960
    %6097 = vmatpush1.bf16.msra.mxu0 %v5959
    %6098 = vmatprep.mubr.bf16.mxu0 %v5639
    %6099 = vmatmul.mubr.bf16.gmra.mrb[0].mxu0 %v5638
    %v6100 = vpop.f32.mrb[0].mxu0
    %v6101 = vadd.f32 0.0, %v6100
    %v6102 = vpop.f32.mrb[0].mxu0
    %v6103 = vadd.f32 0.0, %v6102
    %v6104 = vpop.f32.mrb[0].mxu0
    %v6105 = vpop.f32.mrb[0].mxu0
    %6106 = vdwg.mxu0
    %v6107 = vadd.f32 %v5588, %v6060
    %v6108 = vadd.f32 %v5589, %v6062
    %v6109 = vadd.f32 %v5590, %v6101
    %v6110 = vadd.f32 %v5591, %v6103
    %s6111 = scalar_lea.vmem [#allocation5], 8
    %v6112 = vld [vmem:[%s6111] sm:$0x1]
    %v6114 = vsel %vm1962, %v6112, 0
    %6116 = vmatprep.subr.bf16.mxu0 %v1958
    %6117 = vmatpush1.bf16.msra.mxu0 %v1957
    %6118 = vmatprep.subr.bf16.mxu0 %v1971
    %6119 = vmatpush1.bf16.msra.mxu0 %v1968
    %6120 = vmatprep.subr.bf16.mxu0 0
    %6121 = vmatpush1.bf16.msra.mxu0 0
    %6122 = vmatprep.subr.bf16.mxu0 0
    %6123 = vmatpush1.bf16.msra.mxu0 0
    %6124 = vmatprep.subr.bf16.mxu0 0
    %6125 = vmatpush1.bf16.msra.mxu0 0
    %6126 = vmatprep.subr.bf16.mxu0 0
    %6127 = vmatpush1.bf16.msra.mxu0 0
    %6128 = vmatprep.subr.bf16.mxu0 0
    %6129 = vmatpush1.bf16.msra.mxu0 0
    %6130 = vmatprep.subr.bf16.mxu0 0
    %6131 = vmatpush1.bf16.msra.mxu0 0
    %6132 = vmatprep.subr.bf16.mxu0 0
    %6133 = vmatpush1.bf16.msra.mxu0 0
    %6134 = vmatprep.subr.bf16.mxu0 0
    %6135 = vmatpush1.bf16.msra.mxu0 0
    %6136 = vmatprep.subr.bf16.mxu0 0
    %6137 = vmatpush1.bf16.msra.mxu0 0
    %6138 = vmatprep.subr.bf16.mxu0 0
    %6139 = vmatpush1.bf16.msra.mxu0 0
    %6140 = vmatprep.subr.bf16.mxu0 0
    %6141 = vmatpush1.bf16.msra.mxu0 0
    %6142 = vmatprep.subr.bf16.mxu0 0
    %6143 = vmatpush1.bf16.msra.mxu0 0
    %6144 = vmatprep.subr.bf16.mxu0 0
    %6145 = vmatpush1.bf16.msra.mxu0 0
    %6146 = vmatprep.subr.bf16.mxu0 0
    %6147 = vmatpush1.bf16.msra.mxu0 0
    %6148 = vmatprep.mubr.bf16.mxu0 0
    %6149 = vmatmul.mubr.bf16.gmra.mrb[0].mxu0 %v6114
    %v6150 = vpop.f32.mrb[0].mxu0
    %v6151 = vadd.f32 0.0, %v6150
    %v6152 = vpop.f32.mrb[0].mxu0
    %v6153 = vadd.f32 0.0, %v6152
    %v6154 = vpop.f32.mrb[0].mxu0
    %v6155 = vpop.f32.mrb[0].mxu0
    %6156 = vdwg.mxu0
    %v6157 = vpack.c.bf16 %v6151, %v6151
    %v6158 = vpack.c.bf16 %v6153, %v6153
    %s6159 = scalar_lea.vmem [#allocation13], 4096
    %v6160 = vld [vmem:[%s6159] sm:$0xff]
    %v6161 = vld [vmem:[%s6159 + $0x8] sm:$0xff]
    %v6162 = vld [vmem:[%s6159 + $0x10] sm:$0xff]
    %v6163 = vld [vmem:[%s6159 + $0x18] sm:$0xff]
    %v6164 = vld [vmem:[%s6159 + $0x20] sm:$0xff]
    %v6165 = vld [vmem:[%s6159 + $0x28] sm:$0xff]
    %v6166 = vld [vmem:[%s6159 + $0x30] sm:$0xff]
    %v6167 = vld [vmem:[%s6159 + $0x38] sm:$0xff]
    %v6168 = vld [vmem:[%s6159 + $0x40] sm:$0xff]
    %v6169 = vld [vmem:[%s6159 + $0x48] sm:$0xff]
    %v6170 = vld [vmem:[%s6159 + $0x50] sm:$0xff]
    %v6171 = vld [vmem:[%s6159 + $0x58] sm:$0xff]
    %v6172 = vld [vmem:[%s6159 + $0x60] sm:$0xff]
    %v6173 = vld [vmem:[%s6159 + $0x68] sm:$0xff]
    %v6174 = vld [vmem:[%s6159 + $0x70] sm:$0xff]
    %v6175 = vld [vmem:[%s6159 + $0x78] sm:$0xff]
    %v6176 = vld [vmem:[%s6159 + $0x80] sm:$0xff]
    %v6177 = vld [vmem:[%s6159 + $0x88] sm:$0xff]
    %v6178 = vld [vmem:[%s6159 + $0x90] sm:$0xff]
    %v6179 = vld [vmem:[%s6159 + $0x98] sm:$0xff]
    %v6180 = vld [vmem:[%s6159 + $0xa0] sm:$0xff]
    %v6181 = vld [vmem:[%s6159 + $0xa8] sm:$0xff]
    %v6182 = vld [vmem:[%s6159 + $0xb0] sm:$0xff]
    %v6183 = vld [vmem:[%s6159 + $0xb8] sm:$0xff]
    %v6184 = vld [vmem:[%s6159 + $0xc0] sm:$0xff]
    %v6185 = vld [vmem:[%s6159 + $0xc8] sm:$0xff]
    %v6186 = vld [vmem:[%s6159 + $0xd0] sm:$0xff]
    %v6187 = vld [vmem:[%s6159 + $0xd8] sm:$0xff]
    %v6188 = vld [vmem:[%s6159 + $0xe0] sm:$0xff]
    %v6189 = vld [vmem:[%s6159 + $0xe8] sm:$0xff]
    %v6190 = vld [vmem:[%s6159 + $0xf0] sm:$0xff]
    %v6191 = vld [vmem:[%s6159 + $0xf8] sm:$0xff]
    %v6192 = vld [vmem:[%s6159 + $0x100] sm:$0xff]
    %v6193 = vld [vmem:[%s6159 + $0x108] sm:$0xff]
    %v6194 = vld [vmem:[%s6159 + $0x110] sm:$0xff]
    %v6195 = vld [vmem:[%s6159 + $0x118] sm:$0xff]
    %v6196 = vld [vmem:[%s6159 + $0x120] sm:$0xff]
    %v6197 = vld [vmem:[%s6159 + $0x128] sm:$0xff]
    %v6198 = vld [vmem:[%s6159 + $0x130] sm:$0xff]
    %v6199 = vld [vmem:[%s6159 + $0x138] sm:$0xff]
    %v6200 = vld [vmem:[%s6159 + $0x140] sm:$0xff]
    %v6201 = vld [vmem:[%s6159 + $0x148] sm:$0xff]
    %v6202 = vld [vmem:[%s6159 + $0x150] sm:$0xff]
    %v6203 = vld [vmem:[%s6159 + $0x158] sm:$0xff]
    %v6204 = vld [vmem:[%s6159 + $0x160] sm:$0xff]
    %v6205 = vld [vmem:[%s6159 + $0x168] sm:$0xff]
    %v6206 = vld [vmem:[%s6159 + $0x170] sm:$0xff]
    %v6207 = vld [vmem:[%s6159 + $0x178] sm:$0xff]
    %v6208 = vld [vmem:[%s6159 + $0x180] sm:$0xff]
    %v6209 = vld [vmem:[%s6159 + $0x188] sm:$0xff]
    %v6210 = vld [vmem:[%s6159 + $0x190] sm:$0xff]
    %v6211 = vld [vmem:[%s6159 + $0x198] sm:$0xff]
    %v6212 = vld [vmem:[%s6159 + $0x1a0] sm:$0xff]
    %v6213 = vld [vmem:[%s6159 + $0x1a8] sm:$0xff]
    %v6214 = vld [vmem:[%s6159 + $0x1b0] sm:$0xff]
    %v6215 = vld [vmem:[%s6159 + $0x1b8] sm:$0xff]
    %v6216 = vld [vmem:[%s6159 + $0x1c0] sm:$0xff]
    %v6217 = vld [vmem:[%s6159 + $0x1c8] sm:$0xff]
    %v6218 = vld [vmem:[%s6159 + $0x1d0] sm:$0xff]
    %v6219 = vld [vmem:[%s6159 + $0x1d8] sm:$0xff]
    %v6220 = vld [vmem:[%s6159 + $0x1e0] sm:$0xff]
    %v6221 = vld [vmem:[%s6159 + $0x1e8] sm:$0xff]
    %v6222 = vld [vmem:[%s6159 + $0x1f0] sm:$0xff]
    %v6223 = vld [vmem:[%s6159 + $0x1f8] sm:$0xff]
    %v6288 = vunpack.c.l.b16 %v6160
    %v6289 = vunpack.c.h.b16 %v6160
    %v6290 = vunpack.c.l.b16 %v6161
    %v6291 = vunpack.c.h.b16 %v6161
    %v6292 = vunpack.c.l.b16 %v6162
    %v6293 = vunpack.c.h.b16 %v6162
    %v6294 = vunpack.c.l.b16 %v6163
    %v6295 = vunpack.c.h.b16 %v6163
    %v6296 = vunpack.c.l.b16 %v6164
    %v6297 = vunpack.c.h.b16 %v6164
    %v6298 = vunpack.c.l.b16 %v6165
    %v6299 = vunpack.c.h.b16 %v6165
    %v6300 = vunpack.c.l.b16 %v6166
    %v6301 = vunpack.c.h.b16 %v6166
    %v6302 = vunpack.c.l.b16 %v6167
    %v6303 = vunpack.c.h.b16 %v6167
    %v6304 = vunpack.c.l.b16 %v6168
    %v6305 = vunpack.c.h.b16 %v6168
    %v6306 = vunpack.c.l.b16 %v6169
    %v6307 = vunpack.c.h.b16 %v6169
    %v6308 = vunpack.c.l.b16 %v6170
    %v6309 = vunpack.c.h.b16 %v6170
    %v6310 = vunpack.c.l.b16 %v6171
    %v6311 = vunpack.c.h.b16 %v6171
    %v6312 = vunpack.c.l.b16 %v6172
    %v6313 = vunpack.c.h.b16 %v6172
    %v6314 = vunpack.c.l.b16 %v6173
    %v6315 = vunpack.c.h.b16 %v6173
    %v6316 = vunpack.c.l.b16 %v6174
    %v6317 = vunpack.c.h.b16 %v6174
    %v6318 = vunpack.c.l.b16 %v6175
    %v6319 = vunpack.c.h.b16 %v6175
    %v6320 = vunpack.c.l.b16 %v6176
    %v6321 = vunpack.c.h.b16 %v6176
    %v6322 = vunpack.c.l.b16 %v6177
    %v6323 = vunpack.c.h.b16 %v6177
    %v6324 = vunpack.c.l.b16 %v6178
    %v6325 = vunpack.c.h.b16 %v6178
    %v6326 = vunpack.c.l.b16 %v6179
    %v6327 = vunpack.c.h.b16 %v6179
    %v6328 = vunpack.c.l.b16 %v6180
    %v6329 = vunpack.c.h.b16 %v6180
    %v6330 = vunpack.c.l.b16 %v6181
    %v6331 = vunpack.c.h.b16 %v6181
    %v6332 = vunpack.c.l.b16 %v6182
    %v6333 = vunpack.c.h.b16 %v6182
    %v6334 = vunpack.c.l.b16 %v6183
    %v6335 = vunpack.c.h.b16 %v6183
    %v6336 = vunpack.c.l.b16 %v6184
    %v6337 = vunpack.c.h.b16 %v6184
    %v6338 = vunpack.c.l.b16 %v6185
    %v6339 = vunpack.c.h.b16 %v6185
    %v6340 = vunpack.c.l.b16 %v6186
    %v6341 = vunpack.c.h.b16 %v6186
    %v6342 = vunpack.c.l.b16 %v6187
    %v6343 = vunpack.c.h.b16 %v6187
    %v6344 = vunpack.c.l.b16 %v6188
    %v6345 = vunpack.c.h.b16 %v6188
    %v6346 = vunpack.c.l.b16 %v6189
    %v6347 = vunpack.c.h.b16 %v6189
    %v6348 = vunpack.c.l.b16 %v6190
    %v6349 = vunpack.c.h.b16 %v6190
    %v6350 = vunpack.c.l.b16 %v6191
    %v6351 = vunpack.c.h.b16 %v6191
    %v6352 = vunpack.c.l.b16 %v6192
    %v6353 = vunpack.c.h.b16 %v6192
    %v6354 = vunpack.c.l.b16 %v6193
    %v6355 = vunpack.c.h.b16 %v6193
    %v6356 = vunpack.c.l.b16 %v6194
    %v6357 = vunpack.c.h.b16 %v6194
    %v6358 = vunpack.c.l.b16 %v6195
    %v6359 = vunpack.c.h.b16 %v6195
    %v6360 = vunpack.c.l.b16 %v6196
    %v6361 = vunpack.c.h.b16 %v6196
    %v6362 = vunpack.c.l.b16 %v6197
    %v6363 = vunpack.c.h.b16 %v6197
    %v6364 = vunpack.c.l.b16 %v6198
    %v6365 = vunpack.c.h.b16 %v6198
    %v6366 = vunpack.c.l.b16 %v6199
    %v6367 = vunpack.c.h.b16 %v6199
    %v6368 = vunpack.c.l.b16 %v6200
    %v6369 = vunpack.c.h.b16 %v6200
    %v6370 = vunpack.c.l.b16 %v6201
    %v6371 = vunpack.c.h.b16 %v6201
    %v6372 = vunpack.c.l.b16 %v6202
    %v6373 = vunpack.c.h.b16 %v6202
    %v6374 = vunpack.c.l.b16 %v6203
    %v6375 = vunpack.c.h.b16 %v6203
    %v6376 = vunpack.c.l.b16 %v6204
    %v6377 = vunpack.c.h.b16 %v6204
    %v6378 = vunpack.c.l.b16 %v6205
    %v6379 = vunpack.c.h.b16 %v6205
    %v6380 = vunpack.c.l.b16 %v6206
    %v6381 = vunpack.c.h.b16 %v6206
    %v6382 = vunpack.c.l.b16 %v6207
    %v6383 = vunpack.c.h.b16 %v6207
    %v6384 = vunpack.c.l.b16 %v6208
    %v6385 = vunpack.c.h.b16 %v6208
    %v6386 = vunpack.c.l.b16 %v6209
    %v6387 = vunpack.c.h.b16 %v6209
    %v6388 = vunpack.c.l.b16 %v6210
    %v6389 = vunpack.c.h.b16 %v6210
    %v6390 = vunpack.c.l.b16 %v6211
    %v6391 = vunpack.c.h.b16 %v6211
    %v6392 = vunpack.c.l.b16 %v6212
    %v6393 = vunpack.c.h.b16 %v6212
    %v6394 = vunpack.c.l.b16 %v6213
    %v6395 = vunpack.c.h.b16 %v6213
    %v6396 = vunpack.c.l.b16 %v6214
    %v6397 = vunpack.c.h.b16 %v6214
    %v6398 = vunpack.c.l.b16 %v6215
    %v6399 = vunpack.c.h.b16 %v6215
    %v6400 = vunpack.c.l.b16 %v6216
    %v6401 = vunpack.c.h.b16 %v6216
    %v6402 = vunpack.c.l.b16 %v6217
    %v6403 = vunpack.c.h.b16 %v6217
    %v6404 = vunpack.c.l.b16 %v6218
    %v6405 = vunpack.c.h.b16 %v6218
    %v6406 = vunpack.c.l.b16 %v6219
    %v6407 = vunpack.c.h.b16 %v6219
    %v6408 = vunpack.c.l.b16 %v6220
    %v6409 = vunpack.c.h.b16 %v6220
    %v6410 = vunpack.c.l.b16 %v6221
    %v6411 = vunpack.c.h.b16 %v6221
    %v6412 = vunpack.c.l.b16 %v6222
    %v6413 = vunpack.c.h.b16 %v6222
    %v6414 = vunpack.c.l.b16 %v6223
    %v6415 = vunpack.c.h.b16 %v6223
    %v6416 = vpack.c.b16 %v6292, %v6288
    %v6417 = vpack.c.b16 %v6293, %v6289
    %v6418 = vpack.c.b16 %v6294, %v6290
    %v6419 = vpack.c.b16 %v6295, %v6291
    %v6420 = vpack.c.b16 %v6300, %v6296
    %v6421 = vpack.c.b16 %v6301, %v6297
    %v6422 = vpack.c.b16 %v6302, %v6298
    %v6423 = vpack.c.b16 %v6303, %v6299
    %v6424 = vpack.c.b16 %v6308, %v6304
    %v6425 = vpack.c.b16 %v6309, %v6305
    %v6426 = vpack.c.b16 %v6310, %v6306
    %v6427 = vpack.c.b16 %v6311, %v6307
    %v6428 = vpack.c.b16 %v6316, %v6312
    %v6429 = vpack.c.b16 %v6317, %v6313
    %v6430 = vpack.c.b16 %v6318, %v6314
    %v6431 = vpack.c.b16 %v6319, %v6315
    %v6432 = vpack.c.b16 %v6324, %v6320
    %v6433 = vpack.c.b16 %v6325, %v6321
    %v6434 = vpack.c.b16 %v6326, %v6322
    %v6435 = vpack.c.b16 %v6327, %v6323
    %v6436 = vpack.c.b16 %v6332, %v6328
    %v6437 = vpack.c.b16 %v6333, %v6329
    %v6438 = vpack.c.b16 %v6334, %v6330
    %v6439 = vpack.c.b16 %v6335, %v6331
    %v6440 = vpack.c.b16 %v6340, %v6336
    %v6441 = vpack.c.b16 %v6341, %v6337
    %v6442 = vpack.c.b16 %v6342, %v6338
    %v6443 = vpack.c.b16 %v6343, %v6339
    %v6444 = vpack.c.b16 %v6348, %v6344
    %v6445 = vpack.c.b16 %v6349, %v6345
    %v6446 = vpack.c.b16 %v6350, %v6346
    %v6447 = vpack.c.b16 %v6351, %v6347
    %v6448 = vpack.c.b16 %v6356, %v6352
    %v6449 = vpack.c.b16 %v6357, %v6353
    %v6450 = vpack.c.b16 %v6358, %v6354
    %v6451 = vpack.c.b16 %v6359, %v6355
    %v6452 = vpack.c.b16 %v6364, %v6360
    %v6453 = vpack.c.b16 %v6365, %v6361
    %v6454 = vpack.c.b16 %v6366, %v6362
    %v6455 = vpack.c.b16 %v6367, %v6363
    %v6456 = vpack.c.b16 %v6372, %v6368
    %v6457 = vpack.c.b16 %v6373, %v6369
    %v6458 = vpack.c.b16 %v6374, %v6370
    %v6459 = vpack.c.b16 %v6375, %v6371
    %v6460 = vpack.c.b16 %v6380, %v6376
    %v6461 = vpack.c.b16 %v6381, %v6377
    %v6462 = vpack.c.b16 %v6382, %v6378
    %v6463 = vpack.c.b16 %v6383, %v6379
    %v6464 = vpack.c.b16 %v6388, %v6384
    %v6465 = vpack.c.b16 %v6389, %v6385
    %v6466 = vpack.c.b16 %v6390, %v6386
    %v6467 = vpack.c.b16 %v6391, %v6387
    %v6468 = vpack.c.b16 %v6396, %v6392
    %v6469 = vpack.c.b16 %v6397, %v6393
    %v6470 = vpack.c.b16 %v6398, %v6394
    %v6471 = vpack.c.b16 %v6399, %v6395
    %v6472 = vpack.c.b16 %v6404, %v6400
    %v6473 = vpack.c.b16 %v6405, %v6401
    %v6474 = vpack.c.b16 %v6406, %v6402
    %v6475 = vpack.c.b16 %v6407, %v6403
    %v6476 = vpack.c.b16 %v6412, %v6408
    %v6477 = vpack.c.b16 %v6413, %v6409
    %v6478 = vpack.c.b16 %v6414, %v6410
    %v6479 = vpack.c.b16 %v6415, %v6411
    %6544 = vmatprep.subr.bf16.mxu0 %v6417
    %6545 = vmatpush1.bf16.msra.mxu0 %v6416
    %6546 = vmatprep.subr.bf16.mxu0 %v6421
    %6547 = vmatpush1.bf16.msra.mxu0 %v6420
    %6548 = vmatprep.subr.bf16.mxu0 %v6425
    %6549 = vmatpush1.bf16.msra.mxu0 %v6424
    %6550 = vmatprep.subr.bf16.mxu0 %v6429
    %6551 = vmatpush1.bf16.msra.mxu0 %v6428
    %6552 = vmatprep.subr.bf16.mxu0 %v6433
    %6553 = vmatpush1.bf16.msra.mxu0 %v6432
    %6554 = vmatprep.subr.bf16.mxu0 %v6437
    %6555 = vmatpush1.bf16.msra.mxu0 %v6436
    %6556 = vmatprep.subr.bf16.mxu0 %v6441
    %6557 = vmatpush1.bf16.msra.mxu0 %v6440
    %6558 = vmatprep.subr.bf16.mxu0 %v6445
    %6559 = vmatpush1.bf16.msra.mxu0 %v6444
    %6560 = vmatprep.subr.bf16.mxu0 %v6449
    %6561 = vmatpush1.bf16.msra.mxu0 %v6448
    %6562 = vmatprep.subr.bf16.mxu0 %v6453
    %6563 = vmatpush1.bf16.msra.mxu0 %v6452
    %6564 = vmatprep.subr.bf16.mxu0 %v6457
    %6565 = vmatpush1.bf16.msra.mxu0 %v6456
    %6566 = vmatprep.subr.bf16.mxu0 %v6461
    %6567 = vmatpush1.bf16.msra.mxu0 %v6460
    %6568 = vmatprep.subr.bf16.mxu0 %v6465
    %6569 = vmatpush1.bf16.msra.mxu0 %v6464
    %6570 = vmatprep.subr.bf16.mxu0 %v6469
    %6571 = vmatpush1.bf16.msra.mxu0 %v6468
    %6572 = vmatprep.subr.bf16.mxu0 %v6473
    %6573 = vmatpush1.bf16.msra.mxu0 %v6472
    %6574 = vmatprep.subr.bf16.mxu0 %v6477
    %6575 = vmatpush1.bf16.msra.mxu0 %v6476
    %6576 = vmatprep.mubr.bf16.mxu0 %v6158
    %6577 = vmatmul.mubr.bf16.gmra.mrb[0].mxu0 %v6157
    %v6578 = vpop.f32.mrb[0].mxu0
    %v6579 = vadd.f32 0.0, %v6578
    %v6580 = vpop.f32.mrb[0].mxu0
    %v6581 = vadd.f32 0.0, %v6580
    %v6582 = vpop.f32.mrb[0].mxu0
    %v6583 = vpop.f32.mrb[0].mxu0
    %6584 = vdwg.mxu0
    %6585 = vmatprep.subr.bf16.mxu0 %v6419
    %6586 = vmatpush1.bf16.msra.mxu0 %v6418
    %6587 = vmatprep.subr.bf16.mxu0 %v6423
    %6588 = vmatpush1.bf16.msra.mxu0 %v6422
    %6589 = vmatprep.subr.bf16.mxu0 %v6427
    %6590 = vmatpush1.bf16.msra.mxu0 %v6426
    %6591 = vmatprep.subr.bf16.mxu0 %v6431
    %6592 = vmatpush1.bf16.msra.mxu0 %v6430
    %6593 = vmatprep.subr.bf16.mxu0 %v6435
    %6594 = vmatpush1.bf16.msra.mxu0 %v6434
    %6595 = vmatprep.subr.bf16.mxu0 %v6439
    %6596 = vmatpush1.bf16.msra.mxu0 %v6438
    %6597 = vmatprep.subr.bf16.mxu0 %v6443
    %6598 = vmatpush1.bf16.msra.mxu0 %v6442
    %6599 = vmatprep.subr.bf16.mxu0 %v6447
    %6600 = vmatpush1.bf16.msra.mxu0 %v6446
    %6601 = vmatprep.subr.bf16.mxu0 %v6451
    %6602 = vmatpush1.bf16.msra.mxu0 %v6450
    %6603 = vmatprep.subr.bf16.mxu0 %v6455
    %6604 = vmatpush1.bf16.msra.mxu0 %v6454
    %6605 = vmatprep.subr.bf16.mxu0 %v6459
    %6606 = vmatpush1.bf16.msra.mxu0 %v6458
    %6607 = vmatprep.subr.bf16.mxu0 %v6463
    %6608 = vmatpush1.bf16.msra.mxu0 %v6462
    %6609 = vmatprep.subr.bf16.mxu0 %v6467
    %6610 = vmatpush1.bf16.msra.mxu0 %v6466
    %6611 = vmatprep.subr.bf16.mxu0 %v6471
    %6612 = vmatpush1.bf16.msra.mxu0 %v6470
    %6613 = vmatprep.subr.bf16.mxu0 %v6475
    %6614 = vmatpush1.bf16.msra.mxu0 %v6474
    %6615 = vmatprep.subr.bf16.mxu0 %v6479
    %6616 = vmatpush1.bf16.msra.mxu0 %v6478
    %6617 = vmatprep.mubr.bf16.mxu0 %v6158
    %6618 = vmatmul.mubr.bf16.gmra.mrb[0].mxu0 %v6157
    %v6619 = vpop.f32.mrb[0].mxu0
    %v6620 = vadd.f32 0.0, %v6619
    %v6621 = vpop.f32.mrb[0].mxu0
    %v6622 = vadd.f32 0.0, %v6621
    %v6623 = vpop.f32.mrb[0].mxu0
    %v6624 = vpop.f32.mrb[0].mxu0
    %6625 = vdwg.mxu0
    %v6626 = vadd.f32 %v6107, %v6579
    %v6627 = vadd.f32 %v6108, %v6581
    %v6628 = vadd.f32 %v6109, %v6620
    %v6629 = vadd.f32 %v6110, %v6622
    %v6630 = vld [vmem:[#allocation14] sm:$0xf]
    %v6631 = vld [vmem:[#allocation16] sm:$0xf]
    %v6632 = vsel %vm1854, %v6626, 0.0
    %v6633 = vrot.slane %v6632, 4
    %v6634 = vadd.f32 %v6632, %v6633
    %v6635 = vrot.slane %v6634, 2
    %v6636 = vadd.f32 %v6634, %v6635
    %v6637 = vrot.slane %v6636, 1
    %v6638 = vadd.f32 %v6636, %v6637
    %v6639 = vsel %vm1854, %v6627, 0.0
    %v6640 = vrot.slane %v6639, 4
    %v6641 = vadd.f32 %v6639, %v6640
    %v6642 = vrot.slane %v6641, 2
    %v6643 = vadd.f32 %v6641, %v6642
    %v6644 = vrot.slane %v6643, 1
    %v6645 = vadd.f32 %v6643, %v6644
    %v6646 = vsel %vm1854, %v6628, 0.0
    %v6647 = vrot.slane %v6646, 4
    %v6648 = vadd.f32 %v6646, %v6647
    %v6649 = vrot.slane %v6648, 2
    %v6650 = vadd.f32 %v6648, %v6649
    %v6651 = vrot.slane %v6650, 1
    %v6652 = vadd.f32 %v6650, %v6651
    %v6653 = vsel %vm1854, %v6629, 0.0
    %v6654 = vrot.slane %v6653, 4
    %v6655 = vadd.f32 %v6653, %v6654
    %v6656 = vrot.slane %v6655, 2
    %v6657 = vadd.f32 %v6655, %v6656
    %v6658 = vrot.slane %v6657, 1
    %v6659 = vadd.f32 %v6657, %v6658
    %v6660 = vrcp.pop 2.0
    %v6661 = vmul.f32 %v6638, %v6660
    %v6662 = vmul.f32 %v6645, %v6660
    %v6663 = vmul.f32 %v6652, %v6660
    %v6664 = vmul.f32 %v6659, %v6660
    %v6665 = vsub.f32 %v6626, %v6661
    %v6666 = vsub.f32 %v6627, %v6662
    %v6667 = vsub.f32 %v6628, %v6663
    %v6668 = vsub.f32 %v6629, %v6664
    %v6669 = vmul.f32 %v6665, %v6665
    %v6670 = vmul.f32 %v6666, %v6666
    %v6671 = vmul.f32 %v6667, %v6667
    %v6672 = vmul.f32 %v6668, %v6668
    %v6673 = vsel %vm1854, %v6669, 0.0
    %v6674 = vrot.slane %v6673, 4
    %v6675 = vadd.f32 %v6673, %v6674
    %v6676 = vrot.slane %v6675, 2
    %v6677 = vadd.f32 %v6675, %v6676
    %v6678 = vrot.slane %v6677, 1
    %v6679 = vadd.f32 %v6677, %v6678
    %v6680 = vsel %vm1854, %v6670, 0.0
    %v6681 = vrot.slane %v6680, 4
    %v6682 = vadd.f32 %v6680, %v6681
    %v6683 = vrot.slane %v6682, 2
    %v6684 = vadd.f32 %v6682, %v6683
    %v6685 = vrot.slane %v6684, 1
    %v6686 = vadd.f32 %v6684, %v6685
    %v6687 = vsel %vm1854, %v6671, 0.0
    %v6688 = vrot.slane %v6687, 4
    %v6689 = vadd.f32 %v6687, %v6688
    %v6690 = vrot.slane %v6689, 2
    %v6691 = vadd.f32 %v6689, %v6690
    %v6692 = vrot.slane %v6691, 1
    %v6693 = vadd.f32 %v6691, %v6692
    %v6694 = vsel %vm1854, %v6672, 0.0
    %v6695 = vrot.slane %v6694, 4
    %v6696 = vadd.f32 %v6694, %v6695
    %v6697 = vrot.slane %v6696, 2
    %v6698 = vadd.f32 %v6696, %v6697
    %v6699 = vrot.slane %v6698, 1
    %v6700 = vadd.f32 %v6698, %v6699
    %v6701 = vmul.f32 %v6679, %v6660
    %v6702 = vmul.f32 %v6686, %v6660
    %v6703 = vmul.f32 %v6693, %v6660
    %v6704 = vmul.f32 %v6700, %v6660
    %v6705 = vadd.f32 %v6701, 1e-05
    %v6706 = vadd.f32 %v6702, 1e-05
    %v6707 = vadd.f32 %v6703, 1e-05
    %v6708 = vadd.f32 %v6704, 1e-05
    %v6709 = vrsqrt.pop %v6705
    %v6710 = vrsqrt.pop %v6706
    %v6711 = vrsqrt.pop %v6707
    %v6712 = vrsqrt.pop %v6708
    %v6713 = vmul.f32 %v6665, %v6709
    %v6714 = vmul.f32 %v6666, %v6710
    %v6715 = vmul.f32 %v6667, %v6711
    %v6716 = vmul.f32 %v6668, %v6712
    %v6718 = vlaneseq
    %v6719 = vshrl.u32 %v6718, 7
    %v6720 = vsub.s32 0, %v6719
    %v6721 = vrot.slane %v6630, %v6720
    %v6722 = vlaneseq
    %v6723 = vshrl.u32 %v6722, 7
    %v6724 = vsub.s32 1, %v6723
    %v6725 = vrot.slane %v6630, %v6724
    %v6726 = vlaneseq
    %v6727 = vshrl.u32 %v6726, 7
    %v6728 = vsub.s32 2, %v6727
    %v6729 = vrot.slane %v6630, %v6728
    %v6730 = vlaneseq
    %v6731 = vshrl.u32 %v6730, 7
    %v6732 = vsub.s32 3, %v6731
    %v6733 = vrot.slane %v6630, %v6732
    %v6738 = vmul.f32 %v6721, %v6713
    %v6739 = vmul.f32 %v6725, %v6714
    %v6740 = vmul.f32 %v6729, %v6715
    %v6741 = vmul.f32 %v6733, %v6716
    %v6743 = vlaneseq
    %v6744 = vshrl.u32 %v6743, 7
    %v6745 = vsub.s32 0, %v6744
    %v6746 = vrot.slane %v6631, %v6745
    %v6747 = vlaneseq
    %v6748 = vshrl.u32 %v6747, 7
    %v6749 = vsub.s32 1, %v6748
    %v6750 = vrot.slane %v6631, %v6749
    %v6751 = vlaneseq
    %v6752 = vshrl.u32 %v6751, 7
    %v6753 = vsub.s32 2, %v6752
    %v6754 = vrot.slane %v6631, %v6753
    %v6755 = vlaneseq
    %v6756 = vshrl.u32 %v6755, 7
    %v6757 = vsub.s32 3, %v6756
    %v6758 = vrot.slane %v6631, %v6757
    %v6763 = vadd.f32 %v6738, %v6746
    %v6764 = vadd.f32 %v6739, %v6750
    %v6765 = vadd.f32 %v6740, %v6754
    %v6766 = vadd.f32 %v6741, %v6758
    %v6767 = vmax.f32 %v6763, 0.0
    %v6768 = vmax.f32 %v6764, 0.0
    %v6769 = vmax.f32 %v6765, 0.0
    %v6770 = vmax.f32 %v6766, 0.0
    %v6771 = vld [vmem:[%s3] sm:$0xff]
    %v6772 = vld [vmem:[#allocation22] sm:$0xff]
    %v6773 = vld [vmem:[#allocation22 + $0x8] sm:$0xff]
    %v6774 = vld [vmem:[#allocation22 + $0x10] sm:$0xff]
    %v6775 = vld [vmem:[#allocation22 + $0x18] sm:$0xff]
    %v6776 = vld [vmem:[#allocation22 + $0x20] sm:$0xff]
    %v6777 = vld [vmem:[#allocation22 + $0x28] sm:$0xff]
    %v6778 = vld [vmem:[#allocation22 + $0x30] sm:$0xff]
    %v6779 = vld [vmem:[#allocation22 + $0x38] sm:$0xff]
    %v6780 = vld [vmem:[#allocation22 + $0x40] sm:$0xff]
    %v6781 = vld [vmem:[#allocation22 + $0x48] sm:$0xff]
    %v6782 = vld [vmem:[#allocation22 + $0x50] sm:$0xff]
    %v6783 = vld [vmem:[#allocation22 + $0x58] sm:$0xff]
    %v6784 = vld [vmem:[#allocation22 + $0x60] sm:$0xff]
    %v6785 = vld [vmem:[#allocation22 + $0x68] sm:$0xff]
    %v6786 = vld [vmem:[#allocation22 + $0x70] sm:$0xff]
    %v6787 = vld [vmem:[#allocation22 + $0x78] sm:$0xff]
    %v6788 = vld [vmem:[#allocation22 + $0x80] sm:$0xff]
    %v6789 = vld [vmem:[#allocation22 + $0x88] sm:$0xff]
    %v6790 = vld [vmem:[#allocation22 + $0x90] sm:$0xff]
    %v6791 = vld [vmem:[#allocation22 + $0x98] sm:$0xff]
    %v6792 = vld [vmem:[#allocation22 + $0xa0] sm:$0xff]
    %v6793 = vld [vmem:[#allocation22 + $0xa8] sm:$0xff]
    %v6794 = vld [vmem:[#allocation22 + $0xb0] sm:$0xff]
    %v6795 = vld [vmem:[#allocation22 + $0xb8] sm:$0xff]
    %v6796 = vld [vmem:[#allocation22 + $0xc0] sm:$0xff]
    %v6797 = vld [vmem:[#allocation22 + $0xc8] sm:$0xff]
    %v6798 = vld [vmem:[#allocation22 + $0xd0] sm:$0xff]
    %v6799 = vld [vmem:[#allocation22 + $0xd8] sm:$0xff]
    %v6800 = vld [vmem:[#allocation22 + $0xe0] sm:$0xff]
    %v6801 = vld [vmem:[#allocation22 + $0xe8] sm:$0xff]
    %v6802 = vld [vmem:[#allocation22 + $0xf0] sm:$0xff]
    %v6803 = vld [vmem:[#allocation22 + $0xf8] sm:$0xff]
    %v6804 = vld [vmem:[#allocation22 + $0x100] sm:$0xff]
    %v6805 = vld [vmem:[#allocation22 + $0x108] sm:$0xff]
    %v6806 = vld [vmem:[#allocation22 + $0x110] sm:$0xff]
    %v6807 = vld [vmem:[#allocation22 + $0x118] sm:$0xff]
    %v6808 = vld [vmem:[#allocation22 + $0x120] sm:$0xff]
    %v6809 = vld [vmem:[#allocation22 + $0x128] sm:$0xff]
    %v6810 = vld [vmem:[#allocation22 + $0x130] sm:$0xff]
    %v6811 = vld [vmem:[#allocation22 + $0x138] sm:$0xff]
    %v6812 = vld [vmem:[#allocation22 + $0x140] sm:$0xff]
    %v6813 = vld [vmem:[#allocation22 + $0x148] sm:$0xff]
    %v6814 = vld [vmem:[#allocation22 + $0x150] sm:$0xff]
    %v6815 = vld [vmem:[#allocation22 + $0x158] sm:$0xff]
    %v6816 = vld [vmem:[#allocation22 + $0x160] sm:$0xff]
    %v6817 = vld [vmem:[#allocation22 + $0x168] sm:$0xff]
    %v6818 = vld [vmem:[#allocation22 + $0x170] sm:$0xff]
    %v6819 = vld [vmem:[#allocation22 + $0x178] sm:$0xff]
    %v6820 = vld [vmem:[#allocation22 + $0x180] sm:$0xff]
    %v6821 = vld [vmem:[#allocation22 + $0x188] sm:$0xff]
    %v6823 = vcombine.high %v6771, %v6771
    %v6825 = vunpack.c.l.s4 1983009808
    %v6826 = vunpack.c.0.s8 %v6825
    %v6827 = vlaneseq
    %v6828 = vshrl.u32 %v6827, 7
    %v6829 = vsub.s32 %v6826, %v6828
    %v6830 = vrot.slane %v6771, %v6829
    %v6832 = vunpack.c.l.s4 1983009808
    %v6833 = vunpack.c.0.s8 %v6832
    %v6834 = vlaneseq
    %v6835 = vshrl.u32 %v6834, 7
    %v6836 = vsub.s32 %v6833, %v6835
    %v6837 = vrot.slane %v6823, %v6836
    %v6838 = vcombine.high %v6830, %v6830
    %v6839 = vcombine.high %v6837, %v6837
    %vm6843 = vcmask 130048
    %v6844 = vsel %vm6843, %v6839, 0
    %6846 = vmatprep.subr.mxu0 0.0
    %6847 = vmatpush1.msra.mxu0 %v6772
    %6848 = vmatprep.subr.mxu0 0.0
    %6849 = vmatpush1.msra.mxu0 %v6773
    %6850 = vmatprep.subr.mxu0 0.0
    %6851 = vmatpush1.msra.mxu0 %v6774
    %6852 = vmatprep.subr.mxu0 0.0
    %6853 = vmatpush1.msra.mxu0 %v6775
    %6854 = vmatprep.subr.mxu0 0.0
    %6855 = vmatpush1.msra.mxu0 %v6776
    %6856 = vmatprep.subr.mxu0 0.0
    %6857 = vmatpush1.msra.mxu0 %v6777
    %6858 = vmatprep.subr.mxu0 0.0
    %6859 = vmatpush1.msra.mxu0 %v6778
    %6860 = vmatprep.subr.mxu0 0.0
    %6861 = vmatpush1.msra.mxu0 %v6779
    %6862 = vmatprep.subr.mxu0 0.0
    %6863 = vmatpush1.msra.mxu0 %v6780
    %6864 = vmatprep.subr.mxu0 0.0
    %6865 = vmatpush1.msra.mxu0 %v6781
    %6866 = vmatprep.subr.mxu0 0.0
    %6867 = vmatpush1.msra.mxu0 %v6782
    %6868 = vmatprep.subr.mxu0 0.0
    %6869 = vmatpush1.msra.mxu0 %v6783
    %6870 = vmatprep.subr.mxu0 0.0
    %6871 = vmatpush1.msra.mxu0 %v6784
    %6872 = vmatprep.subr.mxu0 0.0
    %6873 = vmatpush1.msra.mxu0 %v6785
    %6874 = vmatprep.subr.mxu0 0.0
    %6875 = vmatpush1.msra.mxu0 %v6786
    %6876 = vmatprep.subr.mxu0 0.0
    %6877 = vmatpush1.msra.mxu0 %v6787
    %6878 = vmatprep.subr.mxu0 0.0
    %6879 = vmatpush1.msra.mxu0 %v6788
    %6880 = vmatprep.subr.mxu0 0.0
    %6881 = vmatpush1.msra.mxu0 %v6789
    %6882 = vmatprep.subr.mxu0 0.0
    %6883 = vmatpush1.msra.mxu0 %v6790
    %6884 = vmatprep.subr.mxu0 0.0
    %6885 = vmatpush1.msra.mxu0 %v6791
    %6886 = vmatprep.subr.mxu0 0.0
    %6887 = vmatpush1.msra.mxu0 %v6792
    %6888 = vmatprep.subr.mxu0 0.0
    %6889 = vmatpush1.msra.mxu0 %v6793
    %6890 = vmatprep.subr.mxu0 0.0
    %6891 = vmatpush1.msra.mxu0 %v6794
    %6892 = vmatprep.subr.mxu0 0.0
    %6893 = vmatpush1.msra.mxu0 %v6795
    %6894 = vmatprep.subr.mxu0 0.0
    %6895 = vmatpush1.msra.mxu0 %v6796
    %6896 = vmatprep.subr.mxu0 0.0
    %6897 = vmatpush1.msra.mxu0 %v6797
    %6898 = vmatprep.subr.mxu0 0.0
    %6899 = vmatpush1.msra.mxu0 %v6798
    %6900 = vmatprep.subr.mxu0 0.0
    %6901 = vmatpush1.msra.mxu0 %v6799
    %6902 = vmatprep.subr.mxu0 0.0
    %6903 = vmatpush1.msra.mxu0 %v6800
    %6904 = vmatprep.subr.mxu0 0.0
    %6905 = vmatpush1.msra.mxu0 %v6801
    %6906 = vmatprep.subr.mxu0 0.0
    %6907 = vmatpush1.msra.mxu0 %v6802
    %6908 = vmatprep.subr.mxu0 0.0
    %6909 = vmatpush1.msra.mxu0 %v6803
    %6910 = vmatprep.mubr.f32.mxu0 %v6838
    %6911 = vmatmul.mubr.f32.gmra.mrb[0].mxu0 %v6830
    %v6912 = vpop.f32.mrb[0].mxu0
    %v6913 = vadd.f32 0.0, %v6912
    %v6914 = vpop.f32.mrb[0].mxu0
    %6915 = vdwg.mxu0
    %6916 = vmatprep.subr.mxu0 0.0
    %6917 = vmatpush1.msra.mxu0 %v6804
    %6918 = vmatprep.subr.mxu0 0.0
    %6919 = vmatpush1.msra.mxu0 %v6805
    %6920 = vmatprep.subr.mxu0 0.0
    %6921 = vmatpush1.msra.mxu0 %v6806
    %6922 = vmatprep.subr.mxu0 0.0
    %6923 = vmatpush1.msra.mxu0 %v6807
    %6924 = vmatprep.subr.mxu0 0.0
    %6925 = vmatpush1.msra.mxu0 %v6808
    %6926 = vmatprep.subr.mxu0 0.0
    %6927 = vmatpush1.msra.mxu0 %v6809
    %6928 = vmatprep.subr.mxu0 0.0
    %6929 = vmatpush1.msra.mxu0 %v6810
    %6930 = vmatprep.subr.mxu0 0.0
    %6931 = vmatpush1.msra.mxu0 %v6811
    %6932 = vmatprep.subr.mxu0 0.0
    %6933 = vmatpush1.msra.mxu0 %v6812
    %6934 = vmatprep.subr.mxu0 0.0
    %6935 = vmatpush1.msra.mxu0 %v6813
    %6936 = vmatprep.subr.mxu0 0.0
    %6937 = vmatpush1.msra.mxu0 %v6814
    %6938 = vmatprep.subr.mxu0 0.0
    %6939 = vmatpush1.msra.mxu0 %v6815
    %6940 = vmatprep.subr.mxu0 0.0
    %6941 = vmatpush1.msra.mxu0 %v6816
    %6942 = vmatprep.subr.mxu0 0.0
    %6943 = vmatpush1.msra.mxu0 %v6817
    %6944 = vmatprep.subr.mxu0 0.0
    %6945 = vmatpush1.msra.mxu0 %v6818
    %6946 = vmatprep.subr.mxu0 0.0
    %6947 = vmatpush1.msra.mxu0 %v6819
    %6948 = vmatprep.subr.mxu0 0.0
    %6949 = vmatpush1.msra.mxu0 %v6820
    %6950 = vmatprep.subr.mxu0 0.0
    %6951 = vmatpush1.msra.mxu0 %v6821
    %6952 = vmatprep.subr.mxu0 0.0
    %6953 = vmatpush1.msra.mxu0 0.0
    %6954 = vmatprep.subr.mxu0 0.0
    %6955 = vmatpush1.msra.mxu0 0.0
    %6956 = vmatprep.subr.mxu0 0.0
    %6957 = vmatpush1.msra.mxu0 0.0
    %6958 = vmatprep.subr.mxu0 0.0
    %6959 = vmatpush1.msra.mxu0 0.0
    %6960 = vmatprep.subr.mxu0 0.0
    %6961 = vmatpush1.msra.mxu0 0.0
    %6962 = vmatprep.subr.mxu0 0.0
    %6963 = vmatpush1.msra.mxu0 0.0
    %6964 = vmatprep.subr.mxu0 0.0
    %6965 = vmatpush1.msra.mxu0 0.0
    %6966 = vmatprep.subr.mxu0 0.0
    %6967 = vmatpush1.msra.mxu0 0.0
    %6968 = vmatprep.subr.mxu0 0.0
    %6969 = vmatpush1.msra.mxu0 0.0
    %6970 = vmatprep.subr.mxu0 0.0
    %6971 = vmatpush1.msra.mxu0 0.0
    %6972 = vmatprep.subr.mxu0 0.0
    %6973 = vmatpush1.msra.mxu0 0.0
    %6974 = vmatprep.subr.mxu0 0.0
    %6975 = vmatpush1.msra.mxu0 0.0
    %6976 = vmatprep.subr.mxu0 0.0
    %6977 = vmatpush1.msra.mxu0 0.0
    %6978 = vmatprep.subr.mxu0 0.0
    %6979 = vmatpush1.msra.mxu0 0.0
    %6980 = vmatprep.mubr.f32.mxu0 %v6844
    %6981 = vmatmul.mubr.f32.gmra.mrb[0].mxu0 %v6837
    %v6982 = vpop.f32.mrb[0].mxu0
    %v6983 = vadd.f32 %v6913, %v6982
    %v6984 = vpop.f32.mrb[0].mxu0
    %6985 = vdwg.mxu0
    %v6986 = vld [vmem:[#allocation23] sm:$0x1]
    %v6987 = vld [vmem:[#allocation25] sm:$0x1]
    %v6988 = vsel %vm1854, %v6983, 0.0
    %v6989 = vrot.slane %v6988, 4
    %v6990 = vadd.f32 %v6988, %v6989
    %v6991 = vrot.slane %v6990, 2
    %v6992 = vadd.f32 %v6990, %v6991
    %v6993 = vrot.slane %v6992, 1
    %v6994 = vadd.f32 %v6992, %v6993
    %v6995 = vmul.f32 %v6994, %v6660
    %v6996 = vsub.f32 %v6983, %v6995
    %v6997 = vmul.f32 %v6996, %v6996
    %v6998 = vsel %vm1854, %v6997, 0.0
    %v6999 = vrot.slane %v6998, 4
    %v7000 = vadd.f32 %v6998, %v6999
    %v7001 = vrot.slane %v7000, 2
    %v7002 = vadd.f32 %v7000, %v7001
    %v7003 = vrot.slane %v7002, 1
    %v7004 = vadd.f32 %v7002, %v7003
    %v7005 = vmul.f32 %v7004, %v6660
    %v7006 = vadd.f32 %v7005, 1e-05
    %v7007 = vrsqrt.pop %v7006
    %v7008 = vmul.f32 %v6996, %v7007
    %v7010 = vlaneseq
    %v7011 = vshrl.u32 %v7010, 7
    %v7012 = vsub.s32 0, %v7011
    %v7013 = vrot.slane %v6986, %v7012
    %v7015 = vmul.f32 %v7013, %v7008
    %v7017 = vlaneseq
    %v7018 = vshrl.u32 %v7017, 7
    %v7019 = vsub.s32 0, %v7018
    %v7020 = vrot.slane %v6987, %v7019
    %v7022 = vadd.f32 %v7015, %v7020
    %v7023 = vmax.f32 %v7022, 0.0
    %v7024 = vld [vmem:[#allocation17] sm:$0xff]
    %v7025 = vld [vmem:[#allocation17 + $0x8] sm:$0xff]
    %v7026 = vld [vmem:[#allocation17 + $0x10] sm:$0xff]
    %v7027 = vld [vmem:[#allocation17 + $0x18] sm:$0xff]
    %v7028 = vld [vmem:[#allocation17 + $0x20] sm:$0xff]
    %v7029 = vld [vmem:[#allocation17 + $0x28] sm:$0xff]
    %v7030 = vld [vmem:[#allocation17 + $0x30] sm:$0xff]
    %v7031 = vld [vmem:[#allocation17 + $0x38] sm:$0xff]
    %v7032 = vld [vmem:[#allocation17 + $0x40] sm:$0xff]
    %v7033 = vld [vmem:[#allocation17 + $0x48] sm:$0xff]
    %v7034 = vld [vmem:[#allocation17 + $0x50] sm:$0xff]
    %v7035 = vld [vmem:[#allocation17 + $0x58] sm:$0xff]
    %v7036 = vld [vmem:[#allocation17 + $0x60] sm:$0xff]
    %v7037 = vld [vmem:[#allocation17 + $0x68] sm:$0xff]
    %v7038 = vld [vmem:[#allocation17 + $0x70] sm:$0xff]
    %v7039 = vld [vmem:[#allocation17 + $0x78] sm:$0xff]
    %v7040 = vld [vmem:[#allocation17 + $0x80] sm:$0xff]
    %v7041 = vld [vmem:[#allocation17 + $0x88] sm:$0xff]
    %v7042 = vld [vmem:[#allocation17 + $0x90] sm:$0xff]
    %v7043 = vld [vmem:[#allocation17 + $0x98] sm:$0xff]
    %v7044 = vld [vmem:[#allocation17 + $0xa0] sm:$0xff]
    %v7045 = vld [vmem:[#allocation17 + $0xa8] sm:$0xff]
    %v7046 = vld [vmem:[#allocation17 + $0xb0] sm:$0xff]
    %v7047 = vld [vmem:[#allocation17 + $0xb8] sm:$0xff]
    %v7048 = vld [vmem:[#allocation17 + $0xc0] sm:$0xff]
    %v7049 = vld [vmem:[#allocation17 + $0xc8] sm:$0xff]
    %v7050 = vld [vmem:[#allocation17 + $0xd0] sm:$0xff]
    %v7051 = vld [vmem:[#allocation17 + $0xd8] sm:$0xff]
    %v7052 = vld [vmem:[#allocation17 + $0xe0] sm:$0xff]
    %v7053 = vld [vmem:[#allocation17 + $0xe8] sm:$0xff]
    %v7054 = vld [vmem:[#allocation17 + $0xf0] sm:$0xff]
    %v7055 = vld [vmem:[#allocation17 + $0xf8] sm:$0xff]
    %v7056 = vld [vmem:[#allocation17 + $0x100] sm:$0xff]
    %v7057 = vld [vmem:[#allocation17 + $0x108] sm:$0xff]
    %v7058 = vld [vmem:[#allocation17 + $0x110] sm:$0xff]
    %v7059 = vld [vmem:[#allocation17 + $0x118] sm:$0xff]
    %v7060 = vld [vmem:[#allocation17 + $0x120] sm:$0xff]
    %v7061 = vld [vmem:[#allocation17 + $0x128] sm:$0xff]
    %v7062 = vld [vmem:[#allocation17 + $0x130] sm:$0xff]
    %v7063 = vld [vmem:[#allocation17 + $0x138] sm:$0xff]
    %v7064 = vld [vmem:[#allocation17 + $0x140] sm:$0xff]
    %v7065 = vld [vmem:[#allocation17 + $0x148] sm:$0xff]
    %v7066 = vld [vmem:[#allocation17 + $0x150] sm:$0xff]
    %v7067 = vld [vmem:[#allocation17 + $0x158] sm:$0xff]
    %v7068 = vld [vmem:[#allocation17 + $0x160] sm:$0xff]
    %v7069 = vld [vmem:[#allocation17 + $0x168] sm:$0xff]
    %v7070 = vld [vmem:[#allocation17 + $0x170] sm:$0xff]
    %v7071 = vld [vmem:[#allocation17 + $0x178] sm:$0xff]
    %v7072 = vld [vmem:[#allocation17 + $0x180] sm:$0xff]
    %v7073 = vld [vmem:[#allocation17 + $0x188] sm:$0xff]
    %v7074 = vld [vmem:[#allocation17 + $0x190] sm:$0xff]
    %v7075 = vld [vmem:[#allocation17 + $0x198] sm:$0xff]
    %v7076 = vld [vmem:[#allocation17 + $0x1a0] sm:$0xff]
    %v7077 = vld [vmem:[#allocation17 + $0x1a8] sm:$0xff]
    %v7078 = vld [vmem:[#allocation17 + $0x1b0] sm:$0xff]
    %v7079 = vld [vmem:[#allocation17 + $0x1b8] sm:$0xff]
    %v7080 = vld [vmem:[#allocation17 + $0x1c0] sm:$0xff]
    %v7081 = vld [vmem:[#allocation17 + $0x1c8] sm:$0xff]
    %v7082 = vld [vmem:[#allocation17 + $0x1d0] sm:$0xff]
    %v7083 = vld [vmem:[#allocation17 + $0x1d8] sm:$0xff]
    %v7084 = vld [vmem:[#allocation17 + $0x1e0] sm:$0xff]
    %v7085 = vld [vmem:[#allocation17 + $0x1e8] sm:$0xff]
    %v7086 = vld [vmem:[#allocation17 + $0x1f0] sm:$0xff]
    %v7087 = vld [vmem:[#allocation17 + $0x1f8] sm:$0xff]
    %7088 = vmatprep.subr.mxu0 0.0
    %7089 = vmatpush1.msra.mxu0 %v7024
    %7090 = vmatprep.subr.mxu0 0.0
    %7091 = vmatpush1.msra.mxu0 %v7025
    %7092 = vmatprep.subr.mxu0 0.0
    %7093 = vmatpush1.msra.mxu0 %v7026
    %7094 = vmatprep.subr.mxu0 0.0
    %7095 = vmatpush1.msra.mxu0 %v7027
    %7096 = vmatprep.subr.mxu0 0.0
    %7097 = vmatpush1.msra.mxu0 %v7028
    %7098 = vmatprep.subr.mxu0 0.0
    %7099 = vmatpush1.msra.mxu0 %v7029
    %7100 = vmatprep.subr.mxu0 0.0
    %7101 = vmatpush1.msra.mxu0 %v7030
    %7102 = vmatprep.subr.mxu0 0.0
    %7103 = vmatpush1.msra.mxu0 %v7031
    %7104 = vmatprep.subr.mxu0 0.0
    %7105 = vmatpush1.msra.mxu0 %v7032
    %7106 = vmatprep.subr.mxu0 0.0
    %7107 = vmatpush1.msra.mxu0 %v7033
    %7108 = vmatprep.subr.mxu0 0.0
    %7109 = vmatpush1.msra.mxu0 %v7034
    %7110 = vmatprep.subr.mxu0 0.0
    %7111 = vmatpush1.msra.mxu0 %v7035
    %7112 = vmatprep.subr.mxu0 0.0
    %7113 = vmatpush1.msra.mxu0 %v7036
    %7114 = vmatprep.subr.mxu0 0.0
    %7115 = vmatpush1.msra.mxu0 %v7037
    %7116 = vmatprep.subr.mxu0 0.0
    %7117 = vmatpush1.msra.mxu0 %v7038
    %7118 = vmatprep.subr.mxu0 0.0
    %7119 = vmatpush1.msra.mxu0 %v7039
    %7120 = vmatprep.subr.mxu0 0.0
    %7121 = vmatpush1.msra.mxu0 %v7040
    %7122 = vmatprep.subr.mxu0 0.0
    %7123 = vmatpush1.msra.mxu0 %v7041
    %7124 = vmatprep.subr.mxu0 0.0
    %7125 = vmatpush1.msra.mxu0 %v7042
    %7126 = vmatprep.subr.mxu0 0.0
    %7127 = vmatpush1.msra.mxu0 %v7043
    %7128 = vmatprep.subr.mxu0 0.0
    %7129 = vmatpush1.msra.mxu0 %v7044
    %7130 = vmatprep.subr.mxu0 0.0
    %7131 = vmatpush1.msra.mxu0 %v7045
    %7132 = vmatprep.subr.mxu0 0.0
    %7133 = vmatpush1.msra.mxu0 %v7046
    %7134 = vmatprep.subr.mxu0 0.0
    %7135 = vmatpush1.msra.mxu0 %v7047
    %7136 = vmatprep.subr.mxu0 0.0
    %7137 = vmatpush1.msra.mxu0 %v7048
    %7138 = vmatprep.subr.mxu0 0.0
    %7139 = vmatpush1.msra.mxu0 %v7049
    %7140 = vmatprep.subr.mxu0 0.0
    %7141 = vmatpush1.msra.mxu0 %v7050
    %7142 = vmatprep.subr.mxu0 0.0
    %7143 = vmatpush1.msra.mxu0 %v7051
    %7144 = vmatprep.subr.mxu0 0.0
    %7145 = vmatpush1.msra.mxu0 %v7052
    %7146 = vmatprep.subr.mxu0 0.0
    %7147 = vmatpush1.msra.mxu0 %v7053
    %7148 = vmatprep.subr.mxu0 0.0
    %7149 = vmatpush1.msra.mxu0 %v7054
    %7150 = vmatprep.subr.mxu0 0.0
    %7151 = vmatpush1.msra.mxu0 %v7055
    %7152 = vmatprep.mubr.f32.mxu0 %v6768
    %7153 = vmatmul.mubr.f32.gmra.mrb[0].mxu0 %v6767
    %v7154 = vpop.f32.mrb[0].mxu0
    %v7155 = vadd.f32 0.0, %v7154
    %v7156 = vpop.f32.mrb[0].mxu0
    %7157 = vdwg.mxu0
    %7158 = vmatprep.subr.mxu0 0.0
    %7159 = vmatpush1.msra.mxu0 %v7056
    %7160 = vmatprep.subr.mxu0 0.0
    %7161 = vmatpush1.msra.mxu0 %v7057
    %7162 = vmatprep.subr.mxu0 0.0
    %7163 = vmatpush1.msra.mxu0 %v7058
    %7164 = vmatprep.subr.mxu0 0.0
    %7165 = vmatpush1.msra.mxu0 %v7059
    %7166 = vmatprep.subr.mxu0 0.0
    %7167 = vmatpush1.msra.mxu0 %v7060
    %7168 = vmatprep.subr.mxu0 0.0
    %7169 = vmatpush1.msra.mxu0 %v7061
    %7170 = vmatprep.subr.mxu0 0.0
    %7171 = vmatpush1.msra.mxu0 %v7062
    %7172 = vmatprep.subr.mxu0 0.0
    %7173 = vmatpush1.msra.mxu0 %v7063
    %7174 = vmatprep.subr.mxu0 0.0
    %7175 = vmatpush1.msra.mxu0 %v7064
    %7176 = vmatprep.subr.mxu0 0.0
    %7177 = vmatpush1.msra.mxu0 %v7065
    %7178 = vmatprep.subr.mxu0 0.0
    %7179 = vmatpush1.msra.mxu0 %v7066
    %7180 = vmatprep.subr.mxu0 0.0
    %7181 = vmatpush1.msra.mxu0 %v7067
    %7182 = vmatprep.subr.mxu0 0.0
    %7183 = vmatpush1.msra.mxu0 %v7068
    %7184 = vmatprep.subr.mxu0 0.0
    %7185 = vmatpush1.msra.mxu0 %v7069
    %7186 = vmatprep.subr.mxu0 0.0
    %7187 = vmatpush1.msra.mxu0 %v7070
    %7188 = vmatprep.subr.mxu0 0.0
    %7189 = vmatpush1.msra.mxu0 %v7071
    %7190 = vmatprep.subr.mxu0 0.0
    %7191 = vmatpush1.msra.mxu0 %v7072
    %7192 = vmatprep.subr.mxu0 0.0
    %7193 = vmatpush1.msra.mxu0 %v7073
    %7194 = vmatprep.subr.mxu0 0.0
    %7195 = vmatpush1.msra.mxu0 %v7074
    %7196 = vmatprep.subr.mxu0 0.0
    %7197 = vmatpush1.msra.mxu0 %v7075
    %7198 = vmatprep.subr.mxu0 0.0
    %7199 = vmatpush1.msra.mxu0 %v7076
    %7200 = vmatprep.subr.mxu0 0.0
    %7201 = vmatpush1.msra.mxu0 %v7077
    %7202 = vmatprep.subr.mxu0 0.0
    %7203 = vmatpush1.msra.mxu0 %v7078
    %7204 = vmatprep.subr.mxu0 0.0
    %7205 = vmatpush1.msra.mxu0 %v7079
    %7206 = vmatprep.subr.mxu0 0.0
    %7207 = vmatpush1.msra.mxu0 %v7080
    %7208 = vmatprep.subr.mxu0 0.0
    %7209 = vmatpush1.msra.mxu0 %v7081
    %7210 = vmatprep.subr.mxu0 0.0
    %7211 = vmatpush1.msra.mxu0 %v7082
    %7212 = vmatprep.subr.mxu0 0.0
    %7213 = vmatpush1.msra.mxu0 %v7083
    %7214 = vmatprep.subr.mxu0 0.0
    %7215 = vmatpush1.msra.mxu0 %v7084
    %7216 = vmatprep.subr.mxu0 0.0
    %7217 = vmatpush1.msra.mxu0 %v7085
    %7218 = vmatprep.subr.mxu0 0.0
    %7219 = vmatpush1.msra.mxu0 %v7086
    %7220 = vmatprep.subr.mxu0 0.0
    %7221 = vmatpush1.msra.mxu0 %v7087
    %7222 = vmatprep.mubr.f32.mxu0 %v6770
    %7223 = vmatmul.mubr.f32.gmra.mrb[0].mxu0 %v6769
    %v7224 = vpop.f32.mrb[0].mxu0
    %v7225 = vadd.f32 %v7155, %v7224
    %v7226 = vpop.f32.mrb[0].mxu0
    %7227 = vdwg.mxu0
    %v7228 = vld [vmem:[#allocation19] sm:$0x1]
    %v7229 = vld [vmem:[#allocation20] sm:$0x1]
    %v7230 = vsel %vm1854, %v7225, 0.0
    %v7231 = vrot.slane %v7230, 4
    %v7232 = vadd.f32 %v7230, %v7231
    %v7233 = vrot.slane %v7232, 2
    %v7234 = vadd.f32 %v7232, %v7233
    %v7235 = vrot.slane %v7234, 1
    %v7236 = vadd.f32 %v7234, %v7235
    %v7237 = vmul.f32 %v7236, %v6660
    %v7238 = vsub.f32 %v7225, %v7237
    %v7239 = vmul.f32 %v7238, %v7238
    %v7240 = vsel %vm1854, %v7239, 0.0
    %v7241 = vrot.slane %v7240, 4
    %v7242 = vadd.f32 %v7240, %v7241
    %v7243 = vrot.slane %v7242, 2
    %v7244 = vadd.f32 %v7242, %v7243
    %v7245 = vrot.slane %v7244, 1
    %v7246 = vadd.f32 %v7244, %v7245
    %v7247 = vmul.f32 %v7246, %v6660
    %v7248 = vadd.f32 %v7247, 1e-05
    %v7249 = vrsqrt.pop %v7248
    %v7250 = vmul.f32 %v7238, %v7249
    %v7252 = vlaneseq
    %v7253 = vshrl.u32 %v7252, 7
    %v7254 = vsub.s32 0, %v7253
    %v7255 = vrot.slane %v7228, %v7254
    %v7257 = vmul.f32 %v7255, %v7250
    %v7259 = vlaneseq
    %v7260 = vshrl.u32 %v7259, 7
    %v7261 = vsub.s32 0, %v7260
    %v7262 = vrot.slane %v7229, %v7261
    %v7264 = vadd.f32 %v7257, %v7262
    %v7265 = vmax.f32 %v7264, 0.0
    %v7266 = vadd.f32 %v7265, %v7023
    %7267 = vst [vmem:[#allocation26] sm:$0x3] %v7266
    // Predicated region
    $region134: #{visual_cortex_forward.1} parent=1 // pred_check
      _
    $region135: #{visual_cortex_forward.1} parent=1 // pred_check_branch
      %7269 = sbr.rel (0) target = $region137
    $region136: #{visual_cortex_forward.1} parent=1 // pred_region
      %s7271 = ssub.s32 32, 32
      %7272 = vsyncadd [#allocation4], %s7271
      %s7274 = sshll.u32 [#allocation26], 4
      %s7275 = int_to_ptr.vmem [resolvable:$true] %s7274
      %7277 = dma.vmem_to_hbm [thread:$0]  %s7275, 32, %s18, [#allocation4]
    $region137: #{visual_cortex_forward.1} parent=1 // pred_fallthru
      _
    // Predicated region
    $region138: #{visual_cortex_forward.1} parent=1 // pred_check
      _
    $region139: #{visual_cortex_forward.1} parent=1 // pred_check_branch
      %7279 = sbr.rel (0) target = $region141
    $region140: #{visual_cortex_forward.1} parent=1 // pred_region
      %7280 = dma.done [#allocation4], 32
    $region141: #{visual_cortex_forward.1} parent=1 // pred_fallthru
      _
    %7281 = vsyncpa [#allocation3], 1
    %7282 = vsyncpa [#allocation6], 1
    %7283 = vsyncpa [#allocation9], 1
    %7284 = vsyncpa [#allocation12], 1
    %7285 = vsyncpa [#allocation15], 1
    %7286 = vsyncpa [#allocation18], 1
    %7287 = vsyncpa [#allocation21], 1
    %7288 = vsyncpa [#allocation24], 1
    %7289 = vsyncpa [#allocation4], 1

</llo_original>
